<compile_context>
chip_gen: v5e
topology: v5e:2x2
jax: 0.10.0
libtpu: 0.0.40
codegen_flags: <defaults>
</compile_context>

<pallas_src>
import functools

import jax
import jax.numpy as jnp
from jax import lax
from jax.experimental import pallas as pl
from jax.experimental.pallas import tpu as pltpu


VMEM_LIMIT_BYTES = 32 * 1024 * 1024   # safe on v5e/v6e (128 MiB) and v7x (64 MiB)


def _pick_row_tile(H, W, max_rows=2048):
    """Rows of conv output per grid step; bounds im2col/acc/out VMEM."""
    if H * W <= max_rows:
        return H
    if W % 8:
        # TODO(synk): for W not a multiple of 8, fall back to whole-image tiles
        #             (keeps BlockSpec / reshape constraints trivially satisfied).
        return H
    for th in range(max(1, max_rows // W), 0, -1):
        if H % th == 0:
            return th
    return H


def _pick_reduce_tile(rows):
    for tm in (1024, 512, 256, 128, 64, 32, 16, 8):
        if rows % tm == 0:
            return tm
    return rows


# ----------------------------------------------------------------------------
# 3x3 "same" convolution kernel (optionally fused ReLU), NHWC.
# grid = (batch, row_tiles); one MXU matmul per tile via im2col K-folding.
# ----------------------------------------------------------------------------
def _conv3x3_kernel(x_ref, w_ref, b_ref, o_ref, *, TH, W, apply_relu):
    # x_ref: (1, H+2, W+2, Cin)   zero-padded full image of one batch element
    # w_ref: (9*Cin, Cout)        bf16 weights, taps folded into the K axis
    # b_ref: (1, Cout)            f32 bias
    # o_ref: (1, TH*W, Cout)      row tile of the flattened (H*W, Cout) output
    Cin = x_ref.shape[-1]
    Cout = o_ref.shape[-1]
    r = pl.program_id(1)
    row0 = pl.multiple_of(r * TH, TH)

    # im2col: (TH*W, 9*Cin) patch matrix. Column order (dy*3+dx)*Cin + cin
    # matches the (9*Cin, Cout) weight layout.
    cols = []
    for dy in range(3):
        for dx in range(3):
            cols.append(
                x_ref[0, pl.ds(row0 + dy, TH), dx:dx + W, :].reshape(TH * W, Cin))
    patch = jnp.concatenate(cols, axis=-1).astype(jnp.bfloat16)

    acc = jnp.dot(patch, w_ref[...], preferred_element_type=jnp.float32)
    acc = acc + b_ref[...]                      # f32 epilogue (v5e-safe)
    if apply_relu:
        acc = jnp.maximum(acc, 0.0)
    o_ref[...] = acc.reshape(1, TH * W, Cout).astype(o_ref.dtype)


def conv3x3(x, w, b, apply_relu):
    """3x3 'same' conv, NHWC. x:(N,H,W,Cin) f32, w:(9*Cin,Cout) bf16, b:(Cout,) f32."""
    N, H, W, Cin = x.shape
    K, Cout = w.shape
    assert K == 9 * Cin
    TH = _pick_row_tile(H, W)
    x_pad = jnp.pad(x, ((0, 0), (1, 1), (1, 1), (0, 0)))
    kernel = functools.partial(_conv3x3_kernel, TH=TH, W=W, apply_relu=apply_relu)
    out = pl.pallas_call(
        kernel,
        out_shape=jax.ShapeDtypeStruct((N, H * W, Cout), jnp.float32),
        grid=(N, H // TH),
        in_specs=[
            # whole padded image stays resident across the row-tile axis
            pl.BlockSpec((1, H + 2, W + 2, Cin), lambda n, r: (n, 0, 0, 0)),
            pl.BlockSpec((K, Cout), lambda n, r: (0, 0)),
            pl.BlockSpec((1, Cout), lambda n, r: (0, 0)),
        ],
        out_specs=pl.BlockSpec((1, TH * W, Cout), lambda n, r: (n, r, 0)),
        compiler_params=pltpu.CompilerParams(
            dimension_semantics=("parallel", "parallel"),
            vmem_limit_bytes=VMEM_LIMIT_BYTES),
    )(x_pad, w, b.reshape(1, Cout))
    # TODO(synk): for very large images, tile the *input* rows with a halo via
    #             manual DMA (pl.ANY + make_async_copy) to bound input VMEM.
    return out.reshape(N, H, W, Cout)


# ----------------------------------------------------------------------------
# Tiled, accumulating L1 / L2 sum (mean taken in the wrapper).
# grid streams lane-dense row tiles; a resident (1,1) output block accumulates.
# ----------------------------------------------------------------------------
def _loss_sum_kernel(a_ref, b_ref, o_ref, *, squared):
    @pl.when(pl.program_id(0) == 0)
    def _():
        o_ref[...] = jnp.zeros_like(o_ref)
    d = a_ref[...] - b_ref[...]                 # f32 diff
    contrib = d * d if squared else jnp.abs(d)
    o_ref[...] += jnp.sum(contrib, keepdims=True)


def _reduce_pair(a, b, squared):
    # Flatten to a lane-dense 2-D view: (N*H, W*C); W*C is a multiple of 128
    # for the feature layers used here, so tiles stream at HBM roofline.
    N, H, W, C = a.shape
    rows, cols = N * H, W * C
    a2 = a.reshape(rows, cols)
    b2 = b.reshape(rows, cols)
    TM = _pick_reduce_tile(rows)
    kernel = functools.partial(_loss_sum_kernel, squared=squared)
    s = pl.pallas_call(
        kernel,
        out_shape=jax.ShapeDtypeStruct((1, 1), jnp.float32),
        grid=(rows // TM,),
        in_specs=[pl.BlockSpec((TM, cols), lambda i: (i, 0)),
                  pl.BlockSpec((TM, cols), lambda i: (i, 0))],
        out_specs=pl.BlockSpec((1, 1), lambda i: (0, 0)),
        compiler_params=pltpu.CompilerParams(
            dimension_semantics=("arbitrary",),
            vmem_limit_bytes=VMEM_LIMIT_BYTES),
    )(a2, b2)
    return s[0, 0] / a.size


def mse_loss(a, b):
    return _reduce_pair(a, b, squared=True)


def l1_loss(a, b):
    return _reduce_pair(a, b, squared=False)


# ----------------------------------------------------------------------------
# Mini VGG19-prefix feature extractor (glue + Pallas conv kernels).
# ----------------------------------------------------------------------------
IMAGENET_MEAN = jnp.array([0.485, 0.456, 0.406], jnp.float32)
IMAGENET_STD = jnp.array([0.229, 0.224, 0.225], jnp.float32)

VGG_SPECS = {  # layer name -> (Cin, Cout); real VGG19 widths for blocks 1-2
    'conv1_1': (3, 64),
    'conv1_2': (64, 64),
    'conv2_1': (64, 128),
    'conv2_2': (128, 128),
}


def init_vgg_params(key):
    params = {}
    for i, (name, (cin, cout)) in enumerate(VGG_SPECS.items()):
        k = jax.random.fold_in(key, i)
        kw, kb = jax.random.split(k)
        w = jax.random.normal(kw, (9 * cin, cout), jnp.float32) * (2.0 / (9.0 * cin)) ** 0.5
        b = jax.random.normal(kb, (cout,), jnp.float32) * 0.01
        params[name] = (w.astype(jnp.bfloat16), b)   # bf16 MXU operands, f32 bias
    return params


def maxpool2x2(x):
    # TODO(synk): 2x2 maxpool kept in plain JAX glue (tiny, non-hot-path op).
    N, H, W, C = x.shape
    H2, W2 = (H // 2) * 2, (W // 2) * 2              # floor, like nn.MaxPool2d(2)
    x = x[:, :H2, :W2, :]
    return jnp.max(x.reshape(N, H2 // 2, 2, W2 // 2, 2, C), axis=(2, 4))


def vgg_features(x_nhwc, params, layer_names,
                 use_input_norm=True, use_range_norm=False):
    x = x_nhwc
    if use_range_norm:
        x = (x + 1.0) / 2.0
    if use_input_norm:
        x = (x - IMAGENET_MEAN) / IMAGENET_STD
    feats = {}
    # block 1
    x = conv3x3(x, *params['conv1_1'], apply_relu=True)
    x = conv3x3(x, *params['conv1_2'], apply_relu=False)     # pre-ReLU feature
    if 'conv1_2' in layer_names:
        feats['conv1_2'] = x
    x = jnp.maximum(x, 0.0)
    x = maxpool2x2(x)
    # block 2
    x = conv3x3(x, *params['conv2_1'], apply_relu=True)
    x = conv3x3(x, *params['conv2_2'], apply_relu=False)     # pre-ReLU feature
    if 'conv2_2' in layer_names:
        feats['conv2_2'] = x
    return feats


# ----------------------------------------------------------------------------
# PerceptualLoss forward.
# ----------------------------------------------------------------------------
def perceptual_loss(pred_nchw, target_nchw, params, layer_weights,
                    use_input_norm=True, use_range_norm=False,
                    criterion='l2', loss_weight=1.0):
    """pred/target: (n, c, h, w) as in the PyTorch module; returns scalar loss."""
    if criterion == 'l2':
        squared = True
    elif criterion == 'l1':
        squared = False
    else:
        raise NotImplementedError(f'{criterion} criterion is not supported.')

    pred = jnp.transpose(pred_nchw, (0, 2, 3, 1)).astype(jnp.float32)
    target = jnp.transpose(lax.stop_gradient(target_nchw),       # target.detach()
                           (0, 2, 3, 1)).astype(jnp.float32)
    N = pred.shape[0]

    # Single VGG pass over pred & target stacked on the batch axis: halves the
    # conv pallas_call launches and doubles the parallel batch grid extent.
    x = jnp.concatenate([pred, target], axis=0)
    names = list(layer_weights.keys())
    feats = vgg_features(x, params, names, use_input_norm, use_range_norm)

    loss = jnp.float32(0.0)
    for name in names:
        f = feats[name]
        loss = loss + _reduce_pair(f[:N], f[N:], squared) * layer_weights[name]
    return loss * loss_weight


if __name__ == "__main__":
    key = jax.random.PRNGKey(0)
    kp, kt, kw = jax.random.split(key, 3)

    # Small shapes consistent with the module: (n, c, h, w) images in [0, 1].
    pred = jax.random.uniform(kp, (2, 3, 16, 16), jnp.float32)
    target = jax.random.uniform(kt, (2, 3, 16, 16), jnp.float32)

    params = init_vgg_params(kw)
    layer_weights = {'conv1_2': 0.5, 'conv2_2': 1.0}

    @jax.jit
    def loss_fn(p, t):
        return perceptual_loss(p, t, params, layer_weights,
                               use_input_norm=True, use_range_norm=False,
                               criterion='l2', loss_weight=1.0)

    loss = loss_fn(pred, target)
    jax.block_until_ready(loss)
    print("KERNEL_OK")
</pallas_src>

<mosaic_0001>
module attributes {stable_mosaic.version = 11 : i64} {
  func.func @_conv3x3_kernel(%arg0: i32, %arg1: i32, %arg2: memref<1x18x18x3xf32, #tpu.memory_space<vmem>>, %arg3: memref<27x64xbf16, #tpu.memory_space<vmem>>, %arg4: memref<1x64xf32, #tpu.memory_space<vmem>>, %arg5: memref<1x256x64xf32, #tpu.memory_space<vmem>>) attributes {dimension_semantics = [#tpu.dimension_semantics<parallel>, #tpu.dimension_semantics<parallel>], iteration_bounds = array<i64: 4, 1>, scalar_prefetch = 0 : i64, scratch_operands = 0 : i64, tpu.core_type = #tpu.core_type<tc>, window_params = [{transform_indices = @transform_0, window_bounds = array<i64: 1, 18, 18, 3>}, {pipeline_mode = #tpu.pipeline_mode<synchronous>, transform_indices = @transform_1, window_bounds = array<i64: 27, 64>}, {pipeline_mode = #tpu.pipeline_mode<synchronous>, transform_indices = @transform_2, window_bounds = array<i64: 1, 64>}, {transform_indices = @transform_3, window_bounds = array<i64: 1, 256, 64>}]} {
    %c16_i32 = arith.constant 16 : i32
    %0 = arith.muli %arg1, %c16_i32 : i32
    %1 = tpu.assume_multiple %0, 16 : i32
    %c0_i32 = arith.constant 0 : i32
    %2 = arith.addi %1, %c0_i32 : i32
    %c0 = arith.constant 0 : index
    %3 = arith.index_cast %2 : i32 to index
    %c0_0 = arith.constant 0 : index
    %c0_1 = arith.constant 0 : index
    %4 = vector.load %arg2[%c0, %3, %c0_0, %c0_1] : memref<1x18x18x3xf32, #tpu.memory_space<vmem>>, vector<1x16x16x3xf32>
    %5 = vector.shape_cast %4 : vector<1x16x16x3xf32> to vector<16x16x3xf32>
    %6 = vector.shape_cast %5 : vector<16x16x3xf32> to vector<256x3xf32>
    %c0_i32_2 = arith.constant 0 : i32
    %7 = arith.addi %1, %c0_i32_2 : i32
    %c0_3 = arith.constant 0 : index
    %8 = arith.index_cast %7 : i32 to index
    %c1 = arith.constant 1 : index
    %c0_4 = arith.constant 0 : index
    %9 = vector.load %arg2[%c0_3, %8, %c1, %c0_4] : memref<1x18x18x3xf32, #tpu.memory_space<vmem>>, vector<1x16x16x3xf32>
    %10 = vector.shape_cast %9 : vector<1x16x16x3xf32> to vector<16x16x3xf32>
    %11 = vector.shape_cast %10 : vector<16x16x3xf32> to vector<256x3xf32>
    %c0_i32_5 = arith.constant 0 : i32
    %12 = arith.addi %1, %c0_i32_5 : i32
    %c0_6 = arith.constant 0 : index
    %13 = arith.index_cast %12 : i32 to index
    %c2 = arith.constant 2 : index
    %c0_7 = arith.constant 0 : index
    %14 = vector.load %arg2[%c0_6, %13, %c2, %c0_7] : memref<1x18x18x3xf32, #tpu.memory_space<vmem>>, vector<1x16x16x3xf32>
    %15 = vector.shape_cast %14 : vector<1x16x16x3xf32> to vector<16x16x3xf32>
    %16 = vector.shape_cast %15 : vector<16x16x3xf32> to vector<256x3xf32>
    %c1_i32 = arith.constant 1 : i32
    %17 = arith.addi %1, %c1_i32 : i32
    %c0_8 = arith.constant 0 : index
    %18 = arith.index_cast %17 : i32 to index
    %c0_9 = arith.constant 0 : index
    %c0_10 = arith.constant 0 : index
    %19 = vector.load %arg2[%c0_8, %18, %c0_9, %c0_10] : memref<1x18x18x3xf32, #tpu.memory_space<vmem>>, vector<1x16x16x3xf32>
    %20 = vector.shape_cast %19 : vector<1x16x16x3xf32> to vector<16x16x3xf32>
    %21 = vector.shape_cast %20 : vector<16x16x3xf32> to vector<256x3xf32>
    %c1_i32_11 = arith.constant 1 : i32
    %22 = arith.addi %1, %c1_i32_11 : i32
    %c0_12 = arith.constant 0 : index
    %23 = arith.index_cast %22 : i32 to index
    %c1_13 = arith.constant 1 : index
    %c0_14 = arith.constant 0 : index
    %24 = vector.load %arg2[%c0_12, %23, %c1_13, %c0_14] : memref<1x18x18x3xf32, #tpu.memory_space<vmem>>, vector<1x16x16x3xf32>
    %25 = vector.shape_cast %24 : vector<1x16x16x3xf32> to vector<16x16x3xf32>
    %26 = vector.shape_cast %25 : vector<16x16x3xf32> to vector<256x3xf32>
    %c1_i32_15 = arith.constant 1 : i32
    %27 = arith.addi %1, %c1_i32_15 : i32
    %c0_16 = arith.constant 0 : index
    %28 = arith.index_cast %27 : i32 to index
    %c2_17 = arith.constant 2 : index
    %c0_18 = arith.constant 0 : index
    %29 = vector.load %arg2[%c0_16, %28, %c2_17, %c0_18] : memref<1x18x18x3xf32, #tpu.memory_space<vmem>>, vector<1x16x16x3xf32>
    %30 = vector.shape_cast %29 : vector<1x16x16x3xf32> to vector<16x16x3xf32>
    %31 = vector.shape_cast %30 : vector<16x16x3xf32> to vector<256x3xf32>
    %c2_i32 = arith.constant 2 : i32
    %32 = arith.addi %1, %c2_i32 : i32
    %c0_19 = arith.constant 0 : index
    %33 = arith.index_cast %32 : i32 to index
    %c0_20 = arith.constant 0 : index
    %c0_21 = arith.constant 0 : index
    %34 = vector.load %arg2[%c0_19, %33, %c0_20, %c0_21] : memref<1x18x18x3xf32, #tpu.memory_space<vmem>>, vector<1x16x16x3xf32>
    %35 = vector.shape_cast %34 : vector<1x16x16x3xf32> to vector<16x16x3xf32>
    %36 = vector.shape_cast %35 : vector<16x16x3xf32> to vector<256x3xf32>
    %c2_i32_22 = arith.constant 2 : i32
    %37 = arith.addi %1, %c2_i32_22 : i32
    %c0_23 = arith.constant 0 : index
    %38 = arith.index_cast %37 : i32 to index
    %c1_24 = arith.constant 1 : index
    %c0_25 = arith.constant 0 : index
    %39 = vector.load %arg2[%c0_23, %38, %c1_24, %c0_25] : memref<1x18x18x3xf32, #tpu.memory_space<vmem>>, vector<1x16x16x3xf32>
    %40 = vector.shape_cast %39 : vector<1x16x16x3xf32> to vector<16x16x3xf32>
    %41 = vector.shape_cast %40 : vector<16x16x3xf32> to vector<256x3xf32>
    %c2_i32_26 = arith.constant 2 : i32
    %42 = arith.addi %1, %c2_i32_26 : i32
    %c0_27 = arith.constant 0 : index
    %43 = arith.index_cast %42 : i32 to index
    %c2_28 = arith.constant 2 : index
    %c0_29 = arith.constant 0 : index
    %44 = vector.load %arg2[%c0_27, %43, %c2_28, %c0_29] : memref<1x18x18x3xf32, #tpu.memory_space<vmem>>, vector<1x16x16x3xf32>
    %45 = vector.shape_cast %44 : vector<1x16x16x3xf32> to vector<16x16x3xf32>
    %46 = vector.shape_cast %45 : vector<16x16x3xf32> to vector<256x3xf32>
    %47 = tpu.concatenate %6, %11, %16, %21, %26, %31, %36, %41, %46 in 1 : vector<256x3xf32>, vector<256x3xf32>, vector<256x3xf32>, vector<256x3xf32>, vector<256x3xf32>, vector<256x3xf32>, vector<256x3xf32>, vector<256x3xf32>, vector<256x3xf32> -> vector<256x27xf32>
    %48 = arith.truncf %47 : vector<256x27xf32> to vector<256x27xbf16>
    %c0_30 = arith.constant 0 : index
    %c0_31 = arith.constant 0 : index
    %49 = vector.load %arg3[%c0_30, %c0_31] : memref<27x64xbf16, #tpu.memory_space<vmem>>, vector<27x64xbf16>
    %cst = arith.constant dense<0.000000e+00> : vector<256x64xf32>
    %50 = tpu.matmul %48, %49, %cst {dimension_numbers = #tpu.dot_dimension_numbers<[1], [0], [0], [1], [0, 0, 1, 1], [], []>} : vector<256x27xbf16>, vector<27x64xbf16>, vector<256x64xf32> -> vector<256x64xf32>
    %c0_32 = arith.constant 0 : index
    %c0_33 = arith.constant 0 : index
    %51 = vector.load %arg4[%c0_32, %c0_33] : memref<1x64xf32, #tpu.memory_space<vmem>>, vector<1x64xf32>
    %52 = vector.broadcast %51 : vector<1x64xf32> to vector<256x64xf32>
    %53 = arith.addf %50, %52 : vector<256x64xf32>
    %cst_34 = arith.constant 0.000000e+00 : f32
    %54 = vector.broadcast %cst_34 : f32 to vector<256x64xf32>
    %55 = arith.maximumf %53, %54 : vector<256x64xf32>
    %56 = vector.shape_cast %55 : vector<256x64xf32> to vector<1x256x64xf32>
    %c0_35 = arith.constant 0 : index
    %c0_36 = arith.constant 0 : index
    %c0_37 = arith.constant 0 : index
    %57 = vector.load %arg5[%c0_35, %c0_36, %c0_37] : memref<1x256x64xf32, #tpu.memory_space<vmem>>, vector<1x256x64xf32>
    tpu.vector_store %arg5[%c0_35, %c0_36, %c0_37], %56 {strides = array<i32>} : memref<1x256x64xf32, #tpu.memory_space<vmem>>, vector<1x256x64xf32>,
    return
  }
  func.func @transform_0(%arg0: i32, %arg1: i32) -> (i32, i32, i32, i32) {
    %c0_i32 = arith.constant 0 : i32
    %c0_i32_0 = arith.constant 0 : i32
    %c0_i32_1 = arith.constant 0 : i32
    %c0_i32_2 = arith.constant 0 : i32
    return %arg0, %c0_i32, %c0_i32_0, %c0_i32_1 : i32, i32, i32, i32
  }
  func.func @transform_1(%arg0: i32, %arg1: i32) -> (i32, i32) {
    %c0_i32 = arith.constant 0 : i32
    %c0_i32_0 = arith.constant 0 : i32
    %c0_i32_1 = arith.constant 0 : i32
    return %c0_i32, %c0_i32_0 : i32, i32
  }
  func.func @transform_2(%arg0: i32, %arg1: i32) -> (i32, i32) {
    %c0_i32 = arith.constant 0 : i32
    %c0_i32_0 = arith.constant 0 : i32
    %c0_i32_1 = arith.constant 0 : i32
    return %c0_i32, %c0_i32_0 : i32, i32
  }
  func.func @transform_3(%arg0: i32, %arg1: i32) -> (i32, i32, i32) {
    %c0_i32 = arith.constant 0 : i32
    %c0_i32_0 = arith.constant 0 : i32
    return %arg0, %arg1, %c0_i32 : i32, i32, i32
  }
}

module attributes {stable_mosaic.version = 11 : i64} {
  func.func @_conv3x3_kernel(%arg0: i32, %arg1: i32, %arg2: memref<1x18x18x64xf32, #tpu.memory_space<vmem>>, %arg3: memref<576x64xbf16, #tpu.memory_space<vmem>>, %arg4: memref<1x64xf32, #tpu.memory_space<vmem>>, %arg5: memref<1x256x64xf32, #tpu.memory_space<vmem>>) attributes {dimension_semantics = [#tpu.dimension_semantics<parallel>, #tpu.dimension_semantics<parallel>], iteration_bounds = array<i64: 4, 1>, scalar_prefetch = 0 : i64, scratch_operands = 0 : i64, tpu.core_type = #tpu.core_type<tc>, window_params = [{transform_indices = @transform_0, window_bounds = array<i64: 1, 18, 18, 64>}, {pipeline_mode = #tpu.pipeline_mode<synchronous>, transform_indices = @transform_1, window_bounds = array<i64: 576, 64>}, {pipeline_mode = #tpu.pipeline_mode<synchronous>, transform_indices = @transform_2, window_bounds = array<i64: 1, 64>}, {transform_indices = @transform_3, window_bounds = array<i64: 1, 256, 64>}]} {
    %c16_i32 = arith.constant 16 : i32
    %0 = arith.muli %arg1, %c16_i32 : i32
    %1 = tpu.assume_multiple %0, 16 : i32
    %c0_i32 = arith.constant 0 : i32
    %2 = arith.addi %1, %c0_i32 : i32
    %c0 = arith.constant 0 : index
    %3 = arith.index_cast %2 : i32 to index
    %c0_0 = arith.constant 0 : index
    %c0_1 = arith.constant 0 : index
    %4 = vector.load %arg2[%c0, %3, %c0_0, %c0_1] : memref<1x18x18x64xf32, #tpu.memory_space<vmem>>, vector<1x16x16x64xf32>
    %5 = vector.shape_cast %4 : vector<1x16x16x64xf32> to vector<16x16x64xf32>
    %6 = vector.shape_cast %5 : vector<16x16x64xf32> to vector<256x64xf32>
    %c0_i32_2 = arith.constant 0 : i32
    %7 = arith.addi %1, %c0_i32_2 : i32
    %c0_3 = arith.constant 0 : index
    %8 = arith.index_cast %7 : i32 to index
    %c1 = arith.constant 1 : index
    %c0_4 = arith.constant 0 : index
    %9 = vector.load %arg2[%c0_3, %8, %c1, %c0_4] : memref<1x18x18x64xf32, #tpu.memory_space<vmem>>, vector<1x16x16x64xf32>
    %10 = vector.shape_cast %9 : vector<1x16x16x64xf32> to vector<16x16x64xf32>
    %11 = vector.shape_cast %10 : vector<16x16x64xf32> to vector<256x64xf32>
    %c0_i32_5 = arith.constant 0 : i32
    %12 = arith.addi %1, %c0_i32_5 : i32
    %c0_6 = arith.constant 0 : index
    %13 = arith.index_cast %12 : i32 to index
    %c2 = arith.constant 2 : index
    %c0_7 = arith.constant 0 : index
    %14 = vector.load %arg2[%c0_6, %13, %c2, %c0_7] : memref<1x18x18x64xf32, #tpu.memory_space<vmem>>, vector<1x16x16x64xf32>
    %15 = vector.shape_cast %14 : vector<1x16x16x64xf32> to vector<16x16x64xf32>
    %16 = vector.shape_cast %15 : vector<16x16x64xf32> to vector<256x64xf32>
    %c1_i32 = arith.constant 1 : i32
    %17 = arith.addi %1, %c1_i32 : i32
    %c0_8 = arith.constant 0 : index
    %18 = arith.index_cast %17 : i32 to index
    %c0_9 = arith.constant 0 : index
    %c0_10 = arith.constant 0 : index
    %19 = vector.load %arg2[%c0_8, %18, %c0_9, %c0_10] : memref<1x18x18x64xf32, #tpu.memory_space<vmem>>, vector<1x16x16x64xf32>
    %20 = vector.shape_cast %19 : vector<1x16x16x64xf32> to vector<16x16x64xf32>
    %21 = vector.shape_cast %20 : vector<16x16x64xf32> to vector<256x64xf32>
    %c1_i32_11 = arith.constant 1 : i32
    %22 = arith.addi %1, %c1_i32_11 : i32
    %c0_12 = arith.constant 0 : index
    %23 = arith.index_cast %22 : i32 to index
    %c1_13 = arith.constant 1 : index
    %c0_14 = arith.constant 0 : index
    %24 = vector.load %arg2[%c0_12, %23, %c1_13, %c0_14] : memref<1x18x18x64xf32, #tpu.memory_space<vmem>>, vector<1x16x16x64xf32>
    %25 = vector.shape_cast %24 : vector<1x16x16x64xf32> to vector<16x16x64xf32>
    %26 = vector.shape_cast %25 : vector<16x16x64xf32> to vector<256x64xf32>
    %c1_i32_15 = arith.constant 1 : i32
    %27 = arith.addi %1, %c1_i32_15 : i32
    %c0_16 = arith.constant 0 : index
    %28 = arith.index_cast %27 : i32 to index
    %c2_17 = arith.constant 2 : index
    %c0_18 = arith.constant 0 : index
    %29 = vector.load %arg2[%c0_16, %28, %c2_17, %c0_18] : memref<1x18x18x64xf32, #tpu.memory_space<vmem>>, vector<1x16x16x64xf32>
    %30 = vector.shape_cast %29 : vector<1x16x16x64xf32> to vector<16x16x64xf32>
    %31 = vector.shape_cast %30 : vector<16x16x64xf32> to vector<256x64xf32>
    %c2_i32 = arith.constant 2 : i32
    %32 = arith.addi %1, %c2_i32 : i32
    %c0_19 = arith.constant 0 : index
    %33 = arith.index_cast %32 : i32 to index
    %c0_20 = arith.constant 0 : index
    %c0_21 = arith.constant 0 : index
    %34 = vector.load %arg2[%c0_19, %33, %c0_20, %c0_21] : memref<1x18x18x64xf32, #tpu.memory_space<vmem>>, vector<1x16x16x64xf32>
    %35 = vector.shape_cast %34 : vector<1x16x16x64xf32> to vector<16x16x64xf32>
    %36 = vector.shape_cast %35 : vector<16x16x64xf32> to vector<256x64xf32>
    %c2_i32_22 = arith.constant 2 : i32
    %37 = arith.addi %1, %c2_i32_22 : i32
    %c0_23 = arith.constant 0 : index
    %38 = arith.index_cast %37 : i32 to index
    %c1_24 = arith.constant 1 : index
    %c0_25 = arith.constant 0 : index
    %39 = vector.load %arg2[%c0_23, %38, %c1_24, %c0_25] : memref<1x18x18x64xf32, #tpu.memory_space<vmem>>, vector<1x16x16x64xf32>
    %40 = vector.shape_cast %39 : vector<1x16x16x64xf32> to vector<16x16x64xf32>
    %41 = vector.shape_cast %40 : vector<16x16x64xf32> to vector<256x64xf32>
    %c2_i32_26 = arith.constant 2 : i32
    %42 = arith.addi %1, %c2_i32_26 : i32
    %c0_27 = arith.constant 0 : index
    %43 = arith.index_cast %42 : i32 to index
    %c2_28 = arith.constant 2 : index
    %c0_29 = arith.constant 0 : index
    %44 = vector.load %arg2[%c0_27, %43, %c2_28, %c0_29] : memref<1x18x18x64xf32, #tpu.memory_space<vmem>>, vector<1x16x16x64xf32>
    %45 = vector.shape_cast %44 : vector<1x16x16x64xf32> to vector<16x16x64xf32>
    %46 = vector.shape_cast %45 : vector<16x16x64xf32> to vector<256x64xf32>
    %47 = tpu.concatenate %6, %11, %16, %21, %26, %31, %36, %41, %46 in 1 : vector<256x64xf32>, vector<256x64xf32>, vector<256x64xf32>, vector<256x64xf32>, vector<256x64xf32>, vector<256x64xf32>, vector<256x64xf32>, vector<256x64xf32>, vector<256x64xf32> -> vector<256x576xf32>
    %48 = arith.truncf %47 : vector<256x576xf32> to vector<256x576xbf16>
    %c0_30 = arith.constant 0 : index
    %c0_31 = arith.constant 0 : index
    %49 = vector.load %arg3[%c0_30, %c0_31] : memref<576x64xbf16, #tpu.memory_space<vmem>>, vector<576x64xbf16>
    %cst = arith.constant dense<0.000000e+00> : vector<256x64xf32>
    %50 = tpu.matmul %48, %49, %cst {dimension_numbers = #tpu.dot_dimension_numbers<[1], [0], [0], [1], [0, 0, 1, 1], [], []>} : vector<256x576xbf16>, vector<576x64xbf16>, vector<256x64xf32> -> vector<256x64xf32>
    %c0_32 = arith.constant 0 : index
    %c0_33 = arith.constant 0 : index
    %51 = vector.load %arg4[%c0_32, %c0_33] : memref<1x64xf32, #tpu.memory_space<vmem>>, vector<1x64xf32>
    %52 = vector.broadcast %51 : vector<1x64xf32> to vector<256x64xf32>
    %53 = arith.addf %50, %52 : vector<256x64xf32>
    %54 = vector.shape_cast %53 : vector<256x64xf32> to vector<1x256x64xf32>
    %c0_34 = arith.constant 0 : index
    %c0_35 = arith.constant 0 : index
    %c0_36 = arith.constant 0 : index
    %55 = vector.load %arg5[%c0_34, %c0_35, %c0_36] : memref<1x256x64xf32, #tpu.memory_space<vmem>>, vector<1x256x64xf32>
    tpu.vector_store %arg5[%c0_34, %c0_35, %c0_36], %54 {strides = array<i32>} : memref<1x256x64xf32, #tpu.memory_space<vmem>>, vector<1x256x64xf32>,
    return
  }
  func.func @transform_0(%arg0: i32, %arg1: i32) -> (i32, i32, i32, i32) {
    %c0_i32 = arith.constant 0 : i32
    %c0_i32_0 = arith.constant 0 : i32
    %c0_i32_1 = arith.constant 0 : i32
    %c0_i32_2 = arith.constant 0 : i32
    return %arg0, %c0_i32, %c0_i32_0, %c0_i32_1 : i32, i32, i32, i32
  }
  func.func @transform_1(%arg0: i32, %arg1: i32) -> (i32, i32) {
    %c0_i32 = arith.constant 0 : i32
    %c0_i32_0 = arith.constant 0 : i32
    %c0_i32_1 = arith.constant 0 : i32
    return %c0_i32, %c0_i32_0 : i32, i32
  }
  func.func @transform_2(%arg0: i32, %arg1: i32) -> (i32, i32) {
    %c0_i32 = arith.constant 0 : i32
    %c0_i32_0 = arith.constant 0 : i32
    %c0_i32_1 = arith.constant 0 : i32
    return %c0_i32, %c0_i32_0 : i32, i32
  }
  func.func @transform_3(%arg0: i32, %arg1: i32) -> (i32, i32, i32) {
    %c0_i32 = arith.constant 0 : i32
    %c0_i32_0 = arith.constant 0 : i32
    return %arg0, %arg1, %c0_i32 : i32, i32, i32
  }
}

module attributes {stable_mosaic.version = 11 : i64} {
  func.func @_loss_sum_kernel(%arg0: i32, %arg1: memref<32x1024xf32, #tpu.memory_space<vmem>>, %arg2: memref<32x1024xf32, #tpu.memory_space<vmem>>, %arg3: memref<1x1xf32, #tpu.memory_space<vmem>>) attributes {dimension_semantics = [#tpu.dimension_semantics<arbitrary>], iteration_bounds = array<i64: 1>, scalar_prefetch = 0 : i64, scratch_operands = 0 : i64, tpu.core_type = #tpu.core_type<tc>, window_params = [{transform_indices = @transform_0, window_bounds = array<i64: 32, 1024>}, {transform_indices = @transform_1, window_bounds = array<i64: 32, 1024>}, {pipeline_mode = #tpu.pipeline_mode<synchronous>, transform_indices = @transform_2, window_bounds = array<i64: 1, 1>}]} {
    %c0_i32 = arith.constant 0 : i32
    %0 = arith.cmpi eq, %arg0, %c0_i32 : i32
    %1 = arith.extui %0 : i1 to i32
    %c0_i32_0 = arith.constant 0 : i32
    %2 = arith.cmpi ne, %1, %c0_i32_0 : i32
    scf.if %2 {
      %cst_8 = arith.constant 0.000000e+00 : f32
      %15 = vector.broadcast %cst_8 : f32 to vector<1x1xf32>
      %c0_9 = arith.constant 0 : index
      %c0_10 = arith.constant 0 : index
      %16 = vector.load %arg3[%c0_9, %c0_10] : memref<1x1xf32, #tpu.memory_space<vmem>>, vector<1x1xf32>
      tpu.vector_store %arg3[%c0_9, %c0_10], %15 {strides = array<i32>} : memref<1x1xf32, #tpu.memory_space<vmem>>, vector<1x1xf32>,
    } else {
    }
    %c0 = arith.constant 0 : index
    %c0_1 = arith.constant 0 : index
    %3 = vector.load %arg1[%c0, %c0_1] : memref<32x1024xf32, #tpu.memory_space<vmem>>, vector<32x1024xf32>
    %c0_2 = arith.constant 0 : index
    %c0_3 = arith.constant 0 : index
    %4 = vector.load %arg2[%c0_2, %c0_3] : memref<32x1024xf32, #tpu.memory_space<vmem>>, vector<32x1024xf32>
    %5 = arith.subf %3, %4 : vector<32x1024xf32>
    %6 = arith.mulf %5, %5 : vector<32x1024xf32>
    %c0_4 = arith.constant 0 : index
    %c0_5 = arith.constant 0 : index
    %7 = vector.load %arg3[%c0_4, %c0_5] : memref<1x1xf32, #tpu.memory_space<vmem>>, vector<1x1xf32>
    %8 = vector.shape_cast %6 : vector<32x1024xf32> to vector<1x32x1024xf32>
    %cst = arith.constant dense<0.000000e+00> : vector<1xf32>
    %9 = vector.multi_reduction <add>, %8, %cst [1, 2] : vector<1x32x1024xf32> to vector<1xf32>
    %10 = vector.shape_cast %9 : vector<1xf32> to vector<1x1x1xf32>
    %11 = vector.extract %10[0, 0, 0] : f32 from vector<1x1x1xf32>
    %12 = vector.broadcast %11 : f32 to vector<1x1xf32>
    %13 = arith.addf %7, %12 : vector<1x1xf32>
    %c0_6 = arith.constant 0 : index
    %c0_7 = arith.constant 0 : index
    %14 = vector.load %arg3[%c0_6, %c0_7] : memref<1x1xf32, #tpu.memory_space<vmem>>, vector<1x1xf32>
    tpu.vector_store %arg3[%c0_6, %c0_7], %13 {strides = array<i32>} : memref<1x1xf32, #tpu.memory_space<vmem>>, vector<1x1xf32>,
    return
  }
  func.func @transform_0(%arg0: i32) -> (i32, i32) {
    %c0_i32 = arith.constant 0 : i32
    %c0_i32_0 = arith.constant 0 : i32
    return %arg0, %c0_i32 : i32, i32
  }
  func.func @transform_1(%arg0: i32) -> (i32, i32) {
    %c0_i32 = arith.constant 0 : i32
    %c0_i32_0 = arith.constant 0 : i32
    return %arg0, %c0_i32 : i32, i32
  }
  func.func @transform_2(%arg0: i32) -> (i32, i32) {
    %c0_i32 = arith.constant 0 : i32
    %c0_i32_0 = arith.constant 0 : i32
    %c0_i32_1 = arith.constant 0 : i32
    return %c0_i32, %c0_i32_0 : i32, i32
  }
}

module attributes {stable_mosaic.version = 11 : i64} {
  func.func @_conv3x3_kernel(%arg0: i32, %arg1: i32, %arg2: memref<1x10x10x64xf32, #tpu.memory_space<vmem>>, %arg3: memref<576x128xbf16, #tpu.memory_space<vmem>>, %arg4: memref<1x128xf32, #tpu.memory_space<vmem>>, %arg5: memref<1x64x128xf32, #tpu.memory_space<vmem>>) attributes {dimension_semantics = [#tpu.dimension_semantics<parallel>, #tpu.dimension_semantics<parallel>], iteration_bounds = array<i64: 4, 1>, scalar_prefetch = 0 : i64, scratch_operands = 0 : i64, tpu.core_type = #tpu.core_type<tc>, window_params = [{transform_indices = @transform_0, window_bounds = array<i64: 1, 10, 10, 64>}, {pipeline_mode = #tpu.pipeline_mode<synchronous>, transform_indices = @transform_1, window_bounds = array<i64: 576, 128>}, {pipeline_mode = #tpu.pipeline_mode<synchronous>, transform_indices = @transform_2, window_bounds = array<i64: 1, 128>}, {transform_indices = @transform_3, window_bounds = array<i64: 1, 64, 128>}]} {
    %c8_i32 = arith.constant 8 : i32
    %0 = arith.muli %arg1, %c8_i32 : i32
    %1 = tpu.assume_multiple %0, 8 : i32
    %c0_i32 = arith.constant 0 : i32
    %2 = arith.addi %1, %c0_i32 : i32
    %c0 = arith.constant 0 : index
    %3 = arith.index_cast %2 : i32 to index
    %c0_0 = arith.constant 0 : index
    %c0_1 = arith.constant 0 : index
    %4 = vector.load %arg2[%c0, %3, %c0_0, %c0_1] : memref<1x10x10x64xf32, #tpu.memory_space<vmem>>, vector<1x8x8x64xf32>
    %5 = vector.shape_cast %4 : vector<1x8x8x64xf32> to vector<8x8x64xf32>
    %6 = vector.shape_cast %5 : vector<8x8x64xf32> to vector<64x64xf32>
    %c0_i32_2 = arith.constant 0 : i32
    %7 = arith.addi %1, %c0_i32_2 : i32
    %c0_3 = arith.constant 0 : index
    %8 = arith.index_cast %7 : i32 to index
    %c1 = arith.constant 1 : index
    %c0_4 = arith.constant 0 : index
    %9 = vector.load %arg2[%c0_3, %8, %c1, %c0_4] : memref<1x10x10x64xf32, #tpu.memory_space<vmem>>, vector<1x8x8x64xf32>
    %10 = vector.shape_cast %9 : vector<1x8x8x64xf32> to vector<8x8x64xf32>
    %11 = vector.shape_cast %10 : vector<8x8x64xf32> to vector<64x64xf32>
    %c0_i32_5 = arith.constant 0 : i32
    %12 = arith.addi %1, %c0_i32_5 : i32
    %c0_6 = arith.constant 0 : index
    %13 = arith.index_cast %12 : i32 to index
    %c2 = arith.constant 2 : index
    %c0_7 = arith.constant 0 : index
    %14 = vector.load %arg2[%c0_6, %13, %c2, %c0_7] : memref<1x10x10x64xf32, #tpu.memory_space<vmem>>, vector<1x8x8x64xf32>
    %15 = vector.shape_cast %14 : vector<1x8x8x64xf32> to vector<8x8x64xf32>
    %16 = vector.shape_cast %15 : vector<8x8x64xf32> to vector<64x64xf32>
    %c1_i32 = arith.constant 1 : i32
    %17 = arith.addi %1, %c1_i32 : i32
    %c0_8 = arith.constant 0 : index
    %18 = arith.index_cast %17 : i32 to index
    %c0_9 = arith.constant 0 : index
    %c0_10 = arith.constant 0 : index
    %19 = vector.load %arg2[%c0_8, %18, %c0_9, %c0_10] : memref<1x10x10x64xf32, #tpu.memory_space<vmem>>, vector<1x8x8x64xf32>
    %20 = vector.shape_cast %19 : vector<1x8x8x64xf32> to vector<8x8x64xf32>
    %21 = vector.shape_cast %20 : vector<8x8x64xf32> to vector<64x64xf32>
    %c1_i32_11 = arith.constant 1 : i32
    %22 = arith.addi %1, %c1_i32_11 : i32
    %c0_12 = arith.constant 0 : index
    %23 = arith.index_cast %22 : i32 to index
    %c1_13 = arith.constant 1 : index
    %c0_14 = arith.constant 0 : index
    %24 = vector.load %arg2[%c0_12, %23, %c1_13, %c0_14] : memref<1x10x10x64xf32, #tpu.memory_space<vmem>>, vector<1x8x8x64xf32>
    %25 = vector.shape_cast %24 : vector<1x8x8x64xf32> to vector<8x8x64xf32>
    %26 = vector.shape_cast %25 : vector<8x8x64xf32> to vector<64x64xf32>
    %c1_i32_15 = arith.constant 1 : i32
    %27 = arith.addi %1, %c1_i32_15 : i32
    %c0_16 = arith.constant 0 : index
    %28 = arith.index_cast %27 : i32 to index
    %c2_17 = arith.constant 2 : index
    %c0_18 = arith.constant 0 : index
    %29 = vector.load %arg2[%c0_16, %28, %c2_17, %c0_18] : memref<1x10x10x64xf32, #tpu.memory_space<vmem>>, vector<1x8x8x64xf32>
    %30 = vector.shape_cast %29 : vector<1x8x8x64xf32> to vector<8x8x64xf32>
    %31 = vector.shape_cast %30 : vector<8x8x64xf32> to vector<64x64xf32>
    %c2_i32 = arith.constant 2 : i32
    %32 = arith.addi %1, %c2_i32 : i32
    %c0_19 = arith.constant 0 : index
    %33 = arith.index_cast %32 : i32 to index
    %c0_20 = arith.constant 0 : index
    %c0_21 = arith.constant 0 : index
    %34 = vector.load %arg2[%c0_19, %33, %c0_20, %c0_21] : memref<1x10x10x64xf32, #tpu.memory_space<vmem>>, vector<1x8x8x64xf32>
    %35 = vector.shape_cast %34 : vector<1x8x8x64xf32> to vector<8x8x64xf32>
    %36 = vector.shape_cast %35 : vector<8x8x64xf32> to vector<64x64xf32>
    %c2_i32_22 = arith.constant 2 : i32
    %37 = arith.addi %1, %c2_i32_22 : i32
    %c0_23 = arith.constant 0 : index
    %38 = arith.index_cast %37 : i32 to index
    %c1_24 = arith.constant 1 : index
    %c0_25 = arith.constant 0 : index
    %39 = vector.load %arg2[%c0_23, %38, %c1_24, %c0_25] : memref<1x10x10x64xf32, #tpu.memory_space<vmem>>, vector<1x8x8x64xf32>
    %40 = vector.shape_cast %39 : vector<1x8x8x64xf32> to vector<8x8x64xf32>
    %41 = vector.shape_cast %40 : vector<8x8x64xf32> to vector<64x64xf32>
    %c2_i32_26 = arith.constant 2 : i32
    %42 = arith.addi %1, %c2_i32_26 : i32
    %c0_27 = arith.constant 0 : index
    %43 = arith.index_cast %42 : i32 to index
    %c2_28 = arith.constant 2 : index
    %c0_29 = arith.constant 0 : index
    %44 = vector.load %arg2[%c0_27, %43, %c2_28, %c0_29] : memref<1x10x10x64xf32, #tpu.memory_space<vmem>>, vector<1x8x8x64xf32>
    %45 = vector.shape_cast %44 : vector<1x8x8x64xf32> to vector<8x8x64xf32>
    %46 = vector.shape_cast %45 : vector<8x8x64xf32> to vector<64x64xf32>
    %47 = tpu.concatenate %6, %11, %16, %21, %26, %31, %36, %41, %46 in 1 : vector<64x64xf32>, vector<64x64xf32>, vector<64x64xf32>, vector<64x64xf32>, vector<64x64xf32>, vector<64x64xf32>, vector<64x64xf32>, vector<64x64xf32>, vector<64x64xf32> -> vector<64x576xf32>
    %48 = arith.truncf %47 : vector<64x576xf32> to vector<64x576xbf16>
    %c0_30 = arith.constant 0 : index
    %c0_31 = arith.constant 0 : index
    %49 = vector.load %arg3[%c0_30, %c0_31] : memref<576x128xbf16, #tpu.memory_space<vmem>>, vector<576x128xbf16>
    %cst = arith.constant dense<0.000000e+00> : vector<64x128xf32>
    %50 = tpu.matmul %48, %49, %cst {dimension_numbers = #tpu.dot_dimension_numbers<[1], [0], [0], [1], [0, 0, 1, 1], [], []>} : vector<64x576xbf16>, vector<576x128xbf16>, vector<64x128xf32> -> vector<64x128xf32>
    %c0_32 = arith.constant 0 : index
    %c0_33 = arith.constant 0 : index
    %51 = vector.load %arg4[%c0_32, %c0_33] : memref<1x128xf32, #tpu.memory_space<vmem>>, vector<1x128xf32>
    %52 = vector.broadcast %51 : vector<1x128xf32> to vector<64x128xf32>
    %53 = arith.addf %50, %52 : vector<64x128xf32>
    %cst_34 = arith.constant 0.000000e+00 : f32
    %54 = vector.broadcast %cst_34 : f32 to vector<64x128xf32>
    %55 = arith.maximumf %53, %54 : vector<64x128xf32>
    %56 = vector.shape_cast %55 : vector<64x128xf32> to vector<1x64x128xf32>
    %c0_35 = arith.constant 0 : index
    %c0_36 = arith.constant 0 : index
    %c0_37 = arith.constant 0 : index
    %57 = vector.load %arg5[%c0_35, %c0_36, %c0_37] : memref<1x64x128xf32, #tpu.memory_space<vmem>>, vector<1x64x128xf32>
    tpu.vector_store %arg5[%c0_35, %c0_36, %c0_37], %56 {strides = array<i32>} : memref<1x64x128xf32, #tpu.memory_space<vmem>>, vector<1x64x128xf32>,
    return
  }
  func.func @transform_0(%arg0: i32, %arg1: i32) -> (i32, i32, i32, i32) {
    %c0_i32 = arith.constant 0 : i32
    %c0_i32_0 = arith.constant 0 : i32
    %c0_i32_1 = arith.constant 0 : i32
    %c0_i32_2 = arith.constant 0 : i32
    return %arg0, %c0_i32, %c0_i32_0, %c0_i32_1 : i32, i32, i32, i32
  }
  func.func @transform_1(%arg0: i32, %arg1: i32) -> (i32, i32) {
    %c0_i32 = arith.constant 0 : i32
    %c0_i32_0 = arith.constant 0 : i32
    %c0_i32_1 = arith.constant 0 : i32
    return %c0_i32, %c0_i32_0 : i32, i32
  }
  func.func @transform_2(%arg0: i32, %arg1: i32) -> (i32, i32) {
    %c0_i32 = arith.constant 0 : i32
    %c0_i32_0 = arith.constant 0 : i32
    %c0_i32_1 = arith.constant 0 : i32
    return %c0_i32, %c0_i32_0 : i32, i32
  }
  func.func @transform_3(%arg0: i32, %arg1: i32) -> (i32, i32, i32) {
    %c0_i32 = arith.constant 0 : i32
    %c0_i32_0 = arith.constant 0 : i32
    return %arg0, %arg1, %c0_i32 : i32, i32, i32
  }
}

module attributes {stable_mosaic.version = 11 : i64} {
  func.func @_conv3x3_kernel(%arg0: i32, %arg1: i32, %arg2: memref<1x10x10x128xf32, #tpu.memory_space<vmem>>, %arg3: memref<1152x128xbf16, #tpu.memory_space<vmem>>, %arg4: memref<1x128xf32, #tpu.memory_space<vmem>>, %arg5: memref<1x64x128xf32, #tpu.memory_space<vmem>>) attributes {dimension_semantics = [#tpu.dimension_semantics<parallel>, #tpu.dimension_semantics<parallel>], iteration_bounds = array<i64: 4, 1>, scalar_prefetch = 0 : i64, scratch_operands = 0 : i64, tpu.core_type = #tpu.core_type<tc>, window_params = [{transform_indices = @transform_0, window_bounds = array<i64: 1, 10, 10, 128>}, {pipeline_mode = #tpu.pipeline_mode<synchronous>, transform_indices = @transform_1, window_bounds = array<i64: 1152, 128>}, {pipeline_mode = #tpu.pipeline_mode<synchronous>, transform_indices = @transform_2, window_bounds = array<i64: 1, 128>}, {transform_indices = @transform_3, window_bounds = array<i64: 1, 64, 128>}]} {
    %c8_i32 = arith.constant 8 : i32
    %0 = arith.muli %arg1, %c8_i32 : i32
    %1 = tpu.assume_multiple %0, 8 : i32
    %c0_i32 = arith.constant 0 : i32
    %2 = arith.addi %1, %c0_i32 : i32
    %c0 = arith.constant 0 : index
    %3 = arith.index_cast %2 : i32 to index
    %c0_0 = arith.constant 0 : index
    %c0_1 = arith.constant 0 : index
    %4 = vector.load %arg2[%c0, %3, %c0_0, %c0_1] : memref<1x10x10x128xf32, #tpu.memory_space<vmem>>, vector<1x8x8x128xf32>
    %5 = vector.shape_cast %4 : vector<1x8x8x128xf32> to vector<8x8x128xf32>
    %6 = vector.shape_cast %5 : vector<8x8x128xf32> to vector<64x128xf32>
    %c0_i32_2 = arith.constant 0 : i32
    %7 = arith.addi %1, %c0_i32_2 : i32
    %c0_3 = arith.constant 0 : index
    %8 = arith.index_cast %7 : i32 to index
    %c1 = arith.constant 1 : index
    %c0_4 = arith.constant 0 : index
    %9 = vector.load %arg2[%c0_3, %8, %c1, %c0_4] : memref<1x10x10x128xf32, #tpu.memory_space<vmem>>, vector<1x8x8x128xf32>
    %10 = vector.shape_cast %9 : vector<1x8x8x128xf32> to vector<8x8x128xf32>
    %11 = vector.shape_cast %10 : vector<8x8x128xf32> to vector<64x128xf32>
    %c0_i32_5 = arith.constant 0 : i32
    %12 = arith.addi %1, %c0_i32_5 : i32
    %c0_6 = arith.constant 0 : index
    %13 = arith.index_cast %12 : i32 to index
    %c2 = arith.constant 2 : index
    %c0_7 = arith.constant 0 : index
    %14 = vector.load %arg2[%c0_6, %13, %c2, %c0_7] : memref<1x10x10x128xf32, #tpu.memory_space<vmem>>, vector<1x8x8x128xf32>
    %15 = vector.shape_cast %14 : vector<1x8x8x128xf32> to vector<8x8x128xf32>
    %16 = vector.shape_cast %15 : vector<8x8x128xf32> to vector<64x128xf32>
    %c1_i32 = arith.constant 1 : i32
    %17 = arith.addi %1, %c1_i32 : i32
    %c0_8 = arith.constant 0 : index
    %18 = arith.index_cast %17 : i32 to index
    %c0_9 = arith.constant 0 : index
    %c0_10 = arith.constant 0 : index
    %19 = vector.load %arg2[%c0_8, %18, %c0_9, %c0_10] : memref<1x10x10x128xf32, #tpu.memory_space<vmem>>, vector<1x8x8x128xf32>
    %20 = vector.shape_cast %19 : vector<1x8x8x128xf32> to vector<8x8x128xf32>
    %21 = vector.shape_cast %20 : vector<8x8x128xf32> to vector<64x128xf32>
    %c1_i32_11 = arith.constant 1 : i32
    %22 = arith.addi %1, %c1_i32_11 : i32
    %c0_12 = arith.constant 0 : index
    %23 = arith.index_cast %22 : i32 to index
    %c1_13 = arith.constant 1 : index
    %c0_14 = arith.constant 0 : index
    %24 = vector.load %arg2[%c0_12, %23, %c1_13, %c0_14] : memref<1x10x10x128xf32, #tpu.memory_space<vmem>>, vector<1x8x8x128xf32>
    %25 = vector.shape_cast %24 : vector<1x8x8x128xf32> to vector<8x8x128xf32>
    %26 = vector.shape_cast %25 : vector<8x8x128xf32> to vector<64x128xf32>
    %c1_i32_15 = arith.constant 1 : i32
    %27 = arith.addi %1, %c1_i32_15 : i32
    %c0_16 = arith.constant 0 : index
    %28 = arith.index_cast %27 : i32 to index
    %c2_17 = arith.constant 2 : index
    %c0_18 = arith.constant 0 : index
    %29 = vector.load %arg2[%c0_16, %28, %c2_17, %c0_18] : memref<1x10x10x128xf32, #tpu.memory_space<vmem>>, vector<1x8x8x128xf32>
    %30 = vector.shape_cast %29 : vector<1x8x8x128xf32> to vector<8x8x128xf32>
    %31 = vector.shape_cast %30 : vector<8x8x128xf32> to vector<64x128xf32>
    %c2_i32 = arith.constant 2 : i32
    %32 = arith.addi %1, %c2_i32 : i32
    %c0_19 = arith.constant 0 : index
    %33 = arith.index_cast %32 : i32 to index
    %c0_20 = arith.constant 0 : index
    %c0_21 = arith.constant 0 : index
    %34 = vector.load %arg2[%c0_19, %33, %c0_20, %c0_21] : memref<1x10x10x128xf32, #tpu.memory_space<vmem>>, vector<1x8x8x128xf32>
    %35 = vector.shape_cast %34 : vector<1x8x8x128xf32> to vector<8x8x128xf32>
    %36 = vector.shape_cast %35 : vector<8x8x128xf32> to vector<64x128xf32>
    %c2_i32_22 = arith.constant 2 : i32
    %37 = arith.addi %1, %c2_i32_22 : i32
    %c0_23 = arith.constant 0 : index
    %38 = arith.index_cast %37 : i32 to index
    %c1_24 = arith.constant 1 : index
    %c0_25 = arith.constant 0 : index
    %39 = vector.load %arg2[%c0_23, %38, %c1_24, %c0_25] : memref<1x10x10x128xf32, #tpu.memory_space<vmem>>, vector<1x8x8x128xf32>
    %40 = vector.shape_cast %39 : vector<1x8x8x128xf32> to vector<8x8x128xf32>
    %41 = vector.shape_cast %40 : vector<8x8x128xf32> to vector<64x128xf32>
    %c2_i32_26 = arith.constant 2 : i32
    %42 = arith.addi %1, %c2_i32_26 : i32
    %c0_27 = arith.constant 0 : index
    %43 = arith.index_cast %42 : i32 to index
    %c2_28 = arith.constant 2 : index
    %c0_29 = arith.constant 0 : index
    %44 = vector.load %arg2[%c0_27, %43, %c2_28, %c0_29] : memref<1x10x10x128xf32, #tpu.memory_space<vmem>>, vector<1x8x8x128xf32>
    %45 = vector.shape_cast %44 : vector<1x8x8x128xf32> to vector<8x8x128xf32>
    %46 = vector.shape_cast %45 : vector<8x8x128xf32> to vector<64x128xf32>
    %47 = tpu.concatenate %6, %11, %16, %21, %26, %31, %36, %41, %46 in 1 : vector<64x128xf32>, vector<64x128xf32>, vector<64x128xf32>, vector<64x128xf32>, vector<64x128xf32>, vector<64x128xf32>, vector<64x128xf32>, vector<64x128xf32>, vector<64x128xf32> -> vector<64x1152xf32>
    %48 = arith.truncf %47 : vector<64x1152xf32> to vector<64x1152xbf16>
    %c0_30 = arith.constant 0 : index
    %c0_31 = arith.constant 0 : index
    %49 = vector.load %arg3[%c0_30, %c0_31] : memref<1152x128xbf16, #tpu.memory_space<vmem>>, vector<1152x128xbf16>
    %cst = arith.constant dense<0.000000e+00> : vector<64x128xf32>
    %50 = tpu.matmul %48, %49, %cst {dimension_numbers = #tpu.dot_dimension_numbers<[1], [0], [0], [1], [0, 0, 1, 1], [], []>} : vector<64x1152xbf16>, vector<1152x128xbf16>, vector<64x128xf32> -> vector<64x128xf32>
    %c0_32 = arith.constant 0 : index
    %c0_33 = arith.constant 0 : index
    %51 = vector.load %arg4[%c0_32, %c0_33] : memref<1x128xf32, #tpu.memory_space<vmem>>, vector<1x128xf32>
    %52 = vector.broadcast %51 : vector<1x128xf32> to vector<64x128xf32>
    %53 = arith.addf %50, %52 : vector<64x128xf32>
    %54 = vector.shape_cast %53 : vector<64x128xf32> to vector<1x64x128xf32>
    %c0_34 = arith.constant 0 : index
    %c0_35 = arith.constant 0 : index
    %c0_36 = arith.constant 0 : index
    %55 = vector.load %arg5[%c0_34, %c0_35, %c0_36] : memref<1x64x128xf32, #tpu.memory_space<vmem>>, vector<1x64x128xf32>
    tpu.vector_store %arg5[%c0_34, %c0_35, %c0_36], %54 {strides = array<i32>} : memref<1x64x128xf32, #tpu.memory_space<vmem>>, vector<1x64x128xf32>,
    return
  }
  func.func @transform_0(%arg0: i32, %arg1: i32) -> (i32, i32, i32, i32) {
    %c0_i32 = arith.constant 0 : i32
    %c0_i32_0 = arith.constant 0 : i32
    %c0_i32_1 = arith.constant 0 : i32
    %c0_i32_2 = arith.constant 0 : i32
    return %arg0, %c0_i32, %c0_i32_0, %c0_i32_1 : i32, i32, i32, i32
  }
  func.func @transform_1(%arg0: i32, %arg1: i32) -> (i32, i32) {
    %c0_i32 = arith.constant 0 : i32
    %c0_i32_0 = arith.constant 0 : i32
    %c0_i32_1 = arith.constant 0 : i32
    return %c0_i32, %c0_i32_0 : i32, i32
  }
  func.func @transform_2(%arg0: i32, %arg1: i32) -> (i32, i32) {
    %c0_i32 = arith.constant 0 : i32
    %c0_i32_0 = arith.constant 0 : i32
    %c0_i32_1 = arith.constant 0 : i32
    return %c0_i32, %c0_i32_0 : i32, i32
  }
  func.func @transform_3(%arg0: i32, %arg1: i32) -> (i32, i32, i32) {
    %c0_i32 = arith.constant 0 : i32
    %c0_i32_0 = arith.constant 0 : i32
    return %arg0, %arg1, %c0_i32 : i32, i32, i32
  }
}

module attributes {stable_mosaic.version = 11 : i64} {
  func.func @_loss_sum_kernel(%arg0: i32, %arg1: memref<16x1024xf32, #tpu.memory_space<vmem>>, %arg2: memref<16x1024xf32, #tpu.memory_space<vmem>>, %arg3: memref<1x1xf32, #tpu.memory_space<vmem>>) attributes {dimension_semantics = [#tpu.dimension_semantics<arbitrary>], iteration_bounds = array<i64: 1>, scalar_prefetch = 0 : i64, scratch_operands = 0 : i64, tpu.core_type = #tpu.core_type<tc>, window_params = [{transform_indices = @transform_0, window_bounds = array<i64: 16, 1024>}, {transform_indices = @transform_1, window_bounds = array<i64: 16, 1024>}, {pipeline_mode = #tpu.pipeline_mode<synchronous>, transform_indices = @transform_2, window_bounds = array<i64: 1, 1>}]} {
    %c0_i32 = arith.constant 0 : i32
    %0 = arith.cmpi eq, %arg0, %c0_i32 : i32
    %1 = arith.extui %0 : i1 to i32
    %c0_i32_0 = arith.constant 0 : i32
    %2 = arith.cmpi ne, %1, %c0_i32_0 : i32
    scf.if %2 {
      %cst_8 = arith.constant 0.000000e+00 : f32
      %15 = vector.broadcast %cst_8 : f32 to vector<1x1xf32>
      %c0_9 = arith.constant 0 : index
      %c0_10 = arith.constant 0 : index
      %16 = vector.load %arg3[%c0_9, %c0_10] : memref<1x1xf32, #tpu.memory_space<vmem>>, vector<1x1xf32>
      tpu.vector_store %arg3[%c0_9, %c0_10], %15 {strides = array<i32>} : memref<1x1xf32, #tpu.memory_space<vmem>>, vector<1x1xf32>,
    } else {
    }
    %c0 = arith.constant 0 : index
    %c0_1 = arith.constant 0 : index
    %3 = vector.load %arg1[%c0, %c0_1] : memref<16x1024xf32, #tpu.memory_space<vmem>>, vector<16x1024xf32>
    %c0_2 = arith.constant 0 : index
    %c0_3 = arith.constant 0 : index
    %4 = vector.load %arg2[%c0_2, %c0_3] : memref<16x1024xf32, #tpu.memory_space<vmem>>, vector<16x1024xf32>
    %5 = arith.subf %3, %4 : vector<16x1024xf32>
    %6 = arith.mulf %5, %5 : vector<16x1024xf32>
    %c0_4 = arith.constant 0 : index
    %c0_5 = arith.constant 0 : index
    %7 = vector.load %arg3[%c0_4, %c0_5] : memref<1x1xf32, #tpu.memory_space<vmem>>, vector<1x1xf32>
    %8 = vector.shape_cast %6 : vector<16x1024xf32> to vector<1x16x1024xf32>
    %cst = arith.constant dense<0.000000e+00> : vector<1xf32>
    %9 = vector.multi_reduction <add>, %8, %cst [1, 2] : vector<1x16x1024xf32> to vector<1xf32>
    %10 = vector.shape_cast %9 : vector<1xf32> to vector<1x1x1xf32>
    %11 = vector.extract %10[0, 0, 0] : f32 from vector<1x1x1xf32>
    %12 = vector.broadcast %11 : f32 to vector<1x1xf32>
    %13 = arith.addf %7, %12 : vector<1x1xf32>
    %c0_6 = arith.constant 0 : index
    %c0_7 = arith.constant 0 : index
    %14 = vector.load %arg3[%c0_6, %c0_7] : memref<1x1xf32, #tpu.memory_space<vmem>>, vector<1x1xf32>
    tpu.vector_store %arg3[%c0_6, %c0_7], %13 {strides = array<i32>} : memref<1x1xf32, #tpu.memory_space<vmem>>, vector<1x1xf32>,
    return
  }
  func.func @transform_0(%arg0: i32) -> (i32, i32) {
    %c0_i32 = arith.constant 0 : i32
    %c0_i32_0 = arith.constant 0 : i32
    return %arg0, %c0_i32 : i32, i32
  }
  func.func @transform_1(%arg0: i32) -> (i32, i32) {
    %c0_i32 = arith.constant 0 : i32
    %c0_i32_0 = arith.constant 0 : i32
    return %arg0, %c0_i32 : i32, i32
  }
  func.func @transform_2(%arg0: i32) -> (i32, i32) {
    %c0_i32 = arith.constant 0 : i32
    %c0_i32_0 = arith.constant 0 : i32
    %c0_i32_1 = arith.constant 0 : i32
    return %c0_i32, %c0_i32_0 : i32, i32
  }
}

</mosaic_0001>

<llo_original>
// kernel: loss_fn.6
$region0: #{loss_fn.6}
  #allocation0 [shape = 'u32[]', space=smem, size = 0x4, offset = 0x4, fixed_abs, tag = 'smem constant byte address 0x4 - core index']
  #allocation1 [shape = 'u32[72,128]{1,0:T(1,128)}', space=vmem, size = 0x9000, scoped, tag = 'internal scratch']
  %s0 = inlined_call_operand.vmem [shape: f32[4,18,18,3], index: 0, kind: input, shape index: {}]
  %s1 = inlined_call_operand.vmem [shape: bf16[27,64], index: 1, kind: input, shape index: {}]
  %s2 = inlined_call_operand.vmem [shape: f32[1,64], index: 2, kind: input, shape index: {}]
  %s3 = inlined_call_operand.vmem [shape: f32[4,256,64], index: 3, kind: output, shape index: {}]
  %s4 = sld [smem:[#allocation0]]
  $region45: #{loss_fn.6} parent=0
    _
  %s6 = ssub.s32 1, %s4
  %s7 = scalar_select 0, %s6, %s4
  loop: start=0, step=1, limit=6
  $region2: #{loss_fn.6} parent=0 // loop_pre_header
    _
  $region3: #{loss_fn.6} parent=0 // loop_header
    %s9 = sphi 0, %s13
    %p10 = scmp.ge.s32.totalorder %s9, 6
    %s16 = sphi 0, %s28
    %s17 = sphi 0, %s24
    %s18 = sphi 0, %s16
    %s19 = sphi 0, %s17
    %s20 = sphi 0, %s18
    %s21 = sphi 0, %s19
    %s31 = sphi 0, %s33
    %s34 = sphi 0, %s31
    %s35 = sphi 0, %s34
    %s51 = sphi 0, %s35
    %s55 = sphi 0, %s55
    %s57 = sphi 0, %s55
    %s58 = sphi 0, %s57
    %s72 = sphi 0, %s58
    %s76 = sphi 0, %s76
    %s78 = sphi 0, %s76
    %s79 = sphi 0, %s78
    %s93 = sphi 0, %s79
    %s101 = sphi 0, %s103
    %s104 = sphi 0, %s101
    %s105 = sphi 0, %s104
    %s121 = sphi 0, %s105
  $region4: #{loss_fn.6} parent=0 // loop_header_branch
    %12 = sbr.rel (%p10) target = $region8
  $region5: #{loss_fn.6} parent=0 // loop_body
    %s14 = ssub.s32 %s9, 1
    %s15 = ssub.s32 %s9, 2
    %s22 = sadd.s32 1, %s17
    %p23 = scmp.ge.s32.totalorder %s22, 1
    %s24 = scalar_select %p23, 0, %s22
    %s25 = sadd.s32 1, %s16
    %s26 = scalar_select %p23, %s25, %s16
    %p27 = scmp.ge.s32.totalorder %s26, 4
    %s28 = scalar_select %p27, 0, %s26
    %s29 = ssub.s32 %s16, %s28
    %p30 = scmp.eq.s32.totalorder %s29, 0
    %s32 = sadd.s32 %s31, 1
    %s33 = scalar_select %p30, %s31, %s32
    %p36 = pneg %p30
    %p37 = scmp.eq.s32.totalorder %s9, 3
    %p38 = por %p36, %p37
    %p39 = scmp.ne.s32.totalorder %s31, %s34
    %p40 = scmp.eq.s32.totalorder %s9, 0
    %p41 = por %p39, %p40
    %p42 = scmp.ne.s32.totalorder %s31, %s34
    %p43 = scmp.eq.s32.totalorder %s14, 3
    %p44 = por %p42, %p43
    %p45 = scmp.ne.s32.totalorder %s34, %s35
    %p46 = scmp.eq.s32.totalorder %s14, 0
    %p47 = por %p45, %p46
    %p48 = scmp.ne.s32.totalorder %s34, %s35
    %p49 = scmp.eq.s32.totalorder %s15, 3
    %p50 = por %p48, %p49
    %p52 = scmp.ne.s32.totalorder %s35, %s51
    %p53 = scmp.eq.s32.totalorder %s15, 0
    %p54 = por %p52, %p53
    %s56 = sadd.s32 %s55, 1
    %p59 = scmp.eq.s32.totalorder %s9, 3
    %p60 = scmp.ne.s32.totalorder %s55, %s57
    %p61 = scmp.eq.s32.totalorder %s9, 0
    %p62 = por %p60, %p61
    %p63 = scmp.ne.s32.totalorder %s55, %s57
    %p64 = scmp.eq.s32.totalorder %s14, 3
    %p65 = por %p63, %p64
    %p66 = scmp.ne.s32.totalorder %s57, %s58
    %p67 = scmp.eq.s32.totalorder %s14, 0
    %p68 = por %p66, %p67
    %p69 = scmp.ne.s32.totalorder %s57, %s58
    %p70 = scmp.eq.s32.totalorder %s15, 3
    %p71 = por %p69, %p70
    %p73 = scmp.ne.s32.totalorder %s58, %s72
    %p74 = scmp.eq.s32.totalorder %s15, 0
    %p75 = por %p73, %p74
    %s77 = sadd.s32 %s76, 1
    %p80 = scmp.eq.s32.totalorder %s9, 3
    %p81 = scmp.ne.s32.totalorder %s76, %s78
    %p82 = scmp.eq.s32.totalorder %s9, 0
    %p83 = por %p81, %p82
    %p84 = scmp.ne.s32.totalorder %s76, %s78
    %p85 = scmp.eq.s32.totalorder %s14, 3
    %p86 = por %p84, %p85
    %p87 = scmp.ne.s32.totalorder %s78, %s79
    %p88 = scmp.eq.s32.totalorder %s14, 0
    %p89 = por %p87, %p88
    %p90 = scmp.ne.s32.totalorder %s78, %s79
    %p91 = scmp.eq.s32.totalorder %s15, 3
    %p92 = por %p90, %p91
    %p94 = scmp.ne.s32.totalorder %s79, %s93
    %p95 = scmp.eq.s32.totalorder %s15, 0
    %p96 = por %p94, %p95
    %s97 = ssub.s32 %s16, %s28
    %s98 = ssub.s32 %s17, %s24
    %s99 = sor.u32 %s97, %s98
    %p100 = scmp.eq.s32.totalorder %s99, 0
    %s102 = sadd.s32 %s101, 1
    %s103 = scalar_select %p100, %s101, %s102
    %p106 = pneg %p100
    %p107 = scmp.eq.s32.totalorder %s9, 3
    %p108 = por %p106, %p107
    %p109 = scmp.ne.s32.totalorder %s101, %s104
    %p110 = scmp.eq.s32.totalorder %s9, 0
    %p111 = por %p109, %p110
    %p112 = scmp.ne.s32.totalorder %s101, %s104
    %p113 = scmp.eq.s32.totalorder %s14, 3
    %p114 = por %p112, %p113
    %p115 = scmp.ne.s32.totalorder %s104, %s105
    %p116 = scmp.eq.s32.totalorder %s14, 0
    %p117 = por %p115, %p116
    %p118 = scmp.ne.s32.totalorder %s104, %s105
    %p119 = scmp.eq.s32.totalorder %s15, 3
    %p120 = por %p118, %p119
    %p122 = scmp.ne.s32.totalorder %s105, %s121
    %p123 = scmp.eq.s32.totalorder %s15, 0
    %p124 = por %p122, %p123
    %p125 = scmp.le.s32.totalorder 1, %s9
    %p126 = scmp.lt.s32.totalorder %s9, 5
    %p127 = pnand %p125, %p126
    %p128 = pneg %p127
    // Predicated region
    $region9: #{loss_fn.6} parent=5 // pred_check
      _
    $region10: #{loss_fn.6} parent=5 // pred_check_branch
      %130 = sbr.rel (%p127) target = $region12
    $region11: #{loss_fn.6} parent=5 // pred_region
      %s131 = ssub.s32 %s9, 1
      // Predicated region
      $region13: #{loss_fn.6} parent=11 // pred_check
        %p132 = pneg %p68
      $region14: #{loss_fn.6} parent=11 // pred_check_branch
        %134 = sbr.rel (%p132) target = $region16
      $region15: #{loss_fn.6} parent=11 // pred_region
        _
      $region16: #{loss_fn.6} parent=11 // pred_fallthru
        _
      // Predicated region
      $region17: #{loss_fn.6} parent=11 // pred_check
        %p135 = pneg %p89
      $region18: #{loss_fn.6} parent=11 // pred_check_branch
        %137 = sbr.rel (%p135) target = $region20
      $region19: #{loss_fn.6} parent=11 // pred_region
        _
      $region20: #{loss_fn.6} parent=11 // pred_fallthru
        _
    $region12: #{loss_fn.6} parent=5 // pred_fallthru
      _
    %p138 = scmp.lt.s32.totalorder %s9, 4
    // Predicated region
    $region21: #{loss_fn.6} parent=5 // pred_check
      %p139 = pneg %p138
    $region22: #{loss_fn.6} parent=5 // pred_check_branch
      %141 = sbr.rel (%p139) target = $region24
    $region23: #{loss_fn.6} parent=5 // pred_region
      // Predicated region
      $region25: #{loss_fn.6} parent=23 // pred_check
        %p142 = pneg %p41
      $region26: #{loss_fn.6} parent=23 // pred_check_branch
        %144 = sbr.rel (%p142) target = $region28
      $region27: #{loss_fn.6} parent=23 // pred_region
        %p145 = scmp.lt.s32.totalorder %s16, 3
        %s146 = scalar_select %p145, %s16, 3
        %s147 = smul.addr %s146, 54
        %s148 = smul.addr %s147, 8
        %s149 = scalar_lea.vmem %s0, %s148
      $region28: #{loss_fn.6} parent=23 // pred_fallthru
        _
    $region24: #{loss_fn.6} parent=5 // pred_fallthru
      _
    %p150 = scmp.le.s32.totalorder 1, %s9
    %p151 = scmp.lt.s32.totalorder %s9, 5
    %p152 = pnand %p150, %p151
    %p153 = pneg %p152
    // Predicated region
    $region29: #{loss_fn.6} parent=5 // pred_check
      _
    $region30: #{loss_fn.6} parent=5 // pred_check_branch
      %155 = sbr.rel (%p152) target = $region32
    $region31: #{loss_fn.6} parent=5 // pred_region
      %s156 = ssub.s32 %s9, 1
      %p157 = scmp.lt.s32.totalorder %s18, 3
      %s158 = scalar_select %p157, %s18, 3
      %s159 = smul.addr %s158, 54
      %s160 = smul.addr %s159, 8
      %s161 = scalar_lea.vmem %s0, %s160
      %p162 = pneg %p47
      %p163 = pneg %p44
      %p164 = pneg %p68
      %p165 = pneg %p65
      %p166 = pneg %p89
      %p167 = pneg %p86
      %p168 = pneg %p117
      %p169 = pneg %p114
      %s170 = smul.u32 32, %s19
      %p171 = scmp.lt.s32.totalorder %s18, 3
      %s172 = scalar_select %p171, %s18, 3
      %p173 = scmp.lt.s32.totalorder %s170, 31
      %s174 = scalar_select %p173, %s170, 31
      %s175 = smul.addr %s172, 32
      %s176 = sadd.s32 %s174, %s175
      %s177 = smul.addr %s176, 8
      %s178 = scalar_lea.vmem %s3, %s177
      %p179 = scmp.lt.s32.totalorder %s18, 3
      %s180 = scalar_select %p179, %s18, 3
      %s181 = smul.addr %s180, 54
      %s182 = smul.addr %s181, 8
      %s183 = scalar_lea.vmem %s0, %s182
      %s184 = smul.u32 32, %s19
      %p185 = scmp.lt.s32.totalorder %s18, 3
      %s186 = scalar_select %p185, %s18, 3
      %p187 = scmp.lt.s32.totalorder %s184, 31
      %s188 = scalar_select %p187, %s184, 31
      %s189 = smul.addr %s186, 32
      %s190 = sadd.s32 %s188, %s189
      %s191 = smul.addr %s190, 8
      %s192 = scalar_lea.vmem %s3, %s191
      %s193 = smul.u32 32, %s19
      %s195 = smul.u32 %s19, 16
      %s196 = smul.u32 %s195, 24
      %s197 = scalar_lea.vmem %s183, %s196
      %v198 = vld [vmem:[%s197] sm:$0xff]
      %v199 = vld [vmem:[%s197 + $0x8] sm:$0xff]
      %v200 = vld [vmem:[%s197 + $0x18] sm:$0xff]
      %v201 = vld [vmem:[%s197 + $0x20] sm:$0xff]
      %v202 = vld [vmem:[%s197 + $0x30] sm:$0xff]
      %v203 = vld [vmem:[%s197 + $0x38] sm:$0xff]
      %v204 = vld [vmem:[%s197 + $0x48] sm:$0xff]
      %v205 = vld [vmem:[%s197 + $0x50] sm:$0xff]
      %v206 = vld [vmem:[%s197 + $0x60] sm:$0xff]
      %v207 = vld [vmem:[%s197 + $0x68] sm:$0xff]
      %v208 = vld [vmem:[%s197 + $0x78] sm:$0xff]
      %v209 = vld [vmem:[%s197 + $0x80] sm:$0xff]
      %v210 = vld [vmem:[%s197 + $0x90] sm:$0xff]
      %v211 = vld [vmem:[%s197 + $0x98] sm:$0xff]
      %v212 = vld [vmem:[%s197 + $0xa8] sm:$0xff]
      %v213 = vld [vmem:[%s197 + $0xb0] sm:$0xff]
      %v214 = vld [vmem:[%s197 + $0xc0] sm:$0xff]
      %v215 = vld [vmem:[%s197 + $0xc8] sm:$0xff]
      %v216 = vld [vmem:[%s197 + $0xd8] sm:$0xff]
      %v217 = vld [vmem:[%s197 + $0xe0] sm:$0xff]
      %v218 = vld [vmem:[%s197 + $0xf0] sm:$0xff]
      %v219 = vld [vmem:[%s197 + $0xf8] sm:$0xff]
      %v220 = vld [vmem:[%s197 + $0x108] sm:$0xff]
      %v221 = vld [vmem:[%s197 + $0x110] sm:$0xff]
      %v222 = vld [vmem:[%s197 + $0x120] sm:$0xff]
      %v223 = vld [vmem:[%s197 + $0x128] sm:$0xff]
      %v224 = vld [vmem:[%s197 + $0x138] sm:$0xff]
      %v225 = vld [vmem:[%s197 + $0x140] sm:$0xff]
      %v226 = vld [vmem:[%s197 + $0x150] sm:$0xff]
      %v227 = vld [vmem:[%s197 + $0x158] sm:$0xff]
      %v228 = vld [vmem:[%s197 + $0x168] sm:$0xff]
      %v229 = vld [vmem:[%s197 + $0x170] sm:$0xff]
      %v230 = vld [vmem:[%s197 + $0x1] sm:$0xff]
      %v231 = vld [vmem:[%s197 + $0x9] sm:$0xff]
      %v232 = vld [vmem:[%s197 + $0x19] sm:$0xff]
      %v233 = vld [vmem:[%s197 + $0x21] sm:$0xff]
      %v234 = vld [vmem:[%s197 + $0x31] sm:$0xff]
      %v235 = vld [vmem:[%s197 + $0x39] sm:$0xff]
      %v236 = vld [vmem:[%s197 + $0x49] sm:$0xff]
      %v237 = vld [vmem:[%s197 + $0x51] sm:$0xff]
      %v238 = vld [vmem:[%s197 + $0x61] sm:$0xff]
      %v239 = vld [vmem:[%s197 + $0x69] sm:$0xff]
      %v240 = vld [vmem:[%s197 + $0x79] sm:$0xff]
      %v241 = vld [vmem:[%s197 + $0x81] sm:$0xff]
      %v242 = vld [vmem:[%s197 + $0x91] sm:$0xff]
      %v243 = vld [vmem:[%s197 + $0x99] sm:$0xff]
      %v244 = vld [vmem:[%s197 + $0xa9] sm:$0xff]
      %v245 = vld [vmem:[%s197 + $0xb1] sm:$0xff]
      %v246 = vld [vmem:[%s197 + $0xc1] sm:$0xff]
      %v247 = vld [vmem:[%s197 + $0xc9] sm:$0xff]
      %v248 = vld [vmem:[%s197 + $0xd9] sm:$0xff]
      %v249 = vld [vmem:[%s197 + $0xe1] sm:$0xff]
      %v250 = vld [vmem:[%s197 + $0xf1] sm:$0xff]
      %v251 = vld [vmem:[%s197 + $0xf9] sm:$0xff]
      %v252 = vld [vmem:[%s197 + $0x109] sm:$0xff]
      %v253 = vld [vmem:[%s197 + $0x111] sm:$0xff]
      %v254 = vld [vmem:[%s197 + $0x121] sm:$0xff]
      %v255 = vld [vmem:[%s197 + $0x129] sm:$0xff]
      %v256 = vld [vmem:[%s197 + $0x139] sm:$0xff]
      %v257 = vld [vmem:[%s197 + $0x141] sm:$0xff]
      %v258 = vld [vmem:[%s197 + $0x151] sm:$0xff]
      %v259 = vld [vmem:[%s197 + $0x159] sm:$0xff]
      %v260 = vld [vmem:[%s197 + $0x169] sm:$0xff]
      %v261 = vld [vmem:[%s197 + $0x171] sm:$0xff]
      %v262 = vld [vmem:[%s197 + $0x2] sm:$0xff]
      %v263 = vld [vmem:[%s197 + $0xa] sm:$0xff]
      %v264 = vld [vmem:[%s197 + $0x1a] sm:$0xff]
      %v265 = vld [vmem:[%s197 + $0x22] sm:$0xff]
      %v266 = vld [vmem:[%s197 + $0x32] sm:$0xff]
      %v267 = vld [vmem:[%s197 + $0x3a] sm:$0xff]
      %v268 = vld [vmem:[%s197 + $0x4a] sm:$0xff]
      %v269 = vld [vmem:[%s197 + $0x52] sm:$0xff]
      %v270 = vld [vmem:[%s197 + $0x62] sm:$0xff]
      %v271 = vld [vmem:[%s197 + $0x6a] sm:$0xff]
      %v272 = vld [vmem:[%s197 + $0x7a] sm:$0xff]
      %v273 = vld [vmem:[%s197 + $0x82] sm:$0xff]
      %v274 = vld [vmem:[%s197 + $0x92] sm:$0xff]
      %v275 = vld [vmem:[%s197 + $0x9a] sm:$0xff]
      %v276 = vld [vmem:[%s197 + $0xaa] sm:$0xff]
      %v277 = vld [vmem:[%s197 + $0xb2] sm:$0xff]
      %v278 = vld [vmem:[%s197 + $0xc2] sm:$0xff]
      %v279 = vld [vmem:[%s197 + $0xca] sm:$0xff]
      %v280 = vld [vmem:[%s197 + $0xda] sm:$0xff]
      %v281 = vld [vmem:[%s197 + $0xe2] sm:$0xff]
      %v282 = vld [vmem:[%s197 + $0xf2] sm:$0xff]
      %v283 = vld [vmem:[%s197 + $0xfa] sm:$0xff]
      %v284 = vld [vmem:[%s197 + $0x10a] sm:$0xff]
      %v285 = vld [vmem:[%s197 + $0x112] sm:$0xff]
      %v286 = vld [vmem:[%s197 + $0x122] sm:$0xff]
      %v287 = vld [vmem:[%s197 + $0x12a] sm:$0xff]
      %v288 = vld [vmem:[%s197 + $0x13a] sm:$0xff]
      %v289 = vld [vmem:[%s197 + $0x142] sm:$0xff]
      %v290 = vld [vmem:[%s197 + $0x152] sm:$0xff]
      %v291 = vld [vmem:[%s197 + $0x15a] sm:$0xff]
      %v292 = vld [vmem:[%s197 + $0x16a] sm:$0xff]
      %v293 = vld [vmem:[%s197 + $0x172] sm:$0xff]
      %s294 = sadd.s32 %s195, 1
      %s295 = smul.u32 %s294, 24
      %s296 = scalar_lea.vmem %s183, %s295
      %v297 = vld [vmem:[%s296] sm:$0xff]
      %v298 = vld [vmem:[%s296 + $0x8] sm:$0xff]
      %v299 = vld [vmem:[%s296 + $0x18] sm:$0xff]
      %v300 = vld [vmem:[%s296 + $0x20] sm:$0xff]
      %v301 = vld [vmem:[%s296 + $0x30] sm:$0xff]
      %v302 = vld [vmem:[%s296 + $0x38] sm:$0xff]
      %v303 = vld [vmem:[%s296 + $0x48] sm:$0xff]
      %v304 = vld [vmem:[%s296 + $0x50] sm:$0xff]
      %v305 = vld [vmem:[%s296 + $0x60] sm:$0xff]
      %v306 = vld [vmem:[%s296 + $0x68] sm:$0xff]
      %v307 = vld [vmem:[%s296 + $0x78] sm:$0xff]
      %v308 = vld [vmem:[%s296 + $0x80] sm:$0xff]
      %v309 = vld [vmem:[%s296 + $0x90] sm:$0xff]
      %v310 = vld [vmem:[%s296 + $0x98] sm:$0xff]
      %v311 = vld [vmem:[%s296 + $0xa8] sm:$0xff]
      %v312 = vld [vmem:[%s296 + $0xb0] sm:$0xff]
      %v313 = vld [vmem:[%s296 + $0xc0] sm:$0xff]
      %v314 = vld [vmem:[%s296 + $0xc8] sm:$0xff]
      %v315 = vld [vmem:[%s296 + $0xd8] sm:$0xff]
      %v316 = vld [vmem:[%s296 + $0xe0] sm:$0xff]
      %v317 = vld [vmem:[%s296 + $0xf0] sm:$0xff]
      %v318 = vld [vmem:[%s296 + $0xf8] sm:$0xff]
      %v319 = vld [vmem:[%s296 + $0x108] sm:$0xff]
      %v320 = vld [vmem:[%s296 + $0x110] sm:$0xff]
      %v321 = vld [vmem:[%s296 + $0x120] sm:$0xff]
      %v322 = vld [vmem:[%s296 + $0x128] sm:$0xff]
      %v323 = vld [vmem:[%s296 + $0x138] sm:$0xff]
      %v324 = vld [vmem:[%s296 + $0x140] sm:$0xff]
      %v325 = vld [vmem:[%s296 + $0x150] sm:$0xff]
      %v326 = vld [vmem:[%s296 + $0x158] sm:$0xff]
      %v327 = vld [vmem:[%s296 + $0x168] sm:$0xff]
      %v328 = vld [vmem:[%s296 + $0x170] sm:$0xff]
      %v329 = vld [vmem:[%s296 + $0x1] sm:$0xff]
      %v330 = vld [vmem:[%s296 + $0x9] sm:$0xff]
      %v331 = vld [vmem:[%s296 + $0x19] sm:$0xff]
      %v332 = vld [vmem:[%s296 + $0x21] sm:$0xff]
      %v333 = vld [vmem:[%s296 + $0x31] sm:$0xff]
      %v334 = vld [vmem:[%s296 + $0x39] sm:$0xff]
      %v335 = vld [vmem:[%s296 + $0x49] sm:$0xff]
      %v336 = vld [vmem:[%s296 + $0x51] sm:$0xff]
      %v337 = vld [vmem:[%s296 + $0x61] sm:$0xff]
      %v338 = vld [vmem:[%s296 + $0x69] sm:$0xff]
      %v339 = vld [vmem:[%s296 + $0x79] sm:$0xff]
      %v340 = vld [vmem:[%s296 + $0x81] sm:$0xff]
      %v341 = vld [vmem:[%s296 + $0x91] sm:$0xff]
      %v342 = vld [vmem:[%s296 + $0x99] sm:$0xff]
      %v343 = vld [vmem:[%s296 + $0xa9] sm:$0xff]
      %v344 = vld [vmem:[%s296 + $0xb1] sm:$0xff]
      %v345 = vld [vmem:[%s296 + $0xc1] sm:$0xff]
      %v346 = vld [vmem:[%s296 + $0xc9] sm:$0xff]
      %v347 = vld [vmem:[%s296 + $0xd9] sm:$0xff]
      %v348 = vld [vmem:[%s296 + $0xe1] sm:$0xff]
      %v349 = vld [vmem:[%s296 + $0xf1] sm:$0xff]
      %v350 = vld [vmem:[%s296 + $0xf9] sm:$0xff]
      %v351 = vld [vmem:[%s296 + $0x109] sm:$0xff]
      %v352 = vld [vmem:[%s296 + $0x111] sm:$0xff]
      %v353 = vld [vmem:[%s296 + $0x121] sm:$0xff]
      %v354 = vld [vmem:[%s296 + $0x129] sm:$0xff]
      %v355 = vld [vmem:[%s296 + $0x139] sm:$0xff]
      %v356 = vld [vmem:[%s296 + $0x141] sm:$0xff]
      %v357 = vld [vmem:[%s296 + $0x151] sm:$0xff]
      %v358 = vld [vmem:[%s296 + $0x159] sm:$0xff]
      %v359 = vld [vmem:[%s296 + $0x169] sm:$0xff]
      %v360 = vld [vmem:[%s296 + $0x171] sm:$0xff]
      %v361 = vld [vmem:[%s296 + $0x2] sm:$0xff]
      %v362 = vld [vmem:[%s296 + $0xa] sm:$0xff]
      %v363 = vld [vmem:[%s296 + $0x1a] sm:$0xff]
      %v364 = vld [vmem:[%s296 + $0x22] sm:$0xff]
      %v365 = vld [vmem:[%s296 + $0x32] sm:$0xff]
      %v366 = vld [vmem:[%s296 + $0x3a] sm:$0xff]
      %v367 = vld [vmem:[%s296 + $0x4a] sm:$0xff]
      %v368 = vld [vmem:[%s296 + $0x52] sm:$0xff]
      %v369 = vld [vmem:[%s296 + $0x62] sm:$0xff]
      %v370 = vld [vmem:[%s296 + $0x6a] sm:$0xff]
      %v371 = vld [vmem:[%s296 + $0x7a] sm:$0xff]
      %v372 = vld [vmem:[%s296 + $0x82] sm:$0xff]
      %v373 = vld [vmem:[%s296 + $0x92] sm:$0xff]
      %v374 = vld [vmem:[%s296 + $0x9a] sm:$0xff]
      %v375 = vld [vmem:[%s296 + $0xaa] sm:$0xff]
      %v376 = vld [vmem:[%s296 + $0xb2] sm:$0xff]
      %v377 = vld [vmem:[%s296 + $0xc2] sm:$0xff]
      %v378 = vld [vmem:[%s296 + $0xca] sm:$0xff]
      %v379 = vld [vmem:[%s296 + $0xda] sm:$0xff]
      %v380 = vld [vmem:[%s296 + $0xe2] sm:$0xff]
      %v381 = vld [vmem:[%s296 + $0xf2] sm:$0xff]
      %v382 = vld [vmem:[%s296 + $0xfa] sm:$0xff]
      %v383 = vld [vmem:[%s296 + $0x10a] sm:$0xff]
      %v384 = vld [vmem:[%s296 + $0x112] sm:$0xff]
      %v385 = vld [vmem:[%s296 + $0x122] sm:$0xff]
      %v386 = vld [vmem:[%s296 + $0x12a] sm:$0xff]
      %v387 = vld [vmem:[%s296 + $0x13a] sm:$0xff]
      %v388 = vld [vmem:[%s296 + $0x142] sm:$0xff]
      %v389 = vld [vmem:[%s296 + $0x152] sm:$0xff]
      %v390 = vld [vmem:[%s296 + $0x15a] sm:$0xff]
      %v391 = vld [vmem:[%s296 + $0x16a] sm:$0xff]
      %v392 = vld [vmem:[%s296 + $0x172] sm:$0xff]
      %s393 = sadd.s32 %s195, 2
      %s394 = smul.u32 %s393, 24
      %s395 = scalar_lea.vmem %s183, %s394
      %v396 = vld [vmem:[%s395] sm:$0xff]
      %v397 = vld [vmem:[%s395 + $0x8] sm:$0xff]
      %v398 = vld [vmem:[%s395 + $0x18] sm:$0xff]
      %v399 = vld [vmem:[%s395 + $0x20] sm:$0xff]
      %v400 = vld [vmem:[%s395 + $0x30] sm:$0xff]
      %v401 = vld [vmem:[%s395 + $0x38] sm:$0xff]
      %v402 = vld [vmem:[%s395 + $0x48] sm:$0xff]
      %v403 = vld [vmem:[%s395 + $0x50] sm:$0xff]
      %v404 = vld [vmem:[%s395 + $0x60] sm:$0xff]
      %v405 = vld [vmem:[%s395 + $0x68] sm:$0xff]
      %v406 = vld [vmem:[%s395 + $0x78] sm:$0xff]
      %v407 = vld [vmem:[%s395 + $0x80] sm:$0xff]
      %v408 = vld [vmem:[%s395 + $0x90] sm:$0xff]
      %v409 = vld [vmem:[%s395 + $0x98] sm:$0xff]
      %v410 = vld [vmem:[%s395 + $0xa8] sm:$0xff]
      %v411 = vld [vmem:[%s395 + $0xb0] sm:$0xff]
      %v412 = vld [vmem:[%s395 + $0xc0] sm:$0xff]
      %v413 = vld [vmem:[%s395 + $0xc8] sm:$0xff]
      %v414 = vld [vmem:[%s395 + $0xd8] sm:$0xff]
      %v415 = vld [vmem:[%s395 + $0xe0] sm:$0xff]
      %v416 = vld [vmem:[%s395 + $0xf0] sm:$0xff]
      %v417 = vld [vmem:[%s395 + $0xf8] sm:$0xff]
      %v418 = vld [vmem:[%s395 + $0x108] sm:$0xff]
      %v419 = vld [vmem:[%s395 + $0x110] sm:$0xff]
      %v420 = vld [vmem:[%s395 + $0x120] sm:$0xff]
      %v421 = vld [vmem:[%s395 + $0x128] sm:$0xff]
      %v422 = vld [vmem:[%s395 + $0x138] sm:$0xff]
      %v423 = vld [vmem:[%s395 + $0x140] sm:$0xff]
      %v424 = vld [vmem:[%s395 + $0x150] sm:$0xff]
      %v425 = vld [vmem:[%s395 + $0x158] sm:$0xff]
      %v426 = vld [vmem:[%s395 + $0x168] sm:$0xff]
      %v427 = vld [vmem:[%s395 + $0x170] sm:$0xff]
      %v428 = vld [vmem:[%s395 + $0x1] sm:$0xff]
      %v429 = vld [vmem:[%s395 + $0x9] sm:$0xff]
      %v430 = vld [vmem:[%s395 + $0x19] sm:$0xff]
      %v431 = vld [vmem:[%s395 + $0x21] sm:$0xff]
      %v432 = vld [vmem:[%s395 + $0x31] sm:$0xff]
      %v433 = vld [vmem:[%s395 + $0x39] sm:$0xff]
      %v434 = vld [vmem:[%s395 + $0x49] sm:$0xff]
      %v435 = vld [vmem:[%s395 + $0x51] sm:$0xff]
      %v436 = vld [vmem:[%s395 + $0x61] sm:$0xff]
      %v437 = vld [vmem:[%s395 + $0x69] sm:$0xff]
      %v438 = vld [vmem:[%s395 + $0x79] sm:$0xff]
      %v439 = vld [vmem:[%s395 + $0x81] sm:$0xff]
      %v440 = vld [vmem:[%s395 + $0x91] sm:$0xff]
      %v441 = vld [vmem:[%s395 + $0x99] sm:$0xff]
      %v442 = vld [vmem:[%s395 + $0xa9] sm:$0xff]
      %v443 = vld [vmem:[%s395 + $0xb1] sm:$0xff]
      %v444 = vld [vmem:[%s395 + $0xc1] sm:$0xff]
      %v445 = vld [vmem:[%s395 + $0xc9] sm:$0xff]
      %v446 = vld [vmem:[%s395 + $0xd9] sm:$0xff]
      %v447 = vld [vmem:[%s395 + $0xe1] sm:$0xff]
      %v448 = vld [vmem:[%s395 + $0xf1] sm:$0xff]
      %v449 = vld [vmem:[%s395 + $0xf9] sm:$0xff]
      %v450 = vld [vmem:[%s395 + $0x109] sm:$0xff]
      %v451 = vld [vmem:[%s395 + $0x111] sm:$0xff]
      %v452 = vld [vmem:[%s395 + $0x121] sm:$0xff]
      %v453 = vld [vmem:[%s395 + $0x129] sm:$0xff]
      %v454 = vld [vmem:[%s395 + $0x139] sm:$0xff]
      %v455 = vld [vmem:[%s395 + $0x141] sm:$0xff]
      %v456 = vld [vmem:[%s395 + $0x151] sm:$0xff]
      %v457 = vld [vmem:[%s395 + $0x159] sm:$0xff]
      %v458 = vld [vmem:[%s395 + $0x169] sm:$0xff]
      %v459 = vld [vmem:[%s395 + $0x171] sm:$0xff]
      %v460 = vld [vmem:[%s395 + $0x2] sm:$0xff]
      %v461 = vld [vmem:[%s395 + $0xa] sm:$0xff]
      %v462 = vld [vmem:[%s395 + $0x1a] sm:$0xff]
      %v463 = vld [vmem:[%s395 + $0x22] sm:$0xff]
      %v464 = vld [vmem:[%s395 + $0x32] sm:$0xff]
      %v465 = vld [vmem:[%s395 + $0x3a] sm:$0xff]
      %v466 = vld [vmem:[%s395 + $0x4a] sm:$0xff]
      %v467 = vld [vmem:[%s395 + $0x52] sm:$0xff]
      %v468 = vld [vmem:[%s395 + $0x62] sm:$0xff]
      %v469 = vld [vmem:[%s395 + $0x6a] sm:$0xff]
      %v470 = vld [vmem:[%s395 + $0x7a] sm:$0xff]
      %v471 = vld [vmem:[%s395 + $0x82] sm:$0xff]
      %v472 = vld [vmem:[%s395 + $0x92] sm:$0xff]
      %v473 = vld [vmem:[%s395 + $0x9a] sm:$0xff]
      %v474 = vld [vmem:[%s395 + $0xaa] sm:$0xff]
      %v475 = vld [vmem:[%s395 + $0xb2] sm:$0xff]
      %v476 = vld [vmem:[%s395 + $0xc2] sm:$0xff]
      %v477 = vld [vmem:[%s395 + $0xca] sm:$0xff]
      %v478 = vld [vmem:[%s395 + $0xda] sm:$0xff]
      %v479 = vld [vmem:[%s395 + $0xe2] sm:$0xff]
      %v480 = vld [vmem:[%s395 + $0xf2] sm:$0xff]
      %v481 = vld [vmem:[%s395 + $0xfa] sm:$0xff]
      %v482 = vld [vmem:[%s395 + $0x10a] sm:$0xff]
      %v483 = vld [vmem:[%s395 + $0x112] sm:$0xff]
      %v484 = vld [vmem:[%s395 + $0x122] sm:$0xff]
      %v485 = vld [vmem:[%s395 + $0x12a] sm:$0xff]
      %v486 = vld [vmem:[%s395 + $0x13a] sm:$0xff]
      %v487 = vld [vmem:[%s395 + $0x142] sm:$0xff]
      %v488 = vld [vmem:[%s395 + $0x152] sm:$0xff]
      %v489 = vld [vmem:[%s395 + $0x15a] sm:$0xff]
      %v490 = vld [vmem:[%s395 + $0x16a] sm:$0xff]
      %v491 = vld [vmem:[%s395 + $0x172] sm:$0xff]
      %524 = vrot.lane.b32.xlu0 %v230, 3
      %v525 = vpop.permute.xlu0 %524
      %526 = vrot.lane.b32.xlu0 %v231, 3
      %v527 = vpop.permute.xlu0 %526
      %528 = vrot.lane.b32.xlu0 %v232, 3
      %v529 = vpop.permute.xlu0 %528
      %530 = vrot.lane.b32.xlu0 %v233, 3
      %v531 = vpop.permute.xlu0 %530
      %532 = vrot.lane.b32.xlu0 %v234, 3
      %v533 = vpop.permute.xlu0 %532
      %534 = vrot.lane.b32.xlu0 %v235, 3
      %v535 = vpop.permute.xlu0 %534
      %536 = vrot.lane.b32.xlu0 %v236, 3
      %v537 = vpop.permute.xlu0 %536
      %538 = vrot.lane.b32.xlu0 %v237, 3
      %v539 = vpop.permute.xlu0 %538
      %540 = vrot.lane.b32.xlu0 %v238, 3
      %v541 = vpop.permute.xlu0 %540
      %542 = vrot.lane.b32.xlu0 %v239, 3
      %v543 = vpop.permute.xlu0 %542
      %544 = vrot.lane.b32.xlu0 %v240, 3
      %v545 = vpop.permute.xlu0 %544
      %546 = vrot.lane.b32.xlu0 %v241, 3
      %v547 = vpop.permute.xlu0 %546
      %548 = vrot.lane.b32.xlu0 %v242, 3
      %v549 = vpop.permute.xlu0 %548
      %550 = vrot.lane.b32.xlu0 %v243, 3
      %v551 = vpop.permute.xlu0 %550
      %552 = vrot.lane.b32.xlu0 %v244, 3
      %v553 = vpop.permute.xlu0 %552
      %554 = vrot.lane.b32.xlu0 %v245, 3
      %v555 = vpop.permute.xlu0 %554
      %556 = vrot.lane.b32.xlu0 %v246, 3
      %v557 = vpop.permute.xlu0 %556
      %558 = vrot.lane.b32.xlu0 %v247, 3
      %v559 = vpop.permute.xlu0 %558
      %560 = vrot.lane.b32.xlu0 %v248, 3
      %v561 = vpop.permute.xlu0 %560
      %562 = vrot.lane.b32.xlu0 %v249, 3
      %v563 = vpop.permute.xlu0 %562
      %564 = vrot.lane.b32.xlu0 %v250, 3
      %v565 = vpop.permute.xlu0 %564
      %566 = vrot.lane.b32.xlu0 %v251, 3
      %v567 = vpop.permute.xlu0 %566
      %568 = vrot.lane.b32.xlu0 %v252, 3
      %v569 = vpop.permute.xlu0 %568
      %570 = vrot.lane.b32.xlu0 %v253, 3
      %v571 = vpop.permute.xlu0 %570
      %572 = vrot.lane.b32.xlu0 %v254, 3
      %v573 = vpop.permute.xlu0 %572
      %574 = vrot.lane.b32.xlu0 %v255, 3
      %v575 = vpop.permute.xlu0 %574
      %576 = vrot.lane.b32.xlu0 %v256, 3
      %v577 = vpop.permute.xlu0 %576
      %578 = vrot.lane.b32.xlu0 %v257, 3
      %v579 = vpop.permute.xlu0 %578
      %580 = vrot.lane.b32.xlu0 %v258, 3
      %v581 = vpop.permute.xlu0 %580
      %582 = vrot.lane.b32.xlu0 %v259, 3
      %v583 = vpop.permute.xlu0 %582
      %584 = vrot.lane.b32.xlu0 %v260, 3
      %v585 = vpop.permute.xlu0 %584
      %586 = vrot.lane.b32.xlu0 %v261, 3
      %v587 = vpop.permute.xlu0 %586
      %652 = vrot.lane.b32.xlu0 %v262, 6
      %v653 = vpop.permute.xlu0 %652
      %654 = vrot.lane.b32.xlu0 %v263, 6
      %v655 = vpop.permute.xlu0 %654
      %656 = vrot.lane.b32.xlu0 %v264, 6
      %v657 = vpop.permute.xlu0 %656
      %658 = vrot.lane.b32.xlu0 %v265, 6
      %v659 = vpop.permute.xlu0 %658
      %660 = vrot.lane.b32.xlu0 %v266, 6
      %v661 = vpop.permute.xlu0 %660
      %662 = vrot.lane.b32.xlu0 %v267, 6
      %v663 = vpop.permute.xlu0 %662
      %664 = vrot.lane.b32.xlu0 %v268, 6
      %v665 = vpop.permute.xlu0 %664
      %666 = vrot.lane.b32.xlu0 %v269, 6
      %v667 = vpop.permute.xlu0 %666
      %668 = vrot.lane.b32.xlu0 %v270, 6
      %v669 = vpop.permute.xlu0 %668
      %670 = vrot.lane.b32.xlu0 %v271, 6
      %v671 = vpop.permute.xlu0 %670
      %672 = vrot.lane.b32.xlu0 %v272, 6
      %v673 = vpop.permute.xlu0 %672
      %674 = vrot.lane.b32.xlu0 %v273, 6
      %v675 = vpop.permute.xlu0 %674
      %676 = vrot.lane.b32.xlu0 %v274, 6
      %v677 = vpop.permute.xlu0 %676
      %678 = vrot.lane.b32.xlu0 %v275, 6
      %v679 = vpop.permute.xlu0 %678
      %680 = vrot.lane.b32.xlu0 %v276, 6
      %v681 = vpop.permute.xlu0 %680
      %682 = vrot.lane.b32.xlu0 %v277, 6
      %v683 = vpop.permute.xlu0 %682
      %684 = vrot.lane.b32.xlu0 %v278, 6
      %v685 = vpop.permute.xlu0 %684
      %686 = vrot.lane.b32.xlu0 %v279, 6
      %v687 = vpop.permute.xlu0 %686
      %688 = vrot.lane.b32.xlu0 %v280, 6
      %v689 = vpop.permute.xlu0 %688
      %690 = vrot.lane.b32.xlu0 %v281, 6
      %v691 = vpop.permute.xlu0 %690
      %692 = vrot.lane.b32.xlu0 %v282, 6
      %v693 = vpop.permute.xlu0 %692
      %694 = vrot.lane.b32.xlu0 %v283, 6
      %v695 = vpop.permute.xlu0 %694
      %696 = vrot.lane.b32.xlu0 %v284, 6
      %v697 = vpop.permute.xlu0 %696
      %698 = vrot.lane.b32.xlu0 %v285, 6
      %v699 = vpop.permute.xlu0 %698
      %700 = vrot.lane.b32.xlu0 %v286, 6
      %v701 = vpop.permute.xlu0 %700
      %702 = vrot.lane.b32.xlu0 %v287, 6
      %v703 = vpop.permute.xlu0 %702
      %704 = vrot.lane.b32.xlu0 %v288, 6
      %v705 = vpop.permute.xlu0 %704
      %706 = vrot.lane.b32.xlu0 %v289, 6
      %v707 = vpop.permute.xlu0 %706
      %708 = vrot.lane.b32.xlu0 %v290, 6
      %v709 = vpop.permute.xlu0 %708
      %710 = vrot.lane.b32.xlu0 %v291, 6
      %v711 = vpop.permute.xlu0 %710
      %712 = vrot.lane.b32.xlu0 %v292, 6
      %v713 = vpop.permute.xlu0 %712
      %714 = vrot.lane.b32.xlu0 %v293, 6
      %v715 = vpop.permute.xlu0 %714
      %780 = vrot.lane.b32.xlu0 %v297, 9
      %v781 = vpop.permute.xlu0 %780
      %782 = vrot.lane.b32.xlu0 %v298, 9
      %v783 = vpop.permute.xlu0 %782
      %784 = vrot.lane.b32.xlu0 %v299, 9
      %v785 = vpop.permute.xlu0 %784
      %786 = vrot.lane.b32.xlu0 %v300, 9
      %v787 = vpop.permute.xlu0 %786
      %788 = vrot.lane.b32.xlu0 %v301, 9
      %v789 = vpop.permute.xlu0 %788
      %790 = vrot.lane.b32.xlu0 %v302, 9
      %v791 = vpop.permute.xlu0 %790
      %792 = vrot.lane.b32.xlu0 %v303, 9
      %v793 = vpop.permute.xlu0 %792
      %794 = vrot.lane.b32.xlu0 %v304, 9
      %v795 = vpop.permute.xlu0 %794
      %796 = vrot.lane.b32.xlu0 %v305, 9
      %v797 = vpop.permute.xlu0 %796
      %798 = vrot.lane.b32.xlu0 %v306, 9
      %v799 = vpop.permute.xlu0 %798
      %800 = vrot.lane.b32.xlu0 %v307, 9
      %v801 = vpop.permute.xlu0 %800
      %802 = vrot.lane.b32.xlu0 %v308, 9
      %v803 = vpop.permute.xlu0 %802
      %804 = vrot.lane.b32.xlu0 %v309, 9
      %v805 = vpop.permute.xlu0 %804
      %806 = vrot.lane.b32.xlu0 %v310, 9
      %v807 = vpop.permute.xlu0 %806
      %808 = vrot.lane.b32.xlu0 %v311, 9
      %v809 = vpop.permute.xlu0 %808
      %810 = vrot.lane.b32.xlu0 %v312, 9
      %v811 = vpop.permute.xlu0 %810
      %812 = vrot.lane.b32.xlu0 %v313, 9
      %v813 = vpop.permute.xlu0 %812
      %814 = vrot.lane.b32.xlu0 %v314, 9
      %v815 = vpop.permute.xlu0 %814
      %816 = vrot.lane.b32.xlu0 %v315, 9
      %v817 = vpop.permute.xlu0 %816
      %818 = vrot.lane.b32.xlu0 %v316, 9
      %v819 = vpop.permute.xlu0 %818
      %820 = vrot.lane.b32.xlu0 %v317, 9
      %v821 = vpop.permute.xlu0 %820
      %822 = vrot.lane.b32.xlu0 %v318, 9
      %v823 = vpop.permute.xlu0 %822
      %824 = vrot.lane.b32.xlu0 %v319, 9
      %v825 = vpop.permute.xlu0 %824
      %826 = vrot.lane.b32.xlu0 %v320, 9
      %v827 = vpop.permute.xlu0 %826
      %828 = vrot.lane.b32.xlu0 %v321, 9
      %v829 = vpop.permute.xlu0 %828
      %830 = vrot.lane.b32.xlu0 %v322, 9
      %v831 = vpop.permute.xlu0 %830
      %832 = vrot.lane.b32.xlu0 %v323, 9
      %v833 = vpop.permute.xlu0 %832
      %834 = vrot.lane.b32.xlu0 %v324, 9
      %v835 = vpop.permute.xlu0 %834
      %836 = vrot.lane.b32.xlu0 %v325, 9
      %v837 = vpop.permute.xlu0 %836
      %838 = vrot.lane.b32.xlu0 %v326, 9
      %v839 = vpop.permute.xlu0 %838
      %840 = vrot.lane.b32.xlu0 %v327, 9
      %v841 = vpop.permute.xlu0 %840
      %842 = vrot.lane.b32.xlu0 %v328, 9
      %v843 = vpop.permute.xlu0 %842
      %908 = vrot.lane.b32.xlu0 %v329, 12
      %v909 = vpop.permute.xlu0 %908
      %910 = vrot.lane.b32.xlu0 %v330, 12
      %v911 = vpop.permute.xlu0 %910
      %912 = vrot.lane.b32.xlu0 %v331, 12
      %v913 = vpop.permute.xlu0 %912
      %914 = vrot.lane.b32.xlu0 %v332, 12
      %v915 = vpop.permute.xlu0 %914
      %916 = vrot.lane.b32.xlu0 %v333, 12
      %v917 = vpop.permute.xlu0 %916
      %918 = vrot.lane.b32.xlu0 %v334, 12
      %v919 = vpop.permute.xlu0 %918
      %920 = vrot.lane.b32.xlu0 %v335, 12
      %v921 = vpop.permute.xlu0 %920
      %922 = vrot.lane.b32.xlu0 %v336, 12
      %v923 = vpop.permute.xlu0 %922
      %924 = vrot.lane.b32.xlu0 %v337, 12
      %v925 = vpop.permute.xlu0 %924
      %926 = vrot.lane.b32.xlu0 %v338, 12
      %v927 = vpop.permute.xlu0 %926
      %928 = vrot.lane.b32.xlu0 %v339, 12
      %v929 = vpop.permute.xlu0 %928
      %930 = vrot.lane.b32.xlu0 %v340, 12
      %v931 = vpop.permute.xlu0 %930
      %932 = vrot.lane.b32.xlu0 %v341, 12
      %v933 = vpop.permute.xlu0 %932
      %934 = vrot.lane.b32.xlu0 %v342, 12
      %v935 = vpop.permute.xlu0 %934
      %936 = vrot.lane.b32.xlu0 %v343, 12
      %v937 = vpop.permute.xlu0 %936
      %938 = vrot.lane.b32.xlu0 %v344, 12
      %v939 = vpop.permute.xlu0 %938
      %940 = vrot.lane.b32.xlu0 %v345, 12
      %v941 = vpop.permute.xlu0 %940
      %942 = vrot.lane.b32.xlu0 %v346, 12
      %v943 = vpop.permute.xlu0 %942
      %944 = vrot.lane.b32.xlu0 %v347, 12
      %v945 = vpop.permute.xlu0 %944
      %946 = vrot.lane.b32.xlu0 %v348, 12
      %v947 = vpop.permute.xlu0 %946
      %948 = vrot.lane.b32.xlu0 %v349, 12
      %v949 = vpop.permute.xlu0 %948
      %950 = vrot.lane.b32.xlu0 %v350, 12
      %v951 = vpop.permute.xlu0 %950
      %952 = vrot.lane.b32.xlu0 %v351, 12
      %v953 = vpop.permute.xlu0 %952
      %954 = vrot.lane.b32.xlu0 %v352, 12
      %v955 = vpop.permute.xlu0 %954
      %956 = vrot.lane.b32.xlu0 %v353, 12
      %v957 = vpop.permute.xlu0 %956
      %958 = vrot.lane.b32.xlu0 %v354, 12
      %v959 = vpop.permute.xlu0 %958
      %960 = vrot.lane.b32.xlu0 %v355, 12
      %v961 = vpop.permute.xlu0 %960
      %962 = vrot.lane.b32.xlu0 %v356, 12
      %v963 = vpop.permute.xlu0 %962
      %964 = vrot.lane.b32.xlu0 %v357, 12
      %v965 = vpop.permute.xlu0 %964
      %966 = vrot.lane.b32.xlu0 %v358, 12
      %v967 = vpop.permute.xlu0 %966
      %968 = vrot.lane.b32.xlu0 %v359, 12
      %v969 = vpop.permute.xlu0 %968
      %970 = vrot.lane.b32.xlu0 %v360, 12
      %v971 = vpop.permute.xlu0 %970
      %1036 = vrot.lane.b32.xlu0 %v361, 15
      %v1037 = vpop.permute.xlu0 %1036
      %1038 = vrot.lane.b32.xlu0 %v362, 15
      %v1039 = vpop.permute.xlu0 %1038
      %1040 = vrot.lane.b32.xlu0 %v363, 15
      %v1041 = vpop.permute.xlu0 %1040
      %1042 = vrot.lane.b32.xlu0 %v364, 15
      %v1043 = vpop.permute.xlu0 %1042
      %1044 = vrot.lane.b32.xlu0 %v365, 15
      %v1045 = vpop.permute.xlu0 %1044
      %1046 = vrot.lane.b32.xlu0 %v366, 15
      %v1047 = vpop.permute.xlu0 %1046
      %1048 = vrot.lane.b32.xlu0 %v367, 15
      %v1049 = vpop.permute.xlu0 %1048
      %1050 = vrot.lane.b32.xlu0 %v368, 15
      %v1051 = vpop.permute.xlu0 %1050
      %1052 = vrot.lane.b32.xlu0 %v369, 15
      %v1053 = vpop.permute.xlu0 %1052
      %1054 = vrot.lane.b32.xlu0 %v370, 15
      %v1055 = vpop.permute.xlu0 %1054
      %1056 = vrot.lane.b32.xlu0 %v371, 15
      %v1057 = vpop.permute.xlu0 %1056
      %1058 = vrot.lane.b32.xlu0 %v372, 15
      %v1059 = vpop.permute.xlu0 %1058
      %1060 = vrot.lane.b32.xlu0 %v373, 15
      %v1061 = vpop.permute.xlu0 %1060
      %1062 = vrot.lane.b32.xlu0 %v374, 15
      %v1063 = vpop.permute.xlu0 %1062
      %1064 = vrot.lane.b32.xlu0 %v375, 15
      %v1065 = vpop.permute.xlu0 %1064
      %1066 = vrot.lane.b32.xlu0 %v376, 15
      %v1067 = vpop.permute.xlu0 %1066
      %1068 = vrot.lane.b32.xlu0 %v377, 15
      %v1069 = vpop.permute.xlu0 %1068
      %1070 = vrot.lane.b32.xlu0 %v378, 15
      %v1071 = vpop.permute.xlu0 %1070
      %1072 = vrot.lane.b32.xlu0 %v379, 15
      %v1073 = vpop.permute.xlu0 %1072
      %1074 = vrot.lane.b32.xlu0 %v380, 15
      %v1075 = vpop.permute.xlu0 %1074
      %1076 = vrot.lane.b32.xlu0 %v381, 15
      %v1077 = vpop.permute.xlu0 %1076
      %1078 = vrot.lane.b32.xlu0 %v382, 15
      %v1079 = vpop.permute.xlu0 %1078
      %1080 = vrot.lane.b32.xlu0 %v383, 15
      %v1081 = vpop.permute.xlu0 %1080
      %1082 = vrot.lane.b32.xlu0 %v384, 15
      %v1083 = vpop.permute.xlu0 %1082
      %1084 = vrot.lane.b32.xlu0 %v385, 15
      %v1085 = vpop.permute.xlu0 %1084
      %1086 = vrot.lane.b32.xlu0 %v386, 15
      %v1087 = vpop.permute.xlu0 %1086
      %1088 = vrot.lane.b32.xlu0 %v387, 15
      %v1089 = vpop.permute.xlu0 %1088
      %1090 = vrot.lane.b32.xlu0 %v388, 15
      %v1091 = vpop.permute.xlu0 %1090
      %1092 = vrot.lane.b32.xlu0 %v389, 15
      %v1093 = vpop.permute.xlu0 %1092
      %1094 = vrot.lane.b32.xlu0 %v390, 15
      %v1095 = vpop.permute.xlu0 %1094
      %1096 = vrot.lane.b32.xlu0 %v391, 15
      %v1097 = vpop.permute.xlu0 %1096
      %1098 = vrot.lane.b32.xlu0 %v392, 15
      %v1099 = vpop.permute.xlu0 %1098
      %1164 = vrot.lane.b32.xlu0 %v396, 18
      %v1165 = vpop.permute.xlu0 %1164
      %1166 = vrot.lane.b32.xlu0 %v397, 18
      %v1167 = vpop.permute.xlu0 %1166
      %1168 = vrot.lane.b32.xlu0 %v398, 18
      %v1169 = vpop.permute.xlu0 %1168
      %1170 = vrot.lane.b32.xlu0 %v399, 18
      %v1171 = vpop.permute.xlu0 %1170
      %1172 = vrot.lane.b32.xlu0 %v400, 18
      %v1173 = vpop.permute.xlu0 %1172
      %1174 = vrot.lane.b32.xlu0 %v401, 18
      %v1175 = vpop.permute.xlu0 %1174
      %1176 = vrot.lane.b32.xlu0 %v402, 18
      %v1177 = vpop.permute.xlu0 %1176
      %1178 = vrot.lane.b32.xlu0 %v403, 18
      %v1179 = vpop.permute.xlu0 %1178
      %1180 = vrot.lane.b32.xlu0 %v404, 18
      %v1181 = vpop.permute.xlu0 %1180
      %1182 = vrot.lane.b32.xlu0 %v405, 18
      %v1183 = vpop.permute.xlu0 %1182
      %1184 = vrot.lane.b32.xlu0 %v406, 18
      %v1185 = vpop.permute.xlu0 %1184
      %1186 = vrot.lane.b32.xlu0 %v407, 18
      %v1187 = vpop.permute.xlu0 %1186
      %1188 = vrot.lane.b32.xlu0 %v408, 18
      %v1189 = vpop.permute.xlu0 %1188
      %1190 = vrot.lane.b32.xlu0 %v409, 18
      %v1191 = vpop.permute.xlu0 %1190
      %1192 = vrot.lane.b32.xlu0 %v410, 18
      %v1193 = vpop.permute.xlu0 %1192
      %1194 = vrot.lane.b32.xlu0 %v411, 18
      %v1195 = vpop.permute.xlu0 %1194
      %1196 = vrot.lane.b32.xlu0 %v412, 18
      %v1197 = vpop.permute.xlu0 %1196
      %1198 = vrot.lane.b32.xlu0 %v413, 18
      %v1199 = vpop.permute.xlu0 %1198
      %1200 = vrot.lane.b32.xlu0 %v414, 18
      %v1201 = vpop.permute.xlu0 %1200
      %1202 = vrot.lane.b32.xlu0 %v415, 18
      %v1203 = vpop.permute.xlu0 %1202
      %1204 = vrot.lane.b32.xlu0 %v416, 18
      %v1205 = vpop.permute.xlu0 %1204
      %1206 = vrot.lane.b32.xlu0 %v417, 18
      %v1207 = vpop.permute.xlu0 %1206
      %1208 = vrot.lane.b32.xlu0 %v418, 18
      %v1209 = vpop.permute.xlu0 %1208
      %1210 = vrot.lane.b32.xlu0 %v419, 18
      %v1211 = vpop.permute.xlu0 %1210
      %1212 = vrot.lane.b32.xlu0 %v420, 18
      %v1213 = vpop.permute.xlu0 %1212
      %1214 = vrot.lane.b32.xlu0 %v421, 18
      %v1215 = vpop.permute.xlu0 %1214
      %1216 = vrot.lane.b32.xlu0 %v422, 18
      %v1217 = vpop.permute.xlu0 %1216
      %1218 = vrot.lane.b32.xlu0 %v423, 18
      %v1219 = vpop.permute.xlu0 %1218
      %1220 = vrot.lane.b32.xlu0 %v424, 18
      %v1221 = vpop.permute.xlu0 %1220
      %1222 = vrot.lane.b32.xlu0 %v425, 18
      %v1223 = vpop.permute.xlu0 %1222
      %1224 = vrot.lane.b32.xlu0 %v426, 18
      %v1225 = vpop.permute.xlu0 %1224
      %1226 = vrot.lane.b32.xlu0 %v427, 18
      %v1227 = vpop.permute.xlu0 %1226
      %1292 = vrot.lane.b32.xlu0 %v428, 21
      %v1293 = vpop.permute.xlu0 %1292
      %1294 = vrot.lane.b32.xlu0 %v429, 21
      %v1295 = vpop.permute.xlu0 %1294
      %1296 = vrot.lane.b32.xlu0 %v430, 21
      %v1297 = vpop.permute.xlu0 %1296
      %1298 = vrot.lane.b32.xlu0 %v431, 21
      %v1299 = vpop.permute.xlu0 %1298
      %1300 = vrot.lane.b32.xlu0 %v432, 21
      %v1301 = vpop.permute.xlu0 %1300
      %1302 = vrot.lane.b32.xlu0 %v433, 21
      %v1303 = vpop.permute.xlu0 %1302
      %1304 = vrot.lane.b32.xlu0 %v434, 21
      %v1305 = vpop.permute.xlu0 %1304
      %1306 = vrot.lane.b32.xlu0 %v435, 21
      %v1307 = vpop.permute.xlu0 %1306
      %1308 = vrot.lane.b32.xlu0 %v436, 21
      %v1309 = vpop.permute.xlu0 %1308
      %1310 = vrot.lane.b32.xlu0 %v437, 21
      %v1311 = vpop.permute.xlu0 %1310
      %1312 = vrot.lane.b32.xlu0 %v438, 21
      %v1313 = vpop.permute.xlu0 %1312
      %1314 = vrot.lane.b32.xlu0 %v439, 21
      %v1315 = vpop.permute.xlu0 %1314
      %1316 = vrot.lane.b32.xlu0 %v440, 21
      %v1317 = vpop.permute.xlu0 %1316
      %1318 = vrot.lane.b32.xlu0 %v441, 21
      %v1319 = vpop.permute.xlu0 %1318
      %1320 = vrot.lane.b32.xlu0 %v442, 21
      %v1321 = vpop.permute.xlu0 %1320
      %1322 = vrot.lane.b32.xlu0 %v443, 21
      %v1323 = vpop.permute.xlu0 %1322
      %1324 = vrot.lane.b32.xlu0 %v444, 21
      %v1325 = vpop.permute.xlu0 %1324
      %1326 = vrot.lane.b32.xlu0 %v445, 21
      %v1327 = vpop.permute.xlu0 %1326
      %1328 = vrot.lane.b32.xlu0 %v446, 21
      %v1329 = vpop.permute.xlu0 %1328
      %1330 = vrot.lane.b32.xlu0 %v447, 21
      %v1331 = vpop.permute.xlu0 %1330
      %1332 = vrot.lane.b32.xlu0 %v448, 21
      %v1333 = vpop.permute.xlu0 %1332
      %1334 = vrot.lane.b32.xlu0 %v449, 21
      %v1335 = vpop.permute.xlu0 %1334
      %1336 = vrot.lane.b32.xlu0 %v450, 21
      %v1337 = vpop.permute.xlu0 %1336
      %1338 = vrot.lane.b32.xlu0 %v451, 21
      %v1339 = vpop.permute.xlu0 %1338
      %1340 = vrot.lane.b32.xlu0 %v452, 21
      %v1341 = vpop.permute.xlu0 %1340
      %1342 = vrot.lane.b32.xlu0 %v453, 21
      %v1343 = vpop.permute.xlu0 %1342
      %1344 = vrot.lane.b32.xlu0 %v454, 21
      %v1345 = vpop.permute.xlu0 %1344
      %1346 = vrot.lane.b32.xlu0 %v455, 21
      %v1347 = vpop.permute.xlu0 %1346
      %1348 = vrot.lane.b32.xlu0 %v456, 21
      %v1349 = vpop.permute.xlu0 %1348
      %1350 = vrot.lane.b32.xlu0 %v457, 21
      %v1351 = vpop.permute.xlu0 %1350
      %1352 = vrot.lane.b32.xlu0 %v458, 21
      %v1353 = vpop.permute.xlu0 %1352
      %1354 = vrot.lane.b32.xlu0 %v459, 21
      %v1355 = vpop.permute.xlu0 %1354
      %1420 = vrot.lane.b32.xlu0 %v460, 24
      %v1421 = vpop.permute.xlu0 %1420
      %1422 = vrot.lane.b32.xlu0 %v461, 24
      %v1423 = vpop.permute.xlu0 %1422
      %1424 = vrot.lane.b32.xlu0 %v462, 24
      %v1425 = vpop.permute.xlu0 %1424
      %1426 = vrot.lane.b32.xlu0 %v463, 24
      %v1427 = vpop.permute.xlu0 %1426
      %1428 = vrot.lane.b32.xlu0 %v464, 24
      %v1429 = vpop.permute.xlu0 %1428
      %1430 = vrot.lane.b32.xlu0 %v465, 24
      %v1431 = vpop.permute.xlu0 %1430
      %1432 = vrot.lane.b32.xlu0 %v466, 24
      %v1433 = vpop.permute.xlu0 %1432
      %1434 = vrot.lane.b32.xlu0 %v467, 24
      %v1435 = vpop.permute.xlu0 %1434
      %1436 = vrot.lane.b32.xlu0 %v468, 24
      %v1437 = vpop.permute.xlu0 %1436
      %1438 = vrot.lane.b32.xlu0 %v469, 24
      %v1439 = vpop.permute.xlu0 %1438
      %1440 = vrot.lane.b32.xlu0 %v470, 24
      %v1441 = vpop.permute.xlu0 %1440
      %1442 = vrot.lane.b32.xlu0 %v471, 24
      %v1443 = vpop.permute.xlu0 %1442
      %1444 = vrot.lane.b32.xlu0 %v472, 24
      %v1445 = vpop.permute.xlu0 %1444
      %1446 = vrot.lane.b32.xlu0 %v473, 24
      %v1447 = vpop.permute.xlu0 %1446
      %1448 = vrot.lane.b32.xlu0 %v474, 24
      %v1449 = vpop.permute.xlu0 %1448
      %1450 = vrot.lane.b32.xlu0 %v475, 24
      %v1451 = vpop.permute.xlu0 %1450
      %1452 = vrot.lane.b32.xlu0 %v476, 24
      %v1453 = vpop.permute.xlu0 %1452
      %1454 = vrot.lane.b32.xlu0 %v477, 24
      %v1455 = vpop.permute.xlu0 %1454
      %1456 = vrot.lane.b32.xlu0 %v478, 24
      %v1457 = vpop.permute.xlu0 %1456
      %1458 = vrot.lane.b32.xlu0 %v479, 24
      %v1459 = vpop.permute.xlu0 %1458
      %1460 = vrot.lane.b32.xlu0 %v480, 24
      %v1461 = vpop.permute.xlu0 %1460
      %1462 = vrot.lane.b32.xlu0 %v481, 24
      %v1463 = vpop.permute.xlu0 %1462
      %1464 = vrot.lane.b32.xlu0 %v482, 24
      %v1465 = vpop.permute.xlu0 %1464
      %1466 = vrot.lane.b32.xlu0 %v483, 24
      %v1467 = vpop.permute.xlu0 %1466
      %1468 = vrot.lane.b32.xlu0 %v484, 24
      %v1469 = vpop.permute.xlu0 %1468
      %1470 = vrot.lane.b32.xlu0 %v485, 24
      %v1471 = vpop.permute.xlu0 %1470
      %1472 = vrot.lane.b32.xlu0 %v486, 24
      %v1473 = vpop.permute.xlu0 %1472
      %1474 = vrot.lane.b32.xlu0 %v487, 24
      %v1475 = vpop.permute.xlu0 %1474
      %1476 = vrot.lane.b32.xlu0 %v488, 24
      %v1477 = vpop.permute.xlu0 %1476
      %1478 = vrot.lane.b32.xlu0 %v489, 24
      %v1479 = vpop.permute.xlu0 %1478
      %1480 = vrot.lane.b32.xlu0 %v490, 24
      %v1481 = vpop.permute.xlu0 %1480
      %1482 = vrot.lane.b32.xlu0 %v491, 24
      %v1483 = vpop.permute.xlu0 %1482
      %vm1516 = vcmask 23552
      %v1517 = vsel %vm1516, %v198, %v525
      %v1518 = vsel %vm1516, %v199, %v527
      %v1519 = vsel %vm1516, %v200, %v529
      %v1520 = vsel %vm1516, %v201, %v531
      %v1521 = vsel %vm1516, %v202, %v533
      %v1522 = vsel %vm1516, %v203, %v535
      %v1523 = vsel %vm1516, %v204, %v537
      %v1524 = vsel %vm1516, %v205, %v539
      %v1525 = vsel %vm1516, %v206, %v541
      %v1526 = vsel %vm1516, %v207, %v543
      %v1527 = vsel %vm1516, %v208, %v545
      %v1528 = vsel %vm1516, %v209, %v547
      %v1529 = vsel %vm1516, %v210, %v549
      %v1530 = vsel %vm1516, %v211, %v551
      %v1531 = vsel %vm1516, %v212, %v553
      %v1532 = vsel %vm1516, %v213, %v555
      %v1533 = vsel %vm1516, %v214, %v557
      %v1534 = vsel %vm1516, %v215, %v559
      %v1535 = vsel %vm1516, %v216, %v561
      %v1536 = vsel %vm1516, %v217, %v563
      %v1537 = vsel %vm1516, %v218, %v565
      %v1538 = vsel %vm1516, %v219, %v567
      %v1539 = vsel %vm1516, %v220, %v569
      %v1540 = vsel %vm1516, %v221, %v571
      %v1541 = vsel %vm1516, %v222, %v573
      %v1542 = vsel %vm1516, %v223, %v575
      %v1543 = vsel %vm1516, %v224, %v577
      %v1544 = vsel %vm1516, %v225, %v579
      %v1545 = vsel %vm1516, %v226, %v581
      %v1546 = vsel %vm1516, %v227, %v583
      %v1547 = vsel %vm1516, %v228, %v585
      %v1548 = vsel %vm1516, %v229, %v587
      %vm1549 = vcmask 48128
      %v1550 = vsel %vm1549, %v1517, %v653
      %v1551 = vsel %vm1549, %v1518, %v655
      %v1552 = vsel %vm1549, %v1519, %v657
      %v1553 = vsel %vm1549, %v1520, %v659
      %v1554 = vsel %vm1549, %v1521, %v661
      %v1555 = vsel %vm1549, %v1522, %v663
      %v1556 = vsel %vm1549, %v1523, %v665
      %v1557 = vsel %vm1549, %v1524, %v667
      %v1558 = vsel %vm1549, %v1525, %v669
      %v1559 = vsel %vm1549, %v1526, %v671
      %v1560 = vsel %vm1549, %v1527, %v673
      %v1561 = vsel %vm1549, %v1528, %v675
      %v1562 = vsel %vm1549, %v1529, %v677
      %v1563 = vsel %vm1549, %v1530, %v679
      %v1564 = vsel %vm1549, %v1531, %v681
      %v1565 = vsel %vm1549, %v1532, %v683
      %v1566 = vsel %vm1549, %v1533, %v685
      %v1567 = vsel %vm1549, %v1534, %v687
      %v1568 = vsel %vm1549, %v1535, %v689
      %v1569 = vsel %vm1549, %v1536, %v691
      %v1570 = vsel %vm1549, %v1537, %v693
      %v1571 = vsel %vm1549, %v1538, %v695
      %v1572 = vsel %vm1549, %v1539, %v697
      %v1573 = vsel %vm1549, %v1540, %v699
      %v1574 = vsel %vm1549, %v1541, %v701
      %v1575 = vsel %vm1549, %v1542, %v703
      %v1576 = vsel %vm1549, %v1543, %v705
      %v1577 = vsel %vm1549, %v1544, %v707
      %v1578 = vsel %vm1549, %v1545, %v709
      %v1579 = vsel %vm1549, %v1546, %v711
      %v1580 = vsel %vm1549, %v1547, %v713
      %v1581 = vsel %vm1549, %v1548, %v715
      %vm1582 = vcmask 72704
      %v1583 = vsel %vm1582, %v1550, %v781
      %v1584 = vsel %vm1582, %v1551, %v783
      %v1585 = vsel %vm1582, %v1552, %v785
      %v1586 = vsel %vm1582, %v1553, %v787
      %v1587 = vsel %vm1582, %v1554, %v789
      %v1588 = vsel %vm1582, %v1555, %v791
      %v1589 = vsel %vm1582, %v1556, %v793
      %v1590 = vsel %vm1582, %v1557, %v795
      %v1591 = vsel %vm1582, %v1558, %v797
      %v1592 = vsel %vm1582, %v1559, %v799
      %v1593 = vsel %vm1582, %v1560, %v801
      %v1594 = vsel %vm1582, %v1561, %v803
      %v1595 = vsel %vm1582, %v1562, %v805
      %v1596 = vsel %vm1582, %v1563, %v807
      %v1597 = vsel %vm1582, %v1564, %v809
      %v1598 = vsel %vm1582, %v1565, %v811
      %v1599 = vsel %vm1582, %v1566, %v813
      %v1600 = vsel %vm1582, %v1567, %v815
      %v1601 = vsel %vm1582, %v1568, %v817
      %v1602 = vsel %vm1582, %v1569, %v819
      %v1603 = vsel %vm1582, %v1570, %v821
      %v1604 = vsel %vm1582, %v1571, %v823
      %v1605 = vsel %vm1582, %v1572, %v825
      %v1606 = vsel %vm1582, %v1573, %v827
      %v1607 = vsel %vm1582, %v1574, %v829
      %v1608 = vsel %vm1582, %v1575, %v831
      %v1609 = vsel %vm1582, %v1576, %v833
      %v1610 = vsel %vm1582, %v1577, %v835
      %v1611 = vsel %vm1582, %v1578, %v837
      %v1612 = vsel %vm1582, %v1579, %v839
      %v1613 = vsel %vm1582, %v1580, %v841
      %v1614 = vsel %vm1582, %v1581, %v843
      %vm1615 = vcmask 97280
      %v1616 = vsel %vm1615, %v1583, %v909
      %v1617 = vsel %vm1615, %v1584, %v911
      %v1618 = vsel %vm1615, %v1585, %v913
      %v1619 = vsel %vm1615, %v1586, %v915
      %v1620 = vsel %vm1615, %v1587, %v917
      %v1621 = vsel %vm1615, %v1588, %v919
      %v1622 = vsel %vm1615, %v1589, %v921
      %v1623 = vsel %vm1615, %v1590, %v923
      %v1624 = vsel %vm1615, %v1591, %v925
      %v1625 = vsel %vm1615, %v1592, %v927
      %v1626 = vsel %vm1615, %v1593, %v929
      %v1627 = vsel %vm1615, %v1594, %v931
      %v1628 = vsel %vm1615, %v1595, %v933
      %v1629 = vsel %vm1615, %v1596, %v935
      %v1630 = vsel %vm1615, %v1597, %v937
      %v1631 = vsel %vm1615, %v1598, %v939
      %v1632 = vsel %vm1615, %v1599, %v941
      %v1633 = vsel %vm1615, %v1600, %v943
      %v1634 = vsel %vm1615, %v1601, %v945
      %v1635 = vsel %vm1615, %v1602, %v947
      %v1636 = vsel %vm1615, %v1603, %v949
      %v1637 = vsel %vm1615, %v1604, %v951
      %v1638 = vsel %vm1615, %v1605, %v953
      %v1639 = vsel %vm1615, %v1606, %v955
      %v1640 = vsel %vm1615, %v1607, %v957
      %v1641 = vsel %vm1615, %v1608, %v959
      %v1642 = vsel %vm1615, %v1609, %v961
      %v1643 = vsel %vm1615, %v1610, %v963
      %v1644 = vsel %vm1615, %v1611, %v965
      %v1645 = vsel %vm1615, %v1612, %v967
      %v1646 = vsel %vm1615, %v1613, %v969
      %v1647 = vsel %vm1615, %v1614, %v971
      %vm1648 = vcmask 121856
      %v1649 = vsel %vm1648, %v1616, %v1037
      %v1650 = vsel %vm1648, %v1617, %v1039
      %v1651 = vsel %vm1648, %v1618, %v1041
      %v1652 = vsel %vm1648, %v1619, %v1043
      %v1653 = vsel %vm1648, %v1620, %v1045
      %v1654 = vsel %vm1648, %v1621, %v1047
      %v1655 = vsel %vm1648, %v1622, %v1049
      %v1656 = vsel %vm1648, %v1623, %v1051
      %v1657 = vsel %vm1648, %v1624, %v1053
      %v1658 = vsel %vm1648, %v1625, %v1055
      %v1659 = vsel %vm1648, %v1626, %v1057
      %v1660 = vsel %vm1648, %v1627, %v1059
      %v1661 = vsel %vm1648, %v1628, %v1061
      %v1662 = vsel %vm1648, %v1629, %v1063
      %v1663 = vsel %vm1648, %v1630, %v1065
      %v1664 = vsel %vm1648, %v1631, %v1067
      %v1665 = vsel %vm1648, %v1632, %v1069
      %v1666 = vsel %vm1648, %v1633, %v1071
      %v1667 = vsel %vm1648, %v1634, %v1073
      %v1668 = vsel %vm1648, %v1635, %v1075
      %v1669 = vsel %vm1648, %v1636, %v1077
      %v1670 = vsel %vm1648, %v1637, %v1079
      %v1671 = vsel %vm1648, %v1638, %v1081
      %v1672 = vsel %vm1648, %v1639, %v1083
      %v1673 = vsel %vm1648, %v1640, %v1085
      %v1674 = vsel %vm1648, %v1641, %v1087
      %v1675 = vsel %vm1648, %v1642, %v1089
      %v1676 = vsel %vm1648, %v1643, %v1091
      %v1677 = vsel %vm1648, %v1644, %v1093
      %v1678 = vsel %vm1648, %v1645, %v1095
      %v1679 = vsel %vm1648, %v1646, %v1097
      %v1680 = vsel %vm1648, %v1647, %v1099
      %vm1681 = vcmask 146432
      %v1682 = vsel %vm1681, %v1649, %v1165
      %v1683 = vsel %vm1681, %v1650, %v1167
      %v1684 = vsel %vm1681, %v1651, %v1169
      %v1685 = vsel %vm1681, %v1652, %v1171
      %v1686 = vsel %vm1681, %v1653, %v1173
      %v1687 = vsel %vm1681, %v1654, %v1175
      %v1688 = vsel %vm1681, %v1655, %v1177
      %v1689 = vsel %vm1681, %v1656, %v1179
      %v1690 = vsel %vm1681, %v1657, %v1181
      %v1691 = vsel %vm1681, %v1658, %v1183
      %v1692 = vsel %vm1681, %v1659, %v1185
      %v1693 = vsel %vm1681, %v1660, %v1187
      %v1694 = vsel %vm1681, %v1661, %v1189
      %v1695 = vsel %vm1681, %v1662, %v1191
      %v1696 = vsel %vm1681, %v1663, %v1193
      %v1697 = vsel %vm1681, %v1664, %v1195
      %v1698 = vsel %vm1681, %v1665, %v1197
      %v1699 = vsel %vm1681, %v1666, %v1199
      %v1700 = vsel %vm1681, %v1667, %v1201
      %v1701 = vsel %vm1681, %v1668, %v1203
      %v1702 = vsel %vm1681, %v1669, %v1205
      %v1703 = vsel %vm1681, %v1670, %v1207
      %v1704 = vsel %vm1681, %v1671, %v1209
      %v1705 = vsel %vm1681, %v1672, %v1211
      %v1706 = vsel %vm1681, %v1673, %v1213
      %v1707 = vsel %vm1681, %v1674, %v1215
      %v1708 = vsel %vm1681, %v1675, %v1217
      %v1709 = vsel %vm1681, %v1676, %v1219
      %v1710 = vsel %vm1681, %v1677, %v1221
      %v1711 = vsel %vm1681, %v1678, %v1223
      %v1712 = vsel %vm1681, %v1679, %v1225
      %v1713 = vsel %vm1681, %v1680, %v1227
      %vm1714 = vcmask 171008
      %v1715 = vsel %vm1714, %v1682, %v1293
      %v1716 = vsel %vm1714, %v1683, %v1295
      %v1717 = vsel %vm1714, %v1684, %v1297
      %v1718 = vsel %vm1714, %v1685, %v1299
      %v1719 = vsel %vm1714, %v1686, %v1301
      %v1720 = vsel %vm1714, %v1687, %v1303
      %v1721 = vsel %vm1714, %v1688, %v1305
      %v1722 = vsel %vm1714, %v1689, %v1307
      %v1723 = vsel %vm1714, %v1690, %v1309
      %v1724 = vsel %vm1714, %v1691, %v1311
      %v1725 = vsel %vm1714, %v1692, %v1313
      %v1726 = vsel %vm1714, %v1693, %v1315
      %v1727 = vsel %vm1714, %v1694, %v1317
      %v1728 = vsel %vm1714, %v1695, %v1319
      %v1729 = vsel %vm1714, %v1696, %v1321
      %v1730 = vsel %vm1714, %v1697, %v1323
      %v1731 = vsel %vm1714, %v1698, %v1325
      %v1732 = vsel %vm1714, %v1699, %v1327
      %v1733 = vsel %vm1714, %v1700, %v1329
      %v1734 = vsel %vm1714, %v1701, %v1331
      %v1735 = vsel %vm1714, %v1702, %v1333
      %v1736 = vsel %vm1714, %v1703, %v1335
      %v1737 = vsel %vm1714, %v1704, %v1337
      %v1738 = vsel %vm1714, %v1705, %v1339
      %v1739 = vsel %vm1714, %v1706, %v1341
      %v1740 = vsel %vm1714, %v1707, %v1343
      %v1741 = vsel %vm1714, %v1708, %v1345
      %v1742 = vsel %vm1714, %v1709, %v1347
      %v1743 = vsel %vm1714, %v1710, %v1349
      %v1744 = vsel %vm1714, %v1711, %v1351
      %v1745 = vsel %vm1714, %v1712, %v1353
      %v1746 = vsel %vm1714, %v1713, %v1355
      %vm1747 = vcmask 195584
      %v1748 = vsel %vm1747, %v1715, %v1421
      %v1749 = vsel %vm1747, %v1716, %v1423
      %v1750 = vsel %vm1747, %v1717, %v1425
      %v1751 = vsel %vm1747, %v1718, %v1427
      %v1752 = vsel %vm1747, %v1719, %v1429
      %v1753 = vsel %vm1747, %v1720, %v1431
      %v1754 = vsel %vm1747, %v1721, %v1433
      %v1755 = vsel %vm1747, %v1722, %v1435
      %v1756 = vsel %vm1747, %v1723, %v1437
      %v1757 = vsel %vm1747, %v1724, %v1439
      %v1758 = vsel %vm1747, %v1725, %v1441
      %v1759 = vsel %vm1747, %v1726, %v1443
      %v1760 = vsel %vm1747, %v1727, %v1445
      %v1761 = vsel %vm1747, %v1728, %v1447
      %v1762 = vsel %vm1747, %v1729, %v1449
      %v1763 = vsel %vm1747, %v1730, %v1451
      %v1764 = vsel %vm1747, %v1731, %v1453
      %v1765 = vsel %vm1747, %v1732, %v1455
      %v1766 = vsel %vm1747, %v1733, %v1457
      %v1767 = vsel %vm1747, %v1734, %v1459
      %v1768 = vsel %vm1747, %v1735, %v1461
      %v1769 = vsel %vm1747, %v1736, %v1463
      %v1770 = vsel %vm1747, %v1737, %v1465
      %v1771 = vsel %vm1747, %v1738, %v1467
      %v1772 = vsel %vm1747, %v1739, %v1469
      %v1773 = vsel %vm1747, %v1740, %v1471
      %v1774 = vsel %vm1747, %v1741, %v1473
      %v1775 = vsel %vm1747, %v1742, %v1475
      %v1776 = vsel %vm1747, %v1743, %v1477
      %v1777 = vsel %vm1747, %v1744, %v1479
      %v1778 = vsel %vm1747, %v1745, %v1481
      %v1779 = vsel %vm1747, %v1746, %v1483
      %v1780 = vpack.c.bf16 %v1749, %v1748
      %v1781 = vpack.c.bf16 %v1751, %v1750
      %v1782 = vpack.c.bf16 %v1753, %v1752
      %v1783 = vpack.c.bf16 %v1755, %v1754
      %v1784 = vpack.c.bf16 %v1757, %v1756
      %v1785 = vpack.c.bf16 %v1759, %v1758
      %v1786 = vpack.c.bf16 %v1761, %v1760
      %v1787 = vpack.c.bf16 %v1763, %v1762
      %v1788 = vpack.c.bf16 %v1765, %v1764
      %v1789 = vpack.c.bf16 %v1767, %v1766
      %v1790 = vpack.c.bf16 %v1769, %v1768
      %v1791 = vpack.c.bf16 %v1771, %v1770
      %v1792 = vpack.c.bf16 %v1773, %v1772
      %v1793 = vpack.c.bf16 %v1775, %v1774
      %v1794 = vpack.c.bf16 %v1777, %v1776
      %v1795 = vpack.c.bf16 %v1779, %v1778
      %v1796 = vld [vmem:[%s1] sm:$0xf]
      %v1797 = vld [vmem:[%s1 + $0x4] sm:$0xf]
      %v1798 = vld [vmem:[%s1 + $0x8] sm:$0xf]
      %v1799 = vld [vmem:[%s1 + $0xc] sm:$0x3]
      %v1800 = vld [vmem:[%s2] sm:$0x1]
      %v1802 = vperm.slane %v1800, 0
      %v1808 = vunpack.c.l.b16 %v1796
      %v1809 = vunpack.c.l.b16 %v1797
      %v1810 = vunpack.c.l.b16 %v1798
      %v1811 = vunpack.c.l.b16 %v1799
      %v1812 = vpack.c.b16 %v1809, %v1808
      %v1813 = vpack.c.b16 %v1811, %v1810
      %vm1815 = vcmask 220160
      %v1817 = vsel %vm1815, %v1780, 0
      %v1820 = vsel %vm1815, %v1781, 0
      %v1823 = vsel %vm1815, %v1782, 0
      %v1826 = vsel %vm1815, %v1783, 0
      %v1829 = vsel %vm1815, %v1784, 0
      %v1832 = vsel %vm1815, %v1785, 0
      %v1835 = vsel %vm1815, %v1786, 0
      %v1838 = vsel %vm1815, %v1787, 0
      %v1841 = vsel %vm1815, %v1788, 0
      %v1844 = vsel %vm1815, %v1789, 0
      %v1847 = vsel %vm1815, %v1790, 0
      %v1850 = vsel %vm1815, %v1791, 0
      %v1853 = vsel %vm1815, %v1792, 0
      %v1856 = vsel %vm1815, %v1793, 0
      %v1859 = vsel %vm1815, %v1794, 0
      %v1862 = vsel %vm1815, %v1795, 0
      %vm1864 = vcmask 1044480
      %vm1865 = vcmask 1045504
      %v1866 = vsel %vm1864, 4294967295, 65535
      %v1867 = vsel %vm1865, %v1866, 0
      %v1869 = vand.u32 %v1813, %v1867
      %1871 = vmatpush.bf16.msra.mxu0 0
      %1872 = vmatpush.bf16.msra.mxu0 0
      %1873 = vmatpush.bf16.msra.mxu0 0
      %1874 = vmatpush.bf16.msra.mxu0 0
      %1875 = vmatpush.bf16.msra.mxu0 0
      %1876 = vmatpush.bf16.msra.mxu0 0
      %1877 = vmatpush.bf16.msra.mxu0 %v1869
      %1878 = vmatpush.bf16.msra.mxu0 %v1812
      %1879 = vmatmul.bf16.gmra.mxu0 %v1817
      %v1880 = vpop.f32.mrf.mxu0
      %v1881 = vadd.f32 %v1802, %v1880
      %v1882 = vpop.f32.mrf.mxu0
      %v1883 = vadd.f32 %v1802, %v1882
      %1884 = vmatmul.bf16.gmra.mxu0 %v1820
      %v1885 = vpop.f32.mrf.mxu0
      %v1886 = vadd.f32 %v1802, %v1885
      %v1887 = vpop.f32.mrf.mxu0
      %v1888 = vadd.f32 %v1802, %v1887
      %1889 = vmatmul.bf16.gmra.mxu0 %v1823
      %v1890 = vpop.f32.mrf.mxu0
      %v1891 = vadd.f32 %v1802, %v1890
      %v1892 = vpop.f32.mrf.mxu0
      %v1893 = vadd.f32 %v1802, %v1892
      %1894 = vmatmul.bf16.gmra.mxu0 %v1826
      %v1895 = vpop.f32.mrf.mxu0
      %v1896 = vadd.f32 %v1802, %v1895
      %v1897 = vpop.f32.mrf.mxu0
      %v1898 = vadd.f32 %v1802, %v1897
      %1899 = vmatmul.bf16.gmra.mxu0 %v1829
      %v1900 = vpop.f32.mrf.mxu0
      %v1901 = vadd.f32 %v1802, %v1900
      %v1902 = vpop.f32.mrf.mxu0
      %v1903 = vadd.f32 %v1802, %v1902
      %1904 = vmatmul.bf16.gmra.mxu0 %v1832
      %v1905 = vpop.f32.mrf.mxu0
      %v1906 = vadd.f32 %v1802, %v1905
      %v1907 = vpop.f32.mrf.mxu0
      %v1908 = vadd.f32 %v1802, %v1907
      %1909 = vmatmul.bf16.gmra.mxu0 %v1835
      %v1910 = vpop.f32.mrf.mxu0
      %v1911 = vadd.f32 %v1802, %v1910
      %v1912 = vpop.f32.mrf.mxu0
      %v1913 = vadd.f32 %v1802, %v1912
      %1914 = vmatmul.bf16.gmra.mxu0 %v1838
      %v1915 = vpop.f32.mrf.mxu0
      %v1916 = vadd.f32 %v1802, %v1915
      %v1917 = vpop.f32.mrf.mxu0
      %v1918 = vadd.f32 %v1802, %v1917
      %1919 = vmatmul.bf16.gmra.mxu0 %v1841
      %v1920 = vpop.f32.mrf.mxu0
      %v1921 = vadd.f32 %v1802, %v1920
      %v1922 = vpop.f32.mrf.mxu0
      %v1923 = vadd.f32 %v1802, %v1922
      %1924 = vmatmul.bf16.gmra.mxu0 %v1844
      %v1925 = vpop.f32.mrf.mxu0
      %v1926 = vadd.f32 %v1802, %v1925
      %v1927 = vpop.f32.mrf.mxu0
      %v1928 = vadd.f32 %v1802, %v1927
      %1929 = vmatmul.bf16.gmra.mxu0 %v1847
      %v1930 = vpop.f32.mrf.mxu0
      %v1931 = vadd.f32 %v1802, %v1930
      %v1932 = vpop.f32.mrf.mxu0
      %v1933 = vadd.f32 %v1802, %v1932
      %1934 = vmatmul.bf16.gmra.mxu0 %v1850
      %v1935 = vpop.f32.mrf.mxu0
      %v1936 = vadd.f32 %v1802, %v1935
      %v1937 = vpop.f32.mrf.mxu0
      %v1938 = vadd.f32 %v1802, %v1937
      %1939 = vmatmul.bf16.gmra.mxu0 %v1853
      %v1940 = vpop.f32.mrf.mxu0
      %v1941 = vadd.f32 %v1802, %v1940
      %v1942 = vpop.f32.mrf.mxu0
      %v1943 = vadd.f32 %v1802, %v1942
      %1944 = vmatmul.bf16.gmra.mxu0 %v1856
      %v1945 = vpop.f32.mrf.mxu0
      %v1946 = vadd.f32 %v1802, %v1945
      %v1947 = vpop.f32.mrf.mxu0
      %v1948 = vadd.f32 %v1802, %v1947
      %1949 = vmatmul.bf16.gmra.mxu0 %v1859
      %v1950 = vpop.f32.mrf.mxu0
      %v1951 = vadd.f32 %v1802, %v1950
      %v1952 = vpop.f32.mrf.mxu0
      %v1953 = vadd.f32 %v1802, %v1952
      %1954 = vmatmul.bf16.gmra.mxu0 %v1862
      %v1955 = vpop.f32.mrf.mxu0
      %v1956 = vadd.f32 %v1802, %v1955
      %v1957 = vpop.f32.mrf.mxu0
      %v1958 = vadd.f32 %v1802, %v1957
      %1959 = vdwg.mxu0
      %v1960 = vmax.f32 %v1881, 0.0
      %v1961 = vmax.f32 %v1883, 0.0
      %v1962 = vmax.f32 %v1886, 0.0
      %v1963 = vmax.f32 %v1888, 0.0
      %v1964 = vmax.f32 %v1891, 0.0
      %v1965 = vmax.f32 %v1893, 0.0
      %v1966 = vmax.f32 %v1896, 0.0
      %v1967 = vmax.f32 %v1898, 0.0
      %v1968 = vmax.f32 %v1901, 0.0
      %v1969 = vmax.f32 %v1903, 0.0
      %v1970 = vmax.f32 %v1906, 0.0
      %v1971 = vmax.f32 %v1908, 0.0
      %v1972 = vmax.f32 %v1911, 0.0
      %v1973 = vmax.f32 %v1913, 0.0
      %v1974 = vmax.f32 %v1916, 0.0
      %v1975 = vmax.f32 %v1918, 0.0
      %v1976 = vmax.f32 %v1921, 0.0
      %v1977 = vmax.f32 %v1923, 0.0
      %v1978 = vmax.f32 %v1926, 0.0
      %v1979 = vmax.f32 %v1928, 0.0
      %v1980 = vmax.f32 %v1931, 0.0
      %v1981 = vmax.f32 %v1933, 0.0
      %v1982 = vmax.f32 %v1936, 0.0
      %v1983 = vmax.f32 %v1938, 0.0
      %v1984 = vmax.f32 %v1941, 0.0
      %v1985 = vmax.f32 %v1943, 0.0
      %v1986 = vmax.f32 %v1946, 0.0
      %v1987 = vmax.f32 %v1948, 0.0
      %v1988 = vmax.f32 %v1951, 0.0
      %v1989 = vmax.f32 %v1953, 0.0
      %v1990 = vmax.f32 %v1956, 0.0
      %v1991 = vmax.f32 %v1958, 0.0
      %vm1992 = vcmask 523264
      %1993 = vst.msk [vmem:[%s192] sm:$0xff] %vm1992, %v1960
      %1994 = vst.msk [vmem:[%s192 + $0x8] sm:$0xff] %vm1992, %v1961
      %1995 = vst.msk [vmem:[%s192 + $0x10] sm:$0xff] %vm1992, %v1962
      %1996 = vst.msk [vmem:[%s192 + $0x18] sm:$0xff] %vm1992, %v1963
      %1997 = vst.msk [vmem:[%s192 + $0x20] sm:$0xff] %vm1992, %v1964
      %1998 = vst.msk [vmem:[%s192 + $0x28] sm:$0xff] %vm1992, %v1965
      %1999 = vst.msk [vmem:[%s192 + $0x30] sm:$0xff] %vm1992, %v1966
      %2000 = vst.msk [vmem:[%s192 + $0x38] sm:$0xff] %vm1992, %v1967
      %2001 = vst.msk [vmem:[%s192 + $0x40] sm:$0xff] %vm1992, %v1968
      %2002 = vst.msk [vmem:[%s192 + $0x48] sm:$0xff] %vm1992, %v1969
      %2003 = vst.msk [vmem:[%s192 + $0x50] sm:$0xff] %vm1992, %v1970
      %2004 = vst.msk [vmem:[%s192 + $0x58] sm:$0xff] %vm1992, %v1971
      %2005 = vst.msk [vmem:[%s192 + $0x60] sm:$0xff] %vm1992, %v1972
      %2006 = vst.msk [vmem:[%s192 + $0x68] sm:$0xff] %vm1992, %v1973
      %2007 = vst.msk [vmem:[%s192 + $0x70] sm:$0xff] %vm1992, %v1974
      %2008 = vst.msk [vmem:[%s192 + $0x78] sm:$0xff] %vm1992, %v1975
      %2009 = vst.msk [vmem:[%s192 + $0x80] sm:$0xff] %vm1992, %v1976
      %2010 = vst.msk [vmem:[%s192 + $0x88] sm:$0xff] %vm1992, %v1977
      %2011 = vst.msk [vmem:[%s192 + $0x90] sm:$0xff] %vm1992, %v1978
      %2012 = vst.msk [vmem:[%s192 + $0x98] sm:$0xff] %vm1992, %v1979
      %2013 = vst.msk [vmem:[%s192 + $0xa0] sm:$0xff] %vm1992, %v1980
      %2014 = vst.msk [vmem:[%s192 + $0xa8] sm:$0xff] %vm1992, %v1981
      %2015 = vst.msk [vmem:[%s192 + $0xb0] sm:$0xff] %vm1992, %v1982
      %2016 = vst.msk [vmem:[%s192 + $0xb8] sm:$0xff] %vm1992, %v1983
      %2017 = vst.msk [vmem:[%s192 + $0xc0] sm:$0xff] %vm1992, %v1984
      %2018 = vst.msk [vmem:[%s192 + $0xc8] sm:$0xff] %vm1992, %v1985
      %2019 = vst.msk [vmem:[%s192 + $0xd0] sm:$0xff] %vm1992, %v1986
      %2020 = vst.msk [vmem:[%s192 + $0xd8] sm:$0xff] %vm1992, %v1987
      %2021 = vst.msk [vmem:[%s192 + $0xe0] sm:$0xff] %vm1992, %v1988
      %2022 = vst.msk [vmem:[%s192 + $0xe8] sm:$0xff] %vm1992, %v1989
      %2023 = vst.msk [vmem:[%s192 + $0xf0] sm:$0xff] %vm1992, %v1990
      %2024 = vst.msk [vmem:[%s192 + $0xf8] sm:$0xff] %vm1992, %v1991
      %s2025 = smul.u32 32, %s19
      %p2026 = scmp.lt.s32.totalorder %s18, 3
      %s2027 = scalar_select %p2026, %s18, 3
      %p2028 = scmp.lt.s32.totalorder %s2025, 31
      %s2029 = scalar_select %p2028, %s2025, 31
      %s2030 = smul.addr %s2027, 32
      %s2031 = sadd.s32 %s2029, %s2030
      %s2032 = smul.addr %s2031, 8
      %s2033 = scalar_lea.vmem %s3, %s2032
      // Predicated region
      $region33: #{loss_fn.6} parent=31 // pred_check
        %p2034 = pneg %p114
      $region34: #{loss_fn.6} parent=31 // pred_check_branch
        %2036 = sbr.rel (%p2034) target = $region36
      $region35: #{loss_fn.6} parent=31 // pred_region
        %s2037 = smul.u32 32, %s19
      $region36: #{loss_fn.6} parent=31 // pred_fallthru
        _
    $region32: #{loss_fn.6} parent=5 // pred_fallthru
      _
    %p2038 = scmp.le.s32.totalorder 2, %s9
    // Predicated region
    $region37: #{loss_fn.6} parent=5 // pred_check
      %p2039 = pneg %p2038
    $region38: #{loss_fn.6} parent=5 // pred_check_branch
      %2041 = sbr.rel (%p2039) target = $region40
    $region39: #{loss_fn.6} parent=5 // pred_region
      %s2042 = ssub.s32 %s9, 2
      // Predicated region
      $region41: #{loss_fn.6} parent=39 // pred_check
        %p2043 = pneg %p120
      $region42: #{loss_fn.6} parent=39 // pred_check_branch
        %2045 = sbr.rel (%p2043) target = $region44
      $region43: #{loss_fn.6} parent=39 // pred_region
        %s2046 = smul.u32 32, %s21
        %p2047 = scmp.lt.s32.totalorder %s20, 3
        %s2048 = scalar_select %p2047, %s20, 3
        %p2049 = scmp.lt.s32.totalorder %s2046, 31
        %s2050 = scalar_select %p2049, %s2046, 31
        %s2051 = smul.addr %s2048, 32
        %s2052 = sadd.s32 %s2050, %s2051
        %s2053 = smul.addr %s2052, 8
        %s2054 = scalar_lea.vmem %s3, %s2053
      $region44: #{loss_fn.6} parent=39 // pred_fallthru
        _
    $region40: #{loss_fn.6} parent=5 // pred_fallthru
      _
  $region6: #{loss_fn.6} parent=0 // loop_footer
    %s13 = sadd.s32 1, %s9
  $region7: #{loss_fn.6} parent=0 // loop_footer_branch
    %8 = sbr.rel target = $region3
  $region8: #{loss_fn.6} parent=0 // loop_exit
    _

// kernel: loss_fn.10
$region0: #{loss_fn.10}
  #allocation0 [shape = 'u32[]', space=smem, size = 0x4, offset = 0x4, fixed_abs, tag = 'smem constant byte address 0x4 - core index']
  #allocation1 [shape = 'u32[72,128]{1,0:T(1,128)}', space=vmem, size = 0x9000, scoped, tag = 'internal scratch']
  %s0 = inlined_call_operand.vmem [shape: f32[32,1024], index: 0, kind: input, shape index: {}]
  %s1 = inlined_call_operand.vmem [shape: f32[32,1024], index: 1, kind: input, shape index: {}]
  %s2 = inlined_call_operand.hbm [shape: f32[1,1], index: 2, kind: output, shape index: {}]
  %s3 = sld [smem:[#allocation0]]
  $region22: #{loss_fn.10} parent=0
    _
  %s5 = ssub.s32 1, %s3
  %s6 = scalar_select 0, %s5, %s3
  $region1: #{loss_fn.10} parent=0
    #allocation2 [shape = 'u8[512]{0}', space=vmem, size = 0x400, scoped, tag = 'output window, operand 0, single buffered']
    #allocation3 [shape = 's32[1]{0}', space=sflag, size = 0x4, scoped, tag = 'scoped memory for loss_fn.10']
    %7 = vsyncpa [#allocation3], 0
    // Predicated region
    $region2: #{loss_fn.10} parent=1 // pred_check
      _
    $region3: #{loss_fn.10} parent=1 // pred_check_branch
      %9 = sbr.rel (0) target = $region5
    $region4: #{loss_fn.10} parent=1 // pred_region
      _
    $region5: #{loss_fn.10} parent=1 // pred_fallthru
      _
    // Predicated region
    $region6: #{loss_fn.10} parent=1 // pred_check
      _
    $region7: #{loss_fn.10} parent=1 // pred_check_branch
      %11 = sbr.rel (0) target = $region9
    $region8: #{loss_fn.10} parent=1 // pred_region
      _
    $region9: #{loss_fn.10} parent=1 // pred_fallthru
      _
    %p12 = scmp.eq.s32.totalorder 0, 0
    // Predicated region
    $region10: #{loss_fn.10} parent=1 // pred_check
      %p13 = pneg %p12
    $region11: #{loss_fn.10} parent=1 // pred_check_branch
      %15 = sbr.rel (%p13) target = $region13
    $region12: #{loss_fn.10} parent=1 // pred_region
      %vm16 = vcmask 0
      %17 = vst.msk [vmem:[#allocation2] sm:$0x1] %vm16, 0.0
    $region13: #{loss_fn.10} parent=1 // pred_fallthru
      _
    %v18 = vld [vmem:[%s0] sm:$0xff]
    %v19 = vld [vmem:[%s0 + $0x8] sm:$0xff]
    %v20 = vld [vmem:[%s0 + $0x10] sm:$0xff]
    %v21 = vld [vmem:[%s0 + $0x18] sm:$0xff]
    %v22 = vld [vmem:[%s0 + $0x20] sm:$0xff]
    %v23 = vld [vmem:[%s0 + $0x28] sm:$0xff]
    %v24 = vld [vmem:[%s0 + $0x30] sm:$0xff]
    %v25 = vld [vmem:[%s0 + $0x38] sm:$0xff]
    %v26 = vld [vmem:[%s0 + $0x40] sm:$0xff]
    %v27 = vld [vmem:[%s0 + $0x48] sm:$0xff]
    %v28 = vld [vmem:[%s0 + $0x50] sm:$0xff]
    %v29 = vld [vmem:[%s0 + $0x58] sm:$0xff]
    %v30 = vld [vmem:[%s0 + $0x60] sm:$0xff]
    %v31 = vld [vmem:[%s0 + $0x68] sm:$0xff]
    %v32 = vld [vmem:[%s0 + $0x70] sm:$0xff]
    %v33 = vld [vmem:[%s0 + $0x78] sm:$0xff]
    %v34 = vld [vmem:[%s0 + $0x80] sm:$0xff]
    %v35 = vld [vmem:[%s0 + $0x88] sm:$0xff]
    %v36 = vld [vmem:[%s0 + $0x90] sm:$0xff]
    %v37 = vld [vmem:[%s0 + $0x98] sm:$0xff]
    %v38 = vld [vmem:[%s0 + $0xa0] sm:$0xff]
    %v39 = vld [vmem:[%s0 + $0xa8] sm:$0xff]
    %v40 = vld [vmem:[%s0 + $0xb0] sm:$0xff]
    %v41 = vld [vmem:[%s0 + $0xb8] sm:$0xff]
    %v42 = vld [vmem:[%s0 + $0xc0] sm:$0xff]
    %v43 = vld [vmem:[%s0 + $0xc8] sm:$0xff]
    %v44 = vld [vmem:[%s0 + $0xd0] sm:$0xff]
    %v45 = vld [vmem:[%s0 + $0xd8] sm:$0xff]
    %v46 = vld [vmem:[%s0 + $0xe0] sm:$0xff]
    %v47 = vld [vmem:[%s0 + $0xe8] sm:$0xff]
    %v48 = vld [vmem:[%s0 + $0xf0] sm:$0xff]
    %v49 = vld [vmem:[%s0 + $0xf8] sm:$0xff]
    %v50 = vld [vmem:[%s1] sm:$0xff]
    %v51 = vld [vmem:[%s1 + $0x8] sm:$0xff]
    %v52 = vld [vmem:[%s1 + $0x10] sm:$0xff]
    %v53 = vld [vmem:[%s1 + $0x18] sm:$0xff]
    %v54 = vld [vmem:[%s1 + $0x20] sm:$0xff]
    %v55 = vld [vmem:[%s1 + $0x28] sm:$0xff]
    %v56 = vld [vmem:[%s1 + $0x30] sm:$0xff]
    %v57 = vld [vmem:[%s1 + $0x38] sm:$0xff]
    %v58 = vld [vmem:[%s1 + $0x40] sm:$0xff]
    %v59 = vld [vmem:[%s1 + $0x48] sm:$0xff]
    %v60 = vld [vmem:[%s1 + $0x50] sm:$0xff]
    %v61 = vld [vmem:[%s1 + $0x58] sm:$0xff]
    %v62 = vld [vmem:[%s1 + $0x60] sm:$0xff]
    %v63 = vld [vmem:[%s1 + $0x68] sm:$0xff]
    %v64 = vld [vmem:[%s1 + $0x70] sm:$0xff]
    %v65 = vld [vmem:[%s1 + $0x78] sm:$0xff]
    %v66 = vld [vmem:[%s1 + $0x80] sm:$0xff]
    %v67 = vld [vmem:[%s1 + $0x88] sm:$0xff]
    %v68 = vld [vmem:[%s1 + $0x90] sm:$0xff]
    %v69 = vld [vmem:[%s1 + $0x98] sm:$0xff]
    %v70 = vld [vmem:[%s1 + $0xa0] sm:$0xff]
    %v71 = vld [vmem:[%s1 + $0xa8] sm:$0xff]
    %v72 = vld [vmem:[%s1 + $0xb0] sm:$0xff]
    %v73 = vld [vmem:[%s1 + $0xb8] sm:$0xff]
    %v74 = vld [vmem:[%s1 + $0xc0] sm:$0xff]
    %v75 = vld [vmem:[%s1 + $0xc8] sm:$0xff]
    %v76 = vld [vmem:[%s1 + $0xd0] sm:$0xff]
    %v77 = vld [vmem:[%s1 + $0xd8] sm:$0xff]
    %v78 = vld [vmem:[%s1 + $0xe0] sm:$0xff]
    %v79 = vld [vmem:[%s1 + $0xe8] sm:$0xff]
    %v80 = vld [vmem:[%s1 + $0xf0] sm:$0xff]
    %v81 = vld [vmem:[%s1 + $0xf8] sm:$0xff]
    %v82 = vsub.f32 %v18, %v50
    %v83 = vsub.f32 %v19, %v51
    %v84 = vsub.f32 %v20, %v52
    %v85 = vsub.f32 %v21, %v53
    %v86 = vsub.f32 %v22, %v54
    %v87 = vsub.f32 %v23, %v55
    %v88 = vsub.f32 %v24, %v56
    %v89 = vsub.f32 %v25, %v57
    %v90 = vsub.f32 %v26, %v58
    %v91 = vsub.f32 %v27, %v59
    %v92 = vsub.f32 %v28, %v60
    %v93 = vsub.f32 %v29, %v61
    %v94 = vsub.f32 %v30, %v62
    %v95 = vsub.f32 %v31, %v63
    %v96 = vsub.f32 %v32, %v64
    %v97 = vsub.f32 %v33, %v65
    %v98 = vsub.f32 %v34, %v66
    %v99 = vsub.f32 %v35, %v67
    %v100 = vsub.f32 %v36, %v68
    %v101 = vsub.f32 %v37, %v69
    %v102 = vsub.f32 %v38, %v70
    %v103 = vsub.f32 %v39, %v71
    %v104 = vsub.f32 %v40, %v72
    %v105 = vsub.f32 %v41, %v73
    %v106 = vsub.f32 %v42, %v74
    %v107 = vsub.f32 %v43, %v75
    %v108 = vsub.f32 %v44, %v76
    %v109 = vsub.f32 %v45, %v77
    %v110 = vsub.f32 %v46, %v78
    %v111 = vsub.f32 %v47, %v79
    %v112 = vsub.f32 %v48, %v80
    %v113 = vsub.f32 %v49, %v81
    %v114 = vmul.f32 %v82, %v82
    %v115 = vmul.f32 %v83, %v83
    %v116 = vmul.f32 %v84, %v84
    %v117 = vmul.f32 %v85, %v85
    %v118 = vmul.f32 %v86, %v86
    %v119 = vmul.f32 %v87, %v87
    %v120 = vmul.f32 %v88, %v88
    %v121 = vmul.f32 %v89, %v89
    %v122 = vmul.f32 %v90, %v90
    %v123 = vmul.f32 %v91, %v91
    %v124 = vmul.f32 %v92, %v92
    %v125 = vmul.f32 %v93, %v93
    %v126 = vmul.f32 %v94, %v94
    %v127 = vmul.f32 %v95, %v95
    %v128 = vmul.f32 %v96, %v96
    %v129 = vmul.f32 %v97, %v97
    %v130 = vmul.f32 %v98, %v98
    %v131 = vmul.f32 %v99, %v99
    %v132 = vmul.f32 %v100, %v100
    %v133 = vmul.f32 %v101, %v101
    %v134 = vmul.f32 %v102, %v102
    %v135 = vmul.f32 %v103, %v103
    %v136 = vmul.f32 %v104, %v104
    %v137 = vmul.f32 %v105, %v105
    %v138 = vmul.f32 %v106, %v106
    %v139 = vmul.f32 %v107, %v107
    %v140 = vmul.f32 %v108, %v108
    %v141 = vmul.f32 %v109, %v109
    %v142 = vmul.f32 %v110, %v110
    %v143 = vmul.f32 %v111, %v111
    %v144 = vmul.f32 %v112, %v112
    %v145 = vmul.f32 %v113, %v113
    %v146 = vld [vmem:[#allocation2] sm:$0x1]
    %v147 = vadd.f32 %v114, %v115
    %v148 = vadd.f32 %v147, %v116
    %v149 = vadd.f32 %v148, %v117
    %v150 = vadd.f32 %v149, %v118
    %v151 = vadd.f32 %v150, %v119
    %v152 = vadd.f32 %v151, %v120
    %v153 = vadd.f32 %v152, %v121
    %v154 = vadd.f32 %v153, %v122
    %v155 = vadd.f32 %v154, %v123
    %v156 = vadd.f32 %v155, %v124
    %v157 = vadd.f32 %v156, %v125
    %v158 = vadd.f32 %v157, %v126
    %v159 = vadd.f32 %v158, %v127
    %v160 = vadd.f32 %v159, %v128
    %v161 = vadd.f32 %v160, %v129
    %v162 = vadd.f32 %v161, %v130
    %v163 = vadd.f32 %v162, %v131
    %v164 = vadd.f32 %v163, %v132
    %v165 = vadd.f32 %v164, %v133
    %v166 = vadd.f32 %v165, %v134
    %v167 = vadd.f32 %v166, %v135
    %v168 = vadd.f32 %v167, %v136
    %v169 = vadd.f32 %v168, %v137
    %v170 = vadd.f32 %v169, %v138
    %v171 = vadd.f32 %v170, %v139
    %v172 = vadd.f32 %v171, %v140
    %v173 = vadd.f32 %v172, %v141
    %v174 = vadd.f32 %v173, %v142
    %v175 = vadd.f32 %v174, %v143
    %v176 = vadd.f32 %v175, %v144
    %v177 = vadd.f32 %v176, %v145
    %178 = vadd.xlane.f32.xlu0 %v177
    %v179 = vpop.xlane.xlu0 %178
    %v180 = vrot.slane %v179, 4
    %v181 = vadd.f32 %v179, %v180
    %v182 = vrot.slane %v181, 2
    %v183 = vadd.f32 %v181, %v182
    %v184 = vrot.slane %v183, 1
    %v185 = vadd.f32 %v183, %v184
    %s186 = vtos %v185
    %v187 = vstv %s186
    %v188 = vadd.f32 %v146, %v187
    %vm189 = vcmask 0
    %190 = vst.msk [vmem:[#allocation2] sm:$0x1] %vm189, %v188
    // Predicated region
    $region14: #{loss_fn.10} parent=1 // pred_check
      _
    $region15: #{loss_fn.10} parent=1 // pred_check_branch
      %192 = sbr.rel (0) target = $region17
    $region16: #{loss_fn.10} parent=1 // pred_region
      %194 = vsyncadd [#allocation3], 0
      %s196 = sshll.u32 [#allocation2], 4
      %s197 = int_to_ptr.vmem [resolvable:$true] %s196
      %s198 = sshll.u32 %s2, 4
      %s199 = int_to_ptr.hbm [resolvable:$true] %s198
      %201 = dma.vmem_to_hbm [thread:$0]  %s197, 16, %s199, [#allocation3]
    $region17: #{loss_fn.10} parent=1 // pred_fallthru
      _
    // Predicated region
    $region18: #{loss_fn.10} parent=1 // pred_check
      _
    $region19: #{loss_fn.10} parent=1 // pred_check_branch
      %203 = sbr.rel (0) target = $region21
    $region20: #{loss_fn.10} parent=1 // pred_region
      %205 = dma.done [#allocation3], 16
    $region21: #{loss_fn.10} parent=1 // pred_fallthru
      _
    %206 = vsyncpa [#allocation3], 1

// kernel: loss_fn.7
$region0: #{loss_fn.7}
  #allocation0 [shape = 'u32[]', space=smem, size = 0x4, offset = 0x4, fixed_abs, tag = 'smem constant byte address 0x4 - core index']
  #allocation1 [shape = 'u32[72,128]{1,0:T(1,128)}', space=vmem, size = 0x9000, scoped, tag = 'internal scratch']
  %s0 = inlined_call_operand.vmem [shape: f32[4,18,18,64], index: 0, kind: input, shape index: {}]
  %s1 = inlined_call_operand.vmem [shape: bf16[576,64], index: 1, kind: input, shape index: {}]
  %s2 = inlined_call_operand.vmem [shape: f32[1,64], index: 2, kind: input, shape index: {}]
  %s3 = inlined_call_operand.vmem [shape: f32[4,256,64], index: 3, kind: output, shape index: {}]
  %s4 = sld [smem:[#allocation0]]
  $region45: #{loss_fn.7} parent=0
    _
  %s6 = ssub.s32 1, %s4
  %s7 = scalar_select 0, %s6, %s4
  loop: start=0, step=1, limit=6
  $region2: #{loss_fn.7} parent=0 // loop_pre_header
    _
  $region3: #{loss_fn.7} parent=0 // loop_header
    %s9 = sphi 0, %s13
    %p10 = scmp.ge.s32.totalorder %s9, 6
    %s16 = sphi 0, %s28
    %s17 = sphi 0, %s24
    %s18 = sphi 0, %s16
    %s19 = sphi 0, %s17
    %s20 = sphi 0, %s18
    %s21 = sphi 0, %s19
    %s31 = sphi 0, %s33
    %s34 = sphi 0, %s31
    %s35 = sphi 0, %s34
    %s51 = sphi 0, %s35
    %s55 = sphi 0, %s55
    %s57 = sphi 0, %s55
    %s58 = sphi 0, %s57
    %s72 = sphi 0, %s58
    %s76 = sphi 0, %s76
    %s78 = sphi 0, %s76
    %s79 = sphi 0, %s78
    %s93 = sphi 0, %s79
    %s101 = sphi 0, %s103
    %s104 = sphi 0, %s101
    %s105 = sphi 0, %s104
    %s121 = sphi 0, %s105
  $region4: #{loss_fn.7} parent=0 // loop_header_branch
    %12 = sbr.rel (%p10) target = $region8
  $region5: #{loss_fn.7} parent=0 // loop_body
    %s14 = ssub.s32 %s9, 1
    %s15 = ssub.s32 %s9, 2
    %s22 = sadd.s32 1, %s17
    %p23 = scmp.ge.s32.totalorder %s22, 1
    %s24 = scalar_select %p23, 0, %s22
    %s25 = sadd.s32 1, %s16
    %s26 = scalar_select %p23, %s25, %s16
    %p27 = scmp.ge.s32.totalorder %s26, 4
    %s28 = scalar_select %p27, 0, %s26
    %s29 = ssub.s32 %s16, %s28
    %p30 = scmp.eq.s32.totalorder %s29, 0
    %s32 = sadd.s32 %s31, 1
    %s33 = scalar_select %p30, %s31, %s32
    %p36 = pneg %p30
    %p37 = scmp.eq.s32.totalorder %s9, 3
    %p38 = por %p36, %p37
    %p39 = scmp.ne.s32.totalorder %s31, %s34
    %p40 = scmp.eq.s32.totalorder %s9, 0
    %p41 = por %p39, %p40
    %p42 = scmp.ne.s32.totalorder %s31, %s34
    %p43 = scmp.eq.s32.totalorder %s14, 3
    %p44 = por %p42, %p43
    %p45 = scmp.ne.s32.totalorder %s34, %s35
    %p46 = scmp.eq.s32.totalorder %s14, 0
    %p47 = por %p45, %p46
    %p48 = scmp.ne.s32.totalorder %s34, %s35
    %p49 = scmp.eq.s32.totalorder %s15, 3
    %p50 = por %p48, %p49
    %p52 = scmp.ne.s32.totalorder %s35, %s51
    %p53 = scmp.eq.s32.totalorder %s15, 0
    %p54 = por %p52, %p53
    %s56 = sadd.s32 %s55, 1
    %p59 = scmp.eq.s32.totalorder %s9, 3
    %p60 = scmp.ne.s32.totalorder %s55, %s57
    %p61 = scmp.eq.s32.totalorder %s9, 0
    %p62 = por %p60, %p61
    %p63 = scmp.ne.s32.totalorder %s55, %s57
    %p64 = scmp.eq.s32.totalorder %s14, 3
    %p65 = por %p63, %p64
    %p66 = scmp.ne.s32.totalorder %s57, %s58
    %p67 = scmp.eq.s32.totalorder %s14, 0
    %p68 = por %p66, %p67
    %p69 = scmp.ne.s32.totalorder %s57, %s58
    %p70 = scmp.eq.s32.totalorder %s15, 3
    %p71 = por %p69, %p70
    %p73 = scmp.ne.s32.totalorder %s58, %s72
    %p74 = scmp.eq.s32.totalorder %s15, 0
    %p75 = por %p73, %p74
    %s77 = sadd.s32 %s76, 1
    %p80 = scmp.eq.s32.totalorder %s9, 3
    %p81 = scmp.ne.s32.totalorder %s76, %s78
    %p82 = scmp.eq.s32.totalorder %s9, 0
    %p83 = por %p81, %p82
    %p84 = scmp.ne.s32.totalorder %s76, %s78
    %p85 = scmp.eq.s32.totalorder %s14, 3
    %p86 = por %p84, %p85
    %p87 = scmp.ne.s32.totalorder %s78, %s79
    %p88 = scmp.eq.s32.totalorder %s14, 0
    %p89 = por %p87, %p88
    %p90 = scmp.ne.s32.totalorder %s78, %s79
    %p91 = scmp.eq.s32.totalorder %s15, 3
    %p92 = por %p90, %p91
    %p94 = scmp.ne.s32.totalorder %s79, %s93
    %p95 = scmp.eq.s32.totalorder %s15, 0
    %p96 = por %p94, %p95
    %s97 = ssub.s32 %s16, %s28
    %s98 = ssub.s32 %s17, %s24
    %s99 = sor.u32 %s97, %s98
    %p100 = scmp.eq.s32.totalorder %s99, 0
    %s102 = sadd.s32 %s101, 1
    %s103 = scalar_select %p100, %s101, %s102
    %p106 = pneg %p100
    %p107 = scmp.eq.s32.totalorder %s9, 3
    %p108 = por %p106, %p107
    %p109 = scmp.ne.s32.totalorder %s101, %s104
    %p110 = scmp.eq.s32.totalorder %s9, 0
    %p111 = por %p109, %p110
    %p112 = scmp.ne.s32.totalorder %s101, %s104
    %p113 = scmp.eq.s32.totalorder %s14, 3
    %p114 = por %p112, %p113
    %p115 = scmp.ne.s32.totalorder %s104, %s105
    %p116 = scmp.eq.s32.totalorder %s14, 0
    %p117 = por %p115, %p116
    %p118 = scmp.ne.s32.totalorder %s104, %s105
    %p119 = scmp.eq.s32.totalorder %s15, 3
    %p120 = por %p118, %p119
    %p122 = scmp.ne.s32.totalorder %s105, %s121
    %p123 = scmp.eq.s32.totalorder %s15, 0
    %p124 = por %p122, %p123
    %p125 = scmp.le.s32.totalorder 1, %s9
    %p126 = scmp.lt.s32.totalorder %s9, 5
    %p127 = pnand %p125, %p126
    %p128 = pneg %p127
    // Predicated region
    $region9: #{loss_fn.7} parent=5 // pred_check
      _
    $region10: #{loss_fn.7} parent=5 // pred_check_branch
      %130 = sbr.rel (%p127) target = $region12
    $region11: #{loss_fn.7} parent=5 // pred_region
      %s131 = ssub.s32 %s9, 1
      // Predicated region
      $region13: #{loss_fn.7} parent=11 // pred_check
        %p132 = pneg %p68
      $region14: #{loss_fn.7} parent=11 // pred_check_branch
        %134 = sbr.rel (%p132) target = $region16
      $region15: #{loss_fn.7} parent=11 // pred_region
        _
      $region16: #{loss_fn.7} parent=11 // pred_fallthru
        _
      // Predicated region
      $region17: #{loss_fn.7} parent=11 // pred_check
        %p135 = pneg %p89
      $region18: #{loss_fn.7} parent=11 // pred_check_branch
        %137 = sbr.rel (%p135) target = $region20
      $region19: #{loss_fn.7} parent=11 // pred_region
        _
      $region20: #{loss_fn.7} parent=11 // pred_fallthru
        _
    $region12: #{loss_fn.7} parent=5 // pred_fallthru
      _
    %p138 = scmp.lt.s32.totalorder %s9, 4
    // Predicated region
    $region21: #{loss_fn.7} parent=5 // pred_check
      %p139 = pneg %p138
    $region22: #{loss_fn.7} parent=5 // pred_check_branch
      %141 = sbr.rel (%p139) target = $region24
    $region23: #{loss_fn.7} parent=5 // pred_region
      // Predicated region
      $region25: #{loss_fn.7} parent=23 // pred_check
        %p142 = pneg %p41
      $region26: #{loss_fn.7} parent=23 // pred_check_branch
        %144 = sbr.rel (%p142) target = $region28
      $region27: #{loss_fn.7} parent=23 // pred_region
        %p145 = scmp.lt.s32.totalorder %s16, 3
        %s146 = scalar_select %p145, %s16, 3
        %s147 = smul.addr %s146, 54
        %s148 = smul.addr %s147, 8
        %s149 = scalar_lea.vmem %s0, %s148
      $region28: #{loss_fn.7} parent=23 // pred_fallthru
        _
    $region24: #{loss_fn.7} parent=5 // pred_fallthru
      _
    %p150 = scmp.le.s32.totalorder 1, %s9
    %p151 = scmp.lt.s32.totalorder %s9, 5
    %p152 = pnand %p150, %p151
    %p153 = pneg %p152
    // Predicated region
    $region29: #{loss_fn.7} parent=5 // pred_check
      _
    $region30: #{loss_fn.7} parent=5 // pred_check_branch
      %155 = sbr.rel (%p152) target = $region32
    $region31: #{loss_fn.7} parent=5 // pred_region
      %s156 = ssub.s32 %s9, 1
      %p157 = scmp.lt.s32.totalorder %s18, 3
      %s158 = scalar_select %p157, %s18, 3
      %s159 = smul.addr %s158, 54
      %s160 = smul.addr %s159, 8
      %s161 = scalar_lea.vmem %s0, %s160
      %p162 = pneg %p47
      %p163 = pneg %p44
      %p164 = pneg %p68
      %p165 = pneg %p65
      %p166 = pneg %p89
      %p167 = pneg %p86
      %p168 = pneg %p117
      %p169 = pneg %p114
      %s170 = smul.u32 32, %s19
      %p171 = scmp.lt.s32.totalorder %s18, 3
      %s172 = scalar_select %p171, %s18, 3
      %p173 = scmp.lt.s32.totalorder %s170, 31
      %s174 = scalar_select %p173, %s170, 31
      %s175 = smul.addr %s172, 32
      %s176 = sadd.s32 %s174, %s175
      %s177 = smul.addr %s176, 8
      %s178 = scalar_lea.vmem %s3, %s177
      %p179 = scmp.lt.s32.totalorder %s18, 3
      %s180 = scalar_select %p179, %s18, 3
      %s181 = smul.addr %s180, 54
      %s182 = smul.addr %s181, 8
      %s183 = scalar_lea.vmem %s0, %s182
      %s184 = smul.u32 32, %s19
      %p185 = scmp.lt.s32.totalorder %s18, 3
      %s186 = scalar_select %p185, %s18, 3
      %p187 = scmp.lt.s32.totalorder %s184, 31
      %s188 = scalar_select %p187, %s184, 31
      %s189 = smul.addr %s186, 32
      %s190 = sadd.s32 %s188, %s189
      %s191 = smul.addr %s190, 8
      %s192 = scalar_lea.vmem %s3, %s191
      %s193 = smul.u32 32, %s19
      %s195 = smul.u32 %s19, 16
      %s196 = smul.u32 %s195, 24
      %s197 = scalar_lea.vmem %s183, %s196
      %v198 = vld [vmem:[%s197] sm:$0xff]
      %v199 = vld [vmem:[%s197 + $0x8] sm:$0xff]
      %v200 = vld [vmem:[%s197 + $0x18] sm:$0xff]
      %v201 = vld [vmem:[%s197 + $0x20] sm:$0xff]
      %v202 = vld [vmem:[%s197 + $0x30] sm:$0xff]
      %v203 = vld [vmem:[%s197 + $0x38] sm:$0xff]
      %v204 = vld [vmem:[%s197 + $0x48] sm:$0xff]
      %v205 = vld [vmem:[%s197 + $0x50] sm:$0xff]
      %v206 = vld [vmem:[%s197 + $0x60] sm:$0xff]
      %v207 = vld [vmem:[%s197 + $0x68] sm:$0xff]
      %v208 = vld [vmem:[%s197 + $0x78] sm:$0xff]
      %v209 = vld [vmem:[%s197 + $0x80] sm:$0xff]
      %v210 = vld [vmem:[%s197 + $0x90] sm:$0xff]
      %v211 = vld [vmem:[%s197 + $0x98] sm:$0xff]
      %v212 = vld [vmem:[%s197 + $0xa8] sm:$0xff]
      %v213 = vld [vmem:[%s197 + $0xb0] sm:$0xff]
      %v214 = vld [vmem:[%s197 + $0xc0] sm:$0xff]
      %v215 = vld [vmem:[%s197 + $0xc8] sm:$0xff]
      %v216 = vld [vmem:[%s197 + $0xd8] sm:$0xff]
      %v217 = vld [vmem:[%s197 + $0xe0] sm:$0xff]
      %v218 = vld [vmem:[%s197 + $0xf0] sm:$0xff]
      %v219 = vld [vmem:[%s197 + $0xf8] sm:$0xff]
      %v220 = vld [vmem:[%s197 + $0x108] sm:$0xff]
      %v221 = vld [vmem:[%s197 + $0x110] sm:$0xff]
      %v222 = vld [vmem:[%s197 + $0x120] sm:$0xff]
      %v223 = vld [vmem:[%s197 + $0x128] sm:$0xff]
      %v224 = vld [vmem:[%s197 + $0x138] sm:$0xff]
      %v225 = vld [vmem:[%s197 + $0x140] sm:$0xff]
      %v226 = vld [vmem:[%s197 + $0x150] sm:$0xff]
      %v227 = vld [vmem:[%s197 + $0x158] sm:$0xff]
      %v228 = vld [vmem:[%s197 + $0x168] sm:$0xff]
      %v229 = vld [vmem:[%s197 + $0x170] sm:$0xff]
      %v230 = vld [vmem:[%s197 + $0x1] sm:$0xff]
      %v231 = vld [vmem:[%s197 + $0x9] sm:$0xff]
      %v232 = vld [vmem:[%s197 + $0x19] sm:$0xff]
      %v233 = vld [vmem:[%s197 + $0x21] sm:$0xff]
      %v234 = vld [vmem:[%s197 + $0x31] sm:$0xff]
      %v235 = vld [vmem:[%s197 + $0x39] sm:$0xff]
      %v236 = vld [vmem:[%s197 + $0x49] sm:$0xff]
      %v237 = vld [vmem:[%s197 + $0x51] sm:$0xff]
      %v238 = vld [vmem:[%s197 + $0x61] sm:$0xff]
      %v239 = vld [vmem:[%s197 + $0x69] sm:$0xff]
      %v240 = vld [vmem:[%s197 + $0x79] sm:$0xff]
      %v241 = vld [vmem:[%s197 + $0x81] sm:$0xff]
      %v242 = vld [vmem:[%s197 + $0x91] sm:$0xff]
      %v243 = vld [vmem:[%s197 + $0x99] sm:$0xff]
      %v244 = vld [vmem:[%s197 + $0xa9] sm:$0xff]
      %v245 = vld [vmem:[%s197 + $0xb1] sm:$0xff]
      %v246 = vld [vmem:[%s197 + $0xc1] sm:$0xff]
      %v247 = vld [vmem:[%s197 + $0xc9] sm:$0xff]
      %v248 = vld [vmem:[%s197 + $0xd9] sm:$0xff]
      %v249 = vld [vmem:[%s197 + $0xe1] sm:$0xff]
      %v250 = vld [vmem:[%s197 + $0xf1] sm:$0xff]
      %v251 = vld [vmem:[%s197 + $0xf9] sm:$0xff]
      %v252 = vld [vmem:[%s197 + $0x109] sm:$0xff]
      %v253 = vld [vmem:[%s197 + $0x111] sm:$0xff]
      %v254 = vld [vmem:[%s197 + $0x121] sm:$0xff]
      %v255 = vld [vmem:[%s197 + $0x129] sm:$0xff]
      %v256 = vld [vmem:[%s197 + $0x139] sm:$0xff]
      %v257 = vld [vmem:[%s197 + $0x141] sm:$0xff]
      %v258 = vld [vmem:[%s197 + $0x151] sm:$0xff]
      %v259 = vld [vmem:[%s197 + $0x159] sm:$0xff]
      %v260 = vld [vmem:[%s197 + $0x169] sm:$0xff]
      %v261 = vld [vmem:[%s197 + $0x171] sm:$0xff]
      %v262 = vld [vmem:[%s197 + $0x2] sm:$0xff]
      %v263 = vld [vmem:[%s197 + $0xa] sm:$0xff]
      %v264 = vld [vmem:[%s197 + $0x1a] sm:$0xff]
      %v265 = vld [vmem:[%s197 + $0x22] sm:$0xff]
      %v266 = vld [vmem:[%s197 + $0x32] sm:$0xff]
      %v267 = vld [vmem:[%s197 + $0x3a] sm:$0xff]
      %v268 = vld [vmem:[%s197 + $0x4a] sm:$0xff]
      %v269 = vld [vmem:[%s197 + $0x52] sm:$0xff]
      %v270 = vld [vmem:[%s197 + $0x62] sm:$0xff]
      %v271 = vld [vmem:[%s197 + $0x6a] sm:$0xff]
      %v272 = vld [vmem:[%s197 + $0x7a] sm:$0xff]
      %v273 = vld [vmem:[%s197 + $0x82] sm:$0xff]
      %v274 = vld [vmem:[%s197 + $0x92] sm:$0xff]
      %v275 = vld [vmem:[%s197 + $0x9a] sm:$0xff]
      %v276 = vld [vmem:[%s197 + $0xaa] sm:$0xff]
      %v277 = vld [vmem:[%s197 + $0xb2] sm:$0xff]
      %v278 = vld [vmem:[%s197 + $0xc2] sm:$0xff]
      %v279 = vld [vmem:[%s197 + $0xca] sm:$0xff]
      %v280 = vld [vmem:[%s197 + $0xda] sm:$0xff]
      %v281 = vld [vmem:[%s197 + $0xe2] sm:$0xff]
      %v282 = vld [vmem:[%s197 + $0xf2] sm:$0xff]
      %v283 = vld [vmem:[%s197 + $0xfa] sm:$0xff]
      %v284 = vld [vmem:[%s197 + $0x10a] sm:$0xff]
      %v285 = vld [vmem:[%s197 + $0x112] sm:$0xff]
      %v286 = vld [vmem:[%s197 + $0x122] sm:$0xff]
      %v287 = vld [vmem:[%s197 + $0x12a] sm:$0xff]
      %v288 = vld [vmem:[%s197 + $0x13a] sm:$0xff]
      %v289 = vld [vmem:[%s197 + $0x142] sm:$0xff]
      %v290 = vld [vmem:[%s197 + $0x152] sm:$0xff]
      %v291 = vld [vmem:[%s197 + $0x15a] sm:$0xff]
      %v292 = vld [vmem:[%s197 + $0x16a] sm:$0xff]
      %v293 = vld [vmem:[%s197 + $0x172] sm:$0xff]
      %s294 = sadd.s32 %s195, 1
      %s295 = smul.u32 %s294, 24
      %s296 = scalar_lea.vmem %s183, %s295
      %v297 = vld [vmem:[%s296] sm:$0xff]
      %v298 = vld [vmem:[%s296 + $0x8] sm:$0xff]
      %v299 = vld [vmem:[%s296 + $0x18] sm:$0xff]
      %v300 = vld [vmem:[%s296 + $0x20] sm:$0xff]
      %v301 = vld [vmem:[%s296 + $0x30] sm:$0xff]
      %v302 = vld [vmem:[%s296 + $0x38] sm:$0xff]
      %v303 = vld [vmem:[%s296 + $0x48] sm:$0xff]
      %v304 = vld [vmem:[%s296 + $0x50] sm:$0xff]
      %v305 = vld [vmem:[%s296 + $0x60] sm:$0xff]
      %v306 = vld [vmem:[%s296 + $0x68] sm:$0xff]
      %v307 = vld [vmem:[%s296 + $0x78] sm:$0xff]
      %v308 = vld [vmem:[%s296 + $0x80] sm:$0xff]
      %v309 = vld [vmem:[%s296 + $0x90] sm:$0xff]
      %v310 = vld [vmem:[%s296 + $0x98] sm:$0xff]
      %v311 = vld [vmem:[%s296 + $0xa8] sm:$0xff]
      %v312 = vld [vmem:[%s296 + $0xb0] sm:$0xff]
      %v313 = vld [vmem:[%s296 + $0xc0] sm:$0xff]
      %v314 = vld [vmem:[%s296 + $0xc8] sm:$0xff]
      %v315 = vld [vmem:[%s296 + $0xd8] sm:$0xff]
      %v316 = vld [vmem:[%s296 + $0xe0] sm:$0xff]
      %v317 = vld [vmem:[%s296 + $0xf0] sm:$0xff]
      %v318 = vld [vmem:[%s296 + $0xf8] sm:$0xff]
      %v319 = vld [vmem:[%s296 + $0x108] sm:$0xff]
      %v320 = vld [vmem:[%s296 + $0x110] sm:$0xff]
      %v321 = vld [vmem:[%s296 + $0x120] sm:$0xff]
      %v322 = vld [vmem:[%s296 + $0x128] sm:$0xff]
      %v323 = vld [vmem:[%s296 + $0x138] sm:$0xff]
      %v324 = vld [vmem:[%s296 + $0x140] sm:$0xff]
      %v325 = vld [vmem:[%s296 + $0x150] sm:$0xff]
      %v326 = vld [vmem:[%s296 + $0x158] sm:$0xff]
      %v327 = vld [vmem:[%s296 + $0x168] sm:$0xff]
      %v328 = vld [vmem:[%s296 + $0x170] sm:$0xff]
      %v329 = vld [vmem:[%s296 + $0x1] sm:$0xff]
      %v330 = vld [vmem:[%s296 + $0x9] sm:$0xff]
      %v331 = vld [vmem:[%s296 + $0x19] sm:$0xff]
      %v332 = vld [vmem:[%s296 + $0x21] sm:$0xff]
      %v333 = vld [vmem:[%s296 + $0x31] sm:$0xff]
      %v334 = vld [vmem:[%s296 + $0x39] sm:$0xff]
      %v335 = vld [vmem:[%s296 + $0x49] sm:$0xff]
      %v336 = vld [vmem:[%s296 + $0x51] sm:$0xff]
      %v337 = vld [vmem:[%s296 + $0x61] sm:$0xff]
      %v338 = vld [vmem:[%s296 + $0x69] sm:$0xff]
      %v339 = vld [vmem:[%s296 + $0x79] sm:$0xff]
      %v340 = vld [vmem:[%s296 + $0x81] sm:$0xff]
      %v341 = vld [vmem:[%s296 + $0x91] sm:$0xff]
      %v342 = vld [vmem:[%s296 + $0x99] sm:$0xff]
      %v343 = vld [vmem:[%s296 + $0xa9] sm:$0xff]
      %v344 = vld [vmem:[%s296 + $0xb1] sm:$0xff]
      %v345 = vld [vmem:[%s296 + $0xc1] sm:$0xff]
      %v346 = vld [vmem:[%s296 + $0xc9] sm:$0xff]
      %v347 = vld [vmem:[%s296 + $0xd9] sm:$0xff]
      %v348 = vld [vmem:[%s296 + $0xe1] sm:$0xff]
      %v349 = vld [vmem:[%s296 + $0xf1] sm:$0xff]
      %v350 = vld [vmem:[%s296 + $0xf9] sm:$0xff]
      %v351 = vld [vmem:[%s296 + $0x109] sm:$0xff]
      %v352 = vld [vmem:[%s296 + $0x111] sm:$0xff]
      %v353 = vld [vmem:[%s296 + $0x121] sm:$0xff]
      %v354 = vld [vmem:[%s296 + $0x129] sm:$0xff]
      %v355 = vld [vmem:[%s296 + $0x139] sm:$0xff]
      %v356 = vld [vmem:[%s296 + $0x141] sm:$0xff]
      %v357 = vld [vmem:[%s296 + $0x151] sm:$0xff]
      %v358 = vld [vmem:[%s296 + $0x159] sm:$0xff]
      %v359 = vld [vmem:[%s296 + $0x169] sm:$0xff]
      %v360 = vld [vmem:[%s296 + $0x171] sm:$0xff]
      %v361 = vld [vmem:[%s296 + $0x2] sm:$0xff]
      %v362 = vld [vmem:[%s296 + $0xa] sm:$0xff]
      %v363 = vld [vmem:[%s296 + $0x1a] sm:$0xff]
      %v364 = vld [vmem:[%s296 + $0x22] sm:$0xff]
      %v365 = vld [vmem:[%s296 + $0x32] sm:$0xff]
      %v366 = vld [vmem:[%s296 + $0x3a] sm:$0xff]
      %v367 = vld [vmem:[%s296 + $0x4a] sm:$0xff]
      %v368 = vld [vmem:[%s296 + $0x52] sm:$0xff]
      %v369 = vld [vmem:[%s296 + $0x62] sm:$0xff]
      %v370 = vld [vmem:[%s296 + $0x6a] sm:$0xff]
      %v371 = vld [vmem:[%s296 + $0x7a] sm:$0xff]
      %v372 = vld [vmem:[%s296 + $0x82] sm:$0xff]
      %v373 = vld [vmem:[%s296 + $0x92] sm:$0xff]
      %v374 = vld [vmem:[%s296 + $0x9a] sm:$0xff]
      %v375 = vld [vmem:[%s296 + $0xaa] sm:$0xff]
      %v376 = vld [vmem:[%s296 + $0xb2] sm:$0xff]
      %v377 = vld [vmem:[%s296 + $0xc2] sm:$0xff]
      %v378 = vld [vmem:[%s296 + $0xca] sm:$0xff]
      %v379 = vld [vmem:[%s296 + $0xda] sm:$0xff]
      %v380 = vld [vmem:[%s296 + $0xe2] sm:$0xff]
      %v381 = vld [vmem:[%s296 + $0xf2] sm:$0xff]
      %v382 = vld [vmem:[%s296 + $0xfa] sm:$0xff]
      %v383 = vld [vmem:[%s296 + $0x10a] sm:$0xff]
      %v384 = vld [vmem:[%s296 + $0x112] sm:$0xff]
      %v385 = vld [vmem:[%s296 + $0x122] sm:$0xff]
      %v386 = vld [vmem:[%s296 + $0x12a] sm:$0xff]
      %v387 = vld [vmem:[%s296 + $0x13a] sm:$0xff]
      %v388 = vld [vmem:[%s296 + $0x142] sm:$0xff]
      %v389 = vld [vmem:[%s296 + $0x152] sm:$0xff]
      %v390 = vld [vmem:[%s296 + $0x15a] sm:$0xff]
      %v391 = vld [vmem:[%s296 + $0x16a] sm:$0xff]
      %v392 = vld [vmem:[%s296 + $0x172] sm:$0xff]
      %s393 = sadd.s32 %s195, 2
      %s394 = smul.u32 %s393, 24
      %s395 = scalar_lea.vmem %s183, %s394
      %v396 = vld [vmem:[%s395] sm:$0xff]
      %v397 = vld [vmem:[%s395 + $0x8] sm:$0xff]
      %v398 = vld [vmem:[%s395 + $0x18] sm:$0xff]
      %v399 = vld [vmem:[%s395 + $0x20] sm:$0xff]
      %v400 = vld [vmem:[%s395 + $0x30] sm:$0xff]
      %v401 = vld [vmem:[%s395 + $0x38] sm:$0xff]
      %v402 = vld [vmem:[%s395 + $0x48] sm:$0xff]
      %v403 = vld [vmem:[%s395 + $0x50] sm:$0xff]
      %v404 = vld [vmem:[%s395 + $0x60] sm:$0xff]
      %v405 = vld [vmem:[%s395 + $0x68] sm:$0xff]
      %v406 = vld [vmem:[%s395 + $0x78] sm:$0xff]
      %v407 = vld [vmem:[%s395 + $0x80] sm:$0xff]
      %v408 = vld [vmem:[%s395 + $0x90] sm:$0xff]
      %v409 = vld [vmem:[%s395 + $0x98] sm:$0xff]
      %v410 = vld [vmem:[%s395 + $0xa8] sm:$0xff]
      %v411 = vld [vmem:[%s395 + $0xb0] sm:$0xff]
      %v412 = vld [vmem:[%s395 + $0xc0] sm:$0xff]
      %v413 = vld [vmem:[%s395 + $0xc8] sm:$0xff]
      %v414 = vld [vmem:[%s395 + $0xd8] sm:$0xff]
      %v415 = vld [vmem:[%s395 + $0xe0] sm:$0xff]
      %v416 = vld [vmem:[%s395 + $0xf0] sm:$0xff]
      %v417 = vld [vmem:[%s395 + $0xf8] sm:$0xff]
      %v418 = vld [vmem:[%s395 + $0x108] sm:$0xff]
      %v419 = vld [vmem:[%s395 + $0x110] sm:$0xff]
      %v420 = vld [vmem:[%s395 + $0x120] sm:$0xff]
      %v421 = vld [vmem:[%s395 + $0x128] sm:$0xff]
      %v422 = vld [vmem:[%s395 + $0x138] sm:$0xff]
      %v423 = vld [vmem:[%s395 + $0x140] sm:$0xff]
      %v424 = vld [vmem:[%s395 + $0x150] sm:$0xff]
      %v425 = vld [vmem:[%s395 + $0x158] sm:$0xff]
      %v426 = vld [vmem:[%s395 + $0x168] sm:$0xff]
      %v427 = vld [vmem:[%s395 + $0x170] sm:$0xff]
      %v428 = vld [vmem:[%s395 + $0x1] sm:$0xff]
      %v429 = vld [vmem:[%s395 + $0x9] sm:$0xff]
      %v430 = vld [vmem:[%s395 + $0x19] sm:$0xff]
      %v431 = vld [vmem:[%s395 + $0x21] sm:$0xff]
      %v432 = vld [vmem:[%s395 + $0x31] sm:$0xff]
      %v433 = vld [vmem:[%s395 + $0x39] sm:$0xff]
      %v434 = vld [vmem:[%s395 + $0x49] sm:$0xff]
      %v435 = vld [vmem:[%s395 + $0x51] sm:$0xff]
      %v436 = vld [vmem:[%s395 + $0x61] sm:$0xff]
      %v437 = vld [vmem:[%s395 + $0x69] sm:$0xff]
      %v438 = vld [vmem:[%s395 + $0x79] sm:$0xff]
      %v439 = vld [vmem:[%s395 + $0x81] sm:$0xff]
      %v440 = vld [vmem:[%s395 + $0x91] sm:$0xff]
      %v441 = vld [vmem:[%s395 + $0x99] sm:$0xff]
      %v442 = vld [vmem:[%s395 + $0xa9] sm:$0xff]
      %v443 = vld [vmem:[%s395 + $0xb1] sm:$0xff]
      %v444 = vld [vmem:[%s395 + $0xc1] sm:$0xff]
      %v445 = vld [vmem:[%s395 + $0xc9] sm:$0xff]
      %v446 = vld [vmem:[%s395 + $0xd9] sm:$0xff]
      %v447 = vld [vmem:[%s395 + $0xe1] sm:$0xff]
      %v448 = vld [vmem:[%s395 + $0xf1] sm:$0xff]
      %v449 = vld [vmem:[%s395 + $0xf9] sm:$0xff]
      %v450 = vld [vmem:[%s395 + $0x109] sm:$0xff]
      %v451 = vld [vmem:[%s395 + $0x111] sm:$0xff]
      %v452 = vld [vmem:[%s395 + $0x121] sm:$0xff]
      %v453 = vld [vmem:[%s395 + $0x129] sm:$0xff]
      %v454 = vld [vmem:[%s395 + $0x139] sm:$0xff]
      %v455 = vld [vmem:[%s395 + $0x141] sm:$0xff]
      %v456 = vld [vmem:[%s395 + $0x151] sm:$0xff]
      %v457 = vld [vmem:[%s395 + $0x159] sm:$0xff]
      %v458 = vld [vmem:[%s395 + $0x169] sm:$0xff]
      %v459 = vld [vmem:[%s395 + $0x171] sm:$0xff]
      %v460 = vld [vmem:[%s395 + $0x2] sm:$0xff]
      %v461 = vld [vmem:[%s395 + $0xa] sm:$0xff]
      %v462 = vld [vmem:[%s395 + $0x1a] sm:$0xff]
      %v463 = vld [vmem:[%s395 + $0x22] sm:$0xff]
      %v464 = vld [vmem:[%s395 + $0x32] sm:$0xff]
      %v465 = vld [vmem:[%s395 + $0x3a] sm:$0xff]
      %v466 = vld [vmem:[%s395 + $0x4a] sm:$0xff]
      %v467 = vld [vmem:[%s395 + $0x52] sm:$0xff]
      %v468 = vld [vmem:[%s395 + $0x62] sm:$0xff]
      %v469 = vld [vmem:[%s395 + $0x6a] sm:$0xff]
      %v470 = vld [vmem:[%s395 + $0x7a] sm:$0xff]
      %v471 = vld [vmem:[%s395 + $0x82] sm:$0xff]
      %v472 = vld [vmem:[%s395 + $0x92] sm:$0xff]
      %v473 = vld [vmem:[%s395 + $0x9a] sm:$0xff]
      %v474 = vld [vmem:[%s395 + $0xaa] sm:$0xff]
      %v475 = vld [vmem:[%s395 + $0xb2] sm:$0xff]
      %v476 = vld [vmem:[%s395 + $0xc2] sm:$0xff]
      %v477 = vld [vmem:[%s395 + $0xca] sm:$0xff]
      %v478 = vld [vmem:[%s395 + $0xda] sm:$0xff]
      %v479 = vld [vmem:[%s395 + $0xe2] sm:$0xff]
      %v480 = vld [vmem:[%s395 + $0xf2] sm:$0xff]
      %v481 = vld [vmem:[%s395 + $0xfa] sm:$0xff]
      %v482 = vld [vmem:[%s395 + $0x10a] sm:$0xff]
      %v483 = vld [vmem:[%s395 + $0x112] sm:$0xff]
      %v484 = vld [vmem:[%s395 + $0x122] sm:$0xff]
      %v485 = vld [vmem:[%s395 + $0x12a] sm:$0xff]
      %v486 = vld [vmem:[%s395 + $0x13a] sm:$0xff]
      %v487 = vld [vmem:[%s395 + $0x142] sm:$0xff]
      %v488 = vld [vmem:[%s395 + $0x152] sm:$0xff]
      %v489 = vld [vmem:[%s395 + $0x15a] sm:$0xff]
      %v490 = vld [vmem:[%s395 + $0x16a] sm:$0xff]
      %v491 = vld [vmem:[%s395 + $0x172] sm:$0xff]
      %524 = vrot.lane.b32.xlu0 %v230, 64
      %v525 = vpop.permute.xlu0 %524
      %526 = vrot.lane.b32.xlu0 %v231, 64
      %v527 = vpop.permute.xlu0 %526
      %528 = vrot.lane.b32.xlu0 %v232, 64
      %v529 = vpop.permute.xlu0 %528
      %530 = vrot.lane.b32.xlu0 %v233, 64
      %v531 = vpop.permute.xlu0 %530
      %532 = vrot.lane.b32.xlu0 %v234, 64
      %v533 = vpop.permute.xlu0 %532
      %534 = vrot.lane.b32.xlu0 %v235, 64
      %v535 = vpop.permute.xlu0 %534
      %536 = vrot.lane.b32.xlu0 %v236, 64
      %v537 = vpop.permute.xlu0 %536
      %538 = vrot.lane.b32.xlu0 %v237, 64
      %v539 = vpop.permute.xlu0 %538
      %540 = vrot.lane.b32.xlu0 %v238, 64
      %v541 = vpop.permute.xlu0 %540
      %542 = vrot.lane.b32.xlu0 %v239, 64
      %v543 = vpop.permute.xlu0 %542
      %544 = vrot.lane.b32.xlu0 %v240, 64
      %v545 = vpop.permute.xlu0 %544
      %546 = vrot.lane.b32.xlu0 %v241, 64
      %v547 = vpop.permute.xlu0 %546
      %548 = vrot.lane.b32.xlu0 %v242, 64
      %v549 = vpop.permute.xlu0 %548
      %550 = vrot.lane.b32.xlu0 %v243, 64
      %v551 = vpop.permute.xlu0 %550
      %552 = vrot.lane.b32.xlu0 %v244, 64
      %v553 = vpop.permute.xlu0 %552
      %554 = vrot.lane.b32.xlu0 %v245, 64
      %v555 = vpop.permute.xlu0 %554
      %556 = vrot.lane.b32.xlu0 %v246, 64
      %v557 = vpop.permute.xlu0 %556
      %558 = vrot.lane.b32.xlu0 %v247, 64
      %v559 = vpop.permute.xlu0 %558
      %560 = vrot.lane.b32.xlu0 %v248, 64
      %v561 = vpop.permute.xlu0 %560
      %562 = vrot.lane.b32.xlu0 %v249, 64
      %v563 = vpop.permute.xlu0 %562
      %564 = vrot.lane.b32.xlu0 %v250, 64
      %v565 = vpop.permute.xlu0 %564
      %566 = vrot.lane.b32.xlu0 %v251, 64
      %v567 = vpop.permute.xlu0 %566
      %568 = vrot.lane.b32.xlu0 %v252, 64
      %v569 = vpop.permute.xlu0 %568
      %570 = vrot.lane.b32.xlu0 %v253, 64
      %v571 = vpop.permute.xlu0 %570
      %572 = vrot.lane.b32.xlu0 %v254, 64
      %v573 = vpop.permute.xlu0 %572
      %574 = vrot.lane.b32.xlu0 %v255, 64
      %v575 = vpop.permute.xlu0 %574
      %576 = vrot.lane.b32.xlu0 %v256, 64
      %v577 = vpop.permute.xlu0 %576
      %578 = vrot.lane.b32.xlu0 %v257, 64
      %v579 = vpop.permute.xlu0 %578
      %580 = vrot.lane.b32.xlu0 %v258, 64
      %v581 = vpop.permute.xlu0 %580
      %582 = vrot.lane.b32.xlu0 %v259, 64
      %v583 = vpop.permute.xlu0 %582
      %584 = vrot.lane.b32.xlu0 %v260, 64
      %v585 = vpop.permute.xlu0 %584
      %586 = vrot.lane.b32.xlu0 %v261, 64
      %v587 = vpop.permute.xlu0 %586
      %652 = vrot.lane.b32.xlu0 %v297, 64
      %v653 = vpop.permute.xlu0 %652
      %654 = vrot.lane.b32.xlu0 %v298, 64
      %v655 = vpop.permute.xlu0 %654
      %656 = vrot.lane.b32.xlu0 %v299, 64
      %v657 = vpop.permute.xlu0 %656
      %658 = vrot.lane.b32.xlu0 %v300, 64
      %v659 = vpop.permute.xlu0 %658
      %660 = vrot.lane.b32.xlu0 %v301, 64
      %v661 = vpop.permute.xlu0 %660
      %662 = vrot.lane.b32.xlu0 %v302, 64
      %v663 = vpop.permute.xlu0 %662
      %664 = vrot.lane.b32.xlu0 %v303, 64
      %v665 = vpop.permute.xlu0 %664
      %666 = vrot.lane.b32.xlu0 %v304, 64
      %v667 = vpop.permute.xlu0 %666
      %668 = vrot.lane.b32.xlu0 %v305, 64
      %v669 = vpop.permute.xlu0 %668
      %670 = vrot.lane.b32.xlu0 %v306, 64
      %v671 = vpop.permute.xlu0 %670
      %672 = vrot.lane.b32.xlu0 %v307, 64
      %v673 = vpop.permute.xlu0 %672
      %674 = vrot.lane.b32.xlu0 %v308, 64
      %v675 = vpop.permute.xlu0 %674
      %676 = vrot.lane.b32.xlu0 %v309, 64
      %v677 = vpop.permute.xlu0 %676
      %678 = vrot.lane.b32.xlu0 %v310, 64
      %v679 = vpop.permute.xlu0 %678
      %680 = vrot.lane.b32.xlu0 %v311, 64
      %v681 = vpop.permute.xlu0 %680
      %682 = vrot.lane.b32.xlu0 %v312, 64
      %v683 = vpop.permute.xlu0 %682
      %684 = vrot.lane.b32.xlu0 %v313, 64
      %v685 = vpop.permute.xlu0 %684
      %686 = vrot.lane.b32.xlu0 %v314, 64
      %v687 = vpop.permute.xlu0 %686
      %688 = vrot.lane.b32.xlu0 %v315, 64
      %v689 = vpop.permute.xlu0 %688
      %690 = vrot.lane.b32.xlu0 %v316, 64
      %v691 = vpop.permute.xlu0 %690
      %692 = vrot.lane.b32.xlu0 %v317, 64
      %v693 = vpop.permute.xlu0 %692
      %694 = vrot.lane.b32.xlu0 %v318, 64
      %v695 = vpop.permute.xlu0 %694
      %696 = vrot.lane.b32.xlu0 %v319, 64
      %v697 = vpop.permute.xlu0 %696
      %698 = vrot.lane.b32.xlu0 %v320, 64
      %v699 = vpop.permute.xlu0 %698
      %700 = vrot.lane.b32.xlu0 %v321, 64
      %v701 = vpop.permute.xlu0 %700
      %702 = vrot.lane.b32.xlu0 %v322, 64
      %v703 = vpop.permute.xlu0 %702
      %704 = vrot.lane.b32.xlu0 %v323, 64
      %v705 = vpop.permute.xlu0 %704
      %706 = vrot.lane.b32.xlu0 %v324, 64
      %v707 = vpop.permute.xlu0 %706
      %708 = vrot.lane.b32.xlu0 %v325, 64
      %v709 = vpop.permute.xlu0 %708
      %710 = vrot.lane.b32.xlu0 %v326, 64
      %v711 = vpop.permute.xlu0 %710
      %712 = vrot.lane.b32.xlu0 %v327, 64
      %v713 = vpop.permute.xlu0 %712
      %714 = vrot.lane.b32.xlu0 %v328, 64
      %v715 = vpop.permute.xlu0 %714
      %780 = vrot.lane.b32.xlu0 %v361, 64
      %v781 = vpop.permute.xlu0 %780
      %782 = vrot.lane.b32.xlu0 %v362, 64
      %v783 = vpop.permute.xlu0 %782
      %784 = vrot.lane.b32.xlu0 %v363, 64
      %v785 = vpop.permute.xlu0 %784
      %786 = vrot.lane.b32.xlu0 %v364, 64
      %v787 = vpop.permute.xlu0 %786
      %788 = vrot.lane.b32.xlu0 %v365, 64
      %v789 = vpop.permute.xlu0 %788
      %790 = vrot.lane.b32.xlu0 %v366, 64
      %v791 = vpop.permute.xlu0 %790
      %792 = vrot.lane.b32.xlu0 %v367, 64
      %v793 = vpop.permute.xlu0 %792
      %794 = vrot.lane.b32.xlu0 %v368, 64
      %v795 = vpop.permute.xlu0 %794
      %796 = vrot.lane.b32.xlu0 %v369, 64
      %v797 = vpop.permute.xlu0 %796
      %798 = vrot.lane.b32.xlu0 %v370, 64
      %v799 = vpop.permute.xlu0 %798
      %800 = vrot.lane.b32.xlu0 %v371, 64
      %v801 = vpop.permute.xlu0 %800
      %802 = vrot.lane.b32.xlu0 %v372, 64
      %v803 = vpop.permute.xlu0 %802
      %804 = vrot.lane.b32.xlu0 %v373, 64
      %v805 = vpop.permute.xlu0 %804
      %806 = vrot.lane.b32.xlu0 %v374, 64
      %v807 = vpop.permute.xlu0 %806
      %808 = vrot.lane.b32.xlu0 %v375, 64
      %v809 = vpop.permute.xlu0 %808
      %810 = vrot.lane.b32.xlu0 %v376, 64
      %v811 = vpop.permute.xlu0 %810
      %812 = vrot.lane.b32.xlu0 %v377, 64
      %v813 = vpop.permute.xlu0 %812
      %814 = vrot.lane.b32.xlu0 %v378, 64
      %v815 = vpop.permute.xlu0 %814
      %816 = vrot.lane.b32.xlu0 %v379, 64
      %v817 = vpop.permute.xlu0 %816
      %818 = vrot.lane.b32.xlu0 %v380, 64
      %v819 = vpop.permute.xlu0 %818
      %820 = vrot.lane.b32.xlu0 %v381, 64
      %v821 = vpop.permute.xlu0 %820
      %822 = vrot.lane.b32.xlu0 %v382, 64
      %v823 = vpop.permute.xlu0 %822
      %824 = vrot.lane.b32.xlu0 %v383, 64
      %v825 = vpop.permute.xlu0 %824
      %826 = vrot.lane.b32.xlu0 %v384, 64
      %v827 = vpop.permute.xlu0 %826
      %828 = vrot.lane.b32.xlu0 %v385, 64
      %v829 = vpop.permute.xlu0 %828
      %830 = vrot.lane.b32.xlu0 %v386, 64
      %v831 = vpop.permute.xlu0 %830
      %832 = vrot.lane.b32.xlu0 %v387, 64
      %v833 = vpop.permute.xlu0 %832
      %834 = vrot.lane.b32.xlu0 %v388, 64
      %v835 = vpop.permute.xlu0 %834
      %836 = vrot.lane.b32.xlu0 %v389, 64
      %v837 = vpop.permute.xlu0 %836
      %838 = vrot.lane.b32.xlu0 %v390, 64
      %v839 = vpop.permute.xlu0 %838
      %840 = vrot.lane.b32.xlu0 %v391, 64
      %v841 = vpop.permute.xlu0 %840
      %842 = vrot.lane.b32.xlu0 %v392, 64
      %v843 = vpop.permute.xlu0 %842
      %908 = vrot.lane.b32.xlu0 %v428, 64
      %v909 = vpop.permute.xlu0 %908
      %910 = vrot.lane.b32.xlu0 %v429, 64
      %v911 = vpop.permute.xlu0 %910
      %912 = vrot.lane.b32.xlu0 %v430, 64
      %v913 = vpop.permute.xlu0 %912
      %914 = vrot.lane.b32.xlu0 %v431, 64
      %v915 = vpop.permute.xlu0 %914
      %916 = vrot.lane.b32.xlu0 %v432, 64
      %v917 = vpop.permute.xlu0 %916
      %918 = vrot.lane.b32.xlu0 %v433, 64
      %v919 = vpop.permute.xlu0 %918
      %920 = vrot.lane.b32.xlu0 %v434, 64
      %v921 = vpop.permute.xlu0 %920
      %922 = vrot.lane.b32.xlu0 %v435, 64
      %v923 = vpop.permute.xlu0 %922
      %924 = vrot.lane.b32.xlu0 %v436, 64
      %v925 = vpop.permute.xlu0 %924
      %926 = vrot.lane.b32.xlu0 %v437, 64
      %v927 = vpop.permute.xlu0 %926
      %928 = vrot.lane.b32.xlu0 %v438, 64
      %v929 = vpop.permute.xlu0 %928
      %930 = vrot.lane.b32.xlu0 %v439, 64
      %v931 = vpop.permute.xlu0 %930
      %932 = vrot.lane.b32.xlu0 %v440, 64
      %v933 = vpop.permute.xlu0 %932
      %934 = vrot.lane.b32.xlu0 %v441, 64
      %v935 = vpop.permute.xlu0 %934
      %936 = vrot.lane.b32.xlu0 %v442, 64
      %v937 = vpop.permute.xlu0 %936
      %938 = vrot.lane.b32.xlu0 %v443, 64
      %v939 = vpop.permute.xlu0 %938
      %940 = vrot.lane.b32.xlu0 %v444, 64
      %v941 = vpop.permute.xlu0 %940
      %942 = vrot.lane.b32.xlu0 %v445, 64
      %v943 = vpop.permute.xlu0 %942
      %944 = vrot.lane.b32.xlu0 %v446, 64
      %v945 = vpop.permute.xlu0 %944
      %946 = vrot.lane.b32.xlu0 %v447, 64
      %v947 = vpop.permute.xlu0 %946
      %948 = vrot.lane.b32.xlu0 %v448, 64
      %v949 = vpop.permute.xlu0 %948
      %950 = vrot.lane.b32.xlu0 %v449, 64
      %v951 = vpop.permute.xlu0 %950
      %952 = vrot.lane.b32.xlu0 %v450, 64
      %v953 = vpop.permute.xlu0 %952
      %954 = vrot.lane.b32.xlu0 %v451, 64
      %v955 = vpop.permute.xlu0 %954
      %956 = vrot.lane.b32.xlu0 %v452, 64
      %v957 = vpop.permute.xlu0 %956
      %958 = vrot.lane.b32.xlu0 %v453, 64
      %v959 = vpop.permute.xlu0 %958
      %960 = vrot.lane.b32.xlu0 %v454, 64
      %v961 = vpop.permute.xlu0 %960
      %962 = vrot.lane.b32.xlu0 %v455, 64
      %v963 = vpop.permute.xlu0 %962
      %964 = vrot.lane.b32.xlu0 %v456, 64
      %v965 = vpop.permute.xlu0 %964
      %966 = vrot.lane.b32.xlu0 %v457, 64
      %v967 = vpop.permute.xlu0 %966
      %968 = vrot.lane.b32.xlu0 %v458, 64
      %v969 = vpop.permute.xlu0 %968
      %970 = vrot.lane.b32.xlu0 %v459, 64
      %v971 = vpop.permute.xlu0 %970
      %vm1004 = vcmask 523264
      %v1005 = vsel %vm1004, %v198, %v525
      %v1006 = vsel %vm1004, %v199, %v527
      %v1007 = vsel %vm1004, %v200, %v529
      %v1008 = vsel %vm1004, %v201, %v531
      %v1009 = vsel %vm1004, %v202, %v533
      %v1010 = vsel %vm1004, %v203, %v535
      %v1011 = vsel %vm1004, %v204, %v537
      %v1012 = vsel %vm1004, %v205, %v539
      %v1013 = vsel %vm1004, %v206, %v541
      %v1014 = vsel %vm1004, %v207, %v543
      %v1015 = vsel %vm1004, %v208, %v545
      %v1016 = vsel %vm1004, %v209, %v547
      %v1017 = vsel %vm1004, %v210, %v549
      %v1018 = vsel %vm1004, %v211, %v551
      %v1019 = vsel %vm1004, %v212, %v553
      %v1020 = vsel %vm1004, %v213, %v555
      %v1021 = vsel %vm1004, %v214, %v557
      %v1022 = vsel %vm1004, %v215, %v559
      %v1023 = vsel %vm1004, %v216, %v561
      %v1024 = vsel %vm1004, %v217, %v563
      %v1025 = vsel %vm1004, %v218, %v565
      %v1026 = vsel %vm1004, %v219, %v567
      %v1027 = vsel %vm1004, %v220, %v569
      %v1028 = vsel %vm1004, %v221, %v571
      %v1029 = vsel %vm1004, %v222, %v573
      %v1030 = vsel %vm1004, %v223, %v575
      %v1031 = vsel %vm1004, %v224, %v577
      %v1032 = vsel %vm1004, %v225, %v579
      %v1033 = vsel %vm1004, %v226, %v581
      %v1034 = vsel %vm1004, %v227, %v583
      %v1035 = vsel %vm1004, %v228, %v585
      %v1036 = vsel %vm1004, %v229, %v587
      %v1037 = vsel %vm1004, %v262, %v653
      %v1038 = vsel %vm1004, %v263, %v655
      %v1039 = vsel %vm1004, %v264, %v657
      %v1040 = vsel %vm1004, %v265, %v659
      %v1041 = vsel %vm1004, %v266, %v661
      %v1042 = vsel %vm1004, %v267, %v663
      %v1043 = vsel %vm1004, %v268, %v665
      %v1044 = vsel %vm1004, %v269, %v667
      %v1045 = vsel %vm1004, %v270, %v669
      %v1046 = vsel %vm1004, %v271, %v671
      %v1047 = vsel %vm1004, %v272, %v673
      %v1048 = vsel %vm1004, %v273, %v675
      %v1049 = vsel %vm1004, %v274, %v677
      %v1050 = vsel %vm1004, %v275, %v679
      %v1051 = vsel %vm1004, %v276, %v681
      %v1052 = vsel %vm1004, %v277, %v683
      %v1053 = vsel %vm1004, %v278, %v685
      %v1054 = vsel %vm1004, %v279, %v687
      %v1055 = vsel %vm1004, %v280, %v689
      %v1056 = vsel %vm1004, %v281, %v691
      %v1057 = vsel %vm1004, %v282, %v693
      %v1058 = vsel %vm1004, %v283, %v695
      %v1059 = vsel %vm1004, %v284, %v697
      %v1060 = vsel %vm1004, %v285, %v699
      %v1061 = vsel %vm1004, %v286, %v701
      %v1062 = vsel %vm1004, %v287, %v703
      %v1063 = vsel %vm1004, %v288, %v705
      %v1064 = vsel %vm1004, %v289, %v707
      %v1065 = vsel %vm1004, %v290, %v709
      %v1066 = vsel %vm1004, %v291, %v711
      %v1067 = vsel %vm1004, %v292, %v713
      %v1068 = vsel %vm1004, %v293, %v715
      %v1069 = vsel %vm1004, %v329, %v781
      %v1070 = vsel %vm1004, %v330, %v783
      %v1071 = vsel %vm1004, %v331, %v785
      %v1072 = vsel %vm1004, %v332, %v787
      %v1073 = vsel %vm1004, %v333, %v789
      %v1074 = vsel %vm1004, %v334, %v791
      %v1075 = vsel %vm1004, %v335, %v793
      %v1076 = vsel %vm1004, %v336, %v795
      %v1077 = vsel %vm1004, %v337, %v797
      %v1078 = vsel %vm1004, %v338, %v799
      %v1079 = vsel %vm1004, %v339, %v801
      %v1080 = vsel %vm1004, %v340, %v803
      %v1081 = vsel %vm1004, %v341, %v805
      %v1082 = vsel %vm1004, %v342, %v807
      %v1083 = vsel %vm1004, %v343, %v809
      %v1084 = vsel %vm1004, %v344, %v811
      %v1085 = vsel %vm1004, %v345, %v813
      %v1086 = vsel %vm1004, %v346, %v815
      %v1087 = vsel %vm1004, %v347, %v817
      %v1088 = vsel %vm1004, %v348, %v819
      %v1089 = vsel %vm1004, %v349, %v821
      %v1090 = vsel %vm1004, %v350, %v823
      %v1091 = vsel %vm1004, %v351, %v825
      %v1092 = vsel %vm1004, %v352, %v827
      %v1093 = vsel %vm1004, %v353, %v829
      %v1094 = vsel %vm1004, %v354, %v831
      %v1095 = vsel %vm1004, %v355, %v833
      %v1096 = vsel %vm1004, %v356, %v835
      %v1097 = vsel %vm1004, %v357, %v837
      %v1098 = vsel %vm1004, %v358, %v839
      %v1099 = vsel %vm1004, %v359, %v841
      %v1100 = vsel %vm1004, %v360, %v843
      %v1101 = vsel %vm1004, %v396, %v909
      %v1102 = vsel %vm1004, %v397, %v911
      %v1103 = vsel %vm1004, %v398, %v913
      %v1104 = vsel %vm1004, %v399, %v915
      %v1105 = vsel %vm1004, %v400, %v917
      %v1106 = vsel %vm1004, %v401, %v919
      %v1107 = vsel %vm1004, %v402, %v921
      %v1108 = vsel %vm1004, %v403, %v923
      %v1109 = vsel %vm1004, %v404, %v925
      %v1110 = vsel %vm1004, %v405, %v927
      %v1111 = vsel %vm1004, %v406, %v929
      %v1112 = vsel %vm1004, %v407, %v931
      %v1113 = vsel %vm1004, %v408, %v933
      %v1114 = vsel %vm1004, %v409, %v935
      %v1115 = vsel %vm1004, %v410, %v937
      %v1116 = vsel %vm1004, %v411, %v939
      %v1117 = vsel %vm1004, %v412, %v941
      %v1118 = vsel %vm1004, %v413, %v943
      %v1119 = vsel %vm1004, %v414, %v945
      %v1120 = vsel %vm1004, %v415, %v947
      %v1121 = vsel %vm1004, %v416, %v949
      %v1122 = vsel %vm1004, %v417, %v951
      %v1123 = vsel %vm1004, %v418, %v953
      %v1124 = vsel %vm1004, %v419, %v955
      %v1125 = vsel %vm1004, %v420, %v957
      %v1126 = vsel %vm1004, %v421, %v959
      %v1127 = vsel %vm1004, %v422, %v961
      %v1128 = vsel %vm1004, %v423, %v963
      %v1129 = vsel %vm1004, %v424, %v965
      %v1130 = vsel %vm1004, %v425, %v967
      %v1131 = vsel %vm1004, %v426, %v969
      %v1132 = vsel %vm1004, %v427, %v971
      %v1133 = vpack.c.bf16 %v1006, %v1005
      %v1134 = vpack.c.bf16 %v1038, %v1037
      %v1135 = vpack.c.bf16 %v1070, %v1069
      %v1136 = vpack.c.bf16 %v1102, %v1101
      %v1137 = vpack.c.bf16 %v461, %v460
      %v1138 = vpack.c.bf16 %v1008, %v1007
      %v1139 = vpack.c.bf16 %v1040, %v1039
      %v1140 = vpack.c.bf16 %v1072, %v1071
      %v1141 = vpack.c.bf16 %v1104, %v1103
      %v1142 = vpack.c.bf16 %v463, %v462
      %v1143 = vpack.c.bf16 %v1010, %v1009
      %v1144 = vpack.c.bf16 %v1042, %v1041
      %v1145 = vpack.c.bf16 %v1074, %v1073
      %v1146 = vpack.c.bf16 %v1106, %v1105
      %v1147 = vpack.c.bf16 %v465, %v464
      %v1148 = vpack.c.bf16 %v1012, %v1011
      %v1149 = vpack.c.bf16 %v1044, %v1043
      %v1150 = vpack.c.bf16 %v1076, %v1075
      %v1151 = vpack.c.bf16 %v1108, %v1107
      %v1152 = vpack.c.bf16 %v467, %v466
      %v1153 = vpack.c.bf16 %v1014, %v1013
      %v1154 = vpack.c.bf16 %v1046, %v1045
      %v1155 = vpack.c.bf16 %v1078, %v1077
      %v1156 = vpack.c.bf16 %v1110, %v1109
      %v1157 = vpack.c.bf16 %v469, %v468
      %v1158 = vpack.c.bf16 %v1016, %v1015
      %v1159 = vpack.c.bf16 %v1048, %v1047
      %v1160 = vpack.c.bf16 %v1080, %v1079
      %v1161 = vpack.c.bf16 %v1112, %v1111
      %v1162 = vpack.c.bf16 %v471, %v470
      %v1163 = vpack.c.bf16 %v1018, %v1017
      %v1164 = vpack.c.bf16 %v1050, %v1049
      %v1165 = vpack.c.bf16 %v1082, %v1081
      %v1166 = vpack.c.bf16 %v1114, %v1113
      %v1167 = vpack.c.bf16 %v473, %v472
      %v1168 = vpack.c.bf16 %v1020, %v1019
      %v1169 = vpack.c.bf16 %v1052, %v1051
      %v1170 = vpack.c.bf16 %v1084, %v1083
      %v1171 = vpack.c.bf16 %v1116, %v1115
      %v1172 = vpack.c.bf16 %v475, %v474
      %v1173 = vpack.c.bf16 %v1022, %v1021
      %v1174 = vpack.c.bf16 %v1054, %v1053
      %v1175 = vpack.c.bf16 %v1086, %v1085
      %v1176 = vpack.c.bf16 %v1118, %v1117
      %v1177 = vpack.c.bf16 %v477, %v476
      %v1178 = vpack.c.bf16 %v1024, %v1023
      %v1179 = vpack.c.bf16 %v1056, %v1055
      %v1180 = vpack.c.bf16 %v1088, %v1087
      %v1181 = vpack.c.bf16 %v1120, %v1119
      %v1182 = vpack.c.bf16 %v479, %v478
      %v1183 = vpack.c.bf16 %v1026, %v1025
      %v1184 = vpack.c.bf16 %v1058, %v1057
      %v1185 = vpack.c.bf16 %v1090, %v1089
      %v1186 = vpack.c.bf16 %v1122, %v1121
      %v1187 = vpack.c.bf16 %v481, %v480
      %v1188 = vpack.c.bf16 %v1028, %v1027
      %v1189 = vpack.c.bf16 %v1060, %v1059
      %v1190 = vpack.c.bf16 %v1092, %v1091
      %v1191 = vpack.c.bf16 %v1124, %v1123
      %v1192 = vpack.c.bf16 %v483, %v482
      %v1193 = vpack.c.bf16 %v1030, %v1029
      %v1194 = vpack.c.bf16 %v1062, %v1061
      %v1195 = vpack.c.bf16 %v1094, %v1093
      %v1196 = vpack.c.bf16 %v1126, %v1125
      %v1197 = vpack.c.bf16 %v485, %v484
      %v1198 = vpack.c.bf16 %v1032, %v1031
      %v1199 = vpack.c.bf16 %v1064, %v1063
      %v1200 = vpack.c.bf16 %v1096, %v1095
      %v1201 = vpack.c.bf16 %v1128, %v1127
      %v1202 = vpack.c.bf16 %v487, %v486
      %v1203 = vpack.c.bf16 %v1034, %v1033
      %v1204 = vpack.c.bf16 %v1066, %v1065
      %v1205 = vpack.c.bf16 %v1098, %v1097
      %v1206 = vpack.c.bf16 %v1130, %v1129
      %v1207 = vpack.c.bf16 %v489, %v488
      %v1208 = vpack.c.bf16 %v1036, %v1035
      %v1209 = vpack.c.bf16 %v1068, %v1067
      %v1210 = vpack.c.bf16 %v1100, %v1099
      %v1211 = vpack.c.bf16 %v1132, %v1131
      %v1212 = vpack.c.bf16 %v491, %v490
      %v1213 = vld [vmem:[%s1] sm:$0xf]
      %v1214 = vld [vmem:[%s1 + $0x4] sm:$0xf]
      %v1215 = vld [vmem:[%s1 + $0x8] sm:$0xf]
      %v1216 = vld [vmem:[%s1 + $0xc] sm:$0xf]
      %v1217 = vld [vmem:[%s1 + $0x10] sm:$0xf]
      %v1218 = vld [vmem:[%s1 + $0x14] sm:$0xf]
      %v1219 = vld [vmem:[%s1 + $0x18] sm:$0xf]
      %v1220 = vld [vmem:[%s1 + $0x1c] sm:$0xf]
      %v1221 = vld [vmem:[%s1 + $0x20] sm:$0xf]
      %v1222 = vld [vmem:[%s1 + $0x24] sm:$0xf]
      %v1223 = vld [vmem:[%s1 + $0x28] sm:$0xf]
      %v1224 = vld [vmem:[%s1 + $0x2c] sm:$0xf]
      %v1225 = vld [vmem:[%s1 + $0x30] sm:$0xf]
      %v1226 = vld [vmem:[%s1 + $0x34] sm:$0xf]
      %v1227 = vld [vmem:[%s1 + $0x38] sm:$0xf]
      %v1228 = vld [vmem:[%s1 + $0x3c] sm:$0xf]
      %v1229 = vld [vmem:[%s1 + $0x40] sm:$0xf]
      %v1230 = vld [vmem:[%s1 + $0x44] sm:$0xf]
      %v1231 = vld [vmem:[%s1 + $0x48] sm:$0xf]
      %v1232 = vld [vmem:[%s1 + $0x4c] sm:$0xf]
      %v1233 = vld [vmem:[%s1 + $0x50] sm:$0xf]
      %v1234 = vld [vmem:[%s1 + $0x54] sm:$0xf]
      %v1235 = vld [vmem:[%s1 + $0x58] sm:$0xf]
      %v1236 = vld [vmem:[%s1 + $0x5c] sm:$0xf]
      %v1237 = vld [vmem:[%s1 + $0x60] sm:$0xf]
      %v1238 = vld [vmem:[%s1 + $0x64] sm:$0xf]
      %v1239 = vld [vmem:[%s1 + $0x68] sm:$0xf]
      %v1240 = vld [vmem:[%s1 + $0x6c] sm:$0xf]
      %v1241 = vld [vmem:[%s1 + $0x70] sm:$0xf]
      %v1242 = vld [vmem:[%s1 + $0x74] sm:$0xf]
      %v1243 = vld [vmem:[%s1 + $0x78] sm:$0xf]
      %v1244 = vld [vmem:[%s1 + $0x7c] sm:$0xf]
      %v1245 = vld [vmem:[%s1 + $0x80] sm:$0xf]
      %v1246 = vld [vmem:[%s1 + $0x84] sm:$0xf]
      %v1247 = vld [vmem:[%s1 + $0x88] sm:$0xf]
      %v1248 = vld [vmem:[%s1 + $0x8c] sm:$0xf]
      %v1249 = vld [vmem:[%s1 + $0x90] sm:$0xf]
      %v1250 = vld [vmem:[%s1 + $0x94] sm:$0xf]
      %v1251 = vld [vmem:[%s1 + $0x98] sm:$0xf]
      %v1252 = vld [vmem:[%s1 + $0x9c] sm:$0xf]
      %v1253 = vld [vmem:[%s1 + $0xa0] sm:$0xf]
      %v1254 = vld [vmem:[%s1 + $0xa4] sm:$0xf]
      %v1255 = vld [vmem:[%s1 + $0xa8] sm:$0xf]
      %v1256 = vld [vmem:[%s1 + $0xac] sm:$0xf]
      %v1257 = vld [vmem:[%s1 + $0xb0] sm:$0xf]
      %v1258 = vld [vmem:[%s1 + $0xb4] sm:$0xf]
      %v1259 = vld [vmem:[%s1 + $0xb8] sm:$0xf]
      %v1260 = vld [vmem:[%s1 + $0xbc] sm:$0xf]
      %v1261 = vld [vmem:[%s1 + $0xc0] sm:$0xf]
      %v1262 = vld [vmem:[%s1 + $0xc4] sm:$0xf]
      %v1263 = vld [vmem:[%s1 + $0xc8] sm:$0xf]
      %v1264 = vld [vmem:[%s1 + $0xcc] sm:$0xf]
      %v1265 = vld [vmem:[%s1 + $0xd0] sm:$0xf]
      %v1266 = vld [vmem:[%s1 + $0xd4] sm:$0xf]
      %v1267 = vld [vmem:[%s1 + $0xd8] sm:$0xf]
      %v1268 = vld [vmem:[%s1 + $0xdc] sm:$0xf]
      %v1269 = vld [vmem:[%s1 + $0xe0] sm:$0xf]
      %v1270 = vld [vmem:[%s1 + $0xe4] sm:$0xf]
      %v1271 = vld [vmem:[%s1 + $0xe8] sm:$0xf]
      %v1272 = vld [vmem:[%s1 + $0xec] sm:$0xf]
      %v1273 = vld [vmem:[%s1 + $0xf0] sm:$0xf]
      %v1274 = vld [vmem:[%s1 + $0xf4] sm:$0xf]
      %v1275 = vld [vmem:[%s1 + $0xf8] sm:$0xf]
      %v1276 = vld [vmem:[%s1 + $0xfc] sm:$0xf]
      %v1277 = vld [vmem:[%s1 + $0x100] sm:$0xf]
      %v1278 = vld [vmem:[%s1 + $0x104] sm:$0xf]
      %v1279 = vld [vmem:[%s1 + $0x108] sm:$0xf]
      %v1280 = vld [vmem:[%s1 + $0x10c] sm:$0xf]
      %v1281 = vld [vmem:[%s1 + $0x110] sm:$0xf]
      %v1282 = vld [vmem:[%s1 + $0x114] sm:$0xf]
      %v1283 = vld [vmem:[%s1 + $0x118] sm:$0xf]
      %v1284 = vld [vmem:[%s1 + $0x11c] sm:$0xf]
      %v1285 = vld [vmem:[%s2] sm:$0x1]
      %v1287 = vperm.slane %v1285, 0
      %v1361 = vunpack.c.l.b16 %v1213
      %v1362 = vunpack.c.l.b16 %v1214
      %v1363 = vunpack.c.l.b16 %v1215
      %v1364 = vunpack.c.l.b16 %v1216
      %v1365 = vunpack.c.l.b16 %v1217
      %v1366 = vunpack.c.l.b16 %v1218
      %v1367 = vunpack.c.l.b16 %v1219
      %v1368 = vunpack.c.l.b16 %v1220
      %v1369 = vunpack.c.l.b16 %v1221
      %v1370 = vunpack.c.l.b16 %v1222
      %v1371 = vunpack.c.l.b16 %v1223
      %v1372 = vunpack.c.l.b16 %v1224
      %v1373 = vunpack.c.l.b16 %v1225
      %v1374 = vunpack.c.l.b16 %v1226
      %v1375 = vunpack.c.l.b16 %v1227
      %v1376 = vunpack.c.l.b16 %v1228
      %v1377 = vunpack.c.l.b16 %v1229
      %v1378 = vunpack.c.l.b16 %v1230
      %v1379 = vunpack.c.l.b16 %v1231
      %v1380 = vunpack.c.l.b16 %v1232
      %v1381 = vunpack.c.l.b16 %v1233
      %v1382 = vunpack.c.l.b16 %v1234
      %v1383 = vunpack.c.l.b16 %v1235
      %v1384 = vunpack.c.l.b16 %v1236
      %v1385 = vunpack.c.l.b16 %v1237
      %v1386 = vunpack.c.l.b16 %v1238
      %v1387 = vunpack.c.l.b16 %v1239
      %v1388 = vunpack.c.l.b16 %v1240
      %v1389 = vunpack.c.l.b16 %v1241
      %v1390 = vunpack.c.l.b16 %v1242
      %v1391 = vunpack.c.l.b16 %v1243
      %v1392 = vunpack.c.l.b16 %v1244
      %v1393 = vunpack.c.l.b16 %v1245
      %v1394 = vunpack.c.l.b16 %v1246
      %v1395 = vunpack.c.l.b16 %v1247
      %v1396 = vunpack.c.l.b16 %v1248
      %v1397 = vunpack.c.l.b16 %v1249
      %v1398 = vunpack.c.l.b16 %v1250
      %v1399 = vunpack.c.l.b16 %v1251
      %v1400 = vunpack.c.l.b16 %v1252
      %v1401 = vunpack.c.l.b16 %v1253
      %v1402 = vunpack.c.l.b16 %v1254
      %v1403 = vunpack.c.l.b16 %v1255
      %v1404 = vunpack.c.l.b16 %v1256
      %v1405 = vunpack.c.l.b16 %v1257
      %v1406 = vunpack.c.l.b16 %v1258
      %v1407 = vunpack.c.l.b16 %v1259
      %v1408 = vunpack.c.l.b16 %v1260
      %v1409 = vunpack.c.l.b16 %v1261
      %v1410 = vunpack.c.l.b16 %v1262
      %v1411 = vunpack.c.l.b16 %v1263
      %v1412 = vunpack.c.l.b16 %v1264
      %v1413 = vunpack.c.l.b16 %v1265
      %v1414 = vunpack.c.l.b16 %v1266
      %v1415 = vunpack.c.l.b16 %v1267
      %v1416 = vunpack.c.l.b16 %v1268
      %v1417 = vunpack.c.l.b16 %v1269
      %v1418 = vunpack.c.l.b16 %v1270
      %v1419 = vunpack.c.l.b16 %v1271
      %v1420 = vunpack.c.l.b16 %v1272
      %v1421 = vunpack.c.l.b16 %v1273
      %v1422 = vunpack.c.l.b16 %v1274
      %v1423 = vunpack.c.l.b16 %v1275
      %v1424 = vunpack.c.l.b16 %v1276
      %v1425 = vunpack.c.l.b16 %v1277
      %v1426 = vunpack.c.l.b16 %v1278
      %v1427 = vunpack.c.l.b16 %v1279
      %v1428 = vunpack.c.l.b16 %v1280
      %v1429 = vunpack.c.l.b16 %v1281
      %v1430 = vunpack.c.l.b16 %v1282
      %v1431 = vunpack.c.l.b16 %v1283
      %v1432 = vunpack.c.l.b16 %v1284
      %v1433 = vpack.c.b16 %v1362, %v1361
      %v1434 = vpack.c.b16 %v1364, %v1363
      %v1435 = vpack.c.b16 %v1366, %v1365
      %v1436 = vpack.c.b16 %v1368, %v1367
      %v1437 = vpack.c.b16 %v1370, %v1369
      %v1438 = vpack.c.b16 %v1372, %v1371
      %v1439 = vpack.c.b16 %v1374, %v1373
      %v1440 = vpack.c.b16 %v1376, %v1375
      %v1441 = vpack.c.b16 %v1378, %v1377
      %v1442 = vpack.c.b16 %v1380, %v1379
      %v1443 = vpack.c.b16 %v1382, %v1381
      %v1444 = vpack.c.b16 %v1384, %v1383
      %v1445 = vpack.c.b16 %v1386, %v1385
      %v1446 = vpack.c.b16 %v1388, %v1387
      %v1447 = vpack.c.b16 %v1390, %v1389
      %v1448 = vpack.c.b16 %v1392, %v1391
      %v1449 = vpack.c.b16 %v1394, %v1393
      %v1450 = vpack.c.b16 %v1396, %v1395
      %v1451 = vpack.c.b16 %v1398, %v1397
      %v1452 = vpack.c.b16 %v1400, %v1399
      %v1453 = vpack.c.b16 %v1402, %v1401
      %v1454 = vpack.c.b16 %v1404, %v1403
      %v1455 = vpack.c.b16 %v1406, %v1405
      %v1456 = vpack.c.b16 %v1408, %v1407
      %v1457 = vpack.c.b16 %v1410, %v1409
      %v1458 = vpack.c.b16 %v1412, %v1411
      %v1459 = vpack.c.b16 %v1414, %v1413
      %v1460 = vpack.c.b16 %v1416, %v1415
      %v1461 = vpack.c.b16 %v1418, %v1417
      %v1462 = vpack.c.b16 %v1420, %v1419
      %v1463 = vpack.c.b16 %v1422, %v1421
      %v1464 = vpack.c.b16 %v1424, %v1423
      %v1465 = vpack.c.b16 %v1426, %v1425
      %v1466 = vpack.c.b16 %v1428, %v1427
      %v1467 = vpack.c.b16 %v1430, %v1429
      %v1468 = vpack.c.b16 %v1432, %v1431
      %v1506 = vsel %vm1004, %v1137, 0
      %v1509 = vsel %vm1004, %v1142, 0
      %v1512 = vsel %vm1004, %v1147, 0
      %v1515 = vsel %vm1004, %v1152, 0
      %v1518 = vsel %vm1004, %v1157, 0
      %v1521 = vsel %vm1004, %v1162, 0
      %v1524 = vsel %vm1004, %v1167, 0
      %v1527 = vsel %vm1004, %v1172, 0
      %v1530 = vsel %vm1004, %v1177, 0
      %v1533 = vsel %vm1004, %v1182, 0
      %v1536 = vsel %vm1004, %v1187, 0
      %v1539 = vsel %vm1004, %v1192, 0
      %v1542 = vsel %vm1004, %v1197, 0
      %v1545 = vsel %vm1004, %v1202, 0
      %v1548 = vsel %vm1004, %v1207, 0
      %v1551 = vsel %vm1004, %v1212, 0
      %1553 = vmatpush.bf16.msra.mxu0 %v1440
      %1554 = vmatpush.bf16.msra.mxu0 %v1439
      %1555 = vmatpush.bf16.msra.mxu0 %v1438
      %1556 = vmatpush.bf16.msra.mxu0 %v1437
      %1557 = vmatpush.bf16.msra.mxu0 %v1436
      %1558 = vmatpush.bf16.msra.mxu0 %v1435
      %1559 = vmatpush.bf16.msra.mxu0 %v1434
      %1560 = vmatpush.bf16.msra.mxu0 %v1433
      %1561 = vmatmul.bf16.gmra.mxu0 %v1133
      %v1562 = vpop.f32.mrf.mxu0
      %v1563 = vadd.f32 %v1287, %v1562
      %v1564 = vpop.f32.mrf.mxu0
      %v1565 = vadd.f32 %v1287, %v1564
      %1566 = vmatmul.bf16.gmra.mxu0 %v1138
      %v1567 = vpop.f32.mrf.mxu0
      %v1568 = vadd.f32 %v1287, %v1567
      %v1569 = vpop.f32.mrf.mxu0
      %v1570 = vadd.f32 %v1287, %v1569
      %1571 = vmatmul.bf16.gmra.mxu0 %v1143
      %v1572 = vpop.f32.mrf.mxu0
      %v1573 = vadd.f32 %v1287, %v1572
      %v1574 = vpop.f32.mrf.mxu0
      %v1575 = vadd.f32 %v1287, %v1574
      %1576 = vmatmul.bf16.gmra.mxu0 %v1148
      %v1577 = vpop.f32.mrf.mxu0
      %v1578 = vadd.f32 %v1287, %v1577
      %v1579 = vpop.f32.mrf.mxu0
      %v1580 = vadd.f32 %v1287, %v1579
      %1581 = vmatmul.bf16.gmra.mxu0 %v1153
      %v1582 = vpop.f32.mrf.mxu0
      %v1583 = vadd.f32 %v1287, %v1582
      %v1584 = vpop.f32.mrf.mxu0
      %v1585 = vadd.f32 %v1287, %v1584
      %1586 = vmatmul.bf16.gmra.mxu0 %v1158
      %v1587 = vpop.f32.mrf.mxu0
      %v1588 = vadd.f32 %v1287, %v1587
      %v1589 = vpop.f32.mrf.mxu0
      %v1590 = vadd.f32 %v1287, %v1589
      %1591 = vmatmul.bf16.gmra.mxu0 %v1163
      %v1592 = vpop.f32.mrf.mxu0
      %v1593 = vadd.f32 %v1287, %v1592
      %v1594 = vpop.f32.mrf.mxu0
      %v1595 = vadd.f32 %v1287, %v1594
      %1596 = vmatmul.bf16.gmra.mxu0 %v1168
      %v1597 = vpop.f32.mrf.mxu0
      %v1598 = vadd.f32 %v1287, %v1597
      %v1599 = vpop.f32.mrf.mxu0
      %v1600 = vadd.f32 %v1287, %v1599
      %1601 = vmatmul.bf16.gmra.mxu0 %v1173
      %v1602 = vpop.f32.mrf.mxu0
      %v1603 = vadd.f32 %v1287, %v1602
      %v1604 = vpop.f32.mrf.mxu0
      %v1605 = vadd.f32 %v1287, %v1604
      %1606 = vmatmul.bf16.gmra.mxu0 %v1178
      %v1607 = vpop.f32.mrf.mxu0
      %v1608 = vadd.f32 %v1287, %v1607
      %v1609 = vpop.f32.mrf.mxu0
      %v1610 = vadd.f32 %v1287, %v1609
      %1611 = vmatmul.bf16.gmra.mxu0 %v1183
      %v1612 = vpop.f32.mrf.mxu0
      %v1613 = vadd.f32 %v1287, %v1612
      %v1614 = vpop.f32.mrf.mxu0
      %v1615 = vadd.f32 %v1287, %v1614
      %1616 = vmatmul.bf16.gmra.mxu0 %v1188
      %v1617 = vpop.f32.mrf.mxu0
      %v1618 = vadd.f32 %v1287, %v1617
      %v1619 = vpop.f32.mrf.mxu0
      %v1620 = vadd.f32 %v1287, %v1619
      %1621 = vmatmul.bf16.gmra.mxu0 %v1193
      %v1622 = vpop.f32.mrf.mxu0
      %v1623 = vadd.f32 %v1287, %v1622
      %v1624 = vpop.f32.mrf.mxu0
      %v1625 = vadd.f32 %v1287, %v1624
      %1626 = vmatmul.bf16.gmra.mxu0 %v1198
      %v1627 = vpop.f32.mrf.mxu0
      %v1628 = vadd.f32 %v1287, %v1627
      %v1629 = vpop.f32.mrf.mxu0
      %v1630 = vadd.f32 %v1287, %v1629
      %1631 = vmatmul.bf16.gmra.mxu0 %v1203
      %v1632 = vpop.f32.mrf.mxu0
      %v1633 = vadd.f32 %v1287, %v1632
      %v1634 = vpop.f32.mrf.mxu0
      %v1635 = vadd.f32 %v1287, %v1634
      %1636 = vmatmul.bf16.gmra.mxu0 %v1208
      %v1637 = vpop.f32.mrf.mxu0
      %v1638 = vadd.f32 %v1287, %v1637
      %v1639 = vpop.f32.mrf.mxu0
      %v1640 = vadd.f32 %v1287, %v1639
      %1641 = vdwg.mxu0
      %1642 = vmatpush.bf16.msra.mxu0 %v1448
      %1643 = vmatpush.bf16.msra.mxu0 %v1447
      %1644 = vmatpush.bf16.msra.mxu0 %v1446
      %1645 = vmatpush.bf16.msra.mxu0 %v1445
      %1646 = vmatpush.bf16.msra.mxu0 %v1444
      %1647 = vmatpush.bf16.msra.mxu0 %v1443
      %1648 = vmatpush.bf16.msra.mxu0 %v1442
      %1649 = vmatpush.bf16.msra.mxu0 %v1441
      %1650 = vmatmul.bf16.gmra.mxu0 %v1134
      %v1651 = vpop.f32.mrf.mxu0
      %v1652 = vadd.f32 %v1563, %v1651
      %v1653 = vpop.f32.mrf.mxu0
      %v1654 = vadd.f32 %v1565, %v1653
      %1655 = vmatmul.bf16.gmra.mxu0 %v1139
      %v1656 = vpop.f32.mrf.mxu0
      %v1657 = vadd.f32 %v1568, %v1656
      %v1658 = vpop.f32.mrf.mxu0
      %v1659 = vadd.f32 %v1570, %v1658
      %1660 = vmatmul.bf16.gmra.mxu0 %v1144
      %v1661 = vpop.f32.mrf.mxu0
      %v1662 = vadd.f32 %v1573, %v1661
      %v1663 = vpop.f32.mrf.mxu0
      %v1664 = vadd.f32 %v1575, %v1663
      %1665 = vmatmul.bf16.gmra.mxu0 %v1149
      %v1666 = vpop.f32.mrf.mxu0
      %v1667 = vadd.f32 %v1578, %v1666
      %v1668 = vpop.f32.mrf.mxu0
      %v1669 = vadd.f32 %v1580, %v1668
      %1670 = vmatmul.bf16.gmra.mxu0 %v1154
      %v1671 = vpop.f32.mrf.mxu0
      %v1672 = vadd.f32 %v1583, %v1671
      %v1673 = vpop.f32.mrf.mxu0
      %v1674 = vadd.f32 %v1585, %v1673
      %1675 = vmatmul.bf16.gmra.mxu0 %v1159
      %v1676 = vpop.f32.mrf.mxu0
      %v1677 = vadd.f32 %v1588, %v1676
      %v1678 = vpop.f32.mrf.mxu0
      %v1679 = vadd.f32 %v1590, %v1678
      %1680 = vmatmul.bf16.gmra.mxu0 %v1164
      %v1681 = vpop.f32.mrf.mxu0
      %v1682 = vadd.f32 %v1593, %v1681
      %v1683 = vpop.f32.mrf.mxu0
      %v1684 = vadd.f32 %v1595, %v1683
      %1685 = vmatmul.bf16.gmra.mxu0 %v1169
      %v1686 = vpop.f32.mrf.mxu0
      %v1687 = vadd.f32 %v1598, %v1686
      %v1688 = vpop.f32.mrf.mxu0
      %v1689 = vadd.f32 %v1600, %v1688
      %1690 = vmatmul.bf16.gmra.mxu0 %v1174
      %v1691 = vpop.f32.mrf.mxu0
      %v1692 = vadd.f32 %v1603, %v1691
      %v1693 = vpop.f32.mrf.mxu0
      %v1694 = vadd.f32 %v1605, %v1693
      %1695 = vmatmul.bf16.gmra.mxu0 %v1179
      %v1696 = vpop.f32.mrf.mxu0
      %v1697 = vadd.f32 %v1608, %v1696
      %v1698 = vpop.f32.mrf.mxu0
      %v1699 = vadd.f32 %v1610, %v1698
      %1700 = vmatmul.bf16.gmra.mxu0 %v1184
      %v1701 = vpop.f32.mrf.mxu0
      %v1702 = vadd.f32 %v1613, %v1701
      %v1703 = vpop.f32.mrf.mxu0
      %v1704 = vadd.f32 %v1615, %v1703
      %1705 = vmatmul.bf16.gmra.mxu0 %v1189
      %v1706 = vpop.f32.mrf.mxu0
      %v1707 = vadd.f32 %v1618, %v1706
      %v1708 = vpop.f32.mrf.mxu0
      %v1709 = vadd.f32 %v1620, %v1708
      %1710 = vmatmul.bf16.gmra.mxu0 %v1194
      %v1711 = vpop.f32.mrf.mxu0
      %v1712 = vadd.f32 %v1623, %v1711
      %v1713 = vpop.f32.mrf.mxu0
      %v1714 = vadd.f32 %v1625, %v1713
      %1715 = vmatmul.bf16.gmra.mxu0 %v1199
      %v1716 = vpop.f32.mrf.mxu0
      %v1717 = vadd.f32 %v1628, %v1716
      %v1718 = vpop.f32.mrf.mxu0
      %v1719 = vadd.f32 %v1630, %v1718
      %1720 = vmatmul.bf16.gmra.mxu0 %v1204
      %v1721 = vpop.f32.mrf.mxu0
      %v1722 = vadd.f32 %v1633, %v1721
      %v1723 = vpop.f32.mrf.mxu0
      %v1724 = vadd.f32 %v1635, %v1723
      %1725 = vmatmul.bf16.gmra.mxu0 %v1209
      %v1726 = vpop.f32.mrf.mxu0
      %v1727 = vadd.f32 %v1638, %v1726
      %v1728 = vpop.f32.mrf.mxu0
      %v1729 = vadd.f32 %v1640, %v1728
      %1730 = vdwg.mxu0
      %1731 = vmatpush.bf16.msra.mxu0 %v1456
      %1732 = vmatpush.bf16.msra.mxu0 %v1455
      %1733 = vmatpush.bf16.msra.mxu0 %v1454
      %1734 = vmatpush.bf16.msra.mxu0 %v1453
      %1735 = vmatpush.bf16.msra.mxu0 %v1452
      %1736 = vmatpush.bf16.msra.mxu0 %v1451
      %1737 = vmatpush.bf16.msra.mxu0 %v1450
      %1738 = vmatpush.bf16.msra.mxu0 %v1449
      %1739 = vmatmul.bf16.gmra.mxu0 %v1135
      %v1740 = vpop.f32.mrf.mxu0
      %v1741 = vadd.f32 %v1652, %v1740
      %v1742 = vpop.f32.mrf.mxu0
      %v1743 = vadd.f32 %v1654, %v1742
      %1744 = vmatmul.bf16.gmra.mxu0 %v1140
      %v1745 = vpop.f32.mrf.mxu0
      %v1746 = vadd.f32 %v1657, %v1745
      %v1747 = vpop.f32.mrf.mxu0
      %v1748 = vadd.f32 %v1659, %v1747
      %1749 = vmatmul.bf16.gmra.mxu0 %v1145
      %v1750 = vpop.f32.mrf.mxu0
      %v1751 = vadd.f32 %v1662, %v1750
      %v1752 = vpop.f32.mrf.mxu0
      %v1753 = vadd.f32 %v1664, %v1752
      %1754 = vmatmul.bf16.gmra.mxu0 %v1150
      %v1755 = vpop.f32.mrf.mxu0
      %v1756 = vadd.f32 %v1667, %v1755
      %v1757 = vpop.f32.mrf.mxu0
      %v1758 = vadd.f32 %v1669, %v1757
      %1759 = vmatmul.bf16.gmra.mxu0 %v1155
      %v1760 = vpop.f32.mrf.mxu0
      %v1761 = vadd.f32 %v1672, %v1760
      %v1762 = vpop.f32.mrf.mxu0
      %v1763 = vadd.f32 %v1674, %v1762
      %1764 = vmatmul.bf16.gmra.mxu0 %v1160
      %v1765 = vpop.f32.mrf.mxu0
      %v1766 = vadd.f32 %v1677, %v1765
      %v1767 = vpop.f32.mrf.mxu0
      %v1768 = vadd.f32 %v1679, %v1767
      %1769 = vmatmul.bf16.gmra.mxu0 %v1165
      %v1770 = vpop.f32.mrf.mxu0
      %v1771 = vadd.f32 %v1682, %v1770
      %v1772 = vpop.f32.mrf.mxu0
      %v1773 = vadd.f32 %v1684, %v1772
      %1774 = vmatmul.bf16.gmra.mxu0 %v1170
      %v1775 = vpop.f32.mrf.mxu0
      %v1776 = vadd.f32 %v1687, %v1775
      %v1777 = vpop.f32.mrf.mxu0
      %v1778 = vadd.f32 %v1689, %v1777
      %1779 = vmatmul.bf16.gmra.mxu0 %v1175
      %v1780 = vpop.f32.mrf.mxu0
      %v1781 = vadd.f32 %v1692, %v1780
      %v1782 = vpop.f32.mrf.mxu0
      %v1783 = vadd.f32 %v1694, %v1782
      %1784 = vmatmul.bf16.gmra.mxu0 %v1180
      %v1785 = vpop.f32.mrf.mxu0
      %v1786 = vadd.f32 %v1697, %v1785
      %v1787 = vpop.f32.mrf.mxu0
      %v1788 = vadd.f32 %v1699, %v1787
      %1789 = vmatmul.bf16.gmra.mxu0 %v1185
      %v1790 = vpop.f32.mrf.mxu0
      %v1791 = vadd.f32 %v1702, %v1790
      %v1792 = vpop.f32.mrf.mxu0
      %v1793 = vadd.f32 %v1704, %v1792
      %1794 = vmatmul.bf16.gmra.mxu0 %v1190
      %v1795 = vpop.f32.mrf.mxu0
      %v1796 = vadd.f32 %v1707, %v1795
      %v1797 = vpop.f32.mrf.mxu0
      %v1798 = vadd.f32 %v1709, %v1797
      %1799 = vmatmul.bf16.gmra.mxu0 %v1195
      %v1800 = vpop.f32.mrf.mxu0
      %v1801 = vadd.f32 %v1712, %v1800
      %v1802 = vpop.f32.mrf.mxu0
      %v1803 = vadd.f32 %v1714, %v1802
      %1804 = vmatmul.bf16.gmra.mxu0 %v1200
      %v1805 = vpop.f32.mrf.mxu0
      %v1806 = vadd.f32 %v1717, %v1805
      %v1807 = vpop.f32.mrf.mxu0
      %v1808 = vadd.f32 %v1719, %v1807
      %1809 = vmatmul.bf16.gmra.mxu0 %v1205
      %v1810 = vpop.f32.mrf.mxu0
      %v1811 = vadd.f32 %v1722, %v1810
      %v1812 = vpop.f32.mrf.mxu0
      %v1813 = vadd.f32 %v1724, %v1812
      %1814 = vmatmul.bf16.gmra.mxu0 %v1210
      %v1815 = vpop.f32.mrf.mxu0
      %v1816 = vadd.f32 %v1727, %v1815
      %v1817 = vpop.f32.mrf.mxu0
      %v1818 = vadd.f32 %v1729, %v1817
      %1819 = vdwg.mxu0
      %1820 = vmatpush.bf16.msra.mxu0 %v1464
      %1821 = vmatpush.bf16.msra.mxu0 %v1463
      %1822 = vmatpush.bf16.msra.mxu0 %v1462
      %1823 = vmatpush.bf16.msra.mxu0 %v1461
      %1824 = vmatpush.bf16.msra.mxu0 %v1460
      %1825 = vmatpush.bf16.msra.mxu0 %v1459
      %1826 = vmatpush.bf16.msra.mxu0 %v1458
      %1827 = vmatpush.bf16.msra.mxu0 %v1457
      %1828 = vmatmul.bf16.gmra.mxu0 %v1136
      %v1829 = vpop.f32.mrf.mxu0
      %v1830 = vadd.f32 %v1741, %v1829
      %v1831 = vpop.f32.mrf.mxu0
      %v1832 = vadd.f32 %v1743, %v1831
      %1833 = vmatmul.bf16.gmra.mxu0 %v1141
      %v1834 = vpop.f32.mrf.mxu0
      %v1835 = vadd.f32 %v1746, %v1834
      %v1836 = vpop.f32.mrf.mxu0
      %v1837 = vadd.f32 %v1748, %v1836
      %1838 = vmatmul.bf16.gmra.mxu0 %v1146
      %v1839 = vpop.f32.mrf.mxu0
      %v1840 = vadd.f32 %v1751, %v1839
      %v1841 = vpop.f32.mrf.mxu0
      %v1842 = vadd.f32 %v1753, %v1841
      %1843 = vmatmul.bf16.gmra.mxu0 %v1151
      %v1844 = vpop.f32.mrf.mxu0
      %v1845 = vadd.f32 %v1756, %v1844
      %v1846 = vpop.f32.mrf.mxu0
      %v1847 = vadd.f32 %v1758, %v1846
      %1848 = vmatmul.bf16.gmra.mxu0 %v1156
      %v1849 = vpop.f32.mrf.mxu0
      %v1850 = vadd.f32 %v1761, %v1849
      %v1851 = vpop.f32.mrf.mxu0
      %v1852 = vadd.f32 %v1763, %v1851
      %1853 = vmatmul.bf16.gmra.mxu0 %v1161
      %v1854 = vpop.f32.mrf.mxu0
      %v1855 = vadd.f32 %v1766, %v1854
      %v1856 = vpop.f32.mrf.mxu0
      %v1857 = vadd.f32 %v1768, %v1856
      %1858 = vmatmul.bf16.gmra.mxu0 %v1166
      %v1859 = vpop.f32.mrf.mxu0
      %v1860 = vadd.f32 %v1771, %v1859
      %v1861 = vpop.f32.mrf.mxu0
      %v1862 = vadd.f32 %v1773, %v1861
      %1863 = vmatmul.bf16.gmra.mxu0 %v1171
      %v1864 = vpop.f32.mrf.mxu0
      %v1865 = vadd.f32 %v1776, %v1864
      %v1866 = vpop.f32.mrf.mxu0
      %v1867 = vadd.f32 %v1778, %v1866
      %1868 = vmatmul.bf16.gmra.mxu0 %v1176
      %v1869 = vpop.f32.mrf.mxu0
      %v1870 = vadd.f32 %v1781, %v1869
      %v1871 = vpop.f32.mrf.mxu0
      %v1872 = vadd.f32 %v1783, %v1871
      %1873 = vmatmul.bf16.gmra.mxu0 %v1181
      %v1874 = vpop.f32.mrf.mxu0
      %v1875 = vadd.f32 %v1786, %v1874
      %v1876 = vpop.f32.mrf.mxu0
      %v1877 = vadd.f32 %v1788, %v1876
      %1878 = vmatmul.bf16.gmra.mxu0 %v1186
      %v1879 = vpop.f32.mrf.mxu0
      %v1880 = vadd.f32 %v1791, %v1879
      %v1881 = vpop.f32.mrf.mxu0
      %v1882 = vadd.f32 %v1793, %v1881
      %1883 = vmatmul.bf16.gmra.mxu0 %v1191
      %v1884 = vpop.f32.mrf.mxu0
      %v1885 = vadd.f32 %v1796, %v1884
      %v1886 = vpop.f32.mrf.mxu0
      %v1887 = vadd.f32 %v1798, %v1886
      %1888 = vmatmul.bf16.gmra.mxu0 %v1196
      %v1889 = vpop.f32.mrf.mxu0
      %v1890 = vadd.f32 %v1801, %v1889
      %v1891 = vpop.f32.mrf.mxu0
      %v1892 = vadd.f32 %v1803, %v1891
      %1893 = vmatmul.bf16.gmra.mxu0 %v1201
      %v1894 = vpop.f32.mrf.mxu0
      %v1895 = vadd.f32 %v1806, %v1894
      %v1896 = vpop.f32.mrf.mxu0
      %v1897 = vadd.f32 %v1808, %v1896
      %1898 = vmatmul.bf16.gmra.mxu0 %v1206
      %v1899 = vpop.f32.mrf.mxu0
      %v1900 = vadd.f32 %v1811, %v1899
      %v1901 = vpop.f32.mrf.mxu0
      %v1902 = vadd.f32 %v1813, %v1901
      %1903 = vmatmul.bf16.gmra.mxu0 %v1211
      %v1904 = vpop.f32.mrf.mxu0
      %v1905 = vadd.f32 %v1816, %v1904
      %v1906 = vpop.f32.mrf.mxu0
      %v1907 = vadd.f32 %v1818, %v1906
      %1908 = vdwg.mxu0
      %1909 = vmatpush.bf16.msra.mxu0 0
      %1910 = vmatpush.bf16.msra.mxu0 0
      %1911 = vmatpush.bf16.msra.mxu0 0
      %1912 = vmatpush.bf16.msra.mxu0 0
      %1913 = vmatpush.bf16.msra.mxu0 %v1468
      %1914 = vmatpush.bf16.msra.mxu0 %v1467
      %1915 = vmatpush.bf16.msra.mxu0 %v1466
      %1916 = vmatpush.bf16.msra.mxu0 %v1465
      %1917 = vmatmul.bf16.gmra.mxu0 %v1506
      %v1918 = vpop.f32.mrf.mxu0
      %v1919 = vadd.f32 %v1830, %v1918
      %v1920 = vpop.f32.mrf.mxu0
      %v1921 = vadd.f32 %v1832, %v1920
      %1922 = vmatmul.bf16.gmra.mxu0 %v1509
      %v1923 = vpop.f32.mrf.mxu0
      %v1924 = vadd.f32 %v1835, %v1923
      %v1925 = vpop.f32.mrf.mxu0
      %v1926 = vadd.f32 %v1837, %v1925
      %1927 = vmatmul.bf16.gmra.mxu0 %v1512
      %v1928 = vpop.f32.mrf.mxu0
      %v1929 = vadd.f32 %v1840, %v1928
      %v1930 = vpop.f32.mrf.mxu0
      %v1931 = vadd.f32 %v1842, %v1930
      %1932 = vmatmul.bf16.gmra.mxu0 %v1515
      %v1933 = vpop.f32.mrf.mxu0
      %v1934 = vadd.f32 %v1845, %v1933
      %v1935 = vpop.f32.mrf.mxu0
      %v1936 = vadd.f32 %v1847, %v1935
      %1937 = vmatmul.bf16.gmra.mxu0 %v1518
      %v1938 = vpop.f32.mrf.mxu0
      %v1939 = vadd.f32 %v1850, %v1938
      %v1940 = vpop.f32.mrf.mxu0
      %v1941 = vadd.f32 %v1852, %v1940
      %1942 = vmatmul.bf16.gmra.mxu0 %v1521
      %v1943 = vpop.f32.mrf.mxu0
      %v1944 = vadd.f32 %v1855, %v1943
      %v1945 = vpop.f32.mrf.mxu0
      %v1946 = vadd.f32 %v1857, %v1945
      %1947 = vmatmul.bf16.gmra.mxu0 %v1524
      %v1948 = vpop.f32.mrf.mxu0
      %v1949 = vadd.f32 %v1860, %v1948
      %v1950 = vpop.f32.mrf.mxu0
      %v1951 = vadd.f32 %v1862, %v1950
      %1952 = vmatmul.bf16.gmra.mxu0 %v1527
      %v1953 = vpop.f32.mrf.mxu0
      %v1954 = vadd.f32 %v1865, %v1953
      %v1955 = vpop.f32.mrf.mxu0
      %v1956 = vadd.f32 %v1867, %v1955
      %1957 = vmatmul.bf16.gmra.mxu0 %v1530
      %v1958 = vpop.f32.mrf.mxu0
      %v1959 = vadd.f32 %v1870, %v1958
      %v1960 = vpop.f32.mrf.mxu0
      %v1961 = vadd.f32 %v1872, %v1960
      %1962 = vmatmul.bf16.gmra.mxu0 %v1533
      %v1963 = vpop.f32.mrf.mxu0
      %v1964 = vadd.f32 %v1875, %v1963
      %v1965 = vpop.f32.mrf.mxu0
      %v1966 = vadd.f32 %v1877, %v1965
      %1967 = vmatmul.bf16.gmra.mxu0 %v1536
      %v1968 = vpop.f32.mrf.mxu0
      %v1969 = vadd.f32 %v1880, %v1968
      %v1970 = vpop.f32.mrf.mxu0
      %v1971 = vadd.f32 %v1882, %v1970
      %1972 = vmatmul.bf16.gmra.mxu0 %v1539
      %v1973 = vpop.f32.mrf.mxu0
      %v1974 = vadd.f32 %v1885, %v1973
      %v1975 = vpop.f32.mrf.mxu0
      %v1976 = vadd.f32 %v1887, %v1975
      %1977 = vmatmul.bf16.gmra.mxu0 %v1542
      %v1978 = vpop.f32.mrf.mxu0
      %v1979 = vadd.f32 %v1890, %v1978
      %v1980 = vpop.f32.mrf.mxu0
      %v1981 = vadd.f32 %v1892, %v1980
      %1982 = vmatmul.bf16.gmra.mxu0 %v1545
      %v1983 = vpop.f32.mrf.mxu0
      %v1984 = vadd.f32 %v1895, %v1983
      %v1985 = vpop.f32.mrf.mxu0
      %v1986 = vadd.f32 %v1897, %v1985
      %1987 = vmatmul.bf16.gmra.mxu0 %v1548
      %v1988 = vpop.f32.mrf.mxu0
      %v1989 = vadd.f32 %v1900, %v1988
      %v1990 = vpop.f32.mrf.mxu0
      %v1991 = vadd.f32 %v1902, %v1990
      %1992 = vmatmul.bf16.gmra.mxu0 %v1551
      %v1993 = vpop.f32.mrf.mxu0
      %v1994 = vadd.f32 %v1905, %v1993
      %v1995 = vpop.f32.mrf.mxu0
      %v1996 = vadd.f32 %v1907, %v1995
      %1997 = vdwg.mxu0
      %1998 = vst.msk [vmem:[%s192] sm:$0xff] %vm1004, %v1919
      %1999 = vst.msk [vmem:[%s192 + $0x8] sm:$0xff] %vm1004, %v1921
      %2000 = vst.msk [vmem:[%s192 + $0x10] sm:$0xff] %vm1004, %v1924
      %2001 = vst.msk [vmem:[%s192 + $0x18] sm:$0xff] %vm1004, %v1926
      %2002 = vst.msk [vmem:[%s192 + $0x20] sm:$0xff] %vm1004, %v1929
      %2003 = vst.msk [vmem:[%s192 + $0x28] sm:$0xff] %vm1004, %v1931
      %2004 = vst.msk [vmem:[%s192 + $0x30] sm:$0xff] %vm1004, %v1934
      %2005 = vst.msk [vmem:[%s192 + $0x38] sm:$0xff] %vm1004, %v1936
      %2006 = vst.msk [vmem:[%s192 + $0x40] sm:$0xff] %vm1004, %v1939
      %2007 = vst.msk [vmem:[%s192 + $0x48] sm:$0xff] %vm1004, %v1941
      %2008 = vst.msk [vmem:[%s192 + $0x50] sm:$0xff] %vm1004, %v1944
      %2009 = vst.msk [vmem:[%s192 + $0x58] sm:$0xff] %vm1004, %v1946
      %2010 = vst.msk [vmem:[%s192 + $0x60] sm:$0xff] %vm1004, %v1949
      %2011 = vst.msk [vmem:[%s192 + $0x68] sm:$0xff] %vm1004, %v1951
      %2012 = vst.msk [vmem:[%s192 + $0x70] sm:$0xff] %vm1004, %v1954
      %2013 = vst.msk [vmem:[%s192 + $0x78] sm:$0xff] %vm1004, %v1956
      %2014 = vst.msk [vmem:[%s192 + $0x80] sm:$0xff] %vm1004, %v1959
      %2015 = vst.msk [vmem:[%s192 + $0x88] sm:$0xff] %vm1004, %v1961
      %2016 = vst.msk [vmem:[%s192 + $0x90] sm:$0xff] %vm1004, %v1964
      %2017 = vst.msk [vmem:[%s192 + $0x98] sm:$0xff] %vm1004, %v1966
      %2018 = vst.msk [vmem:[%s192 + $0xa0] sm:$0xff] %vm1004, %v1969
      %2019 = vst.msk [vmem:[%s192 + $0xa8] sm:$0xff] %vm1004, %v1971
      %2020 = vst.msk [vmem:[%s192 + $0xb0] sm:$0xff] %vm1004, %v1974
      %2021 = vst.msk [vmem:[%s192 + $0xb8] sm:$0xff] %vm1004, %v1976
      %2022 = vst.msk [vmem:[%s192 + $0xc0] sm:$0xff] %vm1004, %v1979
      %2023 = vst.msk [vmem:[%s192 + $0xc8] sm:$0xff] %vm1004, %v1981
      %2024 = vst.msk [vmem:[%s192 + $0xd0] sm:$0xff] %vm1004, %v1984
      %2025 = vst.msk [vmem:[%s192 + $0xd8] sm:$0xff] %vm1004, %v1986
      %2026 = vst.msk [vmem:[%s192 + $0xe0] sm:$0xff] %vm1004, %v1989
      %2027 = vst.msk [vmem:[%s192 + $0xe8] sm:$0xff] %vm1004, %v1991
      %2028 = vst.msk [vmem:[%s192 + $0xf0] sm:$0xff] %vm1004, %v1994
      %2029 = vst.msk [vmem:[%s192 + $0xf8] sm:$0xff] %vm1004, %v1996
      %s2030 = smul.u32 32, %s19
      %p2031 = scmp.lt.s32.totalorder %s18, 3
      %s2032 = scalar_select %p2031, %s18, 3
      %p2033 = scmp.lt.s32.totalorder %s2030, 31
      %s2034 = scalar_select %p2033, %s2030, 31
      %s2035 = smul.addr %s2032, 32
      %s2036 = sadd.s32 %s2034, %s2035
      %s2037 = smul.addr %s2036, 8
      %s2038 = scalar_lea.vmem %s3, %s2037
      // Predicated region
      $region33: #{loss_fn.7} parent=31 // pred_check
        %p2039 = pneg %p114
      $region34: #{loss_fn.7} parent=31 // pred_check_branch
        %2041 = sbr.rel (%p2039) target = $region36
      $region35: #{loss_fn.7} parent=31 // pred_region
        %s2042 = smul.u32 32, %s19
      $region36: #{loss_fn.7} parent=31 // pred_fallthru
        _
    $region32: #{loss_fn.7} parent=5 // pred_fallthru
      _
    %p2043 = scmp.le.s32.totalorder 2, %s9
    // Predicated region
    $region37: #{loss_fn.7} parent=5 // pred_check
      %p2044 = pneg %p2043
    $region38: #{loss_fn.7} parent=5 // pred_check_branch
      %2046 = sbr.rel (%p2044) target = $region40
    $region39: #{loss_fn.7} parent=5 // pred_region
      %s2047 = ssub.s32 %s9, 2
      // Predicated region
      $region41: #{loss_fn.7} parent=39 // pred_check
        %p2048 = pneg %p120
      $region42: #{loss_fn.7} parent=39 // pred_check_branch
        %2050 = sbr.rel (%p2048) target = $region44
      $region43: #{loss_fn.7} parent=39 // pred_region
        %s2051 = smul.u32 32, %s21
        %p2052 = scmp.lt.s32.totalorder %s20, 3
        %s2053 = scalar_select %p2052, %s20, 3
        %p2054 = scmp.lt.s32.totalorder %s2051, 31
        %s2055 = scalar_select %p2054, %s2051, 31
        %s2056 = smul.addr %s2053, 32
        %s2057 = sadd.s32 %s2055, %s2056
        %s2058 = smul.addr %s2057, 8
        %s2059 = scalar_lea.vmem %s3, %s2058
      $region44: #{loss_fn.7} parent=39 // pred_fallthru
        _
    $region40: #{loss_fn.7} parent=5 // pred_fallthru
      _
  $region6: #{loss_fn.7} parent=0 // loop_footer
    %s13 = sadd.s32 1, %s9
  $region7: #{loss_fn.7} parent=0 // loop_footer_branch
    %8 = sbr.rel target = $region3
  $region8: #{loss_fn.7} parent=0 // loop_exit
    _

// kernel: loss_fn.8
$region0: #{loss_fn.8}
  #allocation0 [shape = 'u32[]', space=smem, size = 0x4, offset = 0x4, fixed_abs, tag = 'smem constant byte address 0x4 - core index']
  #allocation1 [shape = 'u32[72,128]{1,0:T(1,128)}', space=vmem, size = 0x9000, scoped, tag = 'internal scratch']
  %s0 = inlined_call_operand.vmem [shape: f32[4,10,10,64], index: 0, kind: input, shape index: {}]
  %s1 = inlined_call_operand.vmem [shape: bf16[576,128], index: 1, kind: input, shape index: {}]
  %s2 = inlined_call_operand.vmem [shape: f32[1,128], index: 2, kind: input, shape index: {}]
  %s3 = inlined_call_operand.vmem [shape: f32[4,64,128], index: 3, kind: output, shape index: {}]
  %s4 = sld [smem:[#allocation0]]
  $region45: #{loss_fn.8} parent=0
    _
  %s6 = ssub.s32 1, %s4
  %s7 = scalar_select 0, %s6, %s4
  loop: start=0, step=1, limit=6
  $region2: #{loss_fn.8} parent=0 // loop_pre_header
    _
  $region3: #{loss_fn.8} parent=0 // loop_header
    %s9 = sphi 0, %s13
    %p10 = scmp.ge.s32.totalorder %s9, 6
    %s16 = sphi 0, %s28
    %s17 = sphi 0, %s24
    %s18 = sphi 0, %s16
    %s19 = sphi 0, %s17
    %s20 = sphi 0, %s18
    %s21 = sphi 0, %s19
    %s31 = sphi 0, %s33
    %s34 = sphi 0, %s31
    %s35 = sphi 0, %s34
    %s51 = sphi 0, %s35
    %s55 = sphi 0, %s55
    %s57 = sphi 0, %s55
    %s58 = sphi 0, %s57
    %s72 = sphi 0, %s58
    %s76 = sphi 0, %s76
    %s78 = sphi 0, %s76
    %s79 = sphi 0, %s78
    %s93 = sphi 0, %s79
    %s101 = sphi 0, %s103
    %s104 = sphi 0, %s101
    %s105 = sphi 0, %s104
    %s121 = sphi 0, %s105
  $region4: #{loss_fn.8} parent=0 // loop_header_branch
    %12 = sbr.rel (%p10) target = $region8
  $region5: #{loss_fn.8} parent=0 // loop_body
    %s14 = ssub.s32 %s9, 1
    %s15 = ssub.s32 %s9, 2
    %s22 = sadd.s32 1, %s17
    %p23 = scmp.ge.s32.totalorder %s22, 1
    %s24 = scalar_select %p23, 0, %s22
    %s25 = sadd.s32 1, %s16
    %s26 = scalar_select %p23, %s25, %s16
    %p27 = scmp.ge.s32.totalorder %s26, 4
    %s28 = scalar_select %p27, 0, %s26
    %s29 = ssub.s32 %s16, %s28
    %p30 = scmp.eq.s32.totalorder %s29, 0
    %s32 = sadd.s32 %s31, 1
    %s33 = scalar_select %p30, %s31, %s32
    %p36 = pneg %p30
    %p37 = scmp.eq.s32.totalorder %s9, 3
    %p38 = por %p36, %p37
    %p39 = scmp.ne.s32.totalorder %s31, %s34
    %p40 = scmp.eq.s32.totalorder %s9, 0
    %p41 = por %p39, %p40
    %p42 = scmp.ne.s32.totalorder %s31, %s34
    %p43 = scmp.eq.s32.totalorder %s14, 3
    %p44 = por %p42, %p43
    %p45 = scmp.ne.s32.totalorder %s34, %s35
    %p46 = scmp.eq.s32.totalorder %s14, 0
    %p47 = por %p45, %p46
    %p48 = scmp.ne.s32.totalorder %s34, %s35
    %p49 = scmp.eq.s32.totalorder %s15, 3
    %p50 = por %p48, %p49
    %p52 = scmp.ne.s32.totalorder %s35, %s51
    %p53 = scmp.eq.s32.totalorder %s15, 0
    %p54 = por %p52, %p53
    %s56 = sadd.s32 %s55, 1
    %p59 = scmp.eq.s32.totalorder %s9, 3
    %p60 = scmp.ne.s32.totalorder %s55, %s57
    %p61 = scmp.eq.s32.totalorder %s9, 0
    %p62 = por %p60, %p61
    %p63 = scmp.ne.s32.totalorder %s55, %s57
    %p64 = scmp.eq.s32.totalorder %s14, 3
    %p65 = por %p63, %p64
    %p66 = scmp.ne.s32.totalorder %s57, %s58
    %p67 = scmp.eq.s32.totalorder %s14, 0
    %p68 = por %p66, %p67
    %p69 = scmp.ne.s32.totalorder %s57, %s58
    %p70 = scmp.eq.s32.totalorder %s15, 3
    %p71 = por %p69, %p70
    %p73 = scmp.ne.s32.totalorder %s58, %s72
    %p74 = scmp.eq.s32.totalorder %s15, 0
    %p75 = por %p73, %p74
    %s77 = sadd.s32 %s76, 1
    %p80 = scmp.eq.s32.totalorder %s9, 3
    %p81 = scmp.ne.s32.totalorder %s76, %s78
    %p82 = scmp.eq.s32.totalorder %s9, 0
    %p83 = por %p81, %p82
    %p84 = scmp.ne.s32.totalorder %s76, %s78
    %p85 = scmp.eq.s32.totalorder %s14, 3
    %p86 = por %p84, %p85
    %p87 = scmp.ne.s32.totalorder %s78, %s79
    %p88 = scmp.eq.s32.totalorder %s14, 0
    %p89 = por %p87, %p88
    %p90 = scmp.ne.s32.totalorder %s78, %s79
    %p91 = scmp.eq.s32.totalorder %s15, 3
    %p92 = por %p90, %p91
    %p94 = scmp.ne.s32.totalorder %s79, %s93
    %p95 = scmp.eq.s32.totalorder %s15, 0
    %p96 = por %p94, %p95
    %s97 = ssub.s32 %s16, %s28
    %s98 = ssub.s32 %s17, %s24
    %s99 = sor.u32 %s97, %s98
    %p100 = scmp.eq.s32.totalorder %s99, 0
    %s102 = sadd.s32 %s101, 1
    %s103 = scalar_select %p100, %s101, %s102
    %p106 = pneg %p100
    %p107 = scmp.eq.s32.totalorder %s9, 3
    %p108 = por %p106, %p107
    %p109 = scmp.ne.s32.totalorder %s101, %s104
    %p110 = scmp.eq.s32.totalorder %s9, 0
    %p111 = por %p109, %p110
    %p112 = scmp.ne.s32.totalorder %s101, %s104
    %p113 = scmp.eq.s32.totalorder %s14, 3
    %p114 = por %p112, %p113
    %p115 = scmp.ne.s32.totalorder %s104, %s105
    %p116 = scmp.eq.s32.totalorder %s14, 0
    %p117 = por %p115, %p116
    %p118 = scmp.ne.s32.totalorder %s104, %s105
    %p119 = scmp.eq.s32.totalorder %s15, 3
    %p120 = por %p118, %p119
    %p122 = scmp.ne.s32.totalorder %s105, %s121
    %p123 = scmp.eq.s32.totalorder %s15, 0
    %p124 = por %p122, %p123
    %p125 = scmp.le.s32.totalorder 1, %s9
    %p126 = scmp.lt.s32.totalorder %s9, 5
    %p127 = pnand %p125, %p126
    %p128 = pneg %p127
    // Predicated region
    $region9: #{loss_fn.8} parent=5 // pred_check
      _
    $region10: #{loss_fn.8} parent=5 // pred_check_branch
      %130 = sbr.rel (%p127) target = $region12
    $region11: #{loss_fn.8} parent=5 // pred_region
      %s131 = ssub.s32 %s9, 1
      // Predicated region
      $region13: #{loss_fn.8} parent=11 // pred_check
        %p132 = pneg %p68
      $region14: #{loss_fn.8} parent=11 // pred_check_branch
        %134 = sbr.rel (%p132) target = $region16
      $region15: #{loss_fn.8} parent=11 // pred_region
        _
      $region16: #{loss_fn.8} parent=11 // pred_fallthru
        _
      // Predicated region
      $region17: #{loss_fn.8} parent=11 // pred_check
        %p135 = pneg %p89
      $region18: #{loss_fn.8} parent=11 // pred_check_branch
        %137 = sbr.rel (%p135) target = $region20
      $region19: #{loss_fn.8} parent=11 // pred_region
        _
      $region20: #{loss_fn.8} parent=11 // pred_fallthru
        _
    $region12: #{loss_fn.8} parent=5 // pred_fallthru
      _
    %p138 = scmp.lt.s32.totalorder %s9, 4
    // Predicated region
    $region21: #{loss_fn.8} parent=5 // pred_check
      %p139 = pneg %p138
    $region22: #{loss_fn.8} parent=5 // pred_check_branch
      %141 = sbr.rel (%p139) target = $region24
    $region23: #{loss_fn.8} parent=5 // pred_region
      // Predicated region
      $region25: #{loss_fn.8} parent=23 // pred_check
        %p142 = pneg %p41
      $region26: #{loss_fn.8} parent=23 // pred_check_branch
        %144 = sbr.rel (%p142) target = $region28
      $region27: #{loss_fn.8} parent=23 // pred_region
        %p145 = scmp.lt.s32.totalorder %s16, 3
        %s146 = scalar_select %p145, %s16, 3
        %s147 = smul.addr %s146, 20
        %s148 = smul.addr %s147, 8
        %s149 = scalar_lea.vmem %s0, %s148
      $region28: #{loss_fn.8} parent=23 // pred_fallthru
        _
    $region24: #{loss_fn.8} parent=5 // pred_fallthru
      _
    %p150 = scmp.le.s32.totalorder 1, %s9
    %p151 = scmp.lt.s32.totalorder %s9, 5
    %p152 = pnand %p150, %p151
    %p153 = pneg %p152
    // Predicated region
    $region29: #{loss_fn.8} parent=5 // pred_check
      _
    $region30: #{loss_fn.8} parent=5 // pred_check_branch
      %155 = sbr.rel (%p152) target = $region32
    $region31: #{loss_fn.8} parent=5 // pred_region
      %s156 = ssub.s32 %s9, 1
      %p157 = scmp.lt.s32.totalorder %s18, 3
      %s158 = scalar_select %p157, %s18, 3
      %s159 = smul.addr %s158, 20
      %s160 = smul.addr %s159, 8
      %s161 = scalar_lea.vmem %s0, %s160
      %p162 = pneg %p47
      %p163 = pneg %p44
      %p164 = pneg %p68
      %p165 = pneg %p65
      %p166 = pneg %p89
      %p167 = pneg %p86
      %p168 = pneg %p117
      %p169 = pneg %p114
      %s170 = smul.u32 8, %s19
      %p171 = scmp.lt.s32.totalorder %s18, 3
      %s172 = scalar_select %p171, %s18, 3
      %p173 = scmp.lt.s32.totalorder %s170, 7
      %s174 = scalar_select %p173, %s170, 7
      %s175 = smul.addr %s172, 8
      %s176 = sadd.s32 %s174, %s175
      %s177 = smul.addr %s176, 8
      %s178 = scalar_lea.vmem %s3, %s177
      %p179 = scmp.lt.s32.totalorder %s18, 3
      %s180 = scalar_select %p179, %s18, 3
      %s181 = smul.addr %s180, 20
      %s182 = smul.addr %s181, 8
      %s183 = scalar_lea.vmem %s0, %s182
      %s184 = smul.u32 8, %s19
      %p185 = scmp.lt.s32.totalorder %s18, 3
      %s186 = scalar_select %p185, %s18, 3
      %p187 = scmp.lt.s32.totalorder %s184, 7
      %s188 = scalar_select %p187, %s184, 7
      %s189 = smul.addr %s186, 8
      %s190 = sadd.s32 %s188, %s189
      %s191 = smul.addr %s190, 8
      %s192 = scalar_lea.vmem %s3, %s191
      %s193 = smul.u32 8, %s19
      %s195 = smul.u32 %s19, 8
      %s196 = smul.u32 %s195, 16
      %s197 = scalar_lea.vmem %s183, %s196
      %v198 = vld [vmem:[%s197] sm:$0xff]
      %v199 = vld [vmem:[%s197 + $0x10] sm:$0xff]
      %v200 = vld [vmem:[%s197 + $0x20] sm:$0xff]
      %v201 = vld [vmem:[%s197 + $0x30] sm:$0xff]
      %v202 = vld [vmem:[%s197 + $0x40] sm:$0xff]
      %v203 = vld [vmem:[%s197 + $0x50] sm:$0xff]
      %v204 = vld [vmem:[%s197 + $0x60] sm:$0xff]
      %v205 = vld [vmem:[%s197 + $0x70] sm:$0xff]
      %v206 = vld [vmem:[%s197 + $0x1] sm:$0xff]
      %v207 = vld [vmem:[%s197 + $0x11] sm:$0xff]
      %v208 = vld [vmem:[%s197 + $0x21] sm:$0xff]
      %v209 = vld [vmem:[%s197 + $0x31] sm:$0xff]
      %v210 = vld [vmem:[%s197 + $0x41] sm:$0xff]
      %v211 = vld [vmem:[%s197 + $0x51] sm:$0xff]
      %v212 = vld [vmem:[%s197 + $0x61] sm:$0xff]
      %v213 = vld [vmem:[%s197 + $0x71] sm:$0xff]
      %v214 = vld [vmem:[%s197 + $0x2] sm:$0xff]
      %v215 = vld [vmem:[%s197 + $0x12] sm:$0xff]
      %v216 = vld [vmem:[%s197 + $0x22] sm:$0xff]
      %v217 = vld [vmem:[%s197 + $0x32] sm:$0xff]
      %v218 = vld [vmem:[%s197 + $0x42] sm:$0xff]
      %v219 = vld [vmem:[%s197 + $0x52] sm:$0xff]
      %v220 = vld [vmem:[%s197 + $0x62] sm:$0xff]
      %v221 = vld [vmem:[%s197 + $0x72] sm:$0xff]
      %s222 = sadd.s32 %s195, 1
      %s223 = smul.u32 %s222, 16
      %s224 = scalar_lea.vmem %s183, %s223
      %v225 = vld [vmem:[%s224] sm:$0xff]
      %v226 = vld [vmem:[%s224 + $0x10] sm:$0xff]
      %v227 = vld [vmem:[%s224 + $0x20] sm:$0xff]
      %v228 = vld [vmem:[%s224 + $0x30] sm:$0xff]
      %v229 = vld [vmem:[%s224 + $0x40] sm:$0xff]
      %v230 = vld [vmem:[%s224 + $0x50] sm:$0xff]
      %v231 = vld [vmem:[%s224 + $0x60] sm:$0xff]
      %v232 = vld [vmem:[%s224 + $0x70] sm:$0xff]
      %v233 = vld [vmem:[%s224 + $0x1] sm:$0xff]
      %v234 = vld [vmem:[%s224 + $0x11] sm:$0xff]
      %v235 = vld [vmem:[%s224 + $0x21] sm:$0xff]
      %v236 = vld [vmem:[%s224 + $0x31] sm:$0xff]
      %v237 = vld [vmem:[%s224 + $0x41] sm:$0xff]
      %v238 = vld [vmem:[%s224 + $0x51] sm:$0xff]
      %v239 = vld [vmem:[%s224 + $0x61] sm:$0xff]
      %v240 = vld [vmem:[%s224 + $0x71] sm:$0xff]
      %v241 = vld [vmem:[%s224 + $0x2] sm:$0xff]
      %v242 = vld [vmem:[%s224 + $0x12] sm:$0xff]
      %v243 = vld [vmem:[%s224 + $0x22] sm:$0xff]
      %v244 = vld [vmem:[%s224 + $0x32] sm:$0xff]
      %v245 = vld [vmem:[%s224 + $0x42] sm:$0xff]
      %v246 = vld [vmem:[%s224 + $0x52] sm:$0xff]
      %v247 = vld [vmem:[%s224 + $0x62] sm:$0xff]
      %v248 = vld [vmem:[%s224 + $0x72] sm:$0xff]
      %s249 = sadd.s32 %s195, 2
      %s250 = smul.u32 %s249, 16
      %s251 = scalar_lea.vmem %s183, %s250
      %v252 = vld [vmem:[%s251] sm:$0xff]
      %v253 = vld [vmem:[%s251 + $0x10] sm:$0xff]
      %v254 = vld [vmem:[%s251 + $0x20] sm:$0xff]
      %v255 = vld [vmem:[%s251 + $0x30] sm:$0xff]
      %v256 = vld [vmem:[%s251 + $0x40] sm:$0xff]
      %v257 = vld [vmem:[%s251 + $0x50] sm:$0xff]
      %v258 = vld [vmem:[%s251 + $0x60] sm:$0xff]
      %v259 = vld [vmem:[%s251 + $0x70] sm:$0xff]
      %v260 = vld [vmem:[%s251 + $0x1] sm:$0xff]
      %v261 = vld [vmem:[%s251 + $0x11] sm:$0xff]
      %v262 = vld [vmem:[%s251 + $0x21] sm:$0xff]
      %v263 = vld [vmem:[%s251 + $0x31] sm:$0xff]
      %v264 = vld [vmem:[%s251 + $0x41] sm:$0xff]
      %v265 = vld [vmem:[%s251 + $0x51] sm:$0xff]
      %v266 = vld [vmem:[%s251 + $0x61] sm:$0xff]
      %v267 = vld [vmem:[%s251 + $0x71] sm:$0xff]
      %v268 = vld [vmem:[%s251 + $0x2] sm:$0xff]
      %v269 = vld [vmem:[%s251 + $0x12] sm:$0xff]
      %v270 = vld [vmem:[%s251 + $0x22] sm:$0xff]
      %v271 = vld [vmem:[%s251 + $0x32] sm:$0xff]
      %v272 = vld [vmem:[%s251 + $0x42] sm:$0xff]
      %v273 = vld [vmem:[%s251 + $0x52] sm:$0xff]
      %v274 = vld [vmem:[%s251 + $0x62] sm:$0xff]
      %v275 = vld [vmem:[%s251 + $0x72] sm:$0xff]
      %284 = vrot.lane.b32.xlu0 %v206, 64
      %v285 = vpop.permute.xlu0 %284
      %286 = vrot.lane.b32.xlu0 %v207, 64
      %v287 = vpop.permute.xlu0 %286
      %288 = vrot.lane.b32.xlu0 %v208, 64
      %v289 = vpop.permute.xlu0 %288
      %290 = vrot.lane.b32.xlu0 %v209, 64
      %v291 = vpop.permute.xlu0 %290
      %292 = vrot.lane.b32.xlu0 %v210, 64
      %v293 = vpop.permute.xlu0 %292
      %294 = vrot.lane.b32.xlu0 %v211, 64
      %v295 = vpop.permute.xlu0 %294
      %296 = vrot.lane.b32.xlu0 %v212, 64
      %v297 = vpop.permute.xlu0 %296
      %298 = vrot.lane.b32.xlu0 %v213, 64
      %v299 = vpop.permute.xlu0 %298
      %316 = vrot.lane.b32.xlu0 %v225, 64
      %v317 = vpop.permute.xlu0 %316
      %318 = vrot.lane.b32.xlu0 %v226, 64
      %v319 = vpop.permute.xlu0 %318
      %320 = vrot.lane.b32.xlu0 %v227, 64
      %v321 = vpop.permute.xlu0 %320
      %322 = vrot.lane.b32.xlu0 %v228, 64
      %v323 = vpop.permute.xlu0 %322
      %324 = vrot.lane.b32.xlu0 %v229, 64
      %v325 = vpop.permute.xlu0 %324
      %326 = vrot.lane.b32.xlu0 %v230, 64
      %v327 = vpop.permute.xlu0 %326
      %328 = vrot.lane.b32.xlu0 %v231, 64
      %v329 = vpop.permute.xlu0 %328
      %330 = vrot.lane.b32.xlu0 %v232, 64
      %v331 = vpop.permute.xlu0 %330
      %348 = vrot.lane.b32.xlu0 %v241, 64
      %v349 = vpop.permute.xlu0 %348
      %350 = vrot.lane.b32.xlu0 %v242, 64
      %v351 = vpop.permute.xlu0 %350
      %352 = vrot.lane.b32.xlu0 %v243, 64
      %v353 = vpop.permute.xlu0 %352
      %354 = vrot.lane.b32.xlu0 %v244, 64
      %v355 = vpop.permute.xlu0 %354
      %356 = vrot.lane.b32.xlu0 %v245, 64
      %v357 = vpop.permute.xlu0 %356
      %358 = vrot.lane.b32.xlu0 %v246, 64
      %v359 = vpop.permute.xlu0 %358
      %360 = vrot.lane.b32.xlu0 %v247, 64
      %v361 = vpop.permute.xlu0 %360
      %362 = vrot.lane.b32.xlu0 %v248, 64
      %v363 = vpop.permute.xlu0 %362
      %380 = vrot.lane.b32.xlu0 %v260, 64
      %v381 = vpop.permute.xlu0 %380
      %382 = vrot.lane.b32.xlu0 %v261, 64
      %v383 = vpop.permute.xlu0 %382
      %384 = vrot.lane.b32.xlu0 %v262, 64
      %v385 = vpop.permute.xlu0 %384
      %386 = vrot.lane.b32.xlu0 %v263, 64
      %v387 = vpop.permute.xlu0 %386
      %388 = vrot.lane.b32.xlu0 %v264, 64
      %v389 = vpop.permute.xlu0 %388
      %390 = vrot.lane.b32.xlu0 %v265, 64
      %v391 = vpop.permute.xlu0 %390
      %392 = vrot.lane.b32.xlu0 %v266, 64
      %v393 = vpop.permute.xlu0 %392
      %394 = vrot.lane.b32.xlu0 %v267, 64
      %v395 = vpop.permute.xlu0 %394
      %vm404 = vcmask 523264
      %v405 = vsel %vm404, %v198, %v285
      %v406 = vsel %vm404, %v199, %v287
      %v407 = vsel %vm404, %v200, %v289
      %v408 = vsel %vm404, %v201, %v291
      %v409 = vsel %vm404, %v202, %v293
      %v410 = vsel %vm404, %v203, %v295
      %v411 = vsel %vm404, %v204, %v297
      %v412 = vsel %vm404, %v205, %v299
      %v413 = vsel %vm404, %v214, %v317
      %v414 = vsel %vm404, %v215, %v319
      %v415 = vsel %vm404, %v216, %v321
      %v416 = vsel %vm404, %v217, %v323
      %v417 = vsel %vm404, %v218, %v325
      %v418 = vsel %vm404, %v219, %v327
      %v419 = vsel %vm404, %v220, %v329
      %v420 = vsel %vm404, %v221, %v331
      %v421 = vsel %vm404, %v233, %v349
      %v422 = vsel %vm404, %v234, %v351
      %v423 = vsel %vm404, %v235, %v353
      %v424 = vsel %vm404, %v236, %v355
      %v425 = vsel %vm404, %v237, %v357
      %v426 = vsel %vm404, %v238, %v359
      %v427 = vsel %vm404, %v239, %v361
      %v428 = vsel %vm404, %v240, %v363
      %v429 = vsel %vm404, %v252, %v381
      %v430 = vsel %vm404, %v253, %v383
      %v431 = vsel %vm404, %v254, %v385
      %v432 = vsel %vm404, %v255, %v387
      %v433 = vsel %vm404, %v256, %v389
      %v434 = vsel %vm404, %v257, %v391
      %v435 = vsel %vm404, %v258, %v393
      %v436 = vsel %vm404, %v259, %v395
      %v437 = vpack.c.bf16 %v406, %v405
      %v438 = vpack.c.bf16 %v414, %v413
      %v439 = vpack.c.bf16 %v422, %v421
      %v440 = vpack.c.bf16 %v430, %v429
      %v441 = vpack.c.bf16 %v269, %v268
      %v442 = vpack.c.bf16 %v408, %v407
      %v443 = vpack.c.bf16 %v416, %v415
      %v444 = vpack.c.bf16 %v424, %v423
      %v445 = vpack.c.bf16 %v432, %v431
      %v446 = vpack.c.bf16 %v271, %v270
      %v447 = vpack.c.bf16 %v410, %v409
      %v448 = vpack.c.bf16 %v418, %v417
      %v449 = vpack.c.bf16 %v426, %v425
      %v450 = vpack.c.bf16 %v434, %v433
      %v451 = vpack.c.bf16 %v273, %v272
      %v452 = vpack.c.bf16 %v412, %v411
      %v453 = vpack.c.bf16 %v420, %v419
      %v454 = vpack.c.bf16 %v428, %v427
      %v455 = vpack.c.bf16 %v436, %v435
      %v456 = vpack.c.bf16 %v275, %v274
      %v457 = vld [vmem:[%s1] sm:$0xf]
      %v458 = vld [vmem:[%s1 + $0x4] sm:$0xf]
      %v459 = vld [vmem:[%s1 + $0x8] sm:$0xf]
      %v460 = vld [vmem:[%s1 + $0xc] sm:$0xf]
      %v461 = vld [vmem:[%s1 + $0x10] sm:$0xf]
      %v462 = vld [vmem:[%s1 + $0x14] sm:$0xf]
      %v463 = vld [vmem:[%s1 + $0x18] sm:$0xf]
      %v464 = vld [vmem:[%s1 + $0x1c] sm:$0xf]
      %v465 = vld [vmem:[%s1 + $0x20] sm:$0xf]
      %v466 = vld [vmem:[%s1 + $0x24] sm:$0xf]
      %v467 = vld [vmem:[%s1 + $0x28] sm:$0xf]
      %v468 = vld [vmem:[%s1 + $0x2c] sm:$0xf]
      %v469 = vld [vmem:[%s1 + $0x30] sm:$0xf]
      %v470 = vld [vmem:[%s1 + $0x34] sm:$0xf]
      %v471 = vld [vmem:[%s1 + $0x38] sm:$0xf]
      %v472 = vld [vmem:[%s1 + $0x3c] sm:$0xf]
      %v473 = vld [vmem:[%s1 + $0x40] sm:$0xf]
      %v474 = vld [vmem:[%s1 + $0x44] sm:$0xf]
      %v475 = vld [vmem:[%s1 + $0x48] sm:$0xf]
      %v476 = vld [vmem:[%s1 + $0x4c] sm:$0xf]
      %v477 = vld [vmem:[%s1 + $0x50] sm:$0xf]
      %v478 = vld [vmem:[%s1 + $0x54] sm:$0xf]
      %v479 = vld [vmem:[%s1 + $0x58] sm:$0xf]
      %v480 = vld [vmem:[%s1 + $0x5c] sm:$0xf]
      %v481 = vld [vmem:[%s1 + $0x60] sm:$0xf]
      %v482 = vld [vmem:[%s1 + $0x64] sm:$0xf]
      %v483 = vld [vmem:[%s1 + $0x68] sm:$0xf]
      %v484 = vld [vmem:[%s1 + $0x6c] sm:$0xf]
      %v485 = vld [vmem:[%s1 + $0x70] sm:$0xf]
      %v486 = vld [vmem:[%s1 + $0x74] sm:$0xf]
      %v487 = vld [vmem:[%s1 + $0x78] sm:$0xf]
      %v488 = vld [vmem:[%s1 + $0x7c] sm:$0xf]
      %v489 = vld [vmem:[%s1 + $0x80] sm:$0xf]
      %v490 = vld [vmem:[%s1 + $0x84] sm:$0xf]
      %v491 = vld [vmem:[%s1 + $0x88] sm:$0xf]
      %v492 = vld [vmem:[%s1 + $0x8c] sm:$0xf]
      %v493 = vld [vmem:[%s1 + $0x90] sm:$0xf]
      %v494 = vld [vmem:[%s1 + $0x94] sm:$0xf]
      %v495 = vld [vmem:[%s1 + $0x98] sm:$0xf]
      %v496 = vld [vmem:[%s1 + $0x9c] sm:$0xf]
      %v497 = vld [vmem:[%s1 + $0xa0] sm:$0xf]
      %v498 = vld [vmem:[%s1 + $0xa4] sm:$0xf]
      %v499 = vld [vmem:[%s1 + $0xa8] sm:$0xf]
      %v500 = vld [vmem:[%s1 + $0xac] sm:$0xf]
      %v501 = vld [vmem:[%s1 + $0xb0] sm:$0xf]
      %v502 = vld [vmem:[%s1 + $0xb4] sm:$0xf]
      %v503 = vld [vmem:[%s1 + $0xb8] sm:$0xf]
      %v504 = vld [vmem:[%s1 + $0xbc] sm:$0xf]
      %v505 = vld [vmem:[%s1 + $0xc0] sm:$0xf]
      %v506 = vld [vmem:[%s1 + $0xc4] sm:$0xf]
      %v507 = vld [vmem:[%s1 + $0xc8] sm:$0xf]
      %v508 = vld [vmem:[%s1 + $0xcc] sm:$0xf]
      %v509 = vld [vmem:[%s1 + $0xd0] sm:$0xf]
      %v510 = vld [vmem:[%s1 + $0xd4] sm:$0xf]
      %v511 = vld [vmem:[%s1 + $0xd8] sm:$0xf]
      %v512 = vld [vmem:[%s1 + $0xdc] sm:$0xf]
      %v513 = vld [vmem:[%s1 + $0xe0] sm:$0xf]
      %v514 = vld [vmem:[%s1 + $0xe4] sm:$0xf]
      %v515 = vld [vmem:[%s1 + $0xe8] sm:$0xf]
      %v516 = vld [vmem:[%s1 + $0xec] sm:$0xf]
      %v517 = vld [vmem:[%s1 + $0xf0] sm:$0xf]
      %v518 = vld [vmem:[%s1 + $0xf4] sm:$0xf]
      %v519 = vld [vmem:[%s1 + $0xf8] sm:$0xf]
      %v520 = vld [vmem:[%s1 + $0xfc] sm:$0xf]
      %v521 = vld [vmem:[%s1 + $0x100] sm:$0xf]
      %v522 = vld [vmem:[%s1 + $0x104] sm:$0xf]
      %v523 = vld [vmem:[%s1 + $0x108] sm:$0xf]
      %v524 = vld [vmem:[%s1 + $0x10c] sm:$0xf]
      %v525 = vld [vmem:[%s1 + $0x110] sm:$0xf]
      %v526 = vld [vmem:[%s1 + $0x114] sm:$0xf]
      %v527 = vld [vmem:[%s1 + $0x118] sm:$0xf]
      %v528 = vld [vmem:[%s1 + $0x11c] sm:$0xf]
      %v529 = vld [vmem:[%s2] sm:$0x1]
      %v531 = vperm.slane %v529, 0
      %v605 = vunpack.c.l.b16 %v457
      %v606 = vunpack.c.l.b16 %v458
      %v607 = vunpack.c.l.b16 %v459
      %v608 = vunpack.c.l.b16 %v460
      %v609 = vunpack.c.l.b16 %v461
      %v610 = vunpack.c.l.b16 %v462
      %v611 = vunpack.c.l.b16 %v463
      %v612 = vunpack.c.l.b16 %v464
      %v613 = vunpack.c.l.b16 %v465
      %v614 = vunpack.c.l.b16 %v466
      %v615 = vunpack.c.l.b16 %v467
      %v616 = vunpack.c.l.b16 %v468
      %v617 = vunpack.c.l.b16 %v469
      %v618 = vunpack.c.l.b16 %v470
      %v619 = vunpack.c.l.b16 %v471
      %v620 = vunpack.c.l.b16 %v472
      %v621 = vunpack.c.l.b16 %v473
      %v622 = vunpack.c.l.b16 %v474
      %v623 = vunpack.c.l.b16 %v475
      %v624 = vunpack.c.l.b16 %v476
      %v625 = vunpack.c.l.b16 %v477
      %v626 = vunpack.c.l.b16 %v478
      %v627 = vunpack.c.l.b16 %v479
      %v628 = vunpack.c.l.b16 %v480
      %v629 = vunpack.c.l.b16 %v481
      %v630 = vunpack.c.l.b16 %v482
      %v631 = vunpack.c.l.b16 %v483
      %v632 = vunpack.c.l.b16 %v484
      %v633 = vunpack.c.l.b16 %v485
      %v634 = vunpack.c.l.b16 %v486
      %v635 = vunpack.c.l.b16 %v487
      %v636 = vunpack.c.l.b16 %v488
      %v637 = vunpack.c.l.b16 %v489
      %v638 = vunpack.c.l.b16 %v490
      %v639 = vunpack.c.l.b16 %v491
      %v640 = vunpack.c.l.b16 %v492
      %v641 = vunpack.c.l.b16 %v493
      %v642 = vunpack.c.l.b16 %v494
      %v643 = vunpack.c.l.b16 %v495
      %v644 = vunpack.c.l.b16 %v496
      %v645 = vunpack.c.l.b16 %v497
      %v646 = vunpack.c.l.b16 %v498
      %v647 = vunpack.c.l.b16 %v499
      %v648 = vunpack.c.l.b16 %v500
      %v649 = vunpack.c.l.b16 %v501
      %v650 = vunpack.c.l.b16 %v502
      %v651 = vunpack.c.l.b16 %v503
      %v652 = vunpack.c.l.b16 %v504
      %v653 = vunpack.c.l.b16 %v505
      %v654 = vunpack.c.l.b16 %v506
      %v655 = vunpack.c.l.b16 %v507
      %v656 = vunpack.c.l.b16 %v508
      %v657 = vunpack.c.l.b16 %v509
      %v658 = vunpack.c.l.b16 %v510
      %v659 = vunpack.c.l.b16 %v511
      %v660 = vunpack.c.l.b16 %v512
      %v661 = vunpack.c.l.b16 %v513
      %v662 = vunpack.c.l.b16 %v514
      %v663 = vunpack.c.l.b16 %v515
      %v664 = vunpack.c.l.b16 %v516
      %v665 = vunpack.c.l.b16 %v517
      %v666 = vunpack.c.l.b16 %v518
      %v667 = vunpack.c.l.b16 %v519
      %v668 = vunpack.c.l.b16 %v520
      %v669 = vunpack.c.l.b16 %v521
      %v670 = vunpack.c.l.b16 %v522
      %v671 = vunpack.c.l.b16 %v523
      %v672 = vunpack.c.l.b16 %v524
      %v673 = vunpack.c.l.b16 %v525
      %v674 = vunpack.c.l.b16 %v526
      %v675 = vunpack.c.l.b16 %v527
      %v676 = vunpack.c.l.b16 %v528
      %v677 = vpack.c.b16 %v606, %v605
      %v678 = vpack.c.b16 %v608, %v607
      %v679 = vpack.c.b16 %v610, %v609
      %v680 = vpack.c.b16 %v612, %v611
      %v681 = vpack.c.b16 %v614, %v613
      %v682 = vpack.c.b16 %v616, %v615
      %v683 = vpack.c.b16 %v618, %v617
      %v684 = vpack.c.b16 %v620, %v619
      %v685 = vpack.c.b16 %v622, %v621
      %v686 = vpack.c.b16 %v624, %v623
      %v687 = vpack.c.b16 %v626, %v625
      %v688 = vpack.c.b16 %v628, %v627
      %v689 = vpack.c.b16 %v630, %v629
      %v690 = vpack.c.b16 %v632, %v631
      %v691 = vpack.c.b16 %v634, %v633
      %v692 = vpack.c.b16 %v636, %v635
      %v693 = vpack.c.b16 %v638, %v637
      %v694 = vpack.c.b16 %v640, %v639
      %v695 = vpack.c.b16 %v642, %v641
      %v696 = vpack.c.b16 %v644, %v643
      %v697 = vpack.c.b16 %v646, %v645
      %v698 = vpack.c.b16 %v648, %v647
      %v699 = vpack.c.b16 %v650, %v649
      %v700 = vpack.c.b16 %v652, %v651
      %v701 = vpack.c.b16 %v654, %v653
      %v702 = vpack.c.b16 %v656, %v655
      %v703 = vpack.c.b16 %v658, %v657
      %v704 = vpack.c.b16 %v660, %v659
      %v705 = vpack.c.b16 %v662, %v661
      %v706 = vpack.c.b16 %v664, %v663
      %v707 = vpack.c.b16 %v666, %v665
      %v708 = vpack.c.b16 %v668, %v667
      %v709 = vpack.c.b16 %v670, %v669
      %v710 = vpack.c.b16 %v672, %v671
      %v711 = vpack.c.b16 %v674, %v673
      %v712 = vpack.c.b16 %v676, %v675
      %v750 = vsel %vm404, %v441, 0
      %v753 = vsel %vm404, %v446, 0
      %v756 = vsel %vm404, %v451, 0
      %v759 = vsel %vm404, %v456, 0
      %761 = vmatpush.bf16.msra.mxu0 %v684
      %762 = vmatpush.bf16.msra.mxu0 %v683
      %763 = vmatpush.bf16.msra.mxu0 %v682
      %764 = vmatpush.bf16.msra.mxu0 %v681
      %765 = vmatpush.bf16.msra.mxu0 %v680
      %766 = vmatpush.bf16.msra.mxu0 %v679
      %767 = vmatpush.bf16.msra.mxu0 %v678
      %768 = vmatpush.bf16.msra.mxu0 %v677
      %769 = vmatmul.bf16.gmra.mxu0 %v437
      %v770 = vpop.f32.mrf.mxu0
      %v771 = vadd.f32 %v531, %v770
      %v772 = vpop.f32.mrf.mxu0
      %v773 = vadd.f32 %v531, %v772
      %774 = vmatmul.bf16.gmra.mxu0 %v442
      %v775 = vpop.f32.mrf.mxu0
      %v776 = vadd.f32 %v531, %v775
      %v777 = vpop.f32.mrf.mxu0
      %v778 = vadd.f32 %v531, %v777
      %779 = vmatmul.bf16.gmra.mxu0 %v447
      %v780 = vpop.f32.mrf.mxu0
      %v781 = vadd.f32 %v531, %v780
      %v782 = vpop.f32.mrf.mxu0
      %v783 = vadd.f32 %v531, %v782
      %784 = vmatmul.bf16.gmra.mxu0 %v452
      %v785 = vpop.f32.mrf.mxu0
      %v786 = vadd.f32 %v531, %v785
      %v787 = vpop.f32.mrf.mxu0
      %v788 = vadd.f32 %v531, %v787
      %789 = vdwg.mxu0
      %790 = vmatpush.bf16.msra.mxu0 %v692
      %791 = vmatpush.bf16.msra.mxu0 %v691
      %792 = vmatpush.bf16.msra.mxu0 %v690
      %793 = vmatpush.bf16.msra.mxu0 %v689
      %794 = vmatpush.bf16.msra.mxu0 %v688
      %795 = vmatpush.bf16.msra.mxu0 %v687
      %796 = vmatpush.bf16.msra.mxu0 %v686
      %797 = vmatpush.bf16.msra.mxu0 %v685
      %798 = vmatmul.bf16.gmra.mxu0 %v438
      %v799 = vpop.f32.mrf.mxu0
      %v800 = vadd.f32 %v771, %v799
      %v801 = vpop.f32.mrf.mxu0
      %v802 = vadd.f32 %v773, %v801
      %803 = vmatmul.bf16.gmra.mxu0 %v443
      %v804 = vpop.f32.mrf.mxu0
      %v805 = vadd.f32 %v776, %v804
      %v806 = vpop.f32.mrf.mxu0
      %v807 = vadd.f32 %v778, %v806
      %808 = vmatmul.bf16.gmra.mxu0 %v448
      %v809 = vpop.f32.mrf.mxu0
      %v810 = vadd.f32 %v781, %v809
      %v811 = vpop.f32.mrf.mxu0
      %v812 = vadd.f32 %v783, %v811
      %813 = vmatmul.bf16.gmra.mxu0 %v453
      %v814 = vpop.f32.mrf.mxu0
      %v815 = vadd.f32 %v786, %v814
      %v816 = vpop.f32.mrf.mxu0
      %v817 = vadd.f32 %v788, %v816
      %818 = vdwg.mxu0
      %819 = vmatpush.bf16.msra.mxu0 %v700
      %820 = vmatpush.bf16.msra.mxu0 %v699
      %821 = vmatpush.bf16.msra.mxu0 %v698
      %822 = vmatpush.bf16.msra.mxu0 %v697
      %823 = vmatpush.bf16.msra.mxu0 %v696
      %824 = vmatpush.bf16.msra.mxu0 %v695
      %825 = vmatpush.bf16.msra.mxu0 %v694
      %826 = vmatpush.bf16.msra.mxu0 %v693
      %827 = vmatmul.bf16.gmra.mxu0 %v439
      %v828 = vpop.f32.mrf.mxu0
      %v829 = vadd.f32 %v800, %v828
      %v830 = vpop.f32.mrf.mxu0
      %v831 = vadd.f32 %v802, %v830
      %832 = vmatmul.bf16.gmra.mxu0 %v444
      %v833 = vpop.f32.mrf.mxu0
      %v834 = vadd.f32 %v805, %v833
      %v835 = vpop.f32.mrf.mxu0
      %v836 = vadd.f32 %v807, %v835
      %837 = vmatmul.bf16.gmra.mxu0 %v449
      %v838 = vpop.f32.mrf.mxu0
      %v839 = vadd.f32 %v810, %v838
      %v840 = vpop.f32.mrf.mxu0
      %v841 = vadd.f32 %v812, %v840
      %842 = vmatmul.bf16.gmra.mxu0 %v454
      %v843 = vpop.f32.mrf.mxu0
      %v844 = vadd.f32 %v815, %v843
      %v845 = vpop.f32.mrf.mxu0
      %v846 = vadd.f32 %v817, %v845
      %847 = vdwg.mxu0
      %848 = vmatpush.bf16.msra.mxu0 %v708
      %849 = vmatpush.bf16.msra.mxu0 %v707
      %850 = vmatpush.bf16.msra.mxu0 %v706
      %851 = vmatpush.bf16.msra.mxu0 %v705
      %852 = vmatpush.bf16.msra.mxu0 %v704
      %853 = vmatpush.bf16.msra.mxu0 %v703
      %854 = vmatpush.bf16.msra.mxu0 %v702
      %855 = vmatpush.bf16.msra.mxu0 %v701
      %856 = vmatmul.bf16.gmra.mxu0 %v440
      %v857 = vpop.f32.mrf.mxu0
      %v858 = vadd.f32 %v829, %v857
      %v859 = vpop.f32.mrf.mxu0
      %v860 = vadd.f32 %v831, %v859
      %861 = vmatmul.bf16.gmra.mxu0 %v445
      %v862 = vpop.f32.mrf.mxu0
      %v863 = vadd.f32 %v834, %v862
      %v864 = vpop.f32.mrf.mxu0
      %v865 = vadd.f32 %v836, %v864
      %866 = vmatmul.bf16.gmra.mxu0 %v450
      %v867 = vpop.f32.mrf.mxu0
      %v868 = vadd.f32 %v839, %v867
      %v869 = vpop.f32.mrf.mxu0
      %v870 = vadd.f32 %v841, %v869
      %871 = vmatmul.bf16.gmra.mxu0 %v455
      %v872 = vpop.f32.mrf.mxu0
      %v873 = vadd.f32 %v844, %v872
      %v874 = vpop.f32.mrf.mxu0
      %v875 = vadd.f32 %v846, %v874
      %876 = vdwg.mxu0
      %877 = vmatpush.bf16.msra.mxu0 0
      %878 = vmatpush.bf16.msra.mxu0 0
      %879 = vmatpush.bf16.msra.mxu0 0
      %880 = vmatpush.bf16.msra.mxu0 0
      %881 = vmatpush.bf16.msra.mxu0 %v712
      %882 = vmatpush.bf16.msra.mxu0 %v711
      %883 = vmatpush.bf16.msra.mxu0 %v710
      %884 = vmatpush.bf16.msra.mxu0 %v709
      %885 = vmatmul.bf16.gmra.mxu0 %v750
      %v886 = vpop.f32.mrf.mxu0
      %v887 = vadd.f32 %v858, %v886
      %v888 = vpop.f32.mrf.mxu0
      %v889 = vadd.f32 %v860, %v888
      %890 = vmatmul.bf16.gmra.mxu0 %v753
      %v891 = vpop.f32.mrf.mxu0
      %v892 = vadd.f32 %v863, %v891
      %v893 = vpop.f32.mrf.mxu0
      %v894 = vadd.f32 %v865, %v893
      %895 = vmatmul.bf16.gmra.mxu0 %v756
      %v896 = vpop.f32.mrf.mxu0
      %v897 = vadd.f32 %v868, %v896
      %v898 = vpop.f32.mrf.mxu0
      %v899 = vadd.f32 %v870, %v898
      %900 = vmatmul.bf16.gmra.mxu0 %v759
      %v901 = vpop.f32.mrf.mxu0
      %v902 = vadd.f32 %v873, %v901
      %v903 = vpop.f32.mrf.mxu0
      %v904 = vadd.f32 %v875, %v903
      %905 = vdwg.mxu0
      %v906 = vmax.f32 %v887, 0.0
      %v907 = vmax.f32 %v889, 0.0
      %v908 = vmax.f32 %v892, 0.0
      %v909 = vmax.f32 %v894, 0.0
      %v910 = vmax.f32 %v897, 0.0
      %v911 = vmax.f32 %v899, 0.0
      %v912 = vmax.f32 %v902, 0.0
      %v913 = vmax.f32 %v904, 0.0
      %914 = vst [vmem:[%s192] sm:$0xff] %v906
      %915 = vst [vmem:[%s192 + $0x8] sm:$0xff] %v907
      %916 = vst [vmem:[%s192 + $0x10] sm:$0xff] %v908
      %917 = vst [vmem:[%s192 + $0x18] sm:$0xff] %v909
      %918 = vst [vmem:[%s192 + $0x20] sm:$0xff] %v910
      %919 = vst [vmem:[%s192 + $0x28] sm:$0xff] %v911
      %920 = vst [vmem:[%s192 + $0x30] sm:$0xff] %v912
      %921 = vst [vmem:[%s192 + $0x38] sm:$0xff] %v913
      %s922 = smul.u32 8, %s19
      %p923 = scmp.lt.s32.totalorder %s18, 3
      %s924 = scalar_select %p923, %s18, 3
      %p925 = scmp.lt.s32.totalorder %s922, 7
      %s926 = scalar_select %p925, %s922, 7
      %s927 = smul.addr %s924, 8
      %s928 = sadd.s32 %s926, %s927
      %s929 = smul.addr %s928, 8
      %s930 = scalar_lea.vmem %s3, %s929
      // Predicated region
      $region33: #{loss_fn.8} parent=31 // pred_check
        %p931 = pneg %p114
      $region34: #{loss_fn.8} parent=31 // pred_check_branch
        %933 = sbr.rel (%p931) target = $region36
      $region35: #{loss_fn.8} parent=31 // pred_region
        %s934 = smul.u32 8, %s19
      $region36: #{loss_fn.8} parent=31 // pred_fallthru
        _
    $region32: #{loss_fn.8} parent=5 // pred_fallthru
      _
    %p935 = scmp.le.s32.totalorder 2, %s9
    // Predicated region
    $region37: #{loss_fn.8} parent=5 // pred_check
      %p936 = pneg %p935
    $region38: #{loss_fn.8} parent=5 // pred_check_branch
      %938 = sbr.rel (%p936) target = $region40
    $region39: #{loss_fn.8} parent=5 // pred_region
      %s939 = ssub.s32 %s9, 2
      // Predicated region
      $region41: #{loss_fn.8} parent=39 // pred_check
        %p940 = pneg %p120
      $region42: #{loss_fn.8} parent=39 // pred_check_branch
        %942 = sbr.rel (%p940) target = $region44
      $region43: #{loss_fn.8} parent=39 // pred_region
        %s943 = smul.u32 8, %s21
        %p944 = scmp.lt.s32.totalorder %s20, 3
        %s945 = scalar_select %p944, %s20, 3
        %p946 = scmp.lt.s32.totalorder %s943, 7
        %s947 = scalar_select %p946, %s943, 7
        %s948 = smul.addr %s945, 8
        %s949 = sadd.s32 %s947, %s948
        %s950 = smul.addr %s949, 8
        %s951 = scalar_lea.vmem %s3, %s950
      $region44: #{loss_fn.8} parent=39 // pred_fallthru
        _
    $region40: #{loss_fn.8} parent=5 // pred_fallthru
      _
  $region6: #{loss_fn.8} parent=0 // loop_footer
    %s13 = sadd.s32 1, %s9
  $region7: #{loss_fn.8} parent=0 // loop_footer_branch
    %8 = sbr.rel target = $region3
  $region8: #{loss_fn.8} parent=0 // loop_exit
    _

// kernel: loss_fn.11
$region0: #{loss_fn.11}
  #allocation0 [shape = 'u32[]', space=smem, size = 0x4, offset = 0x4, fixed_abs, tag = 'smem constant byte address 0x4 - core index']
  #allocation1 [shape = 'u32[72,128]{1,0:T(1,128)}', space=vmem, size = 0x9000, scoped, tag = 'internal scratch']
  %s0 = inlined_call_operand.vmem [shape: f32[16,1024], index: 0, kind: input, shape index: {}]
  %s1 = inlined_call_operand.vmem [shape: f32[16,1024], index: 1, kind: input, shape index: {}]
  %s2 = inlined_call_operand.hbm [shape: f32[1,1], index: 2, kind: output, shape index: {}]
  %s3 = sld [smem:[#allocation0]]
  $region22: #{loss_fn.11} parent=0
    _
  %s5 = ssub.s32 1, %s3
  %s6 = scalar_select 0, %s5, %s3
  $region1: #{loss_fn.11} parent=0
    #allocation2 [shape = 'u8[512]{0}', space=vmem, size = 0x400, scoped, tag = 'output window, operand 0, single buffered']
    #allocation3 [shape = 's32[1]{0}', space=sflag, size = 0x4, scoped, tag = 'scoped memory for loss_fn.11']
    %7 = vsyncpa [#allocation3], 0
    // Predicated region
    $region2: #{loss_fn.11} parent=1 // pred_check
      _
    $region3: #{loss_fn.11} parent=1 // pred_check_branch
      %9 = sbr.rel (0) target = $region5
    $region4: #{loss_fn.11} parent=1 // pred_region
      _
    $region5: #{loss_fn.11} parent=1 // pred_fallthru
      _
    // Predicated region
    $region6: #{loss_fn.11} parent=1 // pred_check
      _
    $region7: #{loss_fn.11} parent=1 // pred_check_branch
      %11 = sbr.rel (0) target = $region9
    $region8: #{loss_fn.11} parent=1 // pred_region
      _
    $region9: #{loss_fn.11} parent=1 // pred_fallthru
      _
    %p12 = scmp.eq.s32.totalorder 0, 0
    // Predicated region
    $region10: #{loss_fn.11} parent=1 // pred_check
      %p13 = pneg %p12
    $region11: #{loss_fn.11} parent=1 // pred_check_branch
      %15 = sbr.rel (%p13) target = $region13
    $region12: #{loss_fn.11} parent=1 // pred_region
      %vm16 = vcmask 0
      %17 = vst.msk [vmem:[#allocation2] sm:$0x1] %vm16, 0.0
    $region13: #{loss_fn.11} parent=1 // pred_fallthru
      _
    %v18 = vld [vmem:[%s0] sm:$0xff]
    %v19 = vld [vmem:[%s0 + $0x8] sm:$0xff]
    %v20 = vld [vmem:[%s0 + $0x10] sm:$0xff]
    %v21 = vld [vmem:[%s0 + $0x18] sm:$0xff]
    %v22 = vld [vmem:[%s0 + $0x20] sm:$0xff]
    %v23 = vld [vmem:[%s0 + $0x28] sm:$0xff]
    %v24 = vld [vmem:[%s0 + $0x30] sm:$0xff]
    %v25 = vld [vmem:[%s0 + $0x38] sm:$0xff]
    %v26 = vld [vmem:[%s0 + $0x40] sm:$0xff]
    %v27 = vld [vmem:[%s0 + $0x48] sm:$0xff]
    %v28 = vld [vmem:[%s0 + $0x50] sm:$0xff]
    %v29 = vld [vmem:[%s0 + $0x58] sm:$0xff]
    %v30 = vld [vmem:[%s0 + $0x60] sm:$0xff]
    %v31 = vld [vmem:[%s0 + $0x68] sm:$0xff]
    %v32 = vld [vmem:[%s0 + $0x70] sm:$0xff]
    %v33 = vld [vmem:[%s0 + $0x78] sm:$0xff]
    %v34 = vld [vmem:[%s1] sm:$0xff]
    %v35 = vld [vmem:[%s1 + $0x8] sm:$0xff]
    %v36 = vld [vmem:[%s1 + $0x10] sm:$0xff]
    %v37 = vld [vmem:[%s1 + $0x18] sm:$0xff]
    %v38 = vld [vmem:[%s1 + $0x20] sm:$0xff]
    %v39 = vld [vmem:[%s1 + $0x28] sm:$0xff]
    %v40 = vld [vmem:[%s1 + $0x30] sm:$0xff]
    %v41 = vld [vmem:[%s1 + $0x38] sm:$0xff]
    %v42 = vld [vmem:[%s1 + $0x40] sm:$0xff]
    %v43 = vld [vmem:[%s1 + $0x48] sm:$0xff]
    %v44 = vld [vmem:[%s1 + $0x50] sm:$0xff]
    %v45 = vld [vmem:[%s1 + $0x58] sm:$0xff]
    %v46 = vld [vmem:[%s1 + $0x60] sm:$0xff]
    %v47 = vld [vmem:[%s1 + $0x68] sm:$0xff]
    %v48 = vld [vmem:[%s1 + $0x70] sm:$0xff]
    %v49 = vld [vmem:[%s1 + $0x78] sm:$0xff]
    %v50 = vsub.f32 %v18, %v34
    %v51 = vsub.f32 %v19, %v35
    %v52 = vsub.f32 %v20, %v36
    %v53 = vsub.f32 %v21, %v37
    %v54 = vsub.f32 %v22, %v38
    %v55 = vsub.f32 %v23, %v39
    %v56 = vsub.f32 %v24, %v40
    %v57 = vsub.f32 %v25, %v41
    %v58 = vsub.f32 %v26, %v42
    %v59 = vsub.f32 %v27, %v43
    %v60 = vsub.f32 %v28, %v44
    %v61 = vsub.f32 %v29, %v45
    %v62 = vsub.f32 %v30, %v46
    %v63 = vsub.f32 %v31, %v47
    %v64 = vsub.f32 %v32, %v48
    %v65 = vsub.f32 %v33, %v49
    %v66 = vmul.f32 %v50, %v50
    %v67 = vmul.f32 %v51, %v51
    %v68 = vmul.f32 %v52, %v52
    %v69 = vmul.f32 %v53, %v53
    %v70 = vmul.f32 %v54, %v54
    %v71 = vmul.f32 %v55, %v55
    %v72 = vmul.f32 %v56, %v56
    %v73 = vmul.f32 %v57, %v57
    %v74 = vmul.f32 %v58, %v58
    %v75 = vmul.f32 %v59, %v59
    %v76 = vmul.f32 %v60, %v60
    %v77 = vmul.f32 %v61, %v61
    %v78 = vmul.f32 %v62, %v62
    %v79 = vmul.f32 %v63, %v63
    %v80 = vmul.f32 %v64, %v64
    %v81 = vmul.f32 %v65, %v65
    %v82 = vld [vmem:[#allocation2] sm:$0x1]
    %v83 = vadd.f32 %v66, %v67
    %v84 = vadd.f32 %v83, %v68
    %v85 = vadd.f32 %v84, %v69
    %v86 = vadd.f32 %v85, %v70
    %v87 = vadd.f32 %v86, %v71
    %v88 = vadd.f32 %v87, %v72
    %v89 = vadd.f32 %v88, %v73
    %v90 = vadd.f32 %v89, %v74
    %v91 = vadd.f32 %v90, %v75
    %v92 = vadd.f32 %v91, %v76
    %v93 = vadd.f32 %v92, %v77
    %v94 = vadd.f32 %v93, %v78
    %v95 = vadd.f32 %v94, %v79
    %v96 = vadd.f32 %v95, %v80
    %v97 = vadd.f32 %v96, %v81
    %98 = vadd.xlane.f32.xlu0 %v97
    %v99 = vpop.xlane.xlu0 %98
    %v100 = vrot.slane %v99, 4
    %v101 = vadd.f32 %v99, %v100
    %v102 = vrot.slane %v101, 2
    %v103 = vadd.f32 %v101, %v102
    %v104 = vrot.slane %v103, 1
    %v105 = vadd.f32 %v103, %v104
    %s106 = vtos %v105
    %v107 = vstv %s106
    %v108 = vadd.f32 %v82, %v107
    %vm109 = vcmask 0
    %110 = vst.msk [vmem:[#allocation2] sm:$0x1] %vm109, %v108
    // Predicated region
    $region14: #{loss_fn.11} parent=1 // pred_check
      _
    $region15: #{loss_fn.11} parent=1 // pred_check_branch
      %112 = sbr.rel (0) target = $region17
    $region16: #{loss_fn.11} parent=1 // pred_region
      %114 = vsyncadd [#allocation3], 0
      %s116 = sshll.u32 [#allocation2], 4
      %s117 = int_to_ptr.vmem [resolvable:$true] %s116
      %s118 = sshll.u32 %s2, 4
      %s119 = int_to_ptr.hbm [resolvable:$true] %s118
      %121 = dma.vmem_to_hbm [thread:$0]  %s117, 16, %s119, [#allocation3]
    $region17: #{loss_fn.11} parent=1 // pred_fallthru
      _
    // Predicated region
    $region18: #{loss_fn.11} parent=1 // pred_check
      _
    $region19: #{loss_fn.11} parent=1 // pred_check_branch
      %123 = sbr.rel (0) target = $region21
    $region20: #{loss_fn.11} parent=1 // pred_region
      %125 = dma.done [#allocation3], 16
    $region21: #{loss_fn.11} parent=1 // pred_fallthru
      _
    %126 = vsyncpa [#allocation3], 1

// kernel: loss_fn.9
$region0: #{loss_fn.9}
  #allocation0 [shape = 'u32[]', space=smem, size = 0x4, offset = 0x4, fixed_abs, tag = 'smem constant byte address 0x4 - core index']
  #allocation1 [shape = 'u32[72,128]{1,0:T(1,128)}', space=vmem, size = 0x9000, scoped, tag = 'internal scratch']
  %s0 = inlined_call_operand.vmem [shape: f32[4,10,10,128], index: 0, kind: input, shape index: {}]
  %s1 = inlined_call_operand.vmem [shape: bf16[1152,128], index: 1, kind: input, shape index: {}]
  %s2 = inlined_call_operand.vmem [shape: f32[1,128], index: 2, kind: input, shape index: {}]
  %s3 = inlined_call_operand.vmem [shape: f32[4,64,128], index: 3, kind: output, shape index: {}]
  %s4 = sld [smem:[#allocation0]]
  $region45: #{loss_fn.9} parent=0
    _
  %s6 = ssub.s32 1, %s4
  %s7 = scalar_select 0, %s6, %s4
  loop: start=0, step=1, limit=6
  $region2: #{loss_fn.9} parent=0 // loop_pre_header
    _
  $region3: #{loss_fn.9} parent=0 // loop_header
    %s9 = sphi 0, %s13
    %p10 = scmp.ge.s32.totalorder %s9, 6
    %s16 = sphi 0, %s28
    %s17 = sphi 0, %s24
    %s18 = sphi 0, %s16
    %s19 = sphi 0, %s17
    %s20 = sphi 0, %s18
    %s21 = sphi 0, %s19
    %s31 = sphi 0, %s33
    %s34 = sphi 0, %s31
    %s35 = sphi 0, %s34
    %s51 = sphi 0, %s35
    %s55 = sphi 0, %s55
    %s57 = sphi 0, %s55
    %s58 = sphi 0, %s57
    %s72 = sphi 0, %s58
    %s76 = sphi 0, %s76
    %s78 = sphi 0, %s76
    %s79 = sphi 0, %s78
    %s93 = sphi 0, %s79
    %s101 = sphi 0, %s103
    %s104 = sphi 0, %s101
    %s105 = sphi 0, %s104
    %s121 = sphi 0, %s105
  $region4: #{loss_fn.9} parent=0 // loop_header_branch
    %12 = sbr.rel (%p10) target = $region8
  $region5: #{loss_fn.9} parent=0 // loop_body
    %s14 = ssub.s32 %s9, 1
    %s15 = ssub.s32 %s9, 2
    %s22 = sadd.s32 1, %s17
    %p23 = scmp.ge.s32.totalorder %s22, 1
    %s24 = scalar_select %p23, 0, %s22
    %s25 = sadd.s32 1, %s16
    %s26 = scalar_select %p23, %s25, %s16
    %p27 = scmp.ge.s32.totalorder %s26, 4
    %s28 = scalar_select %p27, 0, %s26
    %s29 = ssub.s32 %s16, %s28
    %p30 = scmp.eq.s32.totalorder %s29, 0
    %s32 = sadd.s32 %s31, 1
    %s33 = scalar_select %p30, %s31, %s32
    %p36 = pneg %p30
    %p37 = scmp.eq.s32.totalorder %s9, 3
    %p38 = por %p36, %p37
    %p39 = scmp.ne.s32.totalorder %s31, %s34
    %p40 = scmp.eq.s32.totalorder %s9, 0
    %p41 = por %p39, %p40
    %p42 = scmp.ne.s32.totalorder %s31, %s34
    %p43 = scmp.eq.s32.totalorder %s14, 3
    %p44 = por %p42, %p43
    %p45 = scmp.ne.s32.totalorder %s34, %s35
    %p46 = scmp.eq.s32.totalorder %s14, 0
    %p47 = por %p45, %p46
    %p48 = scmp.ne.s32.totalorder %s34, %s35
    %p49 = scmp.eq.s32.totalorder %s15, 3
    %p50 = por %p48, %p49
    %p52 = scmp.ne.s32.totalorder %s35, %s51
    %p53 = scmp.eq.s32.totalorder %s15, 0
    %p54 = por %p52, %p53
    %s56 = sadd.s32 %s55, 1
    %p59 = scmp.eq.s32.totalorder %s9, 3
    %p60 = scmp.ne.s32.totalorder %s55, %s57
    %p61 = scmp.eq.s32.totalorder %s9, 0
    %p62 = por %p60, %p61
    %p63 = scmp.ne.s32.totalorder %s55, %s57
    %p64 = scmp.eq.s32.totalorder %s14, 3
    %p65 = por %p63, %p64
    %p66 = scmp.ne.s32.totalorder %s57, %s58
    %p67 = scmp.eq.s32.totalorder %s14, 0
    %p68 = por %p66, %p67
    %p69 = scmp.ne.s32.totalorder %s57, %s58
    %p70 = scmp.eq.s32.totalorder %s15, 3
    %p71 = por %p69, %p70
    %p73 = scmp.ne.s32.totalorder %s58, %s72
    %p74 = scmp.eq.s32.totalorder %s15, 0
    %p75 = por %p73, %p74
    %s77 = sadd.s32 %s76, 1
    %p80 = scmp.eq.s32.totalorder %s9, 3
    %p81 = scmp.ne.s32.totalorder %s76, %s78
    %p82 = scmp.eq.s32.totalorder %s9, 0
    %p83 = por %p81, %p82
    %p84 = scmp.ne.s32.totalorder %s76, %s78
    %p85 = scmp.eq.s32.totalorder %s14, 3
    %p86 = por %p84, %p85
    %p87 = scmp.ne.s32.totalorder %s78, %s79
    %p88 = scmp.eq.s32.totalorder %s14, 0
    %p89 = por %p87, %p88
    %p90 = scmp.ne.s32.totalorder %s78, %s79
    %p91 = scmp.eq.s32.totalorder %s15, 3
    %p92 = por %p90, %p91
    %p94 = scmp.ne.s32.totalorder %s79, %s93
    %p95 = scmp.eq.s32.totalorder %s15, 0
    %p96 = por %p94, %p95
    %s97 = ssub.s32 %s16, %s28
    %s98 = ssub.s32 %s17, %s24
    %s99 = sor.u32 %s97, %s98
    %p100 = scmp.eq.s32.totalorder %s99, 0
    %s102 = sadd.s32 %s101, 1
    %s103 = scalar_select %p100, %s101, %s102
    %p106 = pneg %p100
    %p107 = scmp.eq.s32.totalorder %s9, 3
    %p108 = por %p106, %p107
    %p109 = scmp.ne.s32.totalorder %s101, %s104
    %p110 = scmp.eq.s32.totalorder %s9, 0
    %p111 = por %p109, %p110
    %p112 = scmp.ne.s32.totalorder %s101, %s104
    %p113 = scmp.eq.s32.totalorder %s14, 3
    %p114 = por %p112, %p113
    %p115 = scmp.ne.s32.totalorder %s104, %s105
    %p116 = scmp.eq.s32.totalorder %s14, 0
    %p117 = por %p115, %p116
    %p118 = scmp.ne.s32.totalorder %s104, %s105
    %p119 = scmp.eq.s32.totalorder %s15, 3
    %p120 = por %p118, %p119
    %p122 = scmp.ne.s32.totalorder %s105, %s121
    %p123 = scmp.eq.s32.totalorder %s15, 0
    %p124 = por %p122, %p123
    %p125 = scmp.le.s32.totalorder 1, %s9
    %p126 = scmp.lt.s32.totalorder %s9, 5
    %p127 = pnand %p125, %p126
    %p128 = pneg %p127
    // Predicated region
    $region9: #{loss_fn.9} parent=5 // pred_check
      _
    $region10: #{loss_fn.9} parent=5 // pred_check_branch
      %130 = sbr.rel (%p127) target = $region12
    $region11: #{loss_fn.9} parent=5 // pred_region
      %s131 = ssub.s32 %s9, 1
      // Predicated region
      $region13: #{loss_fn.9} parent=11 // pred_check
        %p132 = pneg %p68
      $region14: #{loss_fn.9} parent=11 // pred_check_branch
        %134 = sbr.rel (%p132) target = $region16
      $region15: #{loss_fn.9} parent=11 // pred_region
        _
      $region16: #{loss_fn.9} parent=11 // pred_fallthru
        _
      // Predicated region
      $region17: #{loss_fn.9} parent=11 // pred_check
        %p135 = pneg %p89
      $region18: #{loss_fn.9} parent=11 // pred_check_branch
        %137 = sbr.rel (%p135) target = $region20
      $region19: #{loss_fn.9} parent=11 // pred_region
        _
      $region20: #{loss_fn.9} parent=11 // pred_fallthru
        _
    $region12: #{loss_fn.9} parent=5 // pred_fallthru
      _
    %p138 = scmp.lt.s32.totalorder %s9, 4
    // Predicated region
    $region21: #{loss_fn.9} parent=5 // pred_check
      %p139 = pneg %p138
    $region22: #{loss_fn.9} parent=5 // pred_check_branch
      %141 = sbr.rel (%p139) target = $region24
    $region23: #{loss_fn.9} parent=5 // pred_region
      // Predicated region
      $region25: #{loss_fn.9} parent=23 // pred_check
        %p142 = pneg %p41
      $region26: #{loss_fn.9} parent=23 // pred_check_branch
        %144 = sbr.rel (%p142) target = $region28
      $region27: #{loss_fn.9} parent=23 // pred_region
        %p145 = scmp.lt.s32.totalorder %s16, 3
        %s146 = scalar_select %p145, %s16, 3
        %s147 = smul.addr %s146, 20
        %s148 = smul.addr %s147, 8
        %s149 = scalar_lea.vmem %s0, %s148
      $region28: #{loss_fn.9} parent=23 // pred_fallthru
        _
    $region24: #{loss_fn.9} parent=5 // pred_fallthru
      _
    %p150 = scmp.le.s32.totalorder 1, %s9
    %p151 = scmp.lt.s32.totalorder %s9, 5
    %p152 = pnand %p150, %p151
    %p153 = pneg %p152
    // Predicated region
    $region29: #{loss_fn.9} parent=5 // pred_check
      _
    $region30: #{loss_fn.9} parent=5 // pred_check_branch
      %155 = sbr.rel (%p152) target = $region32
    $region31: #{loss_fn.9} parent=5 // pred_region
      %s156 = ssub.s32 %s9, 1
      %p157 = scmp.lt.s32.totalorder %s18, 3
      %s158 = scalar_select %p157, %s18, 3
      %s159 = smul.addr %s158, 20
      %s160 = smul.addr %s159, 8
      %s161 = scalar_lea.vmem %s0, %s160
      %p162 = pneg %p47
      %p163 = pneg %p44
      %p164 = pneg %p68
      %p165 = pneg %p65
      %p166 = pneg %p89
      %p167 = pneg %p86
      %p168 = pneg %p117
      %p169 = pneg %p114
      %s170 = smul.u32 8, %s19
      %p171 = scmp.lt.s32.totalorder %s18, 3
      %s172 = scalar_select %p171, %s18, 3
      %p173 = scmp.lt.s32.totalorder %s170, 7
      %s174 = scalar_select %p173, %s170, 7
      %s175 = smul.addr %s172, 8
      %s176 = sadd.s32 %s174, %s175
      %s177 = smul.addr %s176, 8
      %s178 = scalar_lea.vmem %s3, %s177
      %p179 = scmp.lt.s32.totalorder %s18, 3
      %s180 = scalar_select %p179, %s18, 3
      %s181 = smul.addr %s180, 20
      %s182 = smul.addr %s181, 8
      %s183 = scalar_lea.vmem %s0, %s182
      %s184 = smul.u32 8, %s19
      %p185 = scmp.lt.s32.totalorder %s18, 3
      %s186 = scalar_select %p185, %s18, 3
      %p187 = scmp.lt.s32.totalorder %s184, 7
      %s188 = scalar_select %p187, %s184, 7
      %s189 = smul.addr %s186, 8
      %s190 = sadd.s32 %s188, %s189
      %s191 = smul.addr %s190, 8
      %s192 = scalar_lea.vmem %s3, %s191
      %s193 = smul.u32 8, %s19
      %s194 = smul.u32 %s19, 8
      %s195 = smul.u32 %s194, 16
      %s196 = scalar_lea.vmem %s183, %s195
      %v197 = vld [vmem:[%s196] sm:$0xff]
      %v198 = vld [vmem:[%s196 + $0x10] sm:$0xff]
      %v199 = vld [vmem:[%s196 + $0x20] sm:$0xff]
      %v200 = vld [vmem:[%s196 + $0x30] sm:$0xff]
      %v201 = vld [vmem:[%s196 + $0x40] sm:$0xff]
      %v202 = vld [vmem:[%s196 + $0x50] sm:$0xff]
      %v203 = vld [vmem:[%s196 + $0x60] sm:$0xff]
      %v204 = vld [vmem:[%s196 + $0x70] sm:$0xff]
      %v205 = vld [vmem:[%s196 + $0x1] sm:$0xff]
      %v206 = vld [vmem:[%s196 + $0x11] sm:$0xff]
      %v207 = vld [vmem:[%s196 + $0x21] sm:$0xff]
      %v208 = vld [vmem:[%s196 + $0x31] sm:$0xff]
      %v209 = vld [vmem:[%s196 + $0x41] sm:$0xff]
      %v210 = vld [vmem:[%s196 + $0x51] sm:$0xff]
      %v211 = vld [vmem:[%s196 + $0x61] sm:$0xff]
      %v212 = vld [vmem:[%s196 + $0x71] sm:$0xff]
      %v213 = vld [vmem:[%s196 + $0x2] sm:$0xff]
      %v214 = vld [vmem:[%s196 + $0x12] sm:$0xff]
      %v215 = vld [vmem:[%s196 + $0x22] sm:$0xff]
      %v216 = vld [vmem:[%s196 + $0x32] sm:$0xff]
      %v217 = vld [vmem:[%s196 + $0x42] sm:$0xff]
      %v218 = vld [vmem:[%s196 + $0x52] sm:$0xff]
      %v219 = vld [vmem:[%s196 + $0x62] sm:$0xff]
      %v220 = vld [vmem:[%s196 + $0x72] sm:$0xff]
      %s221 = sadd.s32 %s194, 1
      %s222 = smul.u32 %s221, 16
      %s223 = scalar_lea.vmem %s183, %s222
      %v224 = vld [vmem:[%s223] sm:$0xff]
      %v225 = vld [vmem:[%s223 + $0x10] sm:$0xff]
      %v226 = vld [vmem:[%s223 + $0x20] sm:$0xff]
      %v227 = vld [vmem:[%s223 + $0x30] sm:$0xff]
      %v228 = vld [vmem:[%s223 + $0x40] sm:$0xff]
      %v229 = vld [vmem:[%s223 + $0x50] sm:$0xff]
      %v230 = vld [vmem:[%s223 + $0x60] sm:$0xff]
      %v231 = vld [vmem:[%s223 + $0x70] sm:$0xff]
      %v232 = vld [vmem:[%s223 + $0x1] sm:$0xff]
      %v233 = vld [vmem:[%s223 + $0x11] sm:$0xff]
      %v234 = vld [vmem:[%s223 + $0x21] sm:$0xff]
      %v235 = vld [vmem:[%s223 + $0x31] sm:$0xff]
      %v236 = vld [vmem:[%s223 + $0x41] sm:$0xff]
      %v237 = vld [vmem:[%s223 + $0x51] sm:$0xff]
      %v238 = vld [vmem:[%s223 + $0x61] sm:$0xff]
      %v239 = vld [vmem:[%s223 + $0x71] sm:$0xff]
      %v240 = vld [vmem:[%s223 + $0x2] sm:$0xff]
      %v241 = vld [vmem:[%s223 + $0x12] sm:$0xff]
      %v242 = vld [vmem:[%s223 + $0x22] sm:$0xff]
      %v243 = vld [vmem:[%s223 + $0x32] sm:$0xff]
      %v244 = vld [vmem:[%s223 + $0x42] sm:$0xff]
      %v245 = vld [vmem:[%s223 + $0x52] sm:$0xff]
      %v246 = vld [vmem:[%s223 + $0x62] sm:$0xff]
      %v247 = vld [vmem:[%s223 + $0x72] sm:$0xff]
      %s248 = sadd.s32 %s194, 2
      %s249 = smul.u32 %s248, 16
      %s250 = scalar_lea.vmem %s183, %s249
      %v251 = vld [vmem:[%s250] sm:$0xff]
      %v252 = vld [vmem:[%s250 + $0x10] sm:$0xff]
      %v253 = vld [vmem:[%s250 + $0x20] sm:$0xff]
      %v254 = vld [vmem:[%s250 + $0x30] sm:$0xff]
      %v255 = vld [vmem:[%s250 + $0x40] sm:$0xff]
      %v256 = vld [vmem:[%s250 + $0x50] sm:$0xff]
      %v257 = vld [vmem:[%s250 + $0x60] sm:$0xff]
      %v258 = vld [vmem:[%s250 + $0x70] sm:$0xff]
      %v259 = vld [vmem:[%s250 + $0x1] sm:$0xff]
      %v260 = vld [vmem:[%s250 + $0x11] sm:$0xff]
      %v261 = vld [vmem:[%s250 + $0x21] sm:$0xff]
      %v262 = vld [vmem:[%s250 + $0x31] sm:$0xff]
      %v263 = vld [vmem:[%s250 + $0x41] sm:$0xff]
      %v264 = vld [vmem:[%s250 + $0x51] sm:$0xff]
      %v265 = vld [vmem:[%s250 + $0x61] sm:$0xff]
      %v266 = vld [vmem:[%s250 + $0x71] sm:$0xff]
      %v267 = vld [vmem:[%s250 + $0x2] sm:$0xff]
      %v268 = vld [vmem:[%s250 + $0x12] sm:$0xff]
      %v269 = vld [vmem:[%s250 + $0x22] sm:$0xff]
      %v270 = vld [vmem:[%s250 + $0x32] sm:$0xff]
      %v271 = vld [vmem:[%s250 + $0x42] sm:$0xff]
      %v272 = vld [vmem:[%s250 + $0x52] sm:$0xff]
      %v273 = vld [vmem:[%s250 + $0x62] sm:$0xff]
      %v274 = vld [vmem:[%s250 + $0x72] sm:$0xff]
      %v275 = vpack.c.bf16 %v198, %v197
      %v276 = vpack.c.bf16 %v206, %v205
      %v277 = vpack.c.bf16 %v214, %v213
      %v278 = vpack.c.bf16 %v225, %v224
      %v279 = vpack.c.bf16 %v233, %v232
      %v280 = vpack.c.bf16 %v241, %v240
      %v281 = vpack.c.bf16 %v252, %v251
      %v282 = vpack.c.bf16 %v260, %v259
      %v283 = vpack.c.bf16 %v268, %v267
      %v284 = vpack.c.bf16 %v200, %v199
      %v285 = vpack.c.bf16 %v208, %v207
      %v286 = vpack.c.bf16 %v216, %v215
      %v287 = vpack.c.bf16 %v227, %v226
      %v288 = vpack.c.bf16 %v235, %v234
      %v289 = vpack.c.bf16 %v243, %v242
      %v290 = vpack.c.bf16 %v254, %v253
      %v291 = vpack.c.bf16 %v262, %v261
      %v292 = vpack.c.bf16 %v270, %v269
      %v293 = vpack.c.bf16 %v202, %v201
      %v294 = vpack.c.bf16 %v210, %v209
      %v295 = vpack.c.bf16 %v218, %v217
      %v296 = vpack.c.bf16 %v229, %v228
      %v297 = vpack.c.bf16 %v237, %v236
      %v298 = vpack.c.bf16 %v245, %v244
      %v299 = vpack.c.bf16 %v256, %v255
      %v300 = vpack.c.bf16 %v264, %v263
      %v301 = vpack.c.bf16 %v272, %v271
      %v302 = vpack.c.bf16 %v204, %v203
      %v303 = vpack.c.bf16 %v212, %v211
      %v304 = vpack.c.bf16 %v220, %v219
      %v305 = vpack.c.bf16 %v231, %v230
      %v306 = vpack.c.bf16 %v239, %v238
      %v307 = vpack.c.bf16 %v247, %v246
      %v308 = vpack.c.bf16 %v258, %v257
      %v309 = vpack.c.bf16 %v266, %v265
      %v310 = vpack.c.bf16 %v274, %v273
      %v311 = vld [vmem:[%s1] sm:$0xf]
      %v312 = vld [vmem:[%s1 + $0x4] sm:$0xf]
      %v313 = vld [vmem:[%s1 + $0x8] sm:$0xf]
      %v314 = vld [vmem:[%s1 + $0xc] sm:$0xf]
      %v315 = vld [vmem:[%s1 + $0x10] sm:$0xf]
      %v316 = vld [vmem:[%s1 + $0x14] sm:$0xf]
      %v317 = vld [vmem:[%s1 + $0x18] sm:$0xf]
      %v318 = vld [vmem:[%s1 + $0x1c] sm:$0xf]
      %v319 = vld [vmem:[%s1 + $0x20] sm:$0xf]
      %v320 = vld [vmem:[%s1 + $0x24] sm:$0xf]
      %v321 = vld [vmem:[%s1 + $0x28] sm:$0xf]
      %v322 = vld [vmem:[%s1 + $0x2c] sm:$0xf]
      %v323 = vld [vmem:[%s1 + $0x30] sm:$0xf]
      %v324 = vld [vmem:[%s1 + $0x34] sm:$0xf]
      %v325 = vld [vmem:[%s1 + $0x38] sm:$0xf]
      %v326 = vld [vmem:[%s1 + $0x3c] sm:$0xf]
      %v327 = vld [vmem:[%s1 + $0x40] sm:$0xf]
      %v328 = vld [vmem:[%s1 + $0x44] sm:$0xf]
      %v329 = vld [vmem:[%s1 + $0x48] sm:$0xf]
      %v330 = vld [vmem:[%s1 + $0x4c] sm:$0xf]
      %v331 = vld [vmem:[%s1 + $0x50] sm:$0xf]
      %v332 = vld [vmem:[%s1 + $0x54] sm:$0xf]
      %v333 = vld [vmem:[%s1 + $0x58] sm:$0xf]
      %v334 = vld [vmem:[%s1 + $0x5c] sm:$0xf]
      %v335 = vld [vmem:[%s1 + $0x60] sm:$0xf]
      %v336 = vld [vmem:[%s1 + $0x64] sm:$0xf]
      %v337 = vld [vmem:[%s1 + $0x68] sm:$0xf]
      %v338 = vld [vmem:[%s1 + $0x6c] sm:$0xf]
      %v339 = vld [vmem:[%s1 + $0x70] sm:$0xf]
      %v340 = vld [vmem:[%s1 + $0x74] sm:$0xf]
      %v341 = vld [vmem:[%s1 + $0x78] sm:$0xf]
      %v342 = vld [vmem:[%s1 + $0x7c] sm:$0xf]
      %v343 = vld [vmem:[%s1 + $0x80] sm:$0xf]
      %v344 = vld [vmem:[%s1 + $0x84] sm:$0xf]
      %v345 = vld [vmem:[%s1 + $0x88] sm:$0xf]
      %v346 = vld [vmem:[%s1 + $0x8c] sm:$0xf]
      %v347 = vld [vmem:[%s1 + $0x90] sm:$0xf]
      %v348 = vld [vmem:[%s1 + $0x94] sm:$0xf]
      %v349 = vld [vmem:[%s1 + $0x98] sm:$0xf]
      %v350 = vld [vmem:[%s1 + $0x9c] sm:$0xf]
      %v351 = vld [vmem:[%s1 + $0xa0] sm:$0xf]
      %v352 = vld [vmem:[%s1 + $0xa4] sm:$0xf]
      %v353 = vld [vmem:[%s1 + $0xa8] sm:$0xf]
      %v354 = vld [vmem:[%s1 + $0xac] sm:$0xf]
      %v355 = vld [vmem:[%s1 + $0xb0] sm:$0xf]
      %v356 = vld [vmem:[%s1 + $0xb4] sm:$0xf]
      %v357 = vld [vmem:[%s1 + $0xb8] sm:$0xf]
      %v358 = vld [vmem:[%s1 + $0xbc] sm:$0xf]
      %v359 = vld [vmem:[%s1 + $0xc0] sm:$0xf]
      %v360 = vld [vmem:[%s1 + $0xc4] sm:$0xf]
      %v361 = vld [vmem:[%s1 + $0xc8] sm:$0xf]
      %v362 = vld [vmem:[%s1 + $0xcc] sm:$0xf]
      %v363 = vld [vmem:[%s1 + $0xd0] sm:$0xf]
      %v364 = vld [vmem:[%s1 + $0xd4] sm:$0xf]
      %v365 = vld [vmem:[%s1 + $0xd8] sm:$0xf]
      %v366 = vld [vmem:[%s1 + $0xdc] sm:$0xf]
      %v367 = vld [vmem:[%s1 + $0xe0] sm:$0xf]
      %v368 = vld [vmem:[%s1 + $0xe4] sm:$0xf]
      %v369 = vld [vmem:[%s1 + $0xe8] sm:$0xf]
      %v370 = vld [vmem:[%s1 + $0xec] sm:$0xf]
      %v371 = vld [vmem:[%s1 + $0xf0] sm:$0xf]
      %v372 = vld [vmem:[%s1 + $0xf4] sm:$0xf]
      %v373 = vld [vmem:[%s1 + $0xf8] sm:$0xf]
      %v374 = vld [vmem:[%s1 + $0xfc] sm:$0xf]
      %v375 = vld [vmem:[%s1 + $0x100] sm:$0xf]
      %v376 = vld [vmem:[%s1 + $0x104] sm:$0xf]
      %v377 = vld [vmem:[%s1 + $0x108] sm:$0xf]
      %v378 = vld [vmem:[%s1 + $0x10c] sm:$0xf]
      %v379 = vld [vmem:[%s1 + $0x110] sm:$0xf]
      %v380 = vld [vmem:[%s1 + $0x114] sm:$0xf]
      %v381 = vld [vmem:[%s1 + $0x118] sm:$0xf]
      %v382 = vld [vmem:[%s1 + $0x11c] sm:$0xf]
      %v383 = vld [vmem:[%s1 + $0x120] sm:$0xf]
      %v384 = vld [vmem:[%s1 + $0x124] sm:$0xf]
      %v385 = vld [vmem:[%s1 + $0x128] sm:$0xf]
      %v386 = vld [vmem:[%s1 + $0x12c] sm:$0xf]
      %v387 = vld [vmem:[%s1 + $0x130] sm:$0xf]
      %v388 = vld [vmem:[%s1 + $0x134] sm:$0xf]
      %v389 = vld [vmem:[%s1 + $0x138] sm:$0xf]
      %v390 = vld [vmem:[%s1 + $0x13c] sm:$0xf]
      %v391 = vld [vmem:[%s1 + $0x140] sm:$0xf]
      %v392 = vld [vmem:[%s1 + $0x144] sm:$0xf]
      %v393 = vld [vmem:[%s1 + $0x148] sm:$0xf]
      %v394 = vld [vmem:[%s1 + $0x14c] sm:$0xf]
      %v395 = vld [vmem:[%s1 + $0x150] sm:$0xf]
      %v396 = vld [vmem:[%s1 + $0x154] sm:$0xf]
      %v397 = vld [vmem:[%s1 + $0x158] sm:$0xf]
      %v398 = vld [vmem:[%s1 + $0x15c] sm:$0xf]
      %v399 = vld [vmem:[%s1 + $0x160] sm:$0xf]
      %v400 = vld [vmem:[%s1 + $0x164] sm:$0xf]
      %v401 = vld [vmem:[%s1 + $0x168] sm:$0xf]
      %v402 = vld [vmem:[%s1 + $0x16c] sm:$0xf]
      %v403 = vld [vmem:[%s1 + $0x170] sm:$0xf]
      %v404 = vld [vmem:[%s1 + $0x174] sm:$0xf]
      %v405 = vld [vmem:[%s1 + $0x178] sm:$0xf]
      %v406 = vld [vmem:[%s1 + $0x17c] sm:$0xf]
      %v407 = vld [vmem:[%s1 + $0x180] sm:$0xf]
      %v408 = vld [vmem:[%s1 + $0x184] sm:$0xf]
      %v409 = vld [vmem:[%s1 + $0x188] sm:$0xf]
      %v410 = vld [vmem:[%s1 + $0x18c] sm:$0xf]
      %v411 = vld [vmem:[%s1 + $0x190] sm:$0xf]
      %v412 = vld [vmem:[%s1 + $0x194] sm:$0xf]
      %v413 = vld [vmem:[%s1 + $0x198] sm:$0xf]
      %v414 = vld [vmem:[%s1 + $0x19c] sm:$0xf]
      %v415 = vld [vmem:[%s1 + $0x1a0] sm:$0xf]
      %v416 = vld [vmem:[%s1 + $0x1a4] sm:$0xf]
      %v417 = vld [vmem:[%s1 + $0x1a8] sm:$0xf]
      %v418 = vld [vmem:[%s1 + $0x1ac] sm:$0xf]
      %v419 = vld [vmem:[%s1 + $0x1b0] sm:$0xf]
      %v420 = vld [vmem:[%s1 + $0x1b4] sm:$0xf]
      %v421 = vld [vmem:[%s1 + $0x1b8] sm:$0xf]
      %v422 = vld [vmem:[%s1 + $0x1bc] sm:$0xf]
      %v423 = vld [vmem:[%s1 + $0x1c0] sm:$0xf]
      %v424 = vld [vmem:[%s1 + $0x1c4] sm:$0xf]
      %v425 = vld [vmem:[%s1 + $0x1c8] sm:$0xf]
      %v426 = vld [vmem:[%s1 + $0x1cc] sm:$0xf]
      %v427 = vld [vmem:[%s1 + $0x1d0] sm:$0xf]
      %v428 = vld [vmem:[%s1 + $0x1d4] sm:$0xf]
      %v429 = vld [vmem:[%s1 + $0x1d8] sm:$0xf]
      %v430 = vld [vmem:[%s1 + $0x1dc] sm:$0xf]
      %v431 = vld [vmem:[%s1 + $0x1e0] sm:$0xf]
      %v432 = vld [vmem:[%s1 + $0x1e4] sm:$0xf]
      %v433 = vld [vmem:[%s1 + $0x1e8] sm:$0xf]
      %v434 = vld [vmem:[%s1 + $0x1ec] sm:$0xf]
      %v435 = vld [vmem:[%s1 + $0x1f0] sm:$0xf]
      %v436 = vld [vmem:[%s1 + $0x1f4] sm:$0xf]
      %v437 = vld [vmem:[%s1 + $0x1f8] sm:$0xf]
      %v438 = vld [vmem:[%s1 + $0x1fc] sm:$0xf]
      %v439 = vld [vmem:[%s1 + $0x200] sm:$0xf]
      %v440 = vld [vmem:[%s1 + $0x204] sm:$0xf]
      %v441 = vld [vmem:[%s1 + $0x208] sm:$0xf]
      %v442 = vld [vmem:[%s1 + $0x20c] sm:$0xf]
      %v443 = vld [vmem:[%s1 + $0x210] sm:$0xf]
      %v444 = vld [vmem:[%s1 + $0x214] sm:$0xf]
      %v445 = vld [vmem:[%s1 + $0x218] sm:$0xf]
      %v446 = vld [vmem:[%s1 + $0x21c] sm:$0xf]
      %v447 = vld [vmem:[%s1 + $0x220] sm:$0xf]
      %v448 = vld [vmem:[%s1 + $0x224] sm:$0xf]
      %v449 = vld [vmem:[%s1 + $0x228] sm:$0xf]
      %v450 = vld [vmem:[%s1 + $0x22c] sm:$0xf]
      %v451 = vld [vmem:[%s1 + $0x230] sm:$0xf]
      %v452 = vld [vmem:[%s1 + $0x234] sm:$0xf]
      %v453 = vld [vmem:[%s1 + $0x238] sm:$0xf]
      %v454 = vld [vmem:[%s1 + $0x23c] sm:$0xf]
      %v455 = vld [vmem:[%s2] sm:$0x1]
      %v457 = vperm.slane %v455, 0
      %v603 = vunpack.c.l.b16 %v311
      %v604 = vunpack.c.l.b16 %v312
      %v605 = vunpack.c.l.b16 %v313
      %v606 = vunpack.c.l.b16 %v314
      %v607 = vunpack.c.l.b16 %v315
      %v608 = vunpack.c.l.b16 %v316
      %v609 = vunpack.c.l.b16 %v317
      %v610 = vunpack.c.l.b16 %v318
      %v611 = vunpack.c.l.b16 %v319
      %v612 = vunpack.c.l.b16 %v320
      %v613 = vunpack.c.l.b16 %v321
      %v614 = vunpack.c.l.b16 %v322
      %v615 = vunpack.c.l.b16 %v323
      %v616 = vunpack.c.l.b16 %v324
      %v617 = vunpack.c.l.b16 %v325
      %v618 = vunpack.c.l.b16 %v326
      %v619 = vunpack.c.l.b16 %v327
      %v620 = vunpack.c.l.b16 %v328
      %v621 = vunpack.c.l.b16 %v329
      %v622 = vunpack.c.l.b16 %v330
      %v623 = vunpack.c.l.b16 %v331
      %v624 = vunpack.c.l.b16 %v332
      %v625 = vunpack.c.l.b16 %v333
      %v626 = vunpack.c.l.b16 %v334
      %v627 = vunpack.c.l.b16 %v335
      %v628 = vunpack.c.l.b16 %v336
      %v629 = vunpack.c.l.b16 %v337
      %v630 = vunpack.c.l.b16 %v338
      %v631 = vunpack.c.l.b16 %v339
      %v632 = vunpack.c.l.b16 %v340
      %v633 = vunpack.c.l.b16 %v341
      %v634 = vunpack.c.l.b16 %v342
      %v635 = vunpack.c.l.b16 %v343
      %v636 = vunpack.c.l.b16 %v344
      %v637 = vunpack.c.l.b16 %v345
      %v638 = vunpack.c.l.b16 %v346
      %v639 = vunpack.c.l.b16 %v347
      %v640 = vunpack.c.l.b16 %v348
      %v641 = vunpack.c.l.b16 %v349
      %v642 = vunpack.c.l.b16 %v350
      %v643 = vunpack.c.l.b16 %v351
      %v644 = vunpack.c.l.b16 %v352
      %v645 = vunpack.c.l.b16 %v353
      %v646 = vunpack.c.l.b16 %v354
      %v647 = vunpack.c.l.b16 %v355
      %v648 = vunpack.c.l.b16 %v356
      %v649 = vunpack.c.l.b16 %v357
      %v650 = vunpack.c.l.b16 %v358
      %v651 = vunpack.c.l.b16 %v359
      %v652 = vunpack.c.l.b16 %v360
      %v653 = vunpack.c.l.b16 %v361
      %v654 = vunpack.c.l.b16 %v362
      %v655 = vunpack.c.l.b16 %v363
      %v656 = vunpack.c.l.b16 %v364
      %v657 = vunpack.c.l.b16 %v365
      %v658 = vunpack.c.l.b16 %v366
      %v659 = vunpack.c.l.b16 %v367
      %v660 = vunpack.c.l.b16 %v368
      %v661 = vunpack.c.l.b16 %v369
      %v662 = vunpack.c.l.b16 %v370
      %v663 = vunpack.c.l.b16 %v371
      %v664 = vunpack.c.l.b16 %v372
      %v665 = vunpack.c.l.b16 %v373
      %v666 = vunpack.c.l.b16 %v374
      %v667 = vunpack.c.l.b16 %v375
      %v668 = vunpack.c.l.b16 %v376
      %v669 = vunpack.c.l.b16 %v377
      %v670 = vunpack.c.l.b16 %v378
      %v671 = vunpack.c.l.b16 %v379
      %v672 = vunpack.c.l.b16 %v380
      %v673 = vunpack.c.l.b16 %v381
      %v674 = vunpack.c.l.b16 %v382
      %v675 = vunpack.c.l.b16 %v383
      %v676 = vunpack.c.l.b16 %v384
      %v677 = vunpack.c.l.b16 %v385
      %v678 = vunpack.c.l.b16 %v386
      %v679 = vunpack.c.l.b16 %v387
      %v680 = vunpack.c.l.b16 %v388
      %v681 = vunpack.c.l.b16 %v389
      %v682 = vunpack.c.l.b16 %v390
      %v683 = vunpack.c.l.b16 %v391
      %v684 = vunpack.c.l.b16 %v392
      %v685 = vunpack.c.l.b16 %v393
      %v686 = vunpack.c.l.b16 %v394
      %v687 = vunpack.c.l.b16 %v395
      %v688 = vunpack.c.l.b16 %v396
      %v689 = vunpack.c.l.b16 %v397
      %v690 = vunpack.c.l.b16 %v398
      %v691 = vunpack.c.l.b16 %v399
      %v692 = vunpack.c.l.b16 %v400
      %v693 = vunpack.c.l.b16 %v401
      %v694 = vunpack.c.l.b16 %v402
      %v695 = vunpack.c.l.b16 %v403
      %v696 = vunpack.c.l.b16 %v404
      %v697 = vunpack.c.l.b16 %v405
      %v698 = vunpack.c.l.b16 %v406
      %v699 = vunpack.c.l.b16 %v407
      %v700 = vunpack.c.l.b16 %v408
      %v701 = vunpack.c.l.b16 %v409
      %v702 = vunpack.c.l.b16 %v410
      %v703 = vunpack.c.l.b16 %v411
      %v704 = vunpack.c.l.b16 %v412
      %v705 = vunpack.c.l.b16 %v413
      %v706 = vunpack.c.l.b16 %v414
      %v707 = vunpack.c.l.b16 %v415
      %v708 = vunpack.c.l.b16 %v416
      %v709 = vunpack.c.l.b16 %v417
      %v710 = vunpack.c.l.b16 %v418
      %v711 = vunpack.c.l.b16 %v419
      %v712 = vunpack.c.l.b16 %v420
      %v713 = vunpack.c.l.b16 %v421
      %v714 = vunpack.c.l.b16 %v422
      %v715 = vunpack.c.l.b16 %v423
      %v716 = vunpack.c.l.b16 %v424
      %v717 = vunpack.c.l.b16 %v425
      %v718 = vunpack.c.l.b16 %v426
      %v719 = vunpack.c.l.b16 %v427
      %v720 = vunpack.c.l.b16 %v428
      %v721 = vunpack.c.l.b16 %v429
      %v722 = vunpack.c.l.b16 %v430
      %v723 = vunpack.c.l.b16 %v431
      %v724 = vunpack.c.l.b16 %v432
      %v725 = vunpack.c.l.b16 %v433
      %v726 = vunpack.c.l.b16 %v434
      %v727 = vunpack.c.l.b16 %v435
      %v728 = vunpack.c.l.b16 %v436
      %v729 = vunpack.c.l.b16 %v437
      %v730 = vunpack.c.l.b16 %v438
      %v731 = vunpack.c.l.b16 %v439
      %v732 = vunpack.c.l.b16 %v440
      %v733 = vunpack.c.l.b16 %v441
      %v734 = vunpack.c.l.b16 %v442
      %v735 = vunpack.c.l.b16 %v443
      %v736 = vunpack.c.l.b16 %v444
      %v737 = vunpack.c.l.b16 %v445
      %v738 = vunpack.c.l.b16 %v446
      %v739 = vunpack.c.l.b16 %v447
      %v740 = vunpack.c.l.b16 %v448
      %v741 = vunpack.c.l.b16 %v449
      %v742 = vunpack.c.l.b16 %v450
      %v743 = vunpack.c.l.b16 %v451
      %v744 = vunpack.c.l.b16 %v452
      %v745 = vunpack.c.l.b16 %v453
      %v746 = vunpack.c.l.b16 %v454
      %v747 = vpack.c.b16 %v604, %v603
      %v748 = vpack.c.b16 %v606, %v605
      %v749 = vpack.c.b16 %v608, %v607
      %v750 = vpack.c.b16 %v610, %v609
      %v751 = vpack.c.b16 %v612, %v611
      %v752 = vpack.c.b16 %v614, %v613
      %v753 = vpack.c.b16 %v616, %v615
      %v754 = vpack.c.b16 %v618, %v617
      %v755 = vpack.c.b16 %v620, %v619
      %v756 = vpack.c.b16 %v622, %v621
      %v757 = vpack.c.b16 %v624, %v623
      %v758 = vpack.c.b16 %v626, %v625
      %v759 = vpack.c.b16 %v628, %v627
      %v760 = vpack.c.b16 %v630, %v629
      %v761 = vpack.c.b16 %v632, %v631
      %v762 = vpack.c.b16 %v634, %v633
      %v763 = vpack.c.b16 %v636, %v635
      %v764 = vpack.c.b16 %v638, %v637
      %v765 = vpack.c.b16 %v640, %v639
      %v766 = vpack.c.b16 %v642, %v641
      %v767 = vpack.c.b16 %v644, %v643
      %v768 = vpack.c.b16 %v646, %v645
      %v769 = vpack.c.b16 %v648, %v647
      %v770 = vpack.c.b16 %v650, %v649
      %v771 = vpack.c.b16 %v652, %v651
      %v772 = vpack.c.b16 %v654, %v653
      %v773 = vpack.c.b16 %v656, %v655
      %v774 = vpack.c.b16 %v658, %v657
      %v775 = vpack.c.b16 %v660, %v659
      %v776 = vpack.c.b16 %v662, %v661
      %v777 = vpack.c.b16 %v664, %v663
      %v778 = vpack.c.b16 %v666, %v665
      %v779 = vpack.c.b16 %v668, %v667
      %v780 = vpack.c.b16 %v670, %v669
      %v781 = vpack.c.b16 %v672, %v671
      %v782 = vpack.c.b16 %v674, %v673
      %v783 = vpack.c.b16 %v676, %v675
      %v784 = vpack.c.b16 %v678, %v677
      %v785 = vpack.c.b16 %v680, %v679
      %v786 = vpack.c.b16 %v682, %v681
      %v787 = vpack.c.b16 %v684, %v683
      %v788 = vpack.c.b16 %v686, %v685
      %v789 = vpack.c.b16 %v688, %v687
      %v790 = vpack.c.b16 %v690, %v689
      %v791 = vpack.c.b16 %v692, %v691
      %v792 = vpack.c.b16 %v694, %v693
      %v793 = vpack.c.b16 %v696, %v695
      %v794 = vpack.c.b16 %v698, %v697
      %v795 = vpack.c.b16 %v700, %v699
      %v796 = vpack.c.b16 %v702, %v701
      %v797 = vpack.c.b16 %v704, %v703
      %v798 = vpack.c.b16 %v706, %v705
      %v799 = vpack.c.b16 %v708, %v707
      %v800 = vpack.c.b16 %v710, %v709
      %v801 = vpack.c.b16 %v712, %v711
      %v802 = vpack.c.b16 %v714, %v713
      %v803 = vpack.c.b16 %v716, %v715
      %v804 = vpack.c.b16 %v718, %v717
      %v805 = vpack.c.b16 %v720, %v719
      %v806 = vpack.c.b16 %v722, %v721
      %v807 = vpack.c.b16 %v724, %v723
      %v808 = vpack.c.b16 %v726, %v725
      %v809 = vpack.c.b16 %v728, %v727
      %v810 = vpack.c.b16 %v730, %v729
      %v811 = vpack.c.b16 %v732, %v731
      %v812 = vpack.c.b16 %v734, %v733
      %v813 = vpack.c.b16 %v736, %v735
      %v814 = vpack.c.b16 %v738, %v737
      %v815 = vpack.c.b16 %v740, %v739
      %v816 = vpack.c.b16 %v742, %v741
      %v817 = vpack.c.b16 %v744, %v743
      %v818 = vpack.c.b16 %v746, %v745
      %891 = vmatpush.bf16.msra.mxu0 %v754
      %892 = vmatpush.bf16.msra.mxu0 %v753
      %893 = vmatpush.bf16.msra.mxu0 %v752
      %894 = vmatpush.bf16.msra.mxu0 %v751
      %895 = vmatpush.bf16.msra.mxu0 %v750
      %896 = vmatpush.bf16.msra.mxu0 %v749
      %897 = vmatpush.bf16.msra.mxu0 %v748
      %898 = vmatpush.bf16.msra.mxu0 %v747
      %899 = vmatmul.bf16.gmra.mxu0 %v275
      %v900 = vpop.f32.mrf.mxu0
      %v901 = vadd.f32 %v457, %v900
      %v902 = vpop.f32.mrf.mxu0
      %v903 = vadd.f32 %v457, %v902
      %904 = vmatmul.bf16.gmra.mxu0 %v284
      %v905 = vpop.f32.mrf.mxu0
      %v906 = vadd.f32 %v457, %v905
      %v907 = vpop.f32.mrf.mxu0
      %v908 = vadd.f32 %v457, %v907
      %909 = vmatmul.bf16.gmra.mxu0 %v293
      %v910 = vpop.f32.mrf.mxu0
      %v911 = vadd.f32 %v457, %v910
      %v912 = vpop.f32.mrf.mxu0
      %v913 = vadd.f32 %v457, %v912
      %914 = vmatmul.bf16.gmra.mxu0 %v302
      %v915 = vpop.f32.mrf.mxu0
      %v916 = vadd.f32 %v457, %v915
      %v917 = vpop.f32.mrf.mxu0
      %v918 = vadd.f32 %v457, %v917
      %919 = vdwg.mxu0
      %920 = vmatpush.bf16.msra.mxu0 %v762
      %921 = vmatpush.bf16.msra.mxu0 %v761
      %922 = vmatpush.bf16.msra.mxu0 %v760
      %923 = vmatpush.bf16.msra.mxu0 %v759
      %924 = vmatpush.bf16.msra.mxu0 %v758
      %925 = vmatpush.bf16.msra.mxu0 %v757
      %926 = vmatpush.bf16.msra.mxu0 %v756
      %927 = vmatpush.bf16.msra.mxu0 %v755
      %928 = vmatmul.bf16.gmra.mxu0 %v276
      %v929 = vpop.f32.mrf.mxu0
      %v930 = vadd.f32 %v901, %v929
      %v931 = vpop.f32.mrf.mxu0
      %v932 = vadd.f32 %v903, %v931
      %933 = vmatmul.bf16.gmra.mxu0 %v285
      %v934 = vpop.f32.mrf.mxu0
      %v935 = vadd.f32 %v906, %v934
      %v936 = vpop.f32.mrf.mxu0
      %v937 = vadd.f32 %v908, %v936
      %938 = vmatmul.bf16.gmra.mxu0 %v294
      %v939 = vpop.f32.mrf.mxu0
      %v940 = vadd.f32 %v911, %v939
      %v941 = vpop.f32.mrf.mxu0
      %v942 = vadd.f32 %v913, %v941
      %943 = vmatmul.bf16.gmra.mxu0 %v303
      %v944 = vpop.f32.mrf.mxu0
      %v945 = vadd.f32 %v916, %v944
      %v946 = vpop.f32.mrf.mxu0
      %v947 = vadd.f32 %v918, %v946
      %948 = vdwg.mxu0
      %949 = vmatpush.bf16.msra.mxu0 %v770
      %950 = vmatpush.bf16.msra.mxu0 %v769
      %951 = vmatpush.bf16.msra.mxu0 %v768
      %952 = vmatpush.bf16.msra.mxu0 %v767
      %953 = vmatpush.bf16.msra.mxu0 %v766
      %954 = vmatpush.bf16.msra.mxu0 %v765
      %955 = vmatpush.bf16.msra.mxu0 %v764
      %956 = vmatpush.bf16.msra.mxu0 %v763
      %957 = vmatmul.bf16.gmra.mxu0 %v277
      %v958 = vpop.f32.mrf.mxu0
      %v959 = vadd.f32 %v930, %v958
      %v960 = vpop.f32.mrf.mxu0
      %v961 = vadd.f32 %v932, %v960
      %962 = vmatmul.bf16.gmra.mxu0 %v286
      %v963 = vpop.f32.mrf.mxu0
      %v964 = vadd.f32 %v935, %v963
      %v965 = vpop.f32.mrf.mxu0
      %v966 = vadd.f32 %v937, %v965
      %967 = vmatmul.bf16.gmra.mxu0 %v295
      %v968 = vpop.f32.mrf.mxu0
      %v969 = vadd.f32 %v940, %v968
      %v970 = vpop.f32.mrf.mxu0
      %v971 = vadd.f32 %v942, %v970
      %972 = vmatmul.bf16.gmra.mxu0 %v304
      %v973 = vpop.f32.mrf.mxu0
      %v974 = vadd.f32 %v945, %v973
      %v975 = vpop.f32.mrf.mxu0
      %v976 = vadd.f32 %v947, %v975
      %977 = vdwg.mxu0
      %978 = vmatpush.bf16.msra.mxu0 %v778
      %979 = vmatpush.bf16.msra.mxu0 %v777
      %980 = vmatpush.bf16.msra.mxu0 %v776
      %981 = vmatpush.bf16.msra.mxu0 %v775
      %982 = vmatpush.bf16.msra.mxu0 %v774
      %983 = vmatpush.bf16.msra.mxu0 %v773
      %984 = vmatpush.bf16.msra.mxu0 %v772
      %985 = vmatpush.bf16.msra.mxu0 %v771
      %986 = vmatmul.bf16.gmra.mxu0 %v278
      %v987 = vpop.f32.mrf.mxu0
      %v988 = vadd.f32 %v959, %v987
      %v989 = vpop.f32.mrf.mxu0
      %v990 = vadd.f32 %v961, %v989
      %991 = vmatmul.bf16.gmra.mxu0 %v287
      %v992 = vpop.f32.mrf.mxu0
      %v993 = vadd.f32 %v964, %v992
      %v994 = vpop.f32.mrf.mxu0
      %v995 = vadd.f32 %v966, %v994
      %996 = vmatmul.bf16.gmra.mxu0 %v296
      %v997 = vpop.f32.mrf.mxu0
      %v998 = vadd.f32 %v969, %v997
      %v999 = vpop.f32.mrf.mxu0
      %v1000 = vadd.f32 %v971, %v999
      %1001 = vmatmul.bf16.gmra.mxu0 %v305
      %v1002 = vpop.f32.mrf.mxu0
      %v1003 = vadd.f32 %v974, %v1002
      %v1004 = vpop.f32.mrf.mxu0
      %v1005 = vadd.f32 %v976, %v1004
      %1006 = vdwg.mxu0
      %1007 = vmatpush.bf16.msra.mxu0 %v786
      %1008 = vmatpush.bf16.msra.mxu0 %v785
      %1009 = vmatpush.bf16.msra.mxu0 %v784
      %1010 = vmatpush.bf16.msra.mxu0 %v783
      %1011 = vmatpush.bf16.msra.mxu0 %v782
      %1012 = vmatpush.bf16.msra.mxu0 %v781
      %1013 = vmatpush.bf16.msra.mxu0 %v780
      %1014 = vmatpush.bf16.msra.mxu0 %v779
      %1015 = vmatmul.bf16.gmra.mxu0 %v279
      %v1016 = vpop.f32.mrf.mxu0
      %v1017 = vadd.f32 %v988, %v1016
      %v1018 = vpop.f32.mrf.mxu0
      %v1019 = vadd.f32 %v990, %v1018
      %1020 = vmatmul.bf16.gmra.mxu0 %v288
      %v1021 = vpop.f32.mrf.mxu0
      %v1022 = vadd.f32 %v993, %v1021
      %v1023 = vpop.f32.mrf.mxu0
      %v1024 = vadd.f32 %v995, %v1023
      %1025 = vmatmul.bf16.gmra.mxu0 %v297
      %v1026 = vpop.f32.mrf.mxu0
      %v1027 = vadd.f32 %v998, %v1026
      %v1028 = vpop.f32.mrf.mxu0
      %v1029 = vadd.f32 %v1000, %v1028
      %1030 = vmatmul.bf16.gmra.mxu0 %v306
      %v1031 = vpop.f32.mrf.mxu0
      %v1032 = vadd.f32 %v1003, %v1031
      %v1033 = vpop.f32.mrf.mxu0
      %v1034 = vadd.f32 %v1005, %v1033
      %1035 = vdwg.mxu0
      %1036 = vmatpush.bf16.msra.mxu0 %v794
      %1037 = vmatpush.bf16.msra.mxu0 %v793
      %1038 = vmatpush.bf16.msra.mxu0 %v792
      %1039 = vmatpush.bf16.msra.mxu0 %v791
      %1040 = vmatpush.bf16.msra.mxu0 %v790
      %1041 = vmatpush.bf16.msra.mxu0 %v789
      %1042 = vmatpush.bf16.msra.mxu0 %v788
      %1043 = vmatpush.bf16.msra.mxu0 %v787
      %1044 = vmatmul.bf16.gmra.mxu0 %v280
      %v1045 = vpop.f32.mrf.mxu0
      %v1046 = vadd.f32 %v1017, %v1045
      %v1047 = vpop.f32.mrf.mxu0
      %v1048 = vadd.f32 %v1019, %v1047
      %1049 = vmatmul.bf16.gmra.mxu0 %v289
      %v1050 = vpop.f32.mrf.mxu0
      %v1051 = vadd.f32 %v1022, %v1050
      %v1052 = vpop.f32.mrf.mxu0
      %v1053 = vadd.f32 %v1024, %v1052
      %1054 = vmatmul.bf16.gmra.mxu0 %v298
      %v1055 = vpop.f32.mrf.mxu0
      %v1056 = vadd.f32 %v1027, %v1055
      %v1057 = vpop.f32.mrf.mxu0
      %v1058 = vadd.f32 %v1029, %v1057
      %1059 = vmatmul.bf16.gmra.mxu0 %v307
      %v1060 = vpop.f32.mrf.mxu0
      %v1061 = vadd.f32 %v1032, %v1060
      %v1062 = vpop.f32.mrf.mxu0
      %v1063 = vadd.f32 %v1034, %v1062
      %1064 = vdwg.mxu0
      %1065 = vmatpush.bf16.msra.mxu0 %v802
      %1066 = vmatpush.bf16.msra.mxu0 %v801
      %1067 = vmatpush.bf16.msra.mxu0 %v800
      %1068 = vmatpush.bf16.msra.mxu0 %v799
      %1069 = vmatpush.bf16.msra.mxu0 %v798
      %1070 = vmatpush.bf16.msra.mxu0 %v797
      %1071 = vmatpush.bf16.msra.mxu0 %v796
      %1072 = vmatpush.bf16.msra.mxu0 %v795
      %1073 = vmatmul.bf16.gmra.mxu0 %v281
      %v1074 = vpop.f32.mrf.mxu0
      %v1075 = vadd.f32 %v1046, %v1074
      %v1076 = vpop.f32.mrf.mxu0
      %v1077 = vadd.f32 %v1048, %v1076
      %1078 = vmatmul.bf16.gmra.mxu0 %v290
      %v1079 = vpop.f32.mrf.mxu0
      %v1080 = vadd.f32 %v1051, %v1079
      %v1081 = vpop.f32.mrf.mxu0
      %v1082 = vadd.f32 %v1053, %v1081
      %1083 = vmatmul.bf16.gmra.mxu0 %v299
      %v1084 = vpop.f32.mrf.mxu0
      %v1085 = vadd.f32 %v1056, %v1084
      %v1086 = vpop.f32.mrf.mxu0
      %v1087 = vadd.f32 %v1058, %v1086
      %1088 = vmatmul.bf16.gmra.mxu0 %v308
      %v1089 = vpop.f32.mrf.mxu0
      %v1090 = vadd.f32 %v1061, %v1089
      %v1091 = vpop.f32.mrf.mxu0
      %v1092 = vadd.f32 %v1063, %v1091
      %1093 = vdwg.mxu0
      %1094 = vmatpush.bf16.msra.mxu0 %v810
      %1095 = vmatpush.bf16.msra.mxu0 %v809
      %1096 = vmatpush.bf16.msra.mxu0 %v808
      %1097 = vmatpush.bf16.msra.mxu0 %v807
      %1098 = vmatpush.bf16.msra.mxu0 %v806
      %1099 = vmatpush.bf16.msra.mxu0 %v805
      %1100 = vmatpush.bf16.msra.mxu0 %v804
      %1101 = vmatpush.bf16.msra.mxu0 %v803
      %1102 = vmatmul.bf16.gmra.mxu0 %v282
      %v1103 = vpop.f32.mrf.mxu0
      %v1104 = vadd.f32 %v1075, %v1103
      %v1105 = vpop.f32.mrf.mxu0
      %v1106 = vadd.f32 %v1077, %v1105
      %1107 = vmatmul.bf16.gmra.mxu0 %v291
      %v1108 = vpop.f32.mrf.mxu0
      %v1109 = vadd.f32 %v1080, %v1108
      %v1110 = vpop.f32.mrf.mxu0
      %v1111 = vadd.f32 %v1082, %v1110
      %1112 = vmatmul.bf16.gmra.mxu0 %v300
      %v1113 = vpop.f32.mrf.mxu0
      %v1114 = vadd.f32 %v1085, %v1113
      %v1115 = vpop.f32.mrf.mxu0
      %v1116 = vadd.f32 %v1087, %v1115
      %1117 = vmatmul.bf16.gmra.mxu0 %v309
      %v1118 = vpop.f32.mrf.mxu0
      %v1119 = vadd.f32 %v1090, %v1118
      %v1120 = vpop.f32.mrf.mxu0
      %v1121 = vadd.f32 %v1092, %v1120
      %1122 = vdwg.mxu0
      %1123 = vmatpush.bf16.msra.mxu0 %v818
      %1124 = vmatpush.bf16.msra.mxu0 %v817
      %1125 = vmatpush.bf16.msra.mxu0 %v816
      %1126 = vmatpush.bf16.msra.mxu0 %v815
      %1127 = vmatpush.bf16.msra.mxu0 %v814
      %1128 = vmatpush.bf16.msra.mxu0 %v813
      %1129 = vmatpush.bf16.msra.mxu0 %v812
      %1130 = vmatpush.bf16.msra.mxu0 %v811
      %1131 = vmatmul.bf16.gmra.mxu0 %v283
      %v1132 = vpop.f32.mrf.mxu0
      %v1133 = vadd.f32 %v1104, %v1132
      %v1134 = vpop.f32.mrf.mxu0
      %v1135 = vadd.f32 %v1106, %v1134
      %1136 = vmatmul.bf16.gmra.mxu0 %v292
      %v1137 = vpop.f32.mrf.mxu0
      %v1138 = vadd.f32 %v1109, %v1137
      %v1139 = vpop.f32.mrf.mxu0
      %v1140 = vadd.f32 %v1111, %v1139
      %1141 = vmatmul.bf16.gmra.mxu0 %v301
      %v1142 = vpop.f32.mrf.mxu0
      %v1143 = vadd.f32 %v1114, %v1142
      %v1144 = vpop.f32.mrf.mxu0
      %v1145 = vadd.f32 %v1116, %v1144
      %1146 = vmatmul.bf16.gmra.mxu0 %v310
      %v1147 = vpop.f32.mrf.mxu0
      %v1148 = vadd.f32 %v1119, %v1147
      %v1149 = vpop.f32.mrf.mxu0
      %v1150 = vadd.f32 %v1121, %v1149
      %1151 = vdwg.mxu0
      %1152 = vst [vmem:[%s192] sm:$0xff] %v1133
      %1153 = vst [vmem:[%s192 + $0x8] sm:$0xff] %v1135
      %1154 = vst [vmem:[%s192 + $0x10] sm:$0xff] %v1138
      %1155 = vst [vmem:[%s192 + $0x18] sm:$0xff] %v1140
      %1156 = vst [vmem:[%s192 + $0x20] sm:$0xff] %v1143
      %1157 = vst [vmem:[%s192 + $0x28] sm:$0xff] %v1145
      %1158 = vst [vmem:[%s192 + $0x30] sm:$0xff] %v1148
      %1159 = vst [vmem:[%s192 + $0x38] sm:$0xff] %v1150
      %s1160 = smul.u32 8, %s19
      %p1161 = scmp.lt.s32.totalorder %s18, 3
      %s1162 = scalar_select %p1161, %s18, 3
      %p1163 = scmp.lt.s32.totalorder %s1160, 7
      %s1164 = scalar_select %p1163, %s1160, 7
      %s1165 = smul.addr %s1162, 8
      %s1166 = sadd.s32 %s1164, %s1165
      %s1167 = smul.addr %s1166, 8
      %s1168 = scalar_lea.vmem %s3, %s1167
      // Predicated region
      $region33: #{loss_fn.9} parent=31 // pred_check
        %p1169 = pneg %p114
      $region34: #{loss_fn.9} parent=31 // pred_check_branch
        %1171 = sbr.rel (%p1169) target = $region36
      $region35: #{loss_fn.9} parent=31 // pred_region
        %s1172 = smul.u32 8, %s19
      $region36: #{loss_fn.9} parent=31 // pred_fallthru
        _
    $region32: #{loss_fn.9} parent=5 // pred_fallthru
      _
    %p1173 = scmp.le.s32.totalorder 2, %s9
    // Predicated region
    $region37: #{loss_fn.9} parent=5 // pred_check
      %p1174 = pneg %p1173
    $region38: #{loss_fn.9} parent=5 // pred_check_branch
      %1176 = sbr.rel (%p1174) target = $region40
    $region39: #{loss_fn.9} parent=5 // pred_region
      %s1177 = ssub.s32 %s9, 2
      // Predicated region
      $region41: #{loss_fn.9} parent=39 // pred_check
        %p1178 = pneg %p120
      $region42: #{loss_fn.9} parent=39 // pred_check_branch
        %1180 = sbr.rel (%p1178) target = $region44
      $region43: #{loss_fn.9} parent=39 // pred_region
        %s1181 = smul.u32 8, %s21
        %p1182 = scmp.lt.s32.totalorder %s20, 3
        %s1183 = scalar_select %p1182, %s20, 3
        %p1184 = scmp.lt.s32.totalorder %s1181, 7
        %s1185 = scalar_select %p1184, %s1181, 7
        %s1186 = smul.addr %s1183, 8
        %s1187 = sadd.s32 %s1185, %s1186
        %s1188 = smul.addr %s1187, 8
        %s1189 = scalar_lea.vmem %s3, %s1188
      $region44: #{loss_fn.9} parent=39 // pred_fallthru
        _
    $region40: #{loss_fn.9} parent=5 // pred_fallthru
      _
  $region6: #{loss_fn.9} parent=0 // loop_footer
    %s13 = sadd.s32 1, %s9
  $region7: #{loss_fn.9} parent=0 // loop_footer_branch
    %8 = sbr.rel target = $region3
  $region8: #{loss_fn.9} parent=0 // loop_exit
    _

</llo_original>
